<compile_context>
chip_gen: v7x
topology: tpu7x:2x2x1
jax: 0.10.0
libtpu: 0.0.40
codegen_flags: <defaults>
</compile_context>

<pallas_src>
import math
import numpy as np
import jax
import jax.numpy as jnp
from jax.experimental import pallas as pl
from jax.experimental.pallas import tpu as pltpu

H = W = 14
HW = H * W                                    # 196
POOL_K, POOL_S = 5, 3
OH = OW = (H - POOL_K) // POOL_S + 1          # 4
SP = OH * OW                                  # 16 pooled spatial positions
CONV_OUT = 128
FC1_IN = CONV_OUT * SP                        # 2048 (matches nn.Linear(2048, 1024))
FC1_OUT = 1024
BN_EPS = 1e-3


def _round_up(x, m):
    return (x + m - 1) // m * m


def _pool_matrix_t():
    """AvgPool2d(5, stride=3) on 14x14 as a [SP, HW] matrix (transposed), entries 1/25."""
    Pt = np.zeros((SP, HW), np.float32)
    for oh in range(OH):
        for ow in range(OW):
            for i in range(POOL_K):
                for j in range(POOL_K):
                    Pt[oh * OW + ow, (POOL_S * oh + i) * W + (POOL_S * ow + j)] = 1.0 / (POOL_K * POOL_K)
    return jnp.asarray(Pt)


# ----------------------------- fused kernel -----------------------------
def inception_aux_kernel(xt_ref, pt_ref, wct_ref, scale_ref, shift_ref,
                         w1_ref, b1_ref, w2_ref, b2_ref, out_ref):
    # xt_ref:    [tb, 196, C]       bf16 activation tile (NHWC-flattened spatial)
    # pt_ref:    [16, 196]          f32  avg-pool matrix^T
    # wct_ref:   [C, 128]           f32  1x1 conv weight^T
    # scale_ref: [1, 128]           f32  folded eval-mode BN scale (gamma / sqrt(var+eps))
    # shift_ref: [1, 128]           f32  folded eval-mode BN shift (beta - mean*scale)
    # w1_ref:    [16, 128, 1024]    bf16 fc1 weight, w1[s, k, :] = W1[:, k*16+s]  (VMEM resident)
    # b1_ref:    [1, 1024]          f32
    # w2_ref:    [1024, ncp]        bf16 fc2 weight^T, zero-padded columns        (VMEM resident)
    # b2_ref:    [1, ncp]           f32  fc2 bias, zero-padded
    # out_ref:   [tb, ncp]          f32
    tb = out_ref.shape[0]

    # ---- Stage 1: avg-pool (batched MXU matmul over the whole tile) + 1x1 conv + BN + ReLU ----
    x = xt_ref[...]                                                     # [tb, 196, C] bf16
    ptb = jnp.broadcast_to(pt_ref[...].astype(jnp.bfloat16)[None],
                           (tb, SP, HW))                                # [tb, 16, 196]
    pooled = jax.lax.dot_general(                                       # [tb, 16, C]
        ptb, x, (((2,), (1,)), ((0,), (0,))),
        preferred_element_type=jnp.float32)
    pooled = pooled.reshape(tb * SP, -1).astype(jnp.bfloat16)           # leading-dim merge (free)
    feat = jnp.dot(pooled, wct_ref[...].astype(jnp.bfloat16),
                   preferred_element_type=jnp.float32)                  # [tb*16, 128] lane-dense
    feat = jnp.maximum(feat * scale_ref[...] + shift_ref[...], 0.0)
    feat = feat.astype(jnp.bfloat16).reshape(tb, SP, CONV_OUT)          # leading-dim split (free)

    # ---- Stage 2: fc1 + ReLU (+ inference-mode dropout) + fc2 ----
    # torch flatten (index k*16+s) expressed as 16 accumulated [tb,128]@[128,1024] matmuls,
    # so the features never get lane-scattered into a 2048-wide vector.
    y1 = jnp.zeros((tb, FC1_OUT), jnp.float32)
    for s in range(SP):                                                 # static, 16 MXU matmuls
        y1 = y1 + jnp.dot(feat[:, s, :], w1_ref[s],
                          preferred_element_type=jnp.float32)
    y1 = jnp.maximum(y1 + b1_ref[...], 0.0).astype(jnp.bfloat16)        # [tb, 1024]
    # TODO(synk): Dropout(p=0.7) is inference-mode identity only (training mask not implemented).
    out_ref[...] = jnp.dot(y1, w2_ref[...],
                           preferred_element_type=jnp.float32) + b2_ref[...]


# ----------------------------- batch-tile / VMEM budgeting -----------------------------
def _pick_batch_tile(n, c, ncp):
    """Pick tb so resident fc weights + double-buffered activation tiles fit scoped VMEM."""
    try:
        vmem_cap = int(pltpu.get_tpu_info().vmem_capacity_bytes)
    except Exception:
        vmem_cap = 64 << 20                            # conservative default: v7x per-core VMEM
    vmem_limit = min(vmem_cap * 3 // 4, 96 << 20)      # scoped VMEM we request

    weights = 2 * 2 * (FC1_IN * FC1_OUT + FC1_OUT * ncp)   # resident bf16 fc weights (2 bufs worst case)
    per_sample = (2 * 2 * HW * c                # bf16 activation tile, double-buffered
                  + 2 * SP * HW                 # broadcast pool matrix (bf16)
                  + 6 * SP * c                  # pooled f32 + bf16
                  + 6 * SP * CONV_OUT           # feat f32 + bf16
                  + 6 * FC1_OUT                 # y1 f32 + bf16
                  + 2 * 4 * ncp)                # f32 output block, double-buffered
    budget = vmem_limit - weights - (2 << 20)
    tb = int(max(8, min(256, budget // per_sample)))

    n8 = _round_up(n, 8)
    if tb >= n8:
        # Whole padded batch fits in one tile; split in two when cleanly possible so both
        # v7x TensorCores get a tile on the "parallel" batch axis.
        tb = n8 // 2 if (n8 >= 16 and n8 % 16 == 0) else n8
    else:
        tb = max(8, tb // 8 * 8)
    n_pad = _round_up(n8, tb)
    return tb, n_pad, int(vmem_limit)


# ----------------------------- wrapper -----------------------------
def inception_aux_forward(x, params):
    N, C, h, w = x.shape
    assert (h, w) == (H, W), "InceptionAux expects 14x14 spatial input (fc1 is 2048-wide)"
    num_classes = params["num_classes"]
    ncp = params["fc2_w_p"].shape[1]

    tb, n_pad, vmem_limit = _pick_batch_tile(N, C, ncp)
    nb = n_pad // tb

    # Glue (single fused XLA pass): NCHW -> [N, 196, C] bf16, channels lane-dense for the conv.
    # Padded batch rows are wasted compute only; they are sliced off below.
    # TODO(synk): for very large C this transpose is an extra HBM pass over the activation; a
    # native-NCHW kernel variant would remove it.
    xt = jnp.transpose(x.reshape(N, C, HW), (0, 2, 1)).astype(jnp.bfloat16)   # [N, 196, C]
    if n_pad != N:
        xt = jnp.pad(xt, ((0, n_pad - N), (0, 0), (0, 0)))

    out = pl.pallas_call(
        inception_aux_kernel,
        out_shape=jax.ShapeDtypeStruct((n_pad, ncp), jnp.float32),
        grid=(nb,),
        in_specs=[
            pl.BlockSpec((tb, HW, C), lambda i: (i, 0, 0)),                # activation tile
            pl.BlockSpec((SP, HW), lambda i: (0, 0)),                      # pool matrix^T
            pl.BlockSpec((C, CONV_OUT), lambda i: (0, 0)),                 # conv weight^T
            pl.BlockSpec((1, CONV_OUT), lambda i: (0, 0)),                 # bn scale
            pl.BlockSpec((1, CONV_OUT), lambda i: (0, 0)),                 # bn shift
            pl.BlockSpec((SP, CONV_OUT, FC1_OUT), lambda i: (0, 0, 0)),    # fc1 weight (resident bf16)
            pl.BlockSpec((1, FC1_OUT), lambda i: (0, 0)),                  # fc1 bias
            pl.BlockSpec((FC1_OUT, ncp), lambda i: (0, 0)),                # fc2 weight (resident bf16)
            pl.BlockSpec((1, ncp), lambda i: (0, 0)),                      # fc2 bias (padded)
        ],
        out_specs=pl.BlockSpec((tb, ncp), lambda i: (i, 0)),
        compiler_params=pltpu.CompilerParams(
            dimension_semantics=("parallel",),
            vmem_limit_bytes=vmem_limit),
    )(xt, params["pool_t"], params["conv_w_t"], params["bn_scale"], params["bn_shift"],
      params["fc1_w"], params["fc1_b"], params["fc2_w_p"], params["fc2_b_p"])

    return out[:N, :num_classes]


# ----------------------------- params -----------------------------
def init_params(key, in_channels, num_classes):
    ks = jax.random.split(key, 8)
    conv_w = 0.1 * jax.random.normal(ks[0], (CONV_OUT, in_channels), jnp.float32)  # [128, C, 1, 1] squeezed
    gamma = 1.0 + 0.1 * jax.random.normal(ks[1], (CONV_OUT,), jnp.float32)
    beta = 0.1 * jax.random.normal(ks[2], (CONV_OUT,), jnp.float32)
    running_mean = 0.1 * jax.random.normal(ks[3], (CONV_OUT,), jnp.float32)
    running_var = jax.random.uniform(ks[4], (CONV_OUT,), jnp.float32, 0.5, 1.5)
    scale = gamma / jnp.sqrt(running_var + BN_EPS)        # eval-mode BN folded into scale/shift
    shift = beta - running_mean * scale

    w1 = 0.02 * jax.random.normal(ks[5], (FC1_OUT, FC1_IN), jnp.float32)   # torch [out, in = k*16 + s]
    b1 = 0.01 * jax.random.normal(ks[6], (FC1_OUT,), jnp.float32)
    w2 = 0.02 * jax.random.normal(ks[7], (num_classes, FC1_OUT), jnp.float32)
    b2 = jnp.zeros((num_classes,), jnp.float32)

    # fc1 weight reshaped to [SP, 128, 1024]: w1_skj[s, k, :] = W1[:, k*16 + s]
    w1_t = jnp.transpose(w1)                                                # [2048, 1024], rows = k*16+s
    w1_skj = jnp.transpose(w1_t.reshape(CONV_OUT, SP, FC1_OUT), (1, 0, 2))  # [16, 128, 1024]

    ncp = _round_up(num_classes, 128)                                       # pad classes to 128 lanes
    w2_p = jnp.pad(jnp.transpose(w2), ((0, 0), (0, ncp - num_classes)))
    b2_p = jnp.pad(b2, (0, ncp - num_classes))

    return {
        "num_classes": num_classes,
        "pool_t": _pool_matrix_t(),                        # [16, 196]
        "conv_w_t": jnp.transpose(conv_w),                 # [C, 128]
        "bn_scale": scale.reshape(1, CONV_OUT),
        "bn_shift": shift.reshape(1, CONV_OUT),
        "fc1_w": w1_skj.astype(jnp.bfloat16),              # [16, 128, 1024] bf16
        "fc1_b": b1.reshape(1, FC1_OUT),
        "fc2_w_p": w2_p.astype(jnp.bfloat16),              # [1024, ncp] bf16
        "fc2_b_p": b2_p.reshape(1, ncp),
    }


# ----------------------------- pure-JAX reference -----------------------------
def reference_forward(x, params):
    """f32 reference using the same (transformed) weights."""
    N, C = x.shape[0], x.shape[1]
    nc = params["num_classes"]
    xf = x.reshape(N, C, HW)
    pooled = jnp.einsum("sp,ncp->nsc", params["pool_t"], xf)               # [N, 16, C]
    feat = jnp.einsum("nsc,ck->nsk", pooled, params["conv_w_t"])           # [N, 16, 128]
    feat = jnp.maximum(feat * params["bn_scale"][None] + params["bn_shift"][None], 0.0)
    y1 = jnp.einsum("nsk,skj->nj", feat, params["fc1_w"].astype(jnp.float32)) + params["fc1_b"]
    y1 = jnp.maximum(y1, 0.0)
    out = y1 @ params["fc2_w_p"].astype(jnp.float32) + params["fc2_b_p"]
    return out[:, :nc]


if __name__ == "__main__":
    key = jax.random.PRNGKey(0)
    kx, kp = jax.random.split(key)
    N, C, num_classes = 2, 4, 10
    x = jax.random.normal(kx, (N, C, H, W), jnp.float32)
    params = init_params(kp, C, num_classes)

    out = inception_aux_forward(x, params)
    jax.block_until_ready(out)
    assert out.shape == (N, num_classes)

    ref = reference_forward(x, params)
    np.testing.assert_allclose(np.asarray(out), np.asarray(ref), atol=2e-2, rtol=2e-2)
    print("KERNEL_OK")
</pallas_src>

<mosaic_0001>
module attributes {stable_mosaic.version = 11 : i64} {
  func.func @inception_aux_kernel(%arg0: i32, %arg1: memref<8x196x4xbf16, #tpu.memory_space<vmem>>, %arg2: memref<16x196xf32, #tpu.memory_space<vmem>>, %arg3: memref<4x128xf32, #tpu.memory_space<vmem>>, %arg4: memref<1x128xf32, #tpu.memory_space<vmem>>, %arg5: memref<1x128xf32, #tpu.memory_space<vmem>>, %arg6: memref<16x128x1024xbf16, #tpu.memory_space<vmem>>, %arg7: memref<1x1024xf32, #tpu.memory_space<vmem>>, %arg8: memref<1024x128xbf16, #tpu.memory_space<vmem>>, %arg9: memref<1x128xf32, #tpu.memory_space<vmem>>, %arg10: memref<8x128xf32, #tpu.memory_space<vmem>>) attributes {dimension_semantics = [#tpu.dimension_semantics<parallel>], iteration_bounds = array<i64: 1>, scalar_prefetch = 0 : i64, scratch_operands = 0 : i64, tpu.core_type = #tpu.core_type<tc>, window_params = [{transform_indices = @transform_0, window_bounds = array<i64: 8, 196, 4>}, {pipeline_mode = #tpu.pipeline_mode<synchronous>, transform_indices = @transform_1, window_bounds = array<i64: 16, 196>}, {pipeline_mode = #tpu.pipeline_mode<synchronous>, transform_indices = @transform_2, window_bounds = array<i64: 4, 128>}, {pipeline_mode = #tpu.pipeline_mode<synchronous>, transform_indices = @transform_3, window_bounds = array<i64: 1, 128>}, {pipeline_mode = #tpu.pipeline_mode<synchronous>, transform_indices = @transform_4, window_bounds = array<i64: 1, 128>}, {pipeline_mode = #tpu.pipeline_mode<synchronous>, transform_indices = @transform_5, window_bounds = array<i64: 16, 128, 1024>}, {pipeline_mode = #tpu.pipeline_mode<synchronous>, transform_indices = @transform_6, window_bounds = array<i64: 1, 1024>}, {pipeline_mode = #tpu.pipeline_mode<synchronous>, transform_indices = @transform_7, window_bounds = array<i64: 1024, 128>}, {pipeline_mode = #tpu.pipeline_mode<synchronous>, transform_indices = @transform_8, window_bounds = array<i64: 1, 128>}, {transform_indices = @transform_9, window_bounds = array<i64: 8, 128>}]} {
    %c0 = arith.constant 0 : index
    %c0_0 = arith.constant 0 : index
    %c0_1 = arith.constant 0 : index
    %0 = vector.load %arg1[%c0, %c0_0, %c0_1] : memref<8x196x4xbf16, #tpu.memory_space<vmem>>, vector<8x196x4xbf16>
    %c0_2 = arith.constant 0 : index
    %c0_3 = arith.constant 0 : index
    %1 = vector.load %arg2[%c0_2, %c0_3] : memref<16x196xf32, #tpu.memory_space<vmem>>, vector<16x196xf32>
    %2 = arith.truncf %1 : vector<16x196xf32> to vector<16x196xbf16>
    %3 = vector.shape_cast %2 : vector<16x196xbf16> to vector<1x16x196xbf16>
    %4 = vector.shape_cast %3 : vector<1x16x196xbf16> to vector<1x16x196xbf16>
    %5 = vector.broadcast %4 : vector<1x16x196xbf16> to vector<8x16x196xbf16>
    %cst = arith.constant dense<0.000000e+00> : vector<8x16x4xf32>
    %6 = tpu.matmul %5, %0, %cst {dimension_numbers = #tpu.dot_dimension_numbers<[2], [1], [1], [2], [0, 0, 0, 1, 1, 2], [0], [0]>} : vector<8x16x196xbf16>, vector<8x196x4xbf16>, vector<8x16x4xf32> -> vector<8x16x4xf32>
    %7 = vector.shape_cast %6 : vector<8x16x4xf32> to vector<128x4xf32>
    %8 = arith.truncf %7 : vector<128x4xf32> to vector<128x4xbf16>
    %c0_4 = arith.constant 0 : index
    %c0_5 = arith.constant 0 : index
    %9 = vector.load %arg3[%c0_4, %c0_5] : memref<4x128xf32, #tpu.memory_space<vmem>>, vector<4x128xf32>
    %10 = arith.truncf %9 : vector<4x128xf32> to vector<4x128xbf16>
    %cst_6 = arith.constant dense<0.000000e+00> : vector<128x128xf32>
    %11 = tpu.matmul %8, %10, %cst_6 {dimension_numbers = #tpu.dot_dimension_numbers<[1], [0], [0], [1], [0, 0, 1, 1], [], []>} : vector<128x4xbf16>, vector<4x128xbf16>, vector<128x128xf32> -> vector<128x128xf32>
    %c0_7 = arith.constant 0 : index
    %c0_8 = arith.constant 0 : index
    %12 = vector.load %arg4[%c0_7, %c0_8] : memref<1x128xf32, #tpu.memory_space<vmem>>, vector<1x128xf32>
    %13 = vector.broadcast %12 : vector<1x128xf32> to vector<128x128xf32>
    %14 = arith.mulf %11, %13 : vector<128x128xf32>
    %c0_9 = arith.constant 0 : index
    %c0_10 = arith.constant 0 : index
    %15 = vector.load %arg5[%c0_9, %c0_10] : memref<1x128xf32, #tpu.memory_space<vmem>>, vector<1x128xf32>
    %16 = vector.broadcast %15 : vector<1x128xf32> to vector<128x128xf32>
    %17 = arith.addf %14, %16 : vector<128x128xf32>
    %cst_11 = arith.constant 0.000000e+00 : f32
    %18 = vector.broadcast %cst_11 : f32 to vector<128x128xf32>
    %19 = arith.maximumf %17, %18 : vector<128x128xf32>
    %20 = arith.truncf %19 : vector<128x128xf32> to vector<128x128xbf16>
    %21 = vector.shape_cast %20 : vector<128x128xbf16> to vector<8x16x128xbf16>
    %cst_12 = arith.constant 0.000000e+00 : f32
    %22 = vector.broadcast %cst_12 : f32 to vector<8x1024xf32>
    %23 = vector.extract_strided_slice %21 {offsets = [0, 0, 0], sizes = [8, 1, 128], strides = [1, 1, 1]} : vector<8x16x128xbf16> to vector<8x1x128xbf16>
    %24 = vector.shape_cast %23 : vector<8x1x128xbf16> to vector<8x128xbf16>
    %c0_13 = arith.constant 0 : index
    %c0_14 = arith.constant 0 : index
    %c0_15 = arith.constant 0 : index
    %25 = vector.load %arg6[%c0_13, %c0_14, %c0_15] : memref<16x128x1024xbf16, #tpu.memory_space<vmem>>, vector<1x128x1024xbf16>
    %26 = vector.shape_cast %25 : vector<1x128x1024xbf16> to vector<128x1024xbf16>
    %cst_16 = arith.constant dense<0.000000e+00> : vector<8x1024xf32>
    %27 = tpu.matmul %24, %26, %cst_16 {dimension_numbers = #tpu.dot_dimension_numbers<[1], [0], [0], [1], [0, 0, 1, 1], [], []>} : vector<8x128xbf16>, vector<128x1024xbf16>, vector<8x1024xf32> -> vector<8x1024xf32>
    %28 = arith.addf %22, %27 : vector<8x1024xf32>
    %29 = vector.extract_strided_slice %21 {offsets = [0, 1, 0], sizes = [8, 1, 128], strides = [1, 1, 1]} : vector<8x16x128xbf16> to vector<8x1x128xbf16>
    %30 = vector.shape_cast %29 : vector<8x1x128xbf16> to vector<8x128xbf16>
    %c1 = arith.constant 1 : index
    %c0_17 = arith.constant 0 : index
    %c0_18 = arith.constant 0 : index
    %31 = vector.load %arg6[%c1, %c0_17, %c0_18] : memref<16x128x1024xbf16, #tpu.memory_space<vmem>>, vector<1x128x1024xbf16>
    %32 = vector.shape_cast %31 : vector<1x128x1024xbf16> to vector<128x1024xbf16>
    %cst_19 = arith.constant dense<0.000000e+00> : vector<8x1024xf32>
    %33 = tpu.matmul %30, %32, %cst_19 {dimension_numbers = #tpu.dot_dimension_numbers<[1], [0], [0], [1], [0, 0, 1, 1], [], []>} : vector<8x128xbf16>, vector<128x1024xbf16>, vector<8x1024xf32> -> vector<8x1024xf32>
    %34 = arith.addf %28, %33 : vector<8x1024xf32>
    %35 = vector.extract_strided_slice %21 {offsets = [0, 2, 0], sizes = [8, 1, 128], strides = [1, 1, 1]} : vector<8x16x128xbf16> to vector<8x1x128xbf16>
    %36 = vector.shape_cast %35 : vector<8x1x128xbf16> to vector<8x128xbf16>
    %c2 = arith.constant 2 : index
    %c0_20 = arith.constant 0 : index
    %c0_21 = arith.constant 0 : index
    %37 = vector.load %arg6[%c2, %c0_20, %c0_21] : memref<16x128x1024xbf16, #tpu.memory_space<vmem>>, vector<1x128x1024xbf16>
    %38 = vector.shape_cast %37 : vector<1x128x1024xbf16> to vector<128x1024xbf16>
    %cst_22 = arith.constant dense<0.000000e+00> : vector<8x1024xf32>
    %39 = tpu.matmul %36, %38, %cst_22 {dimension_numbers = #tpu.dot_dimension_numbers<[1], [0], [0], [1], [0, 0, 1, 1], [], []>} : vector<8x128xbf16>, vector<128x1024xbf16>, vector<8x1024xf32> -> vector<8x1024xf32>
    %40 = arith.addf %34, %39 : vector<8x1024xf32>
    %41 = vector.extract_strided_slice %21 {offsets = [0, 3, 0], sizes = [8, 1, 128], strides = [1, 1, 1]} : vector<8x16x128xbf16> to vector<8x1x128xbf16>
    %42 = vector.shape_cast %41 : vector<8x1x128xbf16> to vector<8x128xbf16>
    %c3 = arith.constant 3 : index
    %c0_23 = arith.constant 0 : index
    %c0_24 = arith.constant 0 : index
    %43 = vector.load %arg6[%c3, %c0_23, %c0_24] : memref<16x128x1024xbf16, #tpu.memory_space<vmem>>, vector<1x128x1024xbf16>
    %44 = vector.shape_cast %43 : vector<1x128x1024xbf16> to vector<128x1024xbf16>
    %cst_25 = arith.constant dense<0.000000e+00> : vector<8x1024xf32>
    %45 = tpu.matmul %42, %44, %cst_25 {dimension_numbers = #tpu.dot_dimension_numbers<[1], [0], [0], [1], [0, 0, 1, 1], [], []>} : vector<8x128xbf16>, vector<128x1024xbf16>, vector<8x1024xf32> -> vector<8x1024xf32>
    %46 = arith.addf %40, %45 : vector<8x1024xf32>
    %47 = vector.extract_strided_slice %21 {offsets = [0, 4, 0], sizes = [8, 1, 128], strides = [1, 1, 1]} : vector<8x16x128xbf16> to vector<8x1x128xbf16>
    %48 = vector.shape_cast %47 : vector<8x1x128xbf16> to vector<8x128xbf16>
    %c4 = arith.constant 4 : index
    %c0_26 = arith.constant 0 : index
    %c0_27 = arith.constant 0 : index
    %49 = vector.load %arg6[%c4, %c0_26, %c0_27] : memref<16x128x1024xbf16, #tpu.memory_space<vmem>>, vector<1x128x1024xbf16>
    %50 = vector.shape_cast %49 : vector<1x128x1024xbf16> to vector<128x1024xbf16>
    %cst_28 = arith.constant dense<0.000000e+00> : vector<8x1024xf32>
    %51 = tpu.matmul %48, %50, %cst_28 {dimension_numbers = #tpu.dot_dimension_numbers<[1], [0], [0], [1], [0, 0, 1, 1], [], []>} : vector<8x128xbf16>, vector<128x1024xbf16>, vector<8x1024xf32> -> vector<8x1024xf32>
    %52 = arith.addf %46, %51 : vector<8x1024xf32>
    %53 = vector.extract_strided_slice %21 {offsets = [0, 5, 0], sizes = [8, 1, 128], strides = [1, 1, 1]} : vector<8x16x128xbf16> to vector<8x1x128xbf16>
    %54 = vector.shape_cast %53 : vector<8x1x128xbf16> to vector<8x128xbf16>
    %c5 = arith.constant 5 : index
    %c0_29 = arith.constant 0 : index
    %c0_30 = arith.constant 0 : index
    %55 = vector.load %arg6[%c5, %c0_29, %c0_30] : memref<16x128x1024xbf16, #tpu.memory_space<vmem>>, vector<1x128x1024xbf16>
    %56 = vector.shape_cast %55 : vector<1x128x1024xbf16> to vector<128x1024xbf16>
    %cst_31 = arith.constant dense<0.000000e+00> : vector<8x1024xf32>
    %57 = tpu.matmul %54, %56, %cst_31 {dimension_numbers = #tpu.dot_dimension_numbers<[1], [0], [0], [1], [0, 0, 1, 1], [], []>} : vector<8x128xbf16>, vector<128x1024xbf16>, vector<8x1024xf32> -> vector<8x1024xf32>
    %58 = arith.addf %52, %57 : vector<8x1024xf32>
    %59 = vector.extract_strided_slice %21 {offsets = [0, 6, 0], sizes = [8, 1, 128], strides = [1, 1, 1]} : vector<8x16x128xbf16> to vector<8x1x128xbf16>
    %60 = vector.shape_cast %59 : vector<8x1x128xbf16> to vector<8x128xbf16>
    %c6 = arith.constant 6 : index
    %c0_32 = arith.constant 0 : index
    %c0_33 = arith.constant 0 : index
    %61 = vector.load %arg6[%c6, %c0_32, %c0_33] : memref<16x128x1024xbf16, #tpu.memory_space<vmem>>, vector<1x128x1024xbf16>
    %62 = vector.shape_cast %61 : vector<1x128x1024xbf16> to vector<128x1024xbf16>
    %cst_34 = arith.constant dense<0.000000e+00> : vector<8x1024xf32>
    %63 = tpu.matmul %60, %62, %cst_34 {dimension_numbers = #tpu.dot_dimension_numbers<[1], [0], [0], [1], [0, 0, 1, 1], [], []>} : vector<8x128xbf16>, vector<128x1024xbf16>, vector<8x1024xf32> -> vector<8x1024xf32>
    %64 = arith.addf %58, %63 : vector<8x1024xf32>
    %65 = vector.extract_strided_slice %21 {offsets = [0, 7, 0], sizes = [8, 1, 128], strides = [1, 1, 1]} : vector<8x16x128xbf16> to vector<8x1x128xbf16>
    %66 = vector.shape_cast %65 : vector<8x1x128xbf16> to vector<8x128xbf16>
    %c7 = arith.constant 7 : index
    %c0_35 = arith.constant 0 : index
    %c0_36 = arith.constant 0 : index
    %67 = vector.load %arg6[%c7, %c0_35, %c0_36] : memref<16x128x1024xbf16, #tpu.memory_space<vmem>>, vector<1x128x1024xbf16>
    %68 = vector.shape_cast %67 : vector<1x128x1024xbf16> to vector<128x1024xbf16>
    %cst_37 = arith.constant dense<0.000000e+00> : vector<8x1024xf32>
    %69 = tpu.matmul %66, %68, %cst_37 {dimension_numbers = #tpu.dot_dimension_numbers<[1], [0], [0], [1], [0, 0, 1, 1], [], []>} : vector<8x128xbf16>, vector<128x1024xbf16>, vector<8x1024xf32> -> vector<8x1024xf32>
    %70 = arith.addf %64, %69 : vector<8x1024xf32>
    %71 = vector.extract_strided_slice %21 {offsets = [0, 8, 0], sizes = [8, 1, 128], strides = [1, 1, 1]} : vector<8x16x128xbf16> to vector<8x1x128xbf16>
    %72 = vector.shape_cast %71 : vector<8x1x128xbf16> to vector<8x128xbf16>
    %c8 = arith.constant 8 : index
    %c0_38 = arith.constant 0 : index
    %c0_39 = arith.constant 0 : index
    %73 = vector.load %arg6[%c8, %c0_38, %c0_39] : memref<16x128x1024xbf16, #tpu.memory_space<vmem>>, vector<1x128x1024xbf16>
    %74 = vector.shape_cast %73 : vector<1x128x1024xbf16> to vector<128x1024xbf16>
    %cst_40 = arith.constant dense<0.000000e+00> : vector<8x1024xf32>
    %75 = tpu.matmul %72, %74, %cst_40 {dimension_numbers = #tpu.dot_dimension_numbers<[1], [0], [0], [1], [0, 0, 1, 1], [], []>} : vector<8x128xbf16>, vector<128x1024xbf16>, vector<8x1024xf32> -> vector<8x1024xf32>
    %76 = arith.addf %70, %75 : vector<8x1024xf32>
    %77 = vector.extract_strided_slice %21 {offsets = [0, 9, 0], sizes = [8, 1, 128], strides = [1, 1, 1]} : vector<8x16x128xbf16> to vector<8x1x128xbf16>
    %78 = vector.shape_cast %77 : vector<8x1x128xbf16> to vector<8x128xbf16>
    %c9 = arith.constant 9 : index
    %c0_41 = arith.constant 0 : index
    %c0_42 = arith.constant 0 : index
    %79 = vector.load %arg6[%c9, %c0_41, %c0_42] : memref<16x128x1024xbf16, #tpu.memory_space<vmem>>, vector<1x128x1024xbf16>
    %80 = vector.shape_cast %79 : vector<1x128x1024xbf16> to vector<128x1024xbf16>
    %cst_43 = arith.constant dense<0.000000e+00> : vector<8x1024xf32>
    %81 = tpu.matmul %78, %80, %cst_43 {dimension_numbers = #tpu.dot_dimension_numbers<[1], [0], [0], [1], [0, 0, 1, 1], [], []>} : vector<8x128xbf16>, vector<128x1024xbf16>, vector<8x1024xf32> -> vector<8x1024xf32>
    %82 = arith.addf %76, %81 : vector<8x1024xf32>
    %83 = vector.extract_strided_slice %21 {offsets = [0, 10, 0], sizes = [8, 1, 128], strides = [1, 1, 1]} : vector<8x16x128xbf16> to vector<8x1x128xbf16>
    %84 = vector.shape_cast %83 : vector<8x1x128xbf16> to vector<8x128xbf16>
    %c10 = arith.constant 10 : index
    %c0_44 = arith.constant 0 : index
    %c0_45 = arith.constant 0 : index
    %85 = vector.load %arg6[%c10, %c0_44, %c0_45] : memref<16x128x1024xbf16, #tpu.memory_space<vmem>>, vector<1x128x1024xbf16>
    %86 = vector.shape_cast %85 : vector<1x128x1024xbf16> to vector<128x1024xbf16>
    %cst_46 = arith.constant dense<0.000000e+00> : vector<8x1024xf32>
    %87 = tpu.matmul %84, %86, %cst_46 {dimension_numbers = #tpu.dot_dimension_numbers<[1], [0], [0], [1], [0, 0, 1, 1], [], []>} : vector<8x128xbf16>, vector<128x1024xbf16>, vector<8x1024xf32> -> vector<8x1024xf32>
    %88 = arith.addf %82, %87 : vector<8x1024xf32>
    %89 = vector.extract_strided_slice %21 {offsets = [0, 11, 0], sizes = [8, 1, 128], strides = [1, 1, 1]} : vector<8x16x128xbf16> to vector<8x1x128xbf16>
    %90 = vector.shape_cast %89 : vector<8x1x128xbf16> to vector<8x128xbf16>
    %c11 = arith.constant 11 : index
    %c0_47 = arith.constant 0 : index
    %c0_48 = arith.constant 0 : index
    %91 = vector.load %arg6[%c11, %c0_47, %c0_48] : memref<16x128x1024xbf16, #tpu.memory_space<vmem>>, vector<1x128x1024xbf16>
    %92 = vector.shape_cast %91 : vector<1x128x1024xbf16> to vector<128x1024xbf16>
    %cst_49 = arith.constant dense<0.000000e+00> : vector<8x1024xf32>
    %93 = tpu.matmul %90, %92, %cst_49 {dimension_numbers = #tpu.dot_dimension_numbers<[1], [0], [0], [1], [0, 0, 1, 1], [], []>} : vector<8x128xbf16>, vector<128x1024xbf16>, vector<8x1024xf32> -> vector<8x1024xf32>
    %94 = arith.addf %88, %93 : vector<8x1024xf32>
    %95 = vector.extract_strided_slice %21 {offsets = [0, 12, 0], sizes = [8, 1, 128], strides = [1, 1, 1]} : vector<8x16x128xbf16> to vector<8x1x128xbf16>
    %96 = vector.shape_cast %95 : vector<8x1x128xbf16> to vector<8x128xbf16>
    %c12 = arith.constant 12 : index
    %c0_50 = arith.constant 0 : index
    %c0_51 = arith.constant 0 : index
    %97 = vector.load %arg6[%c12, %c0_50, %c0_51] : memref<16x128x1024xbf16, #tpu.memory_space<vmem>>, vector<1x128x1024xbf16>
    %98 = vector.shape_cast %97 : vector<1x128x1024xbf16> to vector<128x1024xbf16>
    %cst_52 = arith.constant dense<0.000000e+00> : vector<8x1024xf32>
    %99 = tpu.matmul %96, %98, %cst_52 {dimension_numbers = #tpu.dot_dimension_numbers<[1], [0], [0], [1], [0, 0, 1, 1], [], []>} : vector<8x128xbf16>, vector<128x1024xbf16>, vector<8x1024xf32> -> vector<8x1024xf32>
    %100 = arith.addf %94, %99 : vector<8x1024xf32>
    %101 = vector.extract_strided_slice %21 {offsets = [0, 13, 0], sizes = [8, 1, 128], strides = [1, 1, 1]} : vector<8x16x128xbf16> to vector<8x1x128xbf16>
    %102 = vector.shape_cast %101 : vector<8x1x128xbf16> to vector<8x128xbf16>
    %c13 = arith.constant 13 : index
    %c0_53 = arith.constant 0 : index
    %c0_54 = arith.constant 0 : index
    %103 = vector.load %arg6[%c13, %c0_53, %c0_54] : memref<16x128x1024xbf16, #tpu.memory_space<vmem>>, vector<1x128x1024xbf16>
    %104 = vector.shape_cast %103 : vector<1x128x1024xbf16> to vector<128x1024xbf16>
    %cst_55 = arith.constant dense<0.000000e+00> : vector<8x1024xf32>
    %105 = tpu.matmul %102, %104, %cst_55 {dimension_numbers = #tpu.dot_dimension_numbers<[1], [0], [0], [1], [0, 0, 1, 1], [], []>} : vector<8x128xbf16>, vector<128x1024xbf16>, vector<8x1024xf32> -> vector<8x1024xf32>
    %106 = arith.addf %100, %105 : vector<8x1024xf32>
    %107 = vector.extract_strided_slice %21 {offsets = [0, 14, 0], sizes = [8, 1, 128], strides = [1, 1, 1]} : vector<8x16x128xbf16> to vector<8x1x128xbf16>
    %108 = vector.shape_cast %107 : vector<8x1x128xbf16> to vector<8x128xbf16>
    %c14 = arith.constant 14 : index
    %c0_56 = arith.constant 0 : index
    %c0_57 = arith.constant 0 : index
    %109 = vector.load %arg6[%c14, %c0_56, %c0_57] : memref<16x128x1024xbf16, #tpu.memory_space<vmem>>, vector<1x128x1024xbf16>
    %110 = vector.shape_cast %109 : vector<1x128x1024xbf16> to vector<128x1024xbf16>
    %cst_58 = arith.constant dense<0.000000e+00> : vector<8x1024xf32>
    %111 = tpu.matmul %108, %110, %cst_58 {dimension_numbers = #tpu.dot_dimension_numbers<[1], [0], [0], [1], [0, 0, 1, 1], [], []>} : vector<8x128xbf16>, vector<128x1024xbf16>, vector<8x1024xf32> -> vector<8x1024xf32>
    %112 = arith.addf %106, %111 : vector<8x1024xf32>
    %113 = vector.extract_strided_slice %21 {offsets = [0, 15, 0], sizes = [8, 1, 128], strides = [1, 1, 1]} : vector<8x16x128xbf16> to vector<8x1x128xbf16>
    %114 = vector.shape_cast %113 : vector<8x1x128xbf16> to vector<8x128xbf16>
    %c15 = arith.constant 15 : index
    %c0_59 = arith.constant 0 : index
    %c0_60 = arith.constant 0 : index
    %115 = vector.load %arg6[%c15, %c0_59, %c0_60] : memref<16x128x1024xbf16, #tpu.memory_space<vmem>>, vector<1x128x1024xbf16>
    %116 = vector.shape_cast %115 : vector<1x128x1024xbf16> to vector<128x1024xbf16>
    %cst_61 = arith.constant dense<0.000000e+00> : vector<8x1024xf32>
    %117 = tpu.matmul %114, %116, %cst_61 {dimension_numbers = #tpu.dot_dimension_numbers<[1], [0], [0], [1], [0, 0, 1, 1], [], []>} : vector<8x128xbf16>, vector<128x1024xbf16>, vector<8x1024xf32> -> vector<8x1024xf32>
    %118 = arith.addf %112, %117 : vector<8x1024xf32>
    %c0_62 = arith.constant 0 : index
    %c0_63 = arith.constant 0 : index
    %119 = vector.load %arg7[%c0_62, %c0_63] : memref<1x1024xf32, #tpu.memory_space<vmem>>, vector<1x1024xf32>
    %120 = vector.broadcast %119 : vector<1x1024xf32> to vector<8x1024xf32>
    %121 = arith.addf %118, %120 : vector<8x1024xf32>
    %cst_64 = arith.constant 0.000000e+00 : f32
    %122 = vector.broadcast %cst_64 : f32 to vector<8x1024xf32>
    %123 = arith.maximumf %121, %122 : vector<8x1024xf32>
    %124 = arith.truncf %123 : vector<8x1024xf32> to vector<8x1024xbf16>
    %c0_65 = arith.constant 0 : index
    %c0_66 = arith.constant 0 : index
    %125 = vector.load %arg8[%c0_65, %c0_66] : memref<1024x128xbf16, #tpu.memory_space<vmem>>, vector<1024x128xbf16>
    %cst_67 = arith.constant dense<0.000000e+00> : vector<8x128xf32>
    %126 = tpu.matmul %124, %125, %cst_67 {dimension_numbers = #tpu.dot_dimension_numbers<[1], [0], [0], [1], [0, 0, 1, 1], [], []>} : vector<8x1024xbf16>, vector<1024x128xbf16>, vector<8x128xf32> -> vector<8x128xf32>
    %c0_68 = arith.constant 0 : index
    %c0_69 = arith.constant 0 : index
    %127 = vector.load %arg9[%c0_68, %c0_69] : memref<1x128xf32, #tpu.memory_space<vmem>>, vector<1x128xf32>
    %128 = vector.broadcast %127 : vector<1x128xf32> to vector<8x128xf32>
    %129 = arith.addf %126, %128 : vector<8x128xf32>
    %c0_70 = arith.constant 0 : index
    %c0_71 = arith.constant 0 : index
    %130 = vector.load %arg10[%c0_70, %c0_71] : memref<8x128xf32, #tpu.memory_space<vmem>>, vector<8x128xf32>
    tpu.vector_store %arg10[%c0_70, %c0_71], %129 {strides = array<i32>} : memref<8x128xf32, #tpu.memory_space<vmem>>, vector<8x128xf32>,
    return
  }
  func.func @transform_0(%arg0: i32) -> (i32, i32, i32) {
    %c0_i32 = arith.constant 0 : i32
    %c0_i32_0 = arith.constant 0 : i32
    %c0_i32_1 = arith.constant 0 : i32
    return %arg0, %c0_i32, %c0_i32_0 : i32, i32, i32
  }
  func.func @transform_1(%arg0: i32) -> (i32, i32) {
    %c0_i32 = arith.constant 0 : i32
    %c0_i32_0 = arith.constant 0 : i32
    %c0_i32_1 = arith.constant 0 : i32
    return %c0_i32, %c0_i32_0 : i32, i32
  }
  func.func @transform_2(%arg0: i32) -> (i32, i32) {
    %c0_i32 = arith.constant 0 : i32
    %c0_i32_0 = arith.constant 0 : i32
    %c0_i32_1 = arith.constant 0 : i32
    return %c0_i32, %c0_i32_0 : i32, i32
  }
  func.func @transform_3(%arg0: i32) -> (i32, i32) {
    %c0_i32 = arith.constant 0 : i32
    %c0_i32_0 = arith.constant 0 : i32
    %c0_i32_1 = arith.constant 0 : i32
    return %c0_i32, %c0_i32_0 : i32, i32
  }
  func.func @transform_4(%arg0: i32) -> (i32, i32) {
    %c0_i32 = arith.constant 0 : i32
    %c0_i32_0 = arith.constant 0 : i32
    %c0_i32_1 = arith.constant 0 : i32
    return %c0_i32, %c0_i32_0 : i32, i32
  }
  func.func @transform_5(%arg0: i32) -> (i32, i32, i32) {
    %c0_i32 = arith.constant 0 : i32
    %c0_i32_0 = arith.constant 0 : i32
    %c0_i32_1 = arith.constant 0 : i32
    %c0_i32_2 = arith.constant 0 : i32
    return %c0_i32, %c0_i32_0, %c0_i32_1 : i32, i32, i32
  }
  func.func @transform_6(%arg0: i32) -> (i32, i32) {
    %c0_i32 = arith.constant 0 : i32
    %c0_i32_0 = arith.constant 0 : i32
    %c0_i32_1 = arith.constant 0 : i32
    return %c0_i32, %c0_i32_0 : i32, i32
  }
  func.func @transform_7(%arg0: i32) -> (i32, i32) {
    %c0_i32 = arith.constant 0 : i32
    %c0_i32_0 = arith.constant 0 : i32
    %c0_i32_1 = arith.constant 0 : i32
    return %c0_i32, %c0_i32_0 : i32, i32
  }
  func.func @transform_8(%arg0: i32) -> (i32, i32) {
    %c0_i32 = arith.constant 0 : i32
    %c0_i32_0 = arith.constant 0 : i32
    %c0_i32_1 = arith.constant 0 : i32
    return %c0_i32, %c0_i32_0 : i32, i32
  }
  func.func @transform_9(%arg0: i32) -> (i32, i32) {
    %c0_i32 = arith.constant 0 : i32
    %c0_i32_0 = arith.constant 0 : i32
    return %arg0, %c0_i32 : i32, i32
  }
}

</mosaic_0001>

<llo_original>
// kernel: tpu_custom_call.1
$region0: #{tpu_custom_call.1}
  #allocation0 [shape = 'u32[]', space=smem, size = 0x4, offset = 0x4, fixed_abs, tag = 'smem constant byte address 0x4 - core index']
  #allocation1 [shape = 'u32[144,128]{1,0:T(1,128)}', space=vmem, size = 0x12000, scoped, tag = 'internal scratch']
  %s0 = inlined_call_operand.vmem [shape: bf16[8,196,4], index: 0, kind: input, shape index: {}]
  %s1 = inlined_call_operand.hbm [shape: f32[16,196], index: 1, kind: input, shape index: {}]
  %s2 = inlined_call_operand.hbm [shape: f32[4,128], index: 2, kind: input, shape index: {}]
  %s3 = inlined_call_operand.hbm [shape: f32[1,128], index: 3, kind: input, shape index: {}]
  %s4 = inlined_call_operand.hbm [shape: f32[1,128], index: 4, kind: input, shape index: {}]
  %s5 = inlined_call_operand.hbm [shape: bf16[16,128,1024], index: 5, kind: input, shape index: {}]
  %s6 = inlined_call_operand.hbm [shape: f32[1,1024], index: 6, kind: input, shape index: {}]
  %s7 = inlined_call_operand.hbm [shape: bf16[1024,128], index: 7, kind: input, shape index: {}]
  %s8 = inlined_call_operand.hbm [shape: f32[1,128], index: 8, kind: input, shape index: {}]
  %s9 = inlined_call_operand.hbm [shape: f32[8,128], index: 9, kind: output, shape index: {}]
  %s10 = sld [smem:[#allocation0]]
  $region78: #{tpu_custom_call.1} parent=0
    _
  %s12 = ssub.s32 1, %s10
  %s13 = scalar_select 0, %s12, %s10
  $region1: #{tpu_custom_call.1} parent=0
    #allocation2 [shape = 'u8[16384]{0}', space=vmem, size = 0x4000, scoped, tag = 'input window, operand 1, single buffered']
    #allocation3 [shape = 's32[1]{0}', space=sflag, size = 0x4, scoped, tag = 'scoped memory for tpu_custom_call.1']
    #allocation4 [shape = 's32[1]{0}', space=sflag, size = 0x4, scoped, tag = 'scoped memory for tpu_custom_call.1']
    #allocation5 [shape = 'u8[2048]{0}', space=vmem, size = 0x800, scoped, tag = 'input window, operand 2, single buffered']
    #allocation6 [shape = 's32[1]{0}', space=sflag, size = 0x4, scoped, tag = 'scoped memory for tpu_custom_call.1']
    #allocation7 [shape = 'u8[512]{0}', space=vmem, size = 0x400, scoped, tag = 'input window, operand 3, single buffered']
    #allocation8 [shape = 'u8[512]{0}', space=vmem, size = 0x400, scoped, tag = 'input window, operand 4, single buffered']
    #allocation9 [shape = 's32[1]{0}', space=sflag, size = 0x4, scoped, tag = 'scoped memory for tpu_custom_call.1']
    #allocation10 [shape = 'u8[4194304]{0}', space=vmem, size = 0x400000, scoped, tag = 'input window, operand 5, single buffered']
    #allocation11 [shape = 'u8[4096]{0}', space=vmem, size = 0x1000, scoped, tag = 'input window, operand 6, single buffered']
    #allocation12 [shape = 's32[1]{0}', space=sflag, size = 0x4, scoped, tag = 'scoped memory for tpu_custom_call.1']
    #allocation13 [shape = 'u8[262144]{0}', space=vmem, size = 0x40000, scoped, tag = 'input window, operand 7, single buffered']
    #allocation14 [shape = 'u8[512]{0}', space=vmem, size = 0x400, scoped, tag = 'input window, operand 8, single buffered']
    #allocation15 [shape = 's32[1]{0}', space=sflag, size = 0x4, scoped, tag = 'scoped memory for tpu_custom_call.1']
    #allocation16 [shape = 'u8[4096]{0}', space=vmem, size = 0x1000, scoped, tag = 'output window, operand 0, single buffered']
    %14 = vsyncpa [#allocation3], 0
    %15 = vsyncpa [#allocation6], 0
    %16 = vsyncpa [#allocation9], 0
    %17 = vsyncpa [#allocation12], 0
    %18 = vsyncpa [#allocation15], 0
    %19 = vsyncpa [#allocation4], 0
    // Predicated region
    $region2: #{tpu_custom_call.1} parent=1 // pred_check
      _
    $region3: #{tpu_custom_call.1} parent=1 // pred_check_branch
      %21 = sbr.rel (0) target = $region5
    $region4: #{tpu_custom_call.1} parent=1 // pred_region
      _
    $region5: #{tpu_custom_call.1} parent=1 // pred_fallthru
      _
    // Predicated region
    $region6: #{tpu_custom_call.1} parent=1 // pred_check
      _
    $region7: #{tpu_custom_call.1} parent=1 // pred_check_branch
      %23 = sbr.rel (0) target = $region9
    $region8: #{tpu_custom_call.1} parent=1 // pred_region
      %s25 = ssub.s32 512, 512
      %26 = vsyncadd [#allocation3], %s25
      %s27 = sshll.u32 [#allocation2], 4
      %s28 = int_to_ptr.vmem [resolvable:$true] %s27
      %33 = dma.hbm_to_vmem [thread:$0]  %s1, 512, %s28, [#allocation3], 256, 256, 16
    $region9: #{tpu_custom_call.1} parent=1 // pred_fallthru
      _
    // Predicated region
    $region10: #{tpu_custom_call.1} parent=1 // pred_check
      _
    $region11: #{tpu_custom_call.1} parent=1 // pred_check_branch
      %35 = sbr.rel (0) target = $region13
    $region12: #{tpu_custom_call.1} parent=1 // pred_region
      %s37 = ssub.s32 64, 64
      %38 = vsyncadd [#allocation6], %s37
      %s40 = sshll.u32 [#allocation5], 4
      %s41 = int_to_ptr.vmem [resolvable:$true] %s40
      %43 = dma.hbm_to_vmem [thread:$0]  %s2, 64, %s41, [#allocation6]
    $region13: #{tpu_custom_call.1} parent=1 // pred_fallthru
      _
    // Predicated region
    $region14: #{tpu_custom_call.1} parent=1 // pred_check
      _
    $region15: #{tpu_custom_call.1} parent=1 // pred_check_branch
      %45 = sbr.rel (0) target = $region17
    $region16: #{tpu_custom_call.1} parent=1 // pred_region
      %s47 = ssub.s32 16, 16
      %48 = vsyncadd [#allocation6], %s47
      %s50 = sshll.u32 [#allocation7], 4
      %s51 = int_to_ptr.vmem [resolvable:$true] %s50
      %53 = dma.hbm_to_vmem [thread:$0]  %s3, 16, %s51, [#allocation6]
    $region17: #{tpu_custom_call.1} parent=1 // pred_fallthru
      _
    // Predicated region
    $region18: #{tpu_custom_call.1} parent=1 // pred_check
      _
    $region19: #{tpu_custom_call.1} parent=1 // pred_check_branch
      %55 = sbr.rel (0) target = $region21
    $region20: #{tpu_custom_call.1} parent=1 // pred_region
      %s57 = ssub.s32 16, 16
      %58 = vsyncadd [#allocation9], %s57
      %s60 = sshll.u32 [#allocation8], 4
      %s61 = int_to_ptr.vmem [resolvable:$true] %s60
      %63 = dma.hbm_to_vmem [thread:$0]  %s4, 16, %s61, [#allocation9]
    $region21: #{tpu_custom_call.1} parent=1 // pred_fallthru
      _
    // Predicated region
    $region22: #{tpu_custom_call.1} parent=1 // pred_check
      _
    $region23: #{tpu_custom_call.1} parent=1 // pred_check_branch
      %65 = sbr.rel (0) target = $region25
    $region24: #{tpu_custom_call.1} parent=1 // pred_region
      %s67 = ssub.s32 131072, 131072
      %68 = vsyncadd [#allocation9], %s67
      %s69 = sshll.u32 [#allocation10], 4
      %s70 = int_to_ptr.vmem [resolvable:$true] %s69
      %75 = dma.hbm_to_vmem [thread:$0]  %s5, 131072, %s70, [#allocation9], 512, 512, 32
    $region25: #{tpu_custom_call.1} parent=1 // pred_fallthru
      _
    // Predicated region
    $region26: #{tpu_custom_call.1} parent=1 // pred_check
      _
    $region27: #{tpu_custom_call.1} parent=1 // pred_check_branch
      %77 = sbr.rel (0) target = $region29
    $region28: #{tpu_custom_call.1} parent=1 // pred_region
      %s79 = ssub.s32 128, 128
      %80 = vsyncadd [#allocation12], %s79
      %s82 = sshll.u32 [#allocation11], 4
      %s83 = int_to_ptr.vmem [resolvable:$true] %s82
      %85 = dma.hbm_to_vmem [thread:$0]  %s6, 128, %s83, [#allocation12]
    $region29: #{tpu_custom_call.1} parent=1 // pred_fallthru
      _
    // Predicated region
    $region30: #{tpu_custom_call.1} parent=1 // pred_check
      _
    $region31: #{tpu_custom_call.1} parent=1 // pred_check_branch
      %87 = sbr.rel (0) target = $region33
    $region32: #{tpu_custom_call.1} parent=1 // pred_region
      %s89 = ssub.s32 8192, 8192
      %90 = vsyncadd [#allocation12], %s89
      %s91 = sshll.u32 [#allocation13], 4
      %s92 = int_to_ptr.vmem [resolvable:$true] %s91
      %97 = dma.hbm_to_vmem [thread:$0]  %s7, 8192, %s92, [#allocation12], 64, 64, 4
    $region33: #{tpu_custom_call.1} parent=1 // pred_fallthru
      _
    // Predicated region
    $region34: #{tpu_custom_call.1} parent=1 // pred_check
      _
    $region35: #{tpu_custom_call.1} parent=1 // pred_check_branch
      %99 = sbr.rel (0) target = $region37
    $region36: #{tpu_custom_call.1} parent=1 // pred_region
      %s101 = ssub.s32 16, 16
      %102 = vsyncadd [#allocation15], %s101
      %s104 = sshll.u32 [#allocation14], 4
      %s105 = int_to_ptr.vmem [resolvable:$true] %s104
      %107 = dma.hbm_to_vmem [thread:$0]  %s8, 16, %s105, [#allocation15]
    $region37: #{tpu_custom_call.1} parent=1 // pred_fallthru
      _
    // Predicated region
    $region38: #{tpu_custom_call.1} parent=1 // pred_check
      _
    $region39: #{tpu_custom_call.1} parent=1 // pred_check_branch
      %109 = sbr.rel (0) target = $region41
    $region40: #{tpu_custom_call.1} parent=1 // pred_region
      %110 = dma.done [#allocation3], 512
    $region41: #{tpu_custom_call.1} parent=1 // pred_fallthru
      _
    // Predicated region
    $region42: #{tpu_custom_call.1} parent=1 // pred_check
      _
    $region43: #{tpu_custom_call.1} parent=1 // pred_check_branch
      %112 = sbr.rel (0) target = $region45
    $region44: #{tpu_custom_call.1} parent=1 // pred_region
      %113 = dma.done [#allocation6], 64
    $region45: #{tpu_custom_call.1} parent=1 // pred_fallthru
      _
    // Predicated region
    $region46: #{tpu_custom_call.1} parent=1 // pred_check
      _
    $region47: #{tpu_custom_call.1} parent=1 // pred_check_branch
      %115 = sbr.rel (0) target = $region49
    $region48: #{tpu_custom_call.1} parent=1 // pred_region
      %116 = dma.done [#allocation6], 16
    $region49: #{tpu_custom_call.1} parent=1 // pred_fallthru
      _
    // Predicated region
    $region50: #{tpu_custom_call.1} parent=1 // pred_check
      _
    $region51: #{tpu_custom_call.1} parent=1 // pred_check_branch
      %118 = sbr.rel (0) target = $region53
    $region52: #{tpu_custom_call.1} parent=1 // pred_region
      %119 = dma.done [#allocation9], 16
    $region53: #{tpu_custom_call.1} parent=1 // pred_fallthru
      _
    // Predicated region
    $region54: #{tpu_custom_call.1} parent=1 // pred_check
      _
    $region55: #{tpu_custom_call.1} parent=1 // pred_check_branch
      %121 = sbr.rel (0) target = $region57
    $region56: #{tpu_custom_call.1} parent=1 // pred_region
      %122 = dma.done [#allocation9], 131072
    $region57: #{tpu_custom_call.1} parent=1 // pred_fallthru
      _
    // Predicated region
    $region58: #{tpu_custom_call.1} parent=1 // pred_check
      _
    $region59: #{tpu_custom_call.1} parent=1 // pred_check_branch
      %124 = sbr.rel (0) target = $region61
    $region60: #{tpu_custom_call.1} parent=1 // pred_region
      %125 = dma.done [#allocation12], 128
    $region61: #{tpu_custom_call.1} parent=1 // pred_fallthru
      _
    // Predicated region
    $region62: #{tpu_custom_call.1} parent=1 // pred_check
      _
    $region63: #{tpu_custom_call.1} parent=1 // pred_check_branch
      %127 = sbr.rel (0) target = $region65
    $region64: #{tpu_custom_call.1} parent=1 // pred_region
      %128 = dma.done [#allocation12], 8192
    $region65: #{tpu_custom_call.1} parent=1 // pred_fallthru
      _
    // Predicated region
    $region66: #{tpu_custom_call.1} parent=1 // pred_check
      _
    $region67: #{tpu_custom_call.1} parent=1 // pred_check_branch
      %130 = sbr.rel (0) target = $region69
    $region68: #{tpu_custom_call.1} parent=1 // pred_region
      %131 = dma.done [#allocation15], 16
    $region69: #{tpu_custom_call.1} parent=1 // pred_fallthru
      _
    %v133 = vld [vmem:[%s0] sm:$0xf]
    %v134 = vld [vmem:[%s0 + $0x4] sm:$0xf]
    %v135 = vld [vmem:[%s0 + $0x8] sm:$0xf]
    %v136 = vld [vmem:[%s0 + $0xc] sm:$0xf]
    %v137 = vld [vmem:[%s0 + $0x10] sm:$0xf]
    %v138 = vld [vmem:[%s0 + $0x14] sm:$0xf]
    %v139 = vld [vmem:[%s0 + $0x18] sm:$0xf]
    %v140 = vld [vmem:[%s0 + $0x1c] sm:$0xf]
    %v141 = vld [vmem:[%s0 + $0x20] sm:$0xf]
    %v142 = vld [vmem:[%s0 + $0x24] sm:$0xf]
    %v143 = vld [vmem:[%s0 + $0x28] sm:$0xf]
    %v144 = vld [vmem:[%s0 + $0x2c] sm:$0xf]
    %v145 = vld [vmem:[%s0 + $0x30] sm:$0xf]
    %v146 = vld [vmem:[%s0 + $0x34] sm:$0xf]
    %v147 = vld [vmem:[%s0 + $0x38] sm:$0xf]
    %v148 = vld [vmem:[%s0 + $0x3c] sm:$0xf]
    %v149 = vld [vmem:[%s0 + $0x40] sm:$0xf]
    %v150 = vld [vmem:[%s0 + $0x44] sm:$0xf]
    %v151 = vld [vmem:[%s0 + $0x48] sm:$0xf]
    %v152 = vld [vmem:[%s0 + $0x4c] sm:$0xf]
    %v153 = vld [vmem:[%s0 + $0x50] sm:$0xf]
    %v154 = vld [vmem:[%s0 + $0x54] sm:$0xf]
    %v155 = vld [vmem:[%s0 + $0x58] sm:$0xf]
    %v156 = vld [vmem:[%s0 + $0x5c] sm:$0xf]
    %v157 = vld [vmem:[%s0 + $0x60] sm:$0x3]
    %v158 = vld [vmem:[%s0 + $0x64] sm:$0xf]
    %v159 = vld [vmem:[%s0 + $0x68] sm:$0xf]
    %v160 = vld [vmem:[%s0 + $0x6c] sm:$0xf]
    %v161 = vld [vmem:[%s0 + $0x70] sm:$0xf]
    %v162 = vld [vmem:[%s0 + $0x74] sm:$0xf]
    %v163 = vld [vmem:[%s0 + $0x78] sm:$0xf]
    %v164 = vld [vmem:[%s0 + $0x7c] sm:$0xf]
    %v165 = vld [vmem:[%s0 + $0x80] sm:$0xf]
    %v166 = vld [vmem:[%s0 + $0x84] sm:$0xf]
    %v167 = vld [vmem:[%s0 + $0x88] sm:$0xf]
    %v168 = vld [vmem:[%s0 + $0x8c] sm:$0xf]
    %v169 = vld [vmem:[%s0 + $0x90] sm:$0xf]
    %v170 = vld [vmem:[%s0 + $0x94] sm:$0xf]
    %v171 = vld [vmem:[%s0 + $0x98] sm:$0xf]
    %v172 = vld [vmem:[%s0 + $0x9c] sm:$0xf]
    %v173 = vld [vmem:[%s0 + $0xa0] sm:$0xf]
    %v174 = vld [vmem:[%s0 + $0xa4] sm:$0xf]
    %v175 = vld [vmem:[%s0 + $0xa8] sm:$0xf]
    %v176 = vld [vmem:[%s0 + $0xac] sm:$0xf]
    %v177 = vld [vmem:[%s0 + $0xb0] sm:$0xf]
    %v178 = vld [vmem:[%s0 + $0xb4] sm:$0xf]
    %v179 = vld [vmem:[%s0 + $0xb8] sm:$0xf]
    %v180 = vld [vmem:[%s0 + $0xbc] sm:$0xf]
    %v181 = vld [vmem:[%s0 + $0xc0] sm:$0xf]
    %v182 = vld [vmem:[%s0 + $0xc4] sm:$0x3]
    %v183 = vld [vmem:[%s0 + $0xc8] sm:$0xf]
    %v184 = vld [vmem:[%s0 + $0xcc] sm:$0xf]
    %v185 = vld [vmem:[%s0 + $0xd0] sm:$0xf]
    %v186 = vld [vmem:[%s0 + $0xd4] sm:$0xf]
    %v187 = vld [vmem:[%s0 + $0xd8] sm:$0xf]
    %v188 = vld [vmem:[%s0 + $0xdc] sm:$0xf]
    %v189 = vld [vmem:[%s0 + $0xe0] sm:$0xf]
    %v190 = vld [vmem:[%s0 + $0xe4] sm:$0xf]
    %v191 = vld [vmem:[%s0 + $0xe8] sm:$0xf]
    %v192 = vld [vmem:[%s0 + $0xec] sm:$0xf]
    %v193 = vld [vmem:[%s0 + $0xf0] sm:$0xf]
    %v194 = vld [vmem:[%s0 + $0xf4] sm:$0xf]
    %v195 = vld [vmem:[%s0 + $0xf8] sm:$0xf]
    %v196 = vld [vmem:[%s0 + $0xfc] sm:$0xf]
    %v197 = vld [vmem:[%s0 + $0x100] sm:$0xf]
    %v198 = vld [vmem:[%s0 + $0x104] sm:$0xf]
    %v199 = vld [vmem:[%s0 + $0x108] sm:$0xf]
    %v200 = vld [vmem:[%s0 + $0x10c] sm:$0xf]
    %v201 = vld [vmem:[%s0 + $0x110] sm:$0xf]
    %v202 = vld [vmem:[%s0 + $0x114] sm:$0xf]
    %v203 = vld [vmem:[%s0 + $0x118] sm:$0xf]
    %v204 = vld [vmem:[%s0 + $0x11c] sm:$0xf]
    %v205 = vld [vmem:[%s0 + $0x120] sm:$0xf]
    %v206 = vld [vmem:[%s0 + $0x124] sm:$0xf]
    %v207 = vld [vmem:[%s0 + $0x128] sm:$0x3]
    %v208 = vld [vmem:[%s0 + $0x12c] sm:$0xf]
    %v209 = vld [vmem:[%s0 + $0x130] sm:$0xf]
    %v210 = vld [vmem:[%s0 + $0x134] sm:$0xf]
    %v211 = vld [vmem:[%s0 + $0x138] sm:$0xf]
    %v212 = vld [vmem:[%s0 + $0x13c] sm:$0xf]
    %v213 = vld [vmem:[%s0 + $0x140] sm:$0xf]
    %v214 = vld [vmem:[%s0 + $0x144] sm:$0xf]
    %v215 = vld [vmem:[%s0 + $0x148] sm:$0xf]
    %v216 = vld [vmem:[%s0 + $0x14c] sm:$0xf]
    %v217 = vld [vmem:[%s0 + $0x150] sm:$0xf]
    %v218 = vld [vmem:[%s0 + $0x154] sm:$0xf]
    %v219 = vld [vmem:[%s0 + $0x158] sm:$0xf]
    %v220 = vld [vmem:[%s0 + $0x15c] sm:$0xf]
    %v221 = vld [vmem:[%s0 + $0x160] sm:$0xf]
    %v222 = vld [vmem:[%s0 + $0x164] sm:$0xf]
    %v223 = vld [vmem:[%s0 + $0x168] sm:$0xf]
    %v224 = vld [vmem:[%s0 + $0x16c] sm:$0xf]
    %v225 = vld [vmem:[%s0 + $0x170] sm:$0xf]
    %v226 = vld [vmem:[%s0 + $0x174] sm:$0xf]
    %v227 = vld [vmem:[%s0 + $0x178] sm:$0xf]
    %v228 = vld [vmem:[%s0 + $0x17c] sm:$0xf]
    %v229 = vld [vmem:[%s0 + $0x180] sm:$0xf]
    %v230 = vld [vmem:[%s0 + $0x184] sm:$0xf]
    %v231 = vld [vmem:[%s0 + $0x188] sm:$0xf]
    %v232 = vld [vmem:[%s0 + $0x18c] sm:$0x3]
    %v233 = vld [vmem:[%s0 + $0x190] sm:$0xf]
    %v234 = vld [vmem:[%s0 + $0x194] sm:$0xf]
    %v235 = vld [vmem:[%s0 + $0x198] sm:$0xf]
    %v236 = vld [vmem:[%s0 + $0x19c] sm:$0xf]
    %v237 = vld [vmem:[%s0 + $0x1a0] sm:$0xf]
    %v238 = vld [vmem:[%s0 + $0x1a4] sm:$0xf]
    %v239 = vld [vmem:[%s0 + $0x1a8] sm:$0xf]
    %v240 = vld [vmem:[%s0 + $0x1ac] sm:$0xf]
    %v241 = vld [vmem:[%s0 + $0x1b0] sm:$0xf]
    %v242 = vld [vmem:[%s0 + $0x1b4] sm:$0xf]
    %v243 = vld [vmem:[%s0 + $0x1b8] sm:$0xf]
    %v244 = vld [vmem:[%s0 + $0x1bc] sm:$0xf]
    %v245 = vld [vmem:[%s0 + $0x1c0] sm:$0xf]
    %v246 = vld [vmem:[%s0 + $0x1c4] sm:$0xf]
    %v247 = vld [vmem:[%s0 + $0x1c8] sm:$0xf]
    %v248 = vld [vmem:[%s0 + $0x1cc] sm:$0xf]
    %v249 = vld [vmem:[%s0 + $0x1d0] sm:$0xf]
    %v250 = vld [vmem:[%s0 + $0x1d4] sm:$0xf]
    %v251 = vld [vmem:[%s0 + $0x1d8] sm:$0xf]
    %v252 = vld [vmem:[%s0 + $0x1dc] sm:$0xf]
    %v253 = vld [vmem:[%s0 + $0x1e0] sm:$0xf]
    %v254 = vld [vmem:[%s0 + $0x1e4] sm:$0xf]
    %v255 = vld [vmem:[%s0 + $0x1e8] sm:$0xf]
    %v256 = vld [vmem:[%s0 + $0x1ec] sm:$0xf]
    %v257 = vld [vmem:[%s0 + $0x1f0] sm:$0x3]
    %v258 = vld [vmem:[%s0 + $0x1f4] sm:$0xf]
    %v259 = vld [vmem:[%s0 + $0x1f8] sm:$0xf]
    %v260 = vld [vmem:[%s0 + $0x1fc] sm:$0xf]
    %v261 = vld [vmem:[%s0 + $0x200] sm:$0xf]
    %v262 = vld [vmem:[%s0 + $0x204] sm:$0xf]
    %v263 = vld [vmem:[%s0 + $0x208] sm:$0xf]
    %v264 = vld [vmem:[%s0 + $0x20c] sm:$0xf]
    %v265 = vld [vmem:[%s0 + $0x210] sm:$0xf]
    %v266 = vld [vmem:[%s0 + $0x214] sm:$0xf]
    %v267 = vld [vmem:[%s0 + $0x218] sm:$0xf]
    %v268 = vld [vmem:[%s0 + $0x21c] sm:$0xf]
    %v269 = vld [vmem:[%s0 + $0x220] sm:$0xf]
    %v270 = vld [vmem:[%s0 + $0x224] sm:$0xf]
    %v271 = vld [vmem:[%s0 + $0x228] sm:$0xf]
    %v272 = vld [vmem:[%s0 + $0x22c] sm:$0xf]
    %v273 = vld [vmem:[%s0 + $0x230] sm:$0xf]
    %v274 = vld [vmem:[%s0 + $0x234] sm:$0xf]
    %v275 = vld [vmem:[%s0 + $0x238] sm:$0xf]
    %v276 = vld [vmem:[%s0 + $0x23c] sm:$0xf]
    %v277 = vld [vmem:[%s0 + $0x240] sm:$0xf]
    %v278 = vld [vmem:[%s0 + $0x244] sm:$0xf]
    %v279 = vld [vmem:[%s0 + $0x248] sm:$0xf]
    %v280 = vld [vmem:[%s0 + $0x24c] sm:$0xf]
    %v281 = vld [vmem:[%s0 + $0x250] sm:$0xf]
    %v282 = vld [vmem:[%s0 + $0x254] sm:$0x3]
    %v283 = vld [vmem:[%s0 + $0x258] sm:$0xf]
    %v284 = vld [vmem:[%s0 + $0x25c] sm:$0xf]
    %v285 = vld [vmem:[%s0 + $0x260] sm:$0xf]
    %v286 = vld [vmem:[%s0 + $0x264] sm:$0xf]
    %v287 = vld [vmem:[%s0 + $0x268] sm:$0xf]
    %v288 = vld [vmem:[%s0 + $0x26c] sm:$0xf]
    %v289 = vld [vmem:[%s0 + $0x270] sm:$0xf]
    %v290 = vld [vmem:[%s0 + $0x274] sm:$0xf]
    %v291 = vld [vmem:[%s0 + $0x278] sm:$0xf]
    %v292 = vld [vmem:[%s0 + $0x27c] sm:$0xf]
    %v293 = vld [vmem:[%s0 + $0x280] sm:$0xf]
    %v294 = vld [vmem:[%s0 + $0x284] sm:$0xf]
    %v295 = vld [vmem:[%s0 + $0x288] sm:$0xf]
    %v296 = vld [vmem:[%s0 + $0x28c] sm:$0xf]
    %v297 = vld [vmem:[%s0 + $0x290] sm:$0xf]
    %v298 = vld [vmem:[%s0 + $0x294] sm:$0xf]
    %v299 = vld [vmem:[%s0 + $0x298] sm:$0xf]
    %v300 = vld [vmem:[%s0 + $0x29c] sm:$0xf]
    %v301 = vld [vmem:[%s0 + $0x2a0] sm:$0xf]
    %v302 = vld [vmem:[%s0 + $0x2a4] sm:$0xf]
    %v303 = vld [vmem:[%s0 + $0x2a8] sm:$0xf]
    %v304 = vld [vmem:[%s0 + $0x2ac] sm:$0xf]
    %v305 = vld [vmem:[%s0 + $0x2b0] sm:$0xf]
    %v306 = vld [vmem:[%s0 + $0x2b4] sm:$0xf]
    %v307 = vld [vmem:[%s0 + $0x2b8] sm:$0x3]
    %v308 = vld [vmem:[%s0 + $0x2bc] sm:$0xf]
    %v309 = vld [vmem:[%s0 + $0x2c0] sm:$0xf]
    %v310 = vld [vmem:[%s0 + $0x2c4] sm:$0xf]
    %v311 = vld [vmem:[%s0 + $0x2c8] sm:$0xf]
    %v312 = vld [vmem:[%s0 + $0x2cc] sm:$0xf]
    %v313 = vld [vmem:[%s0 + $0x2d0] sm:$0xf]
    %v314 = vld [vmem:[%s0 + $0x2d4] sm:$0xf]
    %v315 = vld [vmem:[%s0 + $0x2d8] sm:$0xf]
    %v316 = vld [vmem:[%s0 + $0x2dc] sm:$0xf]
    %v317 = vld [vmem:[%s0 + $0x2e0] sm:$0xf]
    %v318 = vld [vmem:[%s0 + $0x2e4] sm:$0xf]
    %v319 = vld [vmem:[%s0 + $0x2e8] sm:$0xf]
    %v320 = vld [vmem:[%s0 + $0x2ec] sm:$0xf]
    %v321 = vld [vmem:[%s0 + $0x2f0] sm:$0xf]
    %v322 = vld [vmem:[%s0 + $0x2f4] sm:$0xf]
    %v323 = vld [vmem:[%s0 + $0x2f8] sm:$0xf]
    %v324 = vld [vmem:[%s0 + $0x2fc] sm:$0xf]
    %v325 = vld [vmem:[%s0 + $0x300] sm:$0xf]
    %v326 = vld [vmem:[%s0 + $0x304] sm:$0xf]
    %v327 = vld [vmem:[%s0 + $0x308] sm:$0xf]
    %v328 = vld [vmem:[%s0 + $0x30c] sm:$0xf]
    %v329 = vld [vmem:[%s0 + $0x310] sm:$0xf]
    %v330 = vld [vmem:[%s0 + $0x314] sm:$0xf]
    %v331 = vld [vmem:[%s0 + $0x318] sm:$0xf]
    %v332 = vld [vmem:[%s0 + $0x31c] sm:$0x3]
    %v333 = vld [vmem:[#allocation2] sm:$0xff]
    %v334 = vld [vmem:[#allocation2 + $0x8] sm:$0xff]
    %v335 = vld [vmem:[#allocation2 + $0x10] sm:$0xff]
    %v336 = vld [vmem:[#allocation2 + $0x18] sm:$0xff]
    %v337 = vpack.c.bf16 %v335, %v333
    %v338 = vpack.c.bf16 %v336, %v334
    %v364 = vunpack.c.l.b16 %v133
    %v365 = vunpack.c.l.b16 %v134
    %v366 = vunpack.c.l.b16 %v135
    %v367 = vunpack.c.l.b16 %v136
    %v368 = vunpack.c.l.b16 %v137
    %v369 = vunpack.c.l.b16 %v138
    %v370 = vunpack.c.l.b16 %v139
    %v371 = vunpack.c.l.b16 %v140
    %v372 = vunpack.c.l.b16 %v141
    %v373 = vunpack.c.l.b16 %v142
    %v374 = vunpack.c.l.b16 %v143
    %v375 = vunpack.c.l.b16 %v144
    %v376 = vunpack.c.l.b16 %v145
    %v377 = vunpack.c.l.b16 %v146
    %v378 = vunpack.c.l.b16 %v147
    %v379 = vunpack.c.l.b16 %v148
    %v380 = vunpack.c.l.b16 %v149
    %v381 = vunpack.c.l.b16 %v150
    %v382 = vunpack.c.l.b16 %v151
    %v383 = vunpack.c.l.b16 %v152
    %v384 = vunpack.c.l.b16 %v153
    %v385 = vunpack.c.l.b16 %v154
    %v386 = vunpack.c.l.b16 %v155
    %v387 = vunpack.c.l.b16 %v156
    %v388 = vunpack.c.l.b16 %v157
    %v389 = vpack.c.b16 %v365, %v364
    %v390 = vpack.c.b16 %v367, %v366
    %v391 = vpack.c.b16 %v369, %v368
    %v392 = vpack.c.b16 %v371, %v370
    %v393 = vpack.c.b16 %v373, %v372
    %v394 = vpack.c.b16 %v375, %v374
    %v395 = vpack.c.b16 %v377, %v376
    %v396 = vpack.c.b16 %v379, %v378
    %v397 = vpack.c.b16 %v381, %v380
    %v398 = vpack.c.b16 %v383, %v382
    %v399 = vpack.c.b16 %v385, %v384
    %v400 = vpack.c.b16 %v387, %v386
    %v401 = vpack.c.b16 %v388, %v388
    %vm414 = vcmask 556032
    %v416 = vsel %vm414, %v338, 0
    %vm418 = vcmask 1041408
    %v420 = vsel %vm418, %v401, 0
    %422 = vmatprep.subr.bf16.mxu0 0
    %423 = vmatpush1.bf16.msra.mxu0 %v389
    %424 = vmatprep.subr.bf16.mxu0 0
    %425 = vmatpush1.bf16.msra.mxu0 %v390
    %426 = vmatprep.subr.bf16.mxu0 0
    %427 = vmatpush1.bf16.msra.mxu0 %v391
    %428 = vmatprep.subr.bf16.mxu0 0
    %429 = vmatpush1.bf16.msra.mxu0 %v392
    %430 = vmatprep.subr.bf16.mxu0 0
    %431 = vmatpush1.bf16.msra.mxu0 %v393
    %432 = vmatprep.subr.bf16.mxu0 0
    %433 = vmatpush1.bf16.msra.mxu0 %v394
    %434 = vmatprep.subr.bf16.mxu0 0
    %435 = vmatpush1.bf16.msra.mxu0 %v395
    %436 = vmatprep.subr.bf16.mxu0 0
    %437 = vmatpush1.bf16.msra.mxu0 %v396
    %438 = vmatprep.subr.bf16.mxu0 0
    %439 = vmatpush1.bf16.msra.mxu0 %v397
    %440 = vmatprep.subr.bf16.mxu0 0
    %441 = vmatpush1.bf16.msra.mxu0 %v398
    %442 = vmatprep.subr.bf16.mxu0 0
    %443 = vmatpush1.bf16.msra.mxu0 %v399
    %444 = vmatprep.subr.bf16.mxu0 0
    %445 = vmatpush1.bf16.msra.mxu0 %v400
    %446 = vmatprep.subr.bf16.mxu0 0
    %447 = vmatpush1.bf16.msra.mxu0 %v420
    %448 = vmatprep.subr.bf16.mxu0 0
    %449 = vmatpush1.bf16.msra.mxu0 0
    %450 = vmatprep.subr.bf16.mxu0 0
    %451 = vmatpush1.bf16.msra.mxu0 0
    %452 = vmatprep.subr.bf16.mxu0 0
    %453 = vmatpush1.bf16.msra.mxu0 0
    %454 = vmatprep.mubr.bf16.mxu0 %v416
    %455 = vmatmul.mubr.bf16.gmra.mrb[0].mxu0 %v337
    %v456 = vpop.f32.mrb[0].mxu0
    %v457 = vadd.f32 0.0, %v456
    %v458 = vpop.f32.mrb[0].mxu0
    %v459 = vpop.f32.mrb[0].mxu0
    %v460 = vadd.f32 0.0, %v459
    %v461 = vpop.f32.mrb[0].mxu0
    %462 = vdwg.mxu0
    %v488 = vunpack.c.l.b16 %v158
    %v489 = vunpack.c.l.b16 %v159
    %v490 = vunpack.c.l.b16 %v160
    %v491 = vunpack.c.l.b16 %v161
    %v492 = vunpack.c.l.b16 %v162
    %v493 = vunpack.c.l.b16 %v163
    %v494 = vunpack.c.l.b16 %v164
    %v495 = vunpack.c.l.b16 %v165
    %v496 = vunpack.c.l.b16 %v166
    %v497 = vunpack.c.l.b16 %v167
    %v498 = vunpack.c.l.b16 %v168
    %v499 = vunpack.c.l.b16 %v169
    %v500 = vunpack.c.l.b16 %v170
    %v501 = vunpack.c.l.b16 %v171
    %v502 = vunpack.c.l.b16 %v172
    %v503 = vunpack.c.l.b16 %v173
    %v504 = vunpack.c.l.b16 %v174
    %v505 = vunpack.c.l.b16 %v175
    %v506 = vunpack.c.l.b16 %v176
    %v507 = vunpack.c.l.b16 %v177
    %v508 = vunpack.c.l.b16 %v178
    %v509 = vunpack.c.l.b16 %v179
    %v510 = vunpack.c.l.b16 %v180
    %v511 = vunpack.c.l.b16 %v181
    %v512 = vunpack.c.l.b16 %v182
    %v513 = vpack.c.b16 %v489, %v488
    %v514 = vpack.c.b16 %v491, %v490
    %v515 = vpack.c.b16 %v493, %v492
    %v516 = vpack.c.b16 %v495, %v494
    %v517 = vpack.c.b16 %v497, %v496
    %v518 = vpack.c.b16 %v499, %v498
    %v519 = vpack.c.b16 %v501, %v500
    %v520 = vpack.c.b16 %v503, %v502
    %v521 = vpack.c.b16 %v505, %v504
    %v522 = vpack.c.b16 %v507, %v506
    %v523 = vpack.c.b16 %v509, %v508
    %v524 = vpack.c.b16 %v511, %v510
    %v525 = vpack.c.b16 %v512, %v512
    %v539 = vsel %vm418, %v525, 0
    %541 = vmatprep.subr.bf16.mxu0 0
    %542 = vmatpush1.bf16.msra.mxu0 %v513
    %543 = vmatprep.subr.bf16.mxu0 0
    %544 = vmatpush1.bf16.msra.mxu0 %v514
    %545 = vmatprep.subr.bf16.mxu0 0
    %546 = vmatpush1.bf16.msra.mxu0 %v515
    %547 = vmatprep.subr.bf16.mxu0 0
    %548 = vmatpush1.bf16.msra.mxu0 %v516
    %549 = vmatprep.subr.bf16.mxu0 0
    %550 = vmatpush1.bf16.msra.mxu0 %v517
    %551 = vmatprep.subr.bf16.mxu0 0
    %552 = vmatpush1.bf16.msra.mxu0 %v518
    %553 = vmatprep.subr.bf16.mxu0 0
    %554 = vmatpush1.bf16.msra.mxu0 %v519
    %555 = vmatprep.subr.bf16.mxu0 0
    %556 = vmatpush1.bf16.msra.mxu0 %v520
    %557 = vmatprep.subr.bf16.mxu0 0
    %558 = vmatpush1.bf16.msra.mxu0 %v521
    %559 = vmatprep.subr.bf16.mxu0 0
    %560 = vmatpush1.bf16.msra.mxu0 %v522
    %561 = vmatprep.subr.bf16.mxu0 0
    %562 = vmatpush1.bf16.msra.mxu0 %v523
    %563 = vmatprep.subr.bf16.mxu0 0
    %564 = vmatpush1.bf16.msra.mxu0 %v524
    %565 = vmatprep.subr.bf16.mxu0 0
    %566 = vmatpush1.bf16.msra.mxu0 %v539
    %567 = vmatprep.subr.bf16.mxu0 0
    %568 = vmatpush1.bf16.msra.mxu0 0
    %569 = vmatprep.subr.bf16.mxu0 0
    %570 = vmatpush1.bf16.msra.mxu0 0
    %571 = vmatprep.subr.bf16.mxu0 0
    %572 = vmatpush1.bf16.msra.mxu0 0
    %573 = vmatprep.mubr.bf16.mxu0 %v416
    %574 = vmatmul.mubr.bf16.gmra.mrb[0].mxu0 %v337
    %v575 = vpop.f32.mrb[0].mxu0
    %v576 = vadd.f32 0.0, %v575
    %v577 = vpop.f32.mrb[0].mxu0
    %v578 = vpop.f32.mrb[0].mxu0
    %v579 = vadd.f32 0.0, %v578
    %v580 = vpop.f32.mrb[0].mxu0
    %581 = vdwg.mxu0
    %v607 = vunpack.c.l.b16 %v183
    %v608 = vunpack.c.l.b16 %v184
    %v609 = vunpack.c.l.b16 %v185
    %v610 = vunpack.c.l.b16 %v186
    %v611 = vunpack.c.l.b16 %v187
    %v612 = vunpack.c.l.b16 %v188
    %v613 = vunpack.c.l.b16 %v189
    %v614 = vunpack.c.l.b16 %v190
    %v615 = vunpack.c.l.b16 %v191
    %v616 = vunpack.c.l.b16 %v192
    %v617 = vunpack.c.l.b16 %v193
    %v618 = vunpack.c.l.b16 %v194
    %v619 = vunpack.c.l.b16 %v195
    %v620 = vunpack.c.l.b16 %v196
    %v621 = vunpack.c.l.b16 %v197
    %v622 = vunpack.c.l.b16 %v198
    %v623 = vunpack.c.l.b16 %v199
    %v624 = vunpack.c.l.b16 %v200
    %v625 = vunpack.c.l.b16 %v201
    %v626 = vunpack.c.l.b16 %v202
    %v627 = vunpack.c.l.b16 %v203
    %v628 = vunpack.c.l.b16 %v204
    %v629 = vunpack.c.l.b16 %v205
    %v630 = vunpack.c.l.b16 %v206
    %v631 = vunpack.c.l.b16 %v207
    %v632 = vpack.c.b16 %v608, %v607
    %v633 = vpack.c.b16 %v610, %v609
    %v634 = vpack.c.b16 %v612, %v611
    %v635 = vpack.c.b16 %v614, %v613
    %v636 = vpack.c.b16 %v616, %v615
    %v637 = vpack.c.b16 %v618, %v617
    %v638 = vpack.c.b16 %v620, %v619
    %v639 = vpack.c.b16 %v622, %v621
    %v640 = vpack.c.b16 %v624, %v623
    %v641 = vpack.c.b16 %v626, %v625
    %v642 = vpack.c.b16 %v628, %v627
    %v643 = vpack.c.b16 %v630, %v629
    %v644 = vpack.c.b16 %v631, %v631
    %v658 = vsel %vm418, %v644, 0
    %660 = vmatprep.subr.bf16.mxu0 0
    %661 = vmatpush1.bf16.msra.mxu0 %v632
    %662 = vmatprep.subr.bf16.mxu0 0
    %663 = vmatpush1.bf16.msra.mxu0 %v633
    %664 = vmatprep.subr.bf16.mxu0 0
    %665 = vmatpush1.bf16.msra.mxu0 %v634
    %666 = vmatprep.subr.bf16.mxu0 0
    %667 = vmatpush1.bf16.msra.mxu0 %v635
    %668 = vmatprep.subr.bf16.mxu0 0
    %669 = vmatpush1.bf16.msra.mxu0 %v636
    %670 = vmatprep.subr.bf16.mxu0 0
    %671 = vmatpush1.bf16.msra.mxu0 %v637
    %672 = vmatprep.subr.bf16.mxu0 0
    %673 = vmatpush1.bf16.msra.mxu0 %v638
    %674 = vmatprep.subr.bf16.mxu0 0
    %675 = vmatpush1.bf16.msra.mxu0 %v639
    %676 = vmatprep.subr.bf16.mxu0 0
    %677 = vmatpush1.bf16.msra.mxu0 %v640
    %678 = vmatprep.subr.bf16.mxu0 0
    %679 = vmatpush1.bf16.msra.mxu0 %v641
    %680 = vmatprep.subr.bf16.mxu0 0
    %681 = vmatpush1.bf16.msra.mxu0 %v642
    %682 = vmatprep.subr.bf16.mxu0 0
    %683 = vmatpush1.bf16.msra.mxu0 %v643
    %684 = vmatprep.subr.bf16.mxu0 0
    %685 = vmatpush1.bf16.msra.mxu0 %v658
    %686 = vmatprep.subr.bf16.mxu0 0
    %687 = vmatpush1.bf16.msra.mxu0 0
    %688 = vmatprep.subr.bf16.mxu0 0
    %689 = vmatpush1.bf16.msra.mxu0 0
    %690 = vmatprep.subr.bf16.mxu0 0
    %691 = vmatpush1.bf16.msra.mxu0 0
    %692 = vmatprep.mubr.bf16.mxu0 %v416
    %693 = vmatmul.mubr.bf16.gmra.mrb[0].mxu0 %v337
    %v694 = vpop.f32.mrb[0].mxu0
    %v695 = vadd.f32 0.0, %v694
    %v696 = vpop.f32.mrb[0].mxu0
    %v697 = vpop.f32.mrb[0].mxu0
    %v698 = vadd.f32 0.0, %v697
    %v699 = vpop.f32.mrb[0].mxu0
    %700 = vdwg.mxu0
    %v726 = vunpack.c.l.b16 %v208
    %v727 = vunpack.c.l.b16 %v209
    %v728 = vunpack.c.l.b16 %v210
    %v729 = vunpack.c.l.b16 %v211
    %v730 = vunpack.c.l.b16 %v212
    %v731 = vunpack.c.l.b16 %v213
    %v732 = vunpack.c.l.b16 %v214
    %v733 = vunpack.c.l.b16 %v215
    %v734 = vunpack.c.l.b16 %v216
    %v735 = vunpack.c.l.b16 %v217
    %v736 = vunpack.c.l.b16 %v218
    %v737 = vunpack.c.l.b16 %v219
    %v738 = vunpack.c.l.b16 %v220
    %v739 = vunpack.c.l.b16 %v221
    %v740 = vunpack.c.l.b16 %v222
    %v741 = vunpack.c.l.b16 %v223
    %v742 = vunpack.c.l.b16 %v224
    %v743 = vunpack.c.l.b16 %v225
    %v744 = vunpack.c.l.b16 %v226
    %v745 = vunpack.c.l.b16 %v227
    %v746 = vunpack.c.l.b16 %v228
    %v747 = vunpack.c.l.b16 %v229
    %v748 = vunpack.c.l.b16 %v230
    %v749 = vunpack.c.l.b16 %v231
    %v750 = vunpack.c.l.b16 %v232
    %v751 = vpack.c.b16 %v727, %v726
    %v752 = vpack.c.b16 %v729, %v728
    %v753 = vpack.c.b16 %v731, %v730
    %v754 = vpack.c.b16 %v733, %v732
    %v755 = vpack.c.b16 %v735, %v734
    %v756 = vpack.c.b16 %v737, %v736
    %v757 = vpack.c.b16 %v739, %v738
    %v758 = vpack.c.b16 %v741, %v740
    %v759 = vpack.c.b16 %v743, %v742
    %v760 = vpack.c.b16 %v745, %v744
    %v761 = vpack.c.b16 %v747, %v746
    %v762 = vpack.c.b16 %v749, %v748
    %v763 = vpack.c.b16 %v750, %v750
    %v777 = vsel %vm418, %v763, 0
    %779 = vmatprep.subr.bf16.mxu0 0
    %780 = vmatpush1.bf16.msra.mxu0 %v751
    %781 = vmatprep.subr.bf16.mxu0 0
    %782 = vmatpush1.bf16.msra.mxu0 %v752
    %783 = vmatprep.subr.bf16.mxu0 0
    %784 = vmatpush1.bf16.msra.mxu0 %v753
    %785 = vmatprep.subr.bf16.mxu0 0
    %786 = vmatpush1.bf16.msra.mxu0 %v754
    %787 = vmatprep.subr.bf16.mxu0 0
    %788 = vmatpush1.bf16.msra.mxu0 %v755
    %789 = vmatprep.subr.bf16.mxu0 0
    %790 = vmatpush1.bf16.msra.mxu0 %v756
    %791 = vmatprep.subr.bf16.mxu0 0
    %792 = vmatpush1.bf16.msra.mxu0 %v757
    %793 = vmatprep.subr.bf16.mxu0 0
    %794 = vmatpush1.bf16.msra.mxu0 %v758
    %795 = vmatprep.subr.bf16.mxu0 0
    %796 = vmatpush1.bf16.msra.mxu0 %v759
    %797 = vmatprep.subr.bf16.mxu0 0
    %798 = vmatpush1.bf16.msra.mxu0 %v760
    %799 = vmatprep.subr.bf16.mxu0 0
    %800 = vmatpush1.bf16.msra.mxu0 %v761
    %801 = vmatprep.subr.bf16.mxu0 0
    %802 = vmatpush1.bf16.msra.mxu0 %v762
    %803 = vmatprep.subr.bf16.mxu0 0
    %804 = vmatpush1.bf16.msra.mxu0 %v777
    %805 = vmatprep.subr.bf16.mxu0 0
    %806 = vmatpush1.bf16.msra.mxu0 0
    %807 = vmatprep.subr.bf16.mxu0 0
    %808 = vmatpush1.bf16.msra.mxu0 0
    %809 = vmatprep.subr.bf16.mxu0 0
    %810 = vmatpush1.bf16.msra.mxu0 0
    %811 = vmatprep.mubr.bf16.mxu0 %v416
    %812 = vmatmul.mubr.bf16.gmra.mrb[0].mxu0 %v337
    %v813 = vpop.f32.mrb[0].mxu0
    %v814 = vadd.f32 0.0, %v813
    %v815 = vpop.f32.mrb[0].mxu0
    %v816 = vpop.f32.mrb[0].mxu0
    %v817 = vadd.f32 0.0, %v816
    %v818 = vpop.f32.mrb[0].mxu0
    %819 = vdwg.mxu0
    %v845 = vunpack.c.l.b16 %v233
    %v846 = vunpack.c.l.b16 %v234
    %v847 = vunpack.c.l.b16 %v235
    %v848 = vunpack.c.l.b16 %v236
    %v849 = vunpack.c.l.b16 %v237
    %v850 = vunpack.c.l.b16 %v238
    %v851 = vunpack.c.l.b16 %v239
    %v852 = vunpack.c.l.b16 %v240
    %v853 = vunpack.c.l.b16 %v241
    %v854 = vunpack.c.l.b16 %v242
    %v855 = vunpack.c.l.b16 %v243
    %v856 = vunpack.c.l.b16 %v244
    %v857 = vunpack.c.l.b16 %v245
    %v858 = vunpack.c.l.b16 %v246
    %v859 = vunpack.c.l.b16 %v247
    %v860 = vunpack.c.l.b16 %v248
    %v861 = vunpack.c.l.b16 %v249
    %v862 = vunpack.c.l.b16 %v250
    %v863 = vunpack.c.l.b16 %v251
    %v864 = vunpack.c.l.b16 %v252
    %v865 = vunpack.c.l.b16 %v253
    %v866 = vunpack.c.l.b16 %v254
    %v867 = vunpack.c.l.b16 %v255
    %v868 = vunpack.c.l.b16 %v256
    %v869 = vunpack.c.l.b16 %v257
    %v870 = vpack.c.b16 %v846, %v845
    %v871 = vpack.c.b16 %v848, %v847
    %v872 = vpack.c.b16 %v850, %v849
    %v873 = vpack.c.b16 %v852, %v851
    %v874 = vpack.c.b16 %v854, %v853
    %v875 = vpack.c.b16 %v856, %v855
    %v876 = vpack.c.b16 %v858, %v857
    %v877 = vpack.c.b16 %v860, %v859
    %v878 = vpack.c.b16 %v862, %v861
    %v879 = vpack.c.b16 %v864, %v863
    %v880 = vpack.c.b16 %v866, %v865
    %v881 = vpack.c.b16 %v868, %v867
    %v882 = vpack.c.b16 %v869, %v869
    %v896 = vsel %vm418, %v882, 0
    %898 = vmatprep.subr.bf16.mxu0 0
    %899 = vmatpush1.bf16.msra.mxu0 %v870
    %900 = vmatprep.subr.bf16.mxu0 0
    %901 = vmatpush1.bf16.msra.mxu0 %v871
    %902 = vmatprep.subr.bf16.mxu0 0
    %903 = vmatpush1.bf16.msra.mxu0 %v872
    %904 = vmatprep.subr.bf16.mxu0 0
    %905 = vmatpush1.bf16.msra.mxu0 %v873
    %906 = vmatprep.subr.bf16.mxu0 0
    %907 = vmatpush1.bf16.msra.mxu0 %v874
    %908 = vmatprep.subr.bf16.mxu0 0
    %909 = vmatpush1.bf16.msra.mxu0 %v875
    %910 = vmatprep.subr.bf16.mxu0 0
    %911 = vmatpush1.bf16.msra.mxu0 %v876
    %912 = vmatprep.subr.bf16.mxu0 0
    %913 = vmatpush1.bf16.msra.mxu0 %v877
    %914 = vmatprep.subr.bf16.mxu0 0
    %915 = vmatpush1.bf16.msra.mxu0 %v878
    %916 = vmatprep.subr.bf16.mxu0 0
    %917 = vmatpush1.bf16.msra.mxu0 %v879
    %918 = vmatprep.subr.bf16.mxu0 0
    %919 = vmatpush1.bf16.msra.mxu0 %v880
    %920 = vmatprep.subr.bf16.mxu0 0
    %921 = vmatpush1.bf16.msra.mxu0 %v881
    %922 = vmatprep.subr.bf16.mxu0 0
    %923 = vmatpush1.bf16.msra.mxu0 %v896
    %924 = vmatprep.subr.bf16.mxu0 0
    %925 = vmatpush1.bf16.msra.mxu0 0
    %926 = vmatprep.subr.bf16.mxu0 0
    %927 = vmatpush1.bf16.msra.mxu0 0
    %928 = vmatprep.subr.bf16.mxu0 0
    %929 = vmatpush1.bf16.msra.mxu0 0
    %930 = vmatprep.mubr.bf16.mxu0 %v416
    %931 = vmatmul.mubr.bf16.gmra.mrb[0].mxu0 %v337
    %v932 = vpop.f32.mrb[0].mxu0
    %v933 = vadd.f32 0.0, %v932
    %v934 = vpop.f32.mrb[0].mxu0
    %v935 = vpop.f32.mrb[0].mxu0
    %v936 = vadd.f32 0.0, %v935
    %v937 = vpop.f32.mrb[0].mxu0
    %938 = vdwg.mxu0
    %v964 = vunpack.c.l.b16 %v258
    %v965 = vunpack.c.l.b16 %v259
    %v966 = vunpack.c.l.b16 %v260
    %v967 = vunpack.c.l.b16 %v261
    %v968 = vunpack.c.l.b16 %v262
    %v969 = vunpack.c.l.b16 %v263
    %v970 = vunpack.c.l.b16 %v264
    %v971 = vunpack.c.l.b16 %v265
    %v972 = vunpack.c.l.b16 %v266
    %v973 = vunpack.c.l.b16 %v267
    %v974 = vunpack.c.l.b16 %v268
    %v975 = vunpack.c.l.b16 %v269
    %v976 = vunpack.c.l.b16 %v270
    %v977 = vunpack.c.l.b16 %v271
    %v978 = vunpack.c.l.b16 %v272
    %v979 = vunpack.c.l.b16 %v273
    %v980 = vunpack.c.l.b16 %v274
    %v981 = vunpack.c.l.b16 %v275
    %v982 = vunpack.c.l.b16 %v276
    %v983 = vunpack.c.l.b16 %v277
    %v984 = vunpack.c.l.b16 %v278
    %v985 = vunpack.c.l.b16 %v279
    %v986 = vunpack.c.l.b16 %v280
    %v987 = vunpack.c.l.b16 %v281
    %v988 = vunpack.c.l.b16 %v282
    %v989 = vpack.c.b16 %v965, %v964
    %v990 = vpack.c.b16 %v967, %v966
    %v991 = vpack.c.b16 %v969, %v968
    %v992 = vpack.c.b16 %v971, %v970
    %v993 = vpack.c.b16 %v973, %v972
    %v994 = vpack.c.b16 %v975, %v974
    %v995 = vpack.c.b16 %v977, %v976
    %v996 = vpack.c.b16 %v979, %v978
    %v997 = vpack.c.b16 %v981, %v980
    %v998 = vpack.c.b16 %v983, %v982
    %v999 = vpack.c.b16 %v985, %v984
    %v1000 = vpack.c.b16 %v987, %v986
    %v1001 = vpack.c.b16 %v988, %v988
    %v1015 = vsel %vm418, %v1001, 0
    %1017 = vmatprep.subr.bf16.mxu0 0
    %1018 = vmatpush1.bf16.msra.mxu0 %v989
    %1019 = vmatprep.subr.bf16.mxu0 0
    %1020 = vmatpush1.bf16.msra.mxu0 %v990
    %1021 = vmatprep.subr.bf16.mxu0 0
    %1022 = vmatpush1.bf16.msra.mxu0 %v991
    %1023 = vmatprep.subr.bf16.mxu0 0
    %1024 = vmatpush1.bf16.msra.mxu0 %v992
    %1025 = vmatprep.subr.bf16.mxu0 0
    %1026 = vmatpush1.bf16.msra.mxu0 %v993
    %1027 = vmatprep.subr.bf16.mxu0 0
    %1028 = vmatpush1.bf16.msra.mxu0 %v994
    %1029 = vmatprep.subr.bf16.mxu0 0
    %1030 = vmatpush1.bf16.msra.mxu0 %v995
    %1031 = vmatprep.subr.bf16.mxu0 0
    %1032 = vmatpush1.bf16.msra.mxu0 %v996
    %1033 = vmatprep.subr.bf16.mxu0 0
    %1034 = vmatpush1.bf16.msra.mxu0 %v997
    %1035 = vmatprep.subr.bf16.mxu0 0
    %1036 = vmatpush1.bf16.msra.mxu0 %v998
    %1037 = vmatprep.subr.bf16.mxu0 0
    %1038 = vmatpush1.bf16.msra.mxu0 %v999
    %1039 = vmatprep.subr.bf16.mxu0 0
    %1040 = vmatpush1.bf16.msra.mxu0 %v1000
    %1041 = vmatprep.subr.bf16.mxu0 0
    %1042 = vmatpush1.bf16.msra.mxu0 %v1015
    %1043 = vmatprep.subr.bf16.mxu0 0
    %1044 = vmatpush1.bf16.msra.mxu0 0
    %1045 = vmatprep.subr.bf16.mxu0 0
    %1046 = vmatpush1.bf16.msra.mxu0 0
    %1047 = vmatprep.subr.bf16.mxu0 0
    %1048 = vmatpush1.bf16.msra.mxu0 0
    %1049 = vmatprep.mubr.bf16.mxu0 %v416
    %1050 = vmatmul.mubr.bf16.gmra.mrb[0].mxu0 %v337
    %v1051 = vpop.f32.mrb[0].mxu0
    %v1052 = vadd.f32 0.0, %v1051
    %v1053 = vpop.f32.mrb[0].mxu0
    %v1054 = vpop.f32.mrb[0].mxu0
    %v1055 = vadd.f32 0.0, %v1054
    %v1056 = vpop.f32.mrb[0].mxu0
    %1057 = vdwg.mxu0
    %v1083 = vunpack.c.l.b16 %v283
    %v1084 = vunpack.c.l.b16 %v284
    %v1085 = vunpack.c.l.b16 %v285
    %v1086 = vunpack.c.l.b16 %v286
    %v1087 = vunpack.c.l.b16 %v287
    %v1088 = vunpack.c.l.b16 %v288
    %v1089 = vunpack.c.l.b16 %v289
    %v1090 = vunpack.c.l.b16 %v290
    %v1091 = vunpack.c.l.b16 %v291
    %v1092 = vunpack.c.l.b16 %v292
    %v1093 = vunpack.c.l.b16 %v293
    %v1094 = vunpack.c.l.b16 %v294
    %v1095 = vunpack.c.l.b16 %v295
    %v1096 = vunpack.c.l.b16 %v296
    %v1097 = vunpack.c.l.b16 %v297
    %v1098 = vunpack.c.l.b16 %v298
    %v1099 = vunpack.c.l.b16 %v299
    %v1100 = vunpack.c.l.b16 %v300
    %v1101 = vunpack.c.l.b16 %v301
    %v1102 = vunpack.c.l.b16 %v302
    %v1103 = vunpack.c.l.b16 %v303
    %v1104 = vunpack.c.l.b16 %v304
    %v1105 = vunpack.c.l.b16 %v305
    %v1106 = vunpack.c.l.b16 %v306
    %v1107 = vunpack.c.l.b16 %v307
    %v1108 = vpack.c.b16 %v1084, %v1083
    %v1109 = vpack.c.b16 %v1086, %v1085
    %v1110 = vpack.c.b16 %v1088, %v1087
    %v1111 = vpack.c.b16 %v1090, %v1089
    %v1112 = vpack.c.b16 %v1092, %v1091
    %v1113 = vpack.c.b16 %v1094, %v1093
    %v1114 = vpack.c.b16 %v1096, %v1095
    %v1115 = vpack.c.b16 %v1098, %v1097
    %v1116 = vpack.c.b16 %v1100, %v1099
    %v1117 = vpack.c.b16 %v1102, %v1101
    %v1118 = vpack.c.b16 %v1104, %v1103
    %v1119 = vpack.c.b16 %v1106, %v1105
    %v1120 = vpack.c.b16 %v1107, %v1107
    %v1134 = vsel %vm418, %v1120, 0
    %1136 = vmatprep.subr.bf16.mxu0 0
    %1137 = vmatpush1.bf16.msra.mxu0 %v1108
    %1138 = vmatprep.subr.bf16.mxu0 0
    %1139 = vmatpush1.bf16.msra.mxu0 %v1109
    %1140 = vmatprep.subr.bf16.mxu0 0
    %1141 = vmatpush1.bf16.msra.mxu0 %v1110
    %1142 = vmatprep.subr.bf16.mxu0 0
    %1143 = vmatpush1.bf16.msra.mxu0 %v1111
    %1144 = vmatprep.subr.bf16.mxu0 0
    %1145 = vmatpush1.bf16.msra.mxu0 %v1112
    %1146 = vmatprep.subr.bf16.mxu0 0
    %1147 = vmatpush1.bf16.msra.mxu0 %v1113
    %1148 = vmatprep.subr.bf16.mxu0 0
    %1149 = vmatpush1.bf16.msra.mxu0 %v1114
    %1150 = vmatprep.subr.bf16.mxu0 0
    %1151 = vmatpush1.bf16.msra.mxu0 %v1115
    %1152 = vmatprep.subr.bf16.mxu0 0
    %1153 = vmatpush1.bf16.msra.mxu0 %v1116
    %1154 = vmatprep.subr.bf16.mxu0 0
    %1155 = vmatpush1.bf16.msra.mxu0 %v1117
    %1156 = vmatprep.subr.bf16.mxu0 0
    %1157 = vmatpush1.bf16.msra.mxu0 %v1118
    %1158 = vmatprep.subr.bf16.mxu0 0
    %1159 = vmatpush1.bf16.msra.mxu0 %v1119
    %1160 = vmatprep.subr.bf16.mxu0 0
    %1161 = vmatpush1.bf16.msra.mxu0 %v1134
    %1162 = vmatprep.subr.bf16.mxu0 0
    %1163 = vmatpush1.bf16.msra.mxu0 0
    %1164 = vmatprep.subr.bf16.mxu0 0
    %1165 = vmatpush1.bf16.msra.mxu0 0
    %1166 = vmatprep.subr.bf16.mxu0 0
    %1167 = vmatpush1.bf16.msra.mxu0 0
    %1168 = vmatprep.mubr.bf16.mxu0 %v416
    %1169 = vmatmul.mubr.bf16.gmra.mrb[0].mxu0 %v337
    %v1170 = vpop.f32.mrb[0].mxu0
    %v1171 = vadd.f32 0.0, %v1170
    %v1172 = vpop.f32.mrb[0].mxu0
    %v1173 = vpop.f32.mrb[0].mxu0
    %v1174 = vadd.f32 0.0, %v1173
    %v1175 = vpop.f32.mrb[0].mxu0
    %1176 = vdwg.mxu0
    %v1202 = vunpack.c.l.b16 %v308
    %v1203 = vunpack.c.l.b16 %v309
    %v1204 = vunpack.c.l.b16 %v310
    %v1205 = vunpack.c.l.b16 %v311
    %v1206 = vunpack.c.l.b16 %v312
    %v1207 = vunpack.c.l.b16 %v313
    %v1208 = vunpack.c.l.b16 %v314
    %v1209 = vunpack.c.l.b16 %v315
    %v1210 = vunpack.c.l.b16 %v316
    %v1211 = vunpack.c.l.b16 %v317
    %v1212 = vunpack.c.l.b16 %v318
    %v1213 = vunpack.c.l.b16 %v319
    %v1214 = vunpack.c.l.b16 %v320
    %v1215 = vunpack.c.l.b16 %v321
    %v1216 = vunpack.c.l.b16 %v322
    %v1217 = vunpack.c.l.b16 %v323
    %v1218 = vunpack.c.l.b16 %v324
    %v1219 = vunpack.c.l.b16 %v325
    %v1220 = vunpack.c.l.b16 %v326
    %v1221 = vunpack.c.l.b16 %v327
    %v1222 = vunpack.c.l.b16 %v328
    %v1223 = vunpack.c.l.b16 %v329
    %v1224 = vunpack.c.l.b16 %v330
    %v1225 = vunpack.c.l.b16 %v331
    %v1226 = vunpack.c.l.b16 %v332
    %v1227 = vpack.c.b16 %v1203, %v1202
    %v1228 = vpack.c.b16 %v1205, %v1204
    %v1229 = vpack.c.b16 %v1207, %v1206
    %v1230 = vpack.c.b16 %v1209, %v1208
    %v1231 = vpack.c.b16 %v1211, %v1210
    %v1232 = vpack.c.b16 %v1213, %v1212
    %v1233 = vpack.c.b16 %v1215, %v1214
    %v1234 = vpack.c.b16 %v1217, %v1216
    %v1235 = vpack.c.b16 %v1219, %v1218
    %v1236 = vpack.c.b16 %v1221, %v1220
    %v1237 = vpack.c.b16 %v1223, %v1222
    %v1238 = vpack.c.b16 %v1225, %v1224
    %v1239 = vpack.c.b16 %v1226, %v1226
    %v1253 = vsel %vm418, %v1239, 0
    %1255 = vmatprep.subr.bf16.mxu0 0
    %1256 = vmatpush1.bf16.msra.mxu0 %v1227
    %1257 = vmatprep.subr.bf16.mxu0 0
    %1258 = vmatpush1.bf16.msra.mxu0 %v1228
    %1259 = vmatprep.subr.bf16.mxu0 0
    %1260 = vmatpush1.bf16.msra.mxu0 %v1229
    %1261 = vmatprep.subr.bf16.mxu0 0
    %1262 = vmatpush1.bf16.msra.mxu0 %v1230
    %1263 = vmatprep.subr.bf16.mxu0 0
    %1264 = vmatpush1.bf16.msra.mxu0 %v1231
    %1265 = vmatprep.subr.bf16.mxu0 0
    %1266 = vmatpush1.bf16.msra.mxu0 %v1232
    %1267 = vmatprep.subr.bf16.mxu0 0
    %1268 = vmatpush1.bf16.msra.mxu0 %v1233
    %1269 = vmatprep.subr.bf16.mxu0 0
    %1270 = vmatpush1.bf16.msra.mxu0 %v1234
    %1271 = vmatprep.subr.bf16.mxu0 0
    %1272 = vmatpush1.bf16.msra.mxu0 %v1235
    %1273 = vmatprep.subr.bf16.mxu0 0
    %1274 = vmatpush1.bf16.msra.mxu0 %v1236
    %1275 = vmatprep.subr.bf16.mxu0 0
    %1276 = vmatpush1.bf16.msra.mxu0 %v1237
    %1277 = vmatprep.subr.bf16.mxu0 0
    %1278 = vmatpush1.bf16.msra.mxu0 %v1238
    %1279 = vmatprep.subr.bf16.mxu0 0
    %1280 = vmatpush1.bf16.msra.mxu0 %v1253
    %1281 = vmatprep.subr.bf16.mxu0 0
    %1282 = vmatpush1.bf16.msra.mxu0 0
    %1283 = vmatprep.subr.bf16.mxu0 0
    %1284 = vmatpush1.bf16.msra.mxu0 0
    %1285 = vmatprep.subr.bf16.mxu0 0
    %1286 = vmatpush1.bf16.msra.mxu0 0
    %1287 = vmatprep.mubr.bf16.mxu0 %v416
    %1288 = vmatmul.mubr.bf16.gmra.mrb[0].mxu0 %v337
    %v1289 = vpop.f32.mrb[0].mxu0
    %v1290 = vadd.f32 0.0, %v1289
    %v1291 = vpop.f32.mrb[0].mxu0
    %v1292 = vpop.f32.mrb[0].mxu0
    %v1293 = vadd.f32 0.0, %v1292
    %v1294 = vpop.f32.mrb[0].mxu0
    %1295 = vdwg.mxu0
    %v1296 = vpack.c.bf16 %v460, %v457
    %v1297 = vpack.c.bf16 %v579, %v576
    %v1298 = vpack.c.bf16 %v698, %v695
    %v1299 = vpack.c.bf16 %v817, %v814
    %v1300 = vpack.c.bf16 %v936, %v933
    %v1301 = vpack.c.bf16 %v1055, %v1052
    %v1302 = vpack.c.bf16 %v1174, %v1171
    %v1303 = vpack.c.bf16 %v1293, %v1290
    %v1304 = vld [vmem:[#allocation5] sm:$0xf]
    %v1305 = vpack.c.bf16 %v1304, %v1304
    %vm1306 = vcmask 31744
    %v1308 = vsel %vm1306, %v1296, 0
    %v1311 = vsel %vm1306, %v1297, 0
    %v1314 = vsel %vm1306, %v1298, 0
    %v1317 = vsel %vm1306, %v1299, 0
    %v1320 = vsel %vm1306, %v1300, 0
    %v1323 = vsel %vm1306, %v1301, 0
    %v1326 = vsel %vm1306, %v1302, 0
    %v1329 = vsel %vm1306, %v1303, 0
    %v1332 = vsel %vm418, %v1305, 0
    %1334 = vmatprep.subr.bf16.mxu0 0
    %1335 = vmatpush1.bf16.msra.mxu0 %v1332
    %1336 = vmatprep.subr.bf16.mxu0 0
    %1337 = vmatpush1.bf16.msra.mxu0 0
    %1338 = vmatprep.subr.bf16.mxu0 0
    %1339 = vmatpush1.bf16.msra.mxu0 0
    %1340 = vmatprep.subr.bf16.mxu0 0
    %1341 = vmatpush1.bf16.msra.mxu0 0
    %1342 = vmatprep.subr.bf16.mxu0 0
    %1343 = vmatpush1.bf16.msra.mxu0 0
    %1344 = vmatprep.subr.bf16.mxu0 0
    %1345 = vmatpush1.bf16.msra.mxu0 0
    %1346 = vmatprep.subr.bf16.mxu0 0
    %1347 = vmatpush1.bf16.msra.mxu0 0
    %1348 = vmatprep.subr.bf16.mxu0 0
    %1349 = vmatpush1.bf16.msra.mxu0 0
    %1350 = vmatprep.subr.bf16.mxu0 0
    %1351 = vmatpush1.bf16.msra.mxu0 0
    %1352 = vmatprep.subr.bf16.mxu0 0
    %1353 = vmatpush1.bf16.msra.mxu0 0
    %1354 = vmatprep.subr.bf16.mxu0 0
    %1355 = vmatpush1.bf16.msra.mxu0 0
    %1356 = vmatprep.subr.bf16.mxu0 0
    %1357 = vmatpush1.bf16.msra.mxu0 0
    %1358 = vmatprep.subr.bf16.mxu0 0
    %1359 = vmatpush1.bf16.msra.mxu0 0
    %1360 = vmatprep.subr.bf16.mxu0 0
    %1361 = vmatpush1.bf16.msra.mxu0 0
    %1362 = vmatprep.subr.bf16.mxu0 0
    %1363 = vmatpush1.bf16.msra.mxu0 0
    %1364 = vmatprep.subr.bf16.mxu0 0
    %1365 = vmatpush1.bf16.msra.mxu0 0
    %1366 = vmatprep.mubr.bf16.mxu0 0
    %1367 = vmatmul.mubr.bf16.gmra.mrb[0].mxu0 %v1308
    %v1368 = vpop.f32.mrb[0].mxu0
    %v1369 = vadd.f32 0.0, %v1368
    %v1370 = vpop.f32.mrb[0].mxu0
    %v1371 = vpop.f32.mrb[0].mxu0
    %v1372 = vadd.f32 0.0, %v1371
    %v1373 = vpop.f32.mrb[0].mxu0
    %1374 = vmatprep.mubr.bf16.mxu0 0
    %1375 = vmatmul.mubr.bf16.gmra.mrb[0].mxu0 %v1311
    %v1376 = vpop.f32.mrb[0].mxu0
    %v1377 = vadd.f32 0.0, %v1376
    %v1378 = vpop.f32.mrb[0].mxu0
    %v1379 = vpop.f32.mrb[0].mxu0
    %v1380 = vadd.f32 0.0, %v1379
    %v1381 = vpop.f32.mrb[0].mxu0
    %1382 = vmatprep.mubr.bf16.mxu0 0
    %1383 = vmatmul.mubr.bf16.gmra.mrb[0].mxu0 %v1314
    %v1384 = vpop.f32.mrb[0].mxu0
    %v1385 = vadd.f32 0.0, %v1384
    %v1386 = vpop.f32.mrb[0].mxu0
    %v1387 = vpop.f32.mrb[0].mxu0
    %v1388 = vadd.f32 0.0, %v1387
    %v1389 = vpop.f32.mrb[0].mxu0
    %1390 = vmatprep.mubr.bf16.mxu0 0
    %1391 = vmatmul.mubr.bf16.gmra.mrb[0].mxu0 %v1317
    %v1392 = vpop.f32.mrb[0].mxu0
    %v1393 = vadd.f32 0.0, %v1392
    %v1394 = vpop.f32.mrb[0].mxu0
    %v1395 = vpop.f32.mrb[0].mxu0
    %v1396 = vadd.f32 0.0, %v1395
    %v1397 = vpop.f32.mrb[0].mxu0
    %1398 = vmatprep.mubr.bf16.mxu0 0
    %1399 = vmatmul.mubr.bf16.gmra.mrb[0].mxu0 %v1320
    %v1400 = vpop.f32.mrb[0].mxu0
    %v1401 = vadd.f32 0.0, %v1400
    %v1402 = vpop.f32.mrb[0].mxu0
    %v1403 = vpop.f32.mrb[0].mxu0
    %v1404 = vadd.f32 0.0, %v1403
    %v1405 = vpop.f32.mrb[0].mxu0
    %1406 = vmatprep.mubr.bf16.mxu0 0
    %1407 = vmatmul.mubr.bf16.gmra.mrb[0].mxu0 %v1323
    %v1408 = vpop.f32.mrb[0].mxu0
    %v1409 = vadd.f32 0.0, %v1408
    %v1410 = vpop.f32.mrb[0].mxu0
    %v1411 = vpop.f32.mrb[0].mxu0
    %v1412 = vadd.f32 0.0, %v1411
    %v1413 = vpop.f32.mrb[0].mxu0
    %1414 = vmatprep.mubr.bf16.mxu0 0
    %1415 = vmatmul.mubr.bf16.gmra.mrb[0].mxu0 %v1326
    %v1416 = vpop.f32.mrb[0].mxu0
    %v1417 = vadd.f32 0.0, %v1416
    %v1418 = vpop.f32.mrb[0].mxu0
    %v1419 = vpop.f32.mrb[0].mxu0
    %v1420 = vadd.f32 0.0, %v1419
    %v1421 = vpop.f32.mrb[0].mxu0
    %1422 = vmatprep.mubr.bf16.mxu0 0
    %1423 = vmatmul.mubr.bf16.gmra.mrb[0].mxu0 %v1329
    %v1424 = vpop.f32.mrb[0].mxu0
    %v1425 = vadd.f32 0.0, %v1424
    %v1426 = vpop.f32.mrb[0].mxu0
    %v1427 = vpop.f32.mrb[0].mxu0
    %v1428 = vadd.f32 0.0, %v1427
    %v1429 = vpop.f32.mrb[0].mxu0
    %1430 = vdwg.mxu0
    %v1431 = vld [vmem:[#allocation7] sm:$0x1]
    %v1433 = vlaneseq
    %v1434 = vshrl.u32 %v1433, 7
    %v1435 = vsub.s32 0, %v1434
    %v1436 = vrot.slane %v1431, %v1435
    %v1438 = vmul.f32 %v1369, %v1436
    %v1439 = vmul.f32 %v1372, %v1436
    %v1440 = vmul.f32 %v1377, %v1436
    %v1441 = vmul.f32 %v1380, %v1436
    %v1442 = vmul.f32 %v1385, %v1436
    %v1443 = vmul.f32 %v1388, %v1436
    %v1444 = vmul.f32 %v1393, %v1436
    %v1445 = vmul.f32 %v1396, %v1436
    %v1446 = vmul.f32 %v1401, %v1436
    %v1447 = vmul.f32 %v1404, %v1436
    %v1448 = vmul.f32 %v1409, %v1436
    %v1449 = vmul.f32 %v1412, %v1436
    %v1450 = vmul.f32 %v1417, %v1436
    %v1451 = vmul.f32 %v1420, %v1436
    %v1452 = vmul.f32 %v1425, %v1436
    %v1453 = vmul.f32 %v1428, %v1436
    %v1454 = vld [vmem:[#allocation8] sm:$0x1]
    %v1456 = vlaneseq
    %v1457 = vshrl.u32 %v1456, 7
    %v1458 = vsub.s32 0, %v1457
    %v1459 = vrot.slane %v1454, %v1458
    %v1461 = vadd.f32 %v1438, %v1459
    %v1462 = vadd.f32 %v1439, %v1459
    %v1463 = vadd.f32 %v1440, %v1459
    %v1464 = vadd.f32 %v1441, %v1459
    %v1465 = vadd.f32 %v1442, %v1459
    %v1466 = vadd.f32 %v1443, %v1459
    %v1467 = vadd.f32 %v1444, %v1459
    %v1468 = vadd.f32 %v1445, %v1459
    %v1469 = vadd.f32 %v1446, %v1459
    %v1470 = vadd.f32 %v1447, %v1459
    %v1471 = vadd.f32 %v1448, %v1459
    %v1472 = vadd.f32 %v1449, %v1459
    %v1473 = vadd.f32 %v1450, %v1459
    %v1474 = vadd.f32 %v1451, %v1459
    %v1475 = vadd.f32 %v1452, %v1459
    %v1476 = vadd.f32 %v1453, %v1459
    %v1477 = vmax.f32 %v1461, 0.0
    %v1478 = vmax.f32 %v1462, 0.0
    %v1479 = vmax.f32 %v1463, 0.0
    %v1480 = vmax.f32 %v1464, 0.0
    %v1481 = vmax.f32 %v1465, 0.0
    %v1482 = vmax.f32 %v1466, 0.0
    %v1483 = vmax.f32 %v1467, 0.0
    %v1484 = vmax.f32 %v1468, 0.0
    %v1485 = vmax.f32 %v1469, 0.0
    %v1486 = vmax.f32 %v1470, 0.0
    %v1487 = vmax.f32 %v1471, 0.0
    %v1488 = vmax.f32 %v1472, 0.0
    %v1489 = vmax.f32 %v1473, 0.0
    %v1490 = vmax.f32 %v1474, 0.0
    %v1491 = vmax.f32 %v1475, 0.0
    %v1492 = vmax.f32 %v1476, 0.0
    %v1493 = vpack.c.bf16 %v1478, %v1477
    %v1494 = vpack.c.bf16 %v1480, %v1479
    %v1495 = vpack.c.bf16 %v1482, %v1481
    %v1496 = vpack.c.bf16 %v1484, %v1483
    %v1497 = vpack.c.bf16 %v1486, %v1485
    %v1498 = vpack.c.bf16 %v1488, %v1487
    %v1499 = vpack.c.bf16 %v1490, %v1489
    %v1500 = vpack.c.bf16 %v1492, %v1491
    %v1501 = vld [vmem:[#allocation10] sm:$0xff]
    %v1502 = vld [vmem:[#allocation10 + $0x8] sm:$0xff]
    %v1503 = vld [vmem:[#allocation10 + $0x10] sm:$0xff]
    %v1504 = vld [vmem:[#allocation10 + $0x18] sm:$0xff]
    %v1505 = vld [vmem:[#allocation10 + $0x20] sm:$0xff]
    %v1506 = vld [vmem:[#allocation10 + $0x28] sm:$0xff]
    %v1507 = vld [vmem:[#allocation10 + $0x30] sm:$0xff]
    %v1508 = vld [vmem:[#allocation10 + $0x38] sm:$0xff]
    %v1509 = vld [vmem:[#allocation10 + $0x40] sm:$0xff]
    %v1510 = vld [vmem:[#allocation10 + $0x48] sm:$0xff]
    %v1511 = vld [vmem:[#allocation10 + $0x50] sm:$0xff]
    %v1512 = vld [vmem:[#allocation10 + $0x58] sm:$0xff]
    %v1513 = vld [vmem:[#allocation10 + $0x60] sm:$0xff]
    %v1514 = vld [vmem:[#allocation10 + $0x68] sm:$0xff]
    %v1515 = vld [vmem:[#allocation10 + $0x70] sm:$0xff]
    %v1516 = vld [vmem:[#allocation10 + $0x78] sm:$0xff]
    %v1517 = vld [vmem:[#allocation10 + $0x80] sm:$0xff]
    %v1518 = vld [vmem:[#allocation10 + $0x88] sm:$0xff]
    %v1519 = vld [vmem:[#allocation10 + $0x90] sm:$0xff]
    %v1520 = vld [vmem:[#allocation10 + $0x98] sm:$0xff]
    %v1521 = vld [vmem:[#allocation10 + $0xa0] sm:$0xff]
    %v1522 = vld [vmem:[#allocation10 + $0xa8] sm:$0xff]
    %v1523 = vld [vmem:[#allocation10 + $0xb0] sm:$0xff]
    %v1524 = vld [vmem:[#allocation10 + $0xb8] sm:$0xff]
    %v1525 = vld [vmem:[#allocation10 + $0xc0] sm:$0xff]
    %v1526 = vld [vmem:[#allocation10 + $0xc8] sm:$0xff]
    %v1527 = vld [vmem:[#allocation10 + $0xd0] sm:$0xff]
    %v1528 = vld [vmem:[#allocation10 + $0xd8] sm:$0xff]
    %v1529 = vld [vmem:[#allocation10 + $0xe0] sm:$0xff]
    %v1530 = vld [vmem:[#allocation10 + $0xe8] sm:$0xff]
    %v1531 = vld [vmem:[#allocation10 + $0xf0] sm:$0xff]
    %v1532 = vld [vmem:[#allocation10 + $0xf8] sm:$0xff]
    %v1533 = vld [vmem:[#allocation10 + $0x100] sm:$0xff]
    %v1534 = vld [vmem:[#allocation10 + $0x108] sm:$0xff]
    %v1535 = vld [vmem:[#allocation10 + $0x110] sm:$0xff]
    %v1536 = vld [vmem:[#allocation10 + $0x118] sm:$0xff]
    %v1537 = vld [vmem:[#allocation10 + $0x120] sm:$0xff]
    %v1538 = vld [vmem:[#allocation10 + $0x128] sm:$0xff]
    %v1539 = vld [vmem:[#allocation10 + $0x130] sm:$0xff]
    %v1540 = vld [vmem:[#allocation10 + $0x138] sm:$0xff]
    %v1541 = vld [vmem:[#allocation10 + $0x140] sm:$0xff]
    %v1542 = vld [vmem:[#allocation10 + $0x148] sm:$0xff]
    %v1543 = vld [vmem:[#allocation10 + $0x150] sm:$0xff]
    %v1544 = vld [vmem:[#allocation10 + $0x158] sm:$0xff]
    %v1545 = vld [vmem:[#allocation10 + $0x160] sm:$0xff]
    %v1546 = vld [vmem:[#allocation10 + $0x168] sm:$0xff]
    %v1547 = vld [vmem:[#allocation10 + $0x170] sm:$0xff]
    %v1548 = vld [vmem:[#allocation10 + $0x178] sm:$0xff]
    %v1549 = vld [vmem:[#allocation10 + $0x180] sm:$0xff]
    %v1550 = vld [vmem:[#allocation10 + $0x188] sm:$0xff]
    %v1551 = vld [vmem:[#allocation10 + $0x190] sm:$0xff]
    %v1552 = vld [vmem:[#allocation10 + $0x198] sm:$0xff]
    %v1553 = vld [vmem:[#allocation10 + $0x1a0] sm:$0xff]
    %v1554 = vld [vmem:[#allocation10 + $0x1a8] sm:$0xff]
    %v1555 = vld [vmem:[#allocation10 + $0x1b0] sm:$0xff]
    %v1556 = vld [vmem:[#allocation10 + $0x1b8] sm:$0xff]
    %v1557 = vld [vmem:[#allocation10 + $0x1c0] sm:$0xff]
    %v1558 = vld [vmem:[#allocation10 + $0x1c8] sm:$0xff]
    %v1559 = vld [vmem:[#allocation10 + $0x1d0] sm:$0xff]
    %v1560 = vld [vmem:[#allocation10 + $0x1d8] sm:$0xff]
    %v1561 = vld [vmem:[#allocation10 + $0x1e0] sm:$0xff]
    %v1562 = vld [vmem:[#allocation10 + $0x1e8] sm:$0xff]
    %v1563 = vld [vmem:[#allocation10 + $0x1f0] sm:$0xff]
    %v1564 = vld [vmem:[#allocation10 + $0x1f8] sm:$0xff]
    %s1565 = scalar_lea.vmem [#allocation10], 512
    %v1566 = vld [vmem:[%s1565] sm:$0xff]
    %v1567 = vld [vmem:[%s1565 + $0x8] sm:$0xff]
    %v1568 = vld [vmem:[%s1565 + $0x10] sm:$0xff]
    %v1569 = vld [vmem:[%s1565 + $0x18] sm:$0xff]
    %v1570 = vld [vmem:[%s1565 + $0x20] sm:$0xff]
    %v1571 = vld [vmem:[%s1565 + $0x28] sm:$0xff]
    %v1572 = vld [vmem:[%s1565 + $0x30] sm:$0xff]
    %v1573 = vld [vmem:[%s1565 + $0x38] sm:$0xff]
    %v1574 = vld [vmem:[%s1565 + $0x40] sm:$0xff]
    %v1575 = vld [vmem:[%s1565 + $0x48] sm:$0xff]
    %v1576 = vld [vmem:[%s1565 + $0x50] sm:$0xff]
    %v1577 = vld [vmem:[%s1565 + $0x58] sm:$0xff]
    %v1578 = vld [vmem:[%s1565 + $0x60] sm:$0xff]
    %v1579 = vld [vmem:[%s1565 + $0x68] sm:$0xff]
    %v1580 = vld [vmem:[%s1565 + $0x70] sm:$0xff]
    %v1581 = vld [vmem:[%s1565 + $0x78] sm:$0xff]
    %v1582 = vld [vmem:[%s1565 + $0x80] sm:$0xff]
    %v1583 = vld [vmem:[%s1565 + $0x88] sm:$0xff]
    %v1584 = vld [vmem:[%s1565 + $0x90] sm:$0xff]
    %v1585 = vld [vmem:[%s1565 + $0x98] sm:$0xff]
    %v1586 = vld [vmem:[%s1565 + $0xa0] sm:$0xff]
    %v1587 = vld [vmem:[%s1565 + $0xa8] sm:$0xff]
    %v1588 = vld [vmem:[%s1565 + $0xb0] sm:$0xff]
    %v1589 = vld [vmem:[%s1565 + $0xb8] sm:$0xff]
    %v1590 = vld [vmem:[%s1565 + $0xc0] sm:$0xff]
    %v1591 = vld [vmem:[%s1565 + $0xc8] sm:$0xff]
    %v1592 = vld [vmem:[%s1565 + $0xd0] sm:$0xff]
    %v1593 = vld [vmem:[%s1565 + $0xd8] sm:$0xff]
    %v1594 = vld [vmem:[%s1565 + $0xe0] sm:$0xff]
    %v1595 = vld [vmem:[%s1565 + $0xe8] sm:$0xff]
    %v1596 = vld [vmem:[%s1565 + $0xf0] sm:$0xff]
    %v1597 = vld [vmem:[%s1565 + $0xf8] sm:$0xff]
    %v1598 = vld [vmem:[%s1565 + $0x100] sm:$0xff]
    %v1599 = vld [vmem:[%s1565 + $0x108] sm:$0xff]
    %v1600 = vld [vmem:[%s1565 + $0x110] sm:$0xff]
    %v1601 = vld [vmem:[%s1565 + $0x118] sm:$0xff]
    %v1602 = vld [vmem:[%s1565 + $0x120] sm:$0xff]
    %v1603 = vld [vmem:[%s1565 + $0x128] sm:$0xff]
    %v1604 = vld [vmem:[%s1565 + $0x130] sm:$0xff]
    %v1605 = vld [vmem:[%s1565 + $0x138] sm:$0xff]
    %v1606 = vld [vmem:[%s1565 + $0x140] sm:$0xff]
    %v1607 = vld [vmem:[%s1565 + $0x148] sm:$0xff]
    %v1608 = vld [vmem:[%s1565 + $0x150] sm:$0xff]
    %v1609 = vld [vmem:[%s1565 + $0x158] sm:$0xff]
    %v1610 = vld [vmem:[%s1565 + $0x160] sm:$0xff]
    %v1611 = vld [vmem:[%s1565 + $0x168] sm:$0xff]
    %v1612 = vld [vmem:[%s1565 + $0x170] sm:$0xff]
    %v1613 = vld [vmem:[%s1565 + $0x178] sm:$0xff]
    %v1614 = vld [vmem:[%s1565 + $0x180] sm:$0xff]
    %v1615 = vld [vmem:[%s1565 + $0x188] sm:$0xff]
    %v1616 = vld [vmem:[%s1565 + $0x190] sm:$0xff]
    %v1617 = vld [vmem:[%s1565 + $0x198] sm:$0xff]
    %v1618 = vld [vmem:[%s1565 + $0x1a0] sm:$0xff]
    %v1619 = vld [vmem:[%s1565 + $0x1a8] sm:$0xff]
    %v1620 = vld [vmem:[%s1565 + $0x1b0] sm:$0xff]
    %v1621 = vld [vmem:[%s1565 + $0x1b8] sm:$0xff]
    %v1622 = vld [vmem:[%s1565 + $0x1c0] sm:$0xff]
    %v1623 = vld [vmem:[%s1565 + $0x1c8] sm:$0xff]
    %v1624 = vld [vmem:[%s1565 + $0x1d0] sm:$0xff]
    %v1625 = vld [vmem:[%s1565 + $0x1d8] sm:$0xff]
    %v1626 = vld [vmem:[%s1565 + $0x1e0] sm:$0xff]
    %v1627 = vld [vmem:[%s1565 + $0x1e8] sm:$0xff]
    %v1628 = vld [vmem:[%s1565 + $0x1f0] sm:$0xff]
    %v1629 = vld [vmem:[%s1565 + $0x1f8] sm:$0xff]
    %v1638 = vunpack.c.l.b16 %v1493
    %v1639 = vunpack.c.l.b16 %v1494
    %v1640 = vunpack.c.l.b16 %v1495
    %v1641 = vunpack.c.l.b16 %v1496
    %v1642 = vunpack.c.l.b16 %v1497
    %v1643 = vunpack.c.l.b16 %v1498
    %v1644 = vunpack.c.l.b16 %v1499
    %v1645 = vunpack.c.l.b16 %v1500
    %v1646 = vrot.slane %v1638, 1
    %vm1647 = vcmask 1041409
    %v1648 = vsel %vm1647, %v1639, %v1646
    %v1649 = vrot.slane %v1640, 7
    %vm1650 = vcmask 1042434
    %v1651 = vsel %vm1650, %v1649, %v1648
    %v1652 = vrot.slane %v1641, 6
    %vm1653 = vcmask 1043459
    %v1654 = vsel %vm1653, %v1652, %v1651
    %v1655 = vrot.slane %v1642, 5
    %vm1656 = vcmask 1044484
    %v1657 = vsel %vm1656, %v1655, %v1654
    %v1658 = vrot.slane %v1643, 4
    %vm1659 = vcmask 1045509
    %v1660 = vsel %vm1659, %v1658, %v1657
    %v1661 = vrot.slane %v1644, 3
    %vm1662 = vcmask 1046534
    %v1663 = vsel %vm1662, %v1661, %v1660
    %v1664 = vrot.slane %v1645, 2
    %vm1665 = vcmask 1047559
    %v1666 = vsel %vm1665, %v1664, %v1663
    %v1667 = vpack.c.b16 %v1666, %v1666
    %v1733 = vunpack.c.l.b16 %v1566
    %v1734 = vunpack.c.h.b16 %v1566
    %v1735 = vunpack.c.l.b16 %v1567
    %v1736 = vunpack.c.h.b16 %v1567
    %v1737 = vunpack.c.l.b16 %v1568
    %v1738 = vunpack.c.h.b16 %v1568
    %v1739 = vunpack.c.l.b16 %v1569
    %v1740 = vunpack.c.h.b16 %v1569
    %v1741 = vunpack.c.l.b16 %v1570
    %v1742 = vunpack.c.h.b16 %v1570
    %v1743 = vunpack.c.l.b16 %v1571
    %v1744 = vunpack.c.h.b16 %v1571
    %v1745 = vunpack.c.l.b16 %v1572
    %v1746 = vunpack.c.h.b16 %v1572
    %v1747 = vunpack.c.l.b16 %v1573
    %v1748 = vunpack.c.h.b16 %v1573
    %v1749 = vunpack.c.l.b16 %v1574
    %v1750 = vunpack.c.h.b16 %v1574
    %v1751 = vunpack.c.l.b16 %v1575
    %v1752 = vunpack.c.h.b16 %v1575
    %v1753 = vunpack.c.l.b16 %v1576
    %v1754 = vunpack.c.h.b16 %v1576
    %v1755 = vunpack.c.l.b16 %v1577
    %v1756 = vunpack.c.h.b16 %v1577
    %v1757 = vunpack.c.l.b16 %v1578
    %v1758 = vunpack.c.h.b16 %v1578
    %v1759 = vunpack.c.l.b16 %v1579
    %v1760 = vunpack.c.h.b16 %v1579
    %v1761 = vunpack.c.l.b16 %v1580
    %v1762 = vunpack.c.h.b16 %v1580
    %v1763 = vunpack.c.l.b16 %v1581
    %v1764 = vunpack.c.h.b16 %v1581
    %v1765 = vunpack.c.l.b16 %v1582
    %v1766 = vunpack.c.h.b16 %v1582
    %v1767 = vunpack.c.l.b16 %v1583
    %v1768 = vunpack.c.h.b16 %v1583
    %v1769 = vunpack.c.l.b16 %v1584
    %v1770 = vunpack.c.h.b16 %v1584
    %v1771 = vunpack.c.l.b16 %v1585
    %v1772 = vunpack.c.h.b16 %v1585
    %v1773 = vunpack.c.l.b16 %v1586
    %v1774 = vunpack.c.h.b16 %v1586
    %v1775 = vunpack.c.l.b16 %v1587
    %v1776 = vunpack.c.h.b16 %v1587
    %v1777 = vunpack.c.l.b16 %v1588
    %v1778 = vunpack.c.h.b16 %v1588
    %v1779 = vunpack.c.l.b16 %v1589
    %v1780 = vunpack.c.h.b16 %v1589
    %v1781 = vunpack.c.l.b16 %v1590
    %v1782 = vunpack.c.h.b16 %v1590
    %v1783 = vunpack.c.l.b16 %v1591
    %v1784 = vunpack.c.h.b16 %v1591
    %v1785 = vunpack.c.l.b16 %v1592
    %v1786 = vunpack.c.h.b16 %v1592
    %v1787 = vunpack.c.l.b16 %v1593
    %v1788 = vunpack.c.h.b16 %v1593
    %v1789 = vunpack.c.l.b16 %v1594
    %v1790 = vunpack.c.h.b16 %v1594
    %v1791 = vunpack.c.l.b16 %v1595
    %v1792 = vunpack.c.h.b16 %v1595
    %v1793 = vunpack.c.l.b16 %v1596
    %v1794 = vunpack.c.h.b16 %v1596
    %v1795 = vunpack.c.l.b16 %v1597
    %v1796 = vunpack.c.h.b16 %v1597
    %v1797 = vunpack.c.l.b16 %v1598
    %v1798 = vunpack.c.h.b16 %v1598
    %v1799 = vunpack.c.l.b16 %v1599
    %v1800 = vunpack.c.h.b16 %v1599
    %v1801 = vunpack.c.l.b16 %v1600
    %v1802 = vunpack.c.h.b16 %v1600
    %v1803 = vunpack.c.l.b16 %v1601
    %v1804 = vunpack.c.h.b16 %v1601
    %v1805 = vunpack.c.l.b16 %v1602
    %v1806 = vunpack.c.h.b16 %v1602
    %v1807 = vunpack.c.l.b16 %v1603
    %v1808 = vunpack.c.h.b16 %v1603
    %v1809 = vunpack.c.l.b16 %v1604
    %v1810 = vunpack.c.h.b16 %v1604
    %v1811 = vunpack.c.l.b16 %v1605
    %v1812 = vunpack.c.h.b16 %v1605
    %v1813 = vunpack.c.l.b16 %v1606
    %v1814 = vunpack.c.h.b16 %v1606
    %v1815 = vunpack.c.l.b16 %v1607
    %v1816 = vunpack.c.h.b16 %v1607
    %v1817 = vunpack.c.l.b16 %v1608
    %v1818 = vunpack.c.h.b16 %v1608
    %v1819 = vunpack.c.l.b16 %v1609
    %v1820 = vunpack.c.h.b16 %v1609
    %v1821 = vunpack.c.l.b16 %v1610
    %v1822 = vunpack.c.h.b16 %v1610
    %v1823 = vunpack.c.l.b16 %v1611
    %v1824 = vunpack.c.h.b16 %v1611
    %v1825 = vunpack.c.l.b16 %v1612
    %v1826 = vunpack.c.h.b16 %v1612
    %v1827 = vunpack.c.l.b16 %v1613
    %v1828 = vunpack.c.h.b16 %v1613
    %v1829 = vunpack.c.l.b16 %v1614
    %v1830 = vunpack.c.h.b16 %v1614
    %v1831 = vunpack.c.l.b16 %v1615
    %v1832 = vunpack.c.h.b16 %v1615
    %v1833 = vunpack.c.l.b16 %v1616
    %v1834 = vunpack.c.h.b16 %v1616
    %v1835 = vunpack.c.l.b16 %v1617
    %v1836 = vunpack.c.h.b16 %v1617
    %v1837 = vunpack.c.l.b16 %v1618
    %v1838 = vunpack.c.h.b16 %v1618
    %v1839 = vunpack.c.l.b16 %v1619
    %v1840 = vunpack.c.h.b16 %v1619
    %v1841 = vunpack.c.l.b16 %v1620
    %v1842 = vunpack.c.h.b16 %v1620
    %v1843 = vunpack.c.l.b16 %v1621
    %v1844 = vunpack.c.h.b16 %v1621
    %v1845 = vunpack.c.l.b16 %v1622
    %v1846 = vunpack.c.h.b16 %v1622
    %v1847 = vunpack.c.l.b16 %v1623
    %v1848 = vunpack.c.h.b16 %v1623
    %v1849 = vunpack.c.l.b16 %v1624
    %v1850 = vunpack.c.h.b16 %v1624
    %v1851 = vunpack.c.l.b16 %v1625
    %v1852 = vunpack.c.h.b16 %v1625
    %v1853 = vunpack.c.l.b16 %v1626
    %v1854 = vunpack.c.h.b16 %v1626
    %v1855 = vunpack.c.l.b16 %v1627
    %v1856 = vunpack.c.h.b16 %v1627
    %v1857 = vunpack.c.l.b16 %v1628
    %v1858 = vunpack.c.h.b16 %v1628
    %v1859 = vunpack.c.l.b16 %v1629
    %v1860 = vunpack.c.h.b16 %v1629
    %v1861 = vpack.c.b16 %v1741, %v1733
    %v1862 = vpack.c.b16 %v1742, %v1734
    %v1863 = vpack.c.b16 %v1743, %v1735
    %v1864 = vpack.c.b16 %v1744, %v1736
    %v1865 = vpack.c.b16 %v1745, %v1737
    %v1866 = vpack.c.b16 %v1746, %v1738
    %v1867 = vpack.c.b16 %v1747, %v1739
    %v1868 = vpack.c.b16 %v1748, %v1740
    %v1869 = vpack.c.b16 %v1757, %v1749
    %v1870 = vpack.c.b16 %v1758, %v1750
    %v1871 = vpack.c.b16 %v1759, %v1751
    %v1872 = vpack.c.b16 %v1760, %v1752
    %v1873 = vpack.c.b16 %v1761, %v1753
    %v1874 = vpack.c.b16 %v1762, %v1754
    %v1875 = vpack.c.b16 %v1763, %v1755
    %v1876 = vpack.c.b16 %v1764, %v1756
    %v1877 = vpack.c.b16 %v1773, %v1765
    %v1878 = vpack.c.b16 %v1774, %v1766
    %v1879 = vpack.c.b16 %v1775, %v1767
    %v1880 = vpack.c.b16 %v1776, %v1768
    %v1881 = vpack.c.b16 %v1777, %v1769
    %v1882 = vpack.c.b16 %v1778, %v1770
    %v1883 = vpack.c.b16 %v1779, %v1771
    %v1884 = vpack.c.b16 %v1780, %v1772
    %v1885 = vpack.c.b16 %v1789, %v1781
    %v1886 = vpack.c.b16 %v1790, %v1782
    %v1887 = vpack.c.b16 %v1791, %v1783
    %v1888 = vpack.c.b16 %v1792, %v1784
    %v1889 = vpack.c.b16 %v1793, %v1785
    %v1890 = vpack.c.b16 %v1794, %v1786
    %v1891 = vpack.c.b16 %v1795, %v1787
    %v1892 = vpack.c.b16 %v1796, %v1788
    %v1893 = vpack.c.b16 %v1805, %v1797
    %v1894 = vpack.c.b16 %v1806, %v1798
    %v1895 = vpack.c.b16 %v1807, %v1799
    %v1896 = vpack.c.b16 %v1808, %v1800
    %v1897 = vpack.c.b16 %v1809, %v1801
    %v1898 = vpack.c.b16 %v1810, %v1802
    %v1899 = vpack.c.b16 %v1811, %v1803
    %v1900 = vpack.c.b16 %v1812, %v1804
    %v1901 = vpack.c.b16 %v1821, %v1813
    %v1902 = vpack.c.b16 %v1822, %v1814
    %v1903 = vpack.c.b16 %v1823, %v1815
    %v1904 = vpack.c.b16 %v1824, %v1816
    %v1905 = vpack.c.b16 %v1825, %v1817
    %v1906 = vpack.c.b16 %v1826, %v1818
    %v1907 = vpack.c.b16 %v1827, %v1819
    %v1908 = vpack.c.b16 %v1828, %v1820
    %v1909 = vpack.c.b16 %v1837, %v1829
    %v1910 = vpack.c.b16 %v1838, %v1830
    %v1911 = vpack.c.b16 %v1839, %v1831
    %v1912 = vpack.c.b16 %v1840, %v1832
    %v1913 = vpack.c.b16 %v1841, %v1833
    %v1914 = vpack.c.b16 %v1842, %v1834
    %v1915 = vpack.c.b16 %v1843, %v1835
    %v1916 = vpack.c.b16 %v1844, %v1836
    %v1917 = vpack.c.b16 %v1853, %v1845
    %v1918 = vpack.c.b16 %v1854, %v1846
    %v1919 = vpack.c.b16 %v1855, %v1847
    %v1920 = vpack.c.b16 %v1856, %v1848
    %v1921 = vpack.c.b16 %v1857, %v1849
    %v1922 = vpack.c.b16 %v1858, %v1850
    %v1923 = vpack.c.b16 %v1859, %v1851
    %v1924 = vpack.c.b16 %v1860, %v1852
    %1989 = vmatprep.subr.bf16.mxu0 %v1862
    %1990 = vmatpush1.bf16.msra.mxu0 %v1861
    %1991 = vmatprep.subr.bf16.mxu0 %v1870
    %1992 = vmatpush1.bf16.msra.mxu0 %v1869
    %1993 = vmatprep.subr.bf16.mxu0 %v1878
    %1994 = vmatpush1.bf16.msra.mxu0 %v1877
    %1995 = vmatprep.subr.bf16.mxu0 %v1886
    %1996 = vmatpush1.bf16.msra.mxu0 %v1885
    %1997 = vmatprep.subr.bf16.mxu0 %v1894
    %1998 = vmatpush1.bf16.msra.mxu0 %v1893
    %1999 = vmatprep.subr.bf16.mxu0 %v1902
    %2000 = vmatpush1.bf16.msra.mxu0 %v1901
    %2001 = vmatprep.subr.bf16.mxu0 %v1910
    %2002 = vmatpush1.bf16.msra.mxu0 %v1909
    %2003 = vmatprep.subr.bf16.mxu0 %v1918
    %2004 = vmatpush1.bf16.msra.mxu0 %v1917
    %2005 = vmatprep.subr.bf16.mxu0 0
    %2006 = vmatpush1.bf16.msra.mxu0 0
    %2007 = vmatprep.subr.bf16.mxu0 0
    %2008 = vmatpush1.bf16.msra.mxu0 0
    %2009 = vmatprep.subr.bf16.mxu0 0
    %2010 = vmatpush1.bf16.msra.mxu0 0
    %2011 = vmatprep.subr.bf16.mxu0 0
    %2012 = vmatpush1.bf16.msra.mxu0 0
    %2013 = vmatprep.subr.bf16.mxu0 0
    %2014 = vmatpush1.bf16.msra.mxu0 0
    %2015 = vmatprep.subr.bf16.mxu0 0
    %2016 = vmatpush1.bf16.msra.mxu0 0
    %2017 = vmatprep.subr.bf16.mxu0 0
    %2018 = vmatpush1.bf16.msra.mxu0 0
    %2019 = vmatprep.subr.bf16.mxu0 0
    %2020 = vmatpush1.bf16.msra.mxu0 0
    %2021 = vmatprep.mubr.bf16.mxu0 0
    %2022 = vmatmul.mubr.bf16.gmra.mrb[0].mxu0 %v1667
    %v2023 = vpop.f32.mrb[0].mxu0
    %v2024 = vadd.f32 0.0, %v2023
    %v2025 = vpop.f32.mrb[0].mxu0
    %v2026 = vadd.f32 0.0, %v2025
    %v2027 = vpop.f32.mrb[0].mxu0
    %v2028 = vpop.f32.mrb[0].mxu0
    %2029 = vdwg.mxu0
    %2030 = vmatprep.subr.bf16.mxu0 %v1864
    %2031 = vmatpush1.bf16.msra.mxu0 %v1863
    %2032 = vmatprep.subr.bf16.mxu0 %v1872
    %2033 = vmatpush1.bf16.msra.mxu0 %v1871
    %2034 = vmatprep.subr.bf16.mxu0 %v1880
    %2035 = vmatpush1.bf16.msra.mxu0 %v1879
    %2036 = vmatprep.subr.bf16.mxu0 %v1888
    %2037 = vmatpush1.bf16.msra.mxu0 %v1887
    %2038 = vmatprep.subr.bf16.mxu0 %v1896
    %2039 = vmatpush1.bf16.msra.mxu0 %v1895
    %2040 = vmatprep.subr.bf16.mxu0 %v1904
    %2041 = vmatpush1.bf16.msra.mxu0 %v1903
    %2042 = vmatprep.subr.bf16.mxu0 %v1912
    %2043 = vmatpush1.bf16.msra.mxu0 %v1911
    %2044 = vmatprep.subr.bf16.mxu0 %v1920
    %2045 = vmatpush1.bf16.msra.mxu0 %v1919
    %2046 = vmatprep.subr.bf16.mxu0 0
    %2047 = vmatpush1.bf16.msra.mxu0 0
    %2048 = vmatprep.subr.bf16.mxu0 0
    %2049 = vmatpush1.bf16.msra.mxu0 0
    %2050 = vmatprep.subr.bf16.mxu0 0
    %2051 = vmatpush1.bf16.msra.mxu0 0
    %2052 = vmatprep.subr.bf16.mxu0 0
    %2053 = vmatpush1.bf16.msra.mxu0 0
    %2054 = vmatprep.subr.bf16.mxu0 0
    %2055 = vmatpush1.bf16.msra.mxu0 0
    %2056 = vmatprep.subr.bf16.mxu0 0
    %2057 = vmatpush1.bf16.msra.mxu0 0
    %2058 = vmatprep.subr.bf16.mxu0 0
    %2059 = vmatpush1.bf16.msra.mxu0 0
    %2060 = vmatprep.subr.bf16.mxu0 0
    %2061 = vmatpush1.bf16.msra.mxu0 0
    %2062 = vmatprep.mubr.bf16.mxu0 0
    %2063 = vmatmul.mubr.bf16.gmra.mrb[0].mxu0 %v1667
    %v2064 = vpop.f32.mrb[0].mxu0
    %v2065 = vadd.f32 0.0, %v2064
    %v2066 = vpop.f32.mrb[0].mxu0
    %v2067 = vadd.f32 0.0, %v2066
    %v2068 = vpop.f32.mrb[0].mxu0
    %v2069 = vpop.f32.mrb[0].mxu0
    %2070 = vdwg.mxu0
    %2071 = vmatprep.subr.bf16.mxu0 %v1866
    %2072 = vmatpush1.bf16.msra.mxu0 %v1865
    %2073 = vmatprep.subr.bf16.mxu0 %v1874
    %2074 = vmatpush1.bf16.msra.mxu0 %v1873
    %2075 = vmatprep.subr.bf16.mxu0 %v1882
    %2076 = vmatpush1.bf16.msra.mxu0 %v1881
    %2077 = vmatprep.subr.bf16.mxu0 %v1890
    %2078 = vmatpush1.bf16.msra.mxu0 %v1889
    %2079 = vmatprep.subr.bf16.mxu0 %v1898
    %2080 = vmatpush1.bf16.msra.mxu0 %v1897
    %2081 = vmatprep.subr.bf16.mxu0 %v1906
    %2082 = vmatpush1.bf16.msra.mxu0 %v1905
    %2083 = vmatprep.subr.bf16.mxu0 %v1914
    %2084 = vmatpush1.bf16.msra.mxu0 %v1913
    %2085 = vmatprep.subr.bf16.mxu0 %v1922
    %2086 = vmatpush1.bf16.msra.mxu0 %v1921
    %2087 = vmatprep.subr.bf16.mxu0 0
    %2088 = vmatpush1.bf16.msra.mxu0 0
    %2089 = vmatprep.subr.bf16.mxu0 0
    %2090 = vmatpush1.bf16.msra.mxu0 0
    %2091 = vmatprep.subr.bf16.mxu0 0
    %2092 = vmatpush1.bf16.msra.mxu0 0
    %2093 = vmatprep.subr.bf16.mxu0 0
    %2094 = vmatpush1.bf16.msra.mxu0 0
    %2095 = vmatprep.subr.bf16.mxu0 0
    %2096 = vmatpush1.bf16.msra.mxu0 0
    %2097 = vmatprep.subr.bf16.mxu0 0
    %2098 = vmatpush1.bf16.msra.mxu0 0
    %2099 = vmatprep.subr.bf16.mxu0 0
    %2100 = vmatpush1.bf16.msra.mxu0 0
    %2101 = vmatprep.subr.bf16.mxu0 0
    %2102 = vmatpush1.bf16.msra.mxu0 0
    %2103 = vmatprep.mubr.bf16.mxu0 0
    %2104 = vmatmul.mubr.bf16.gmra.mrb[0].mxu0 %v1667
    %v2105 = vpop.f32.mrb[0].mxu0
    %v2106 = vadd.f32 0.0, %v2105
    %v2107 = vpop.f32.mrb[0].mxu0
    %v2108 = vadd.f32 0.0, %v2107
    %v2109 = vpop.f32.mrb[0].mxu0
    %v2110 = vpop.f32.mrb[0].mxu0
    %2111 = vdwg.mxu0
    %2112 = vmatprep.subr.bf16.mxu0 %v1868
    %2113 = vmatpush1.bf16.msra.mxu0 %v1867
    %2114 = vmatprep.subr.bf16.mxu0 %v1876
    %2115 = vmatpush1.bf16.msra.mxu0 %v1875
    %2116 = vmatprep.subr.bf16.mxu0 %v1884
    %2117 = vmatpush1.bf16.msra.mxu0 %v1883
    %2118 = vmatprep.subr.bf16.mxu0 %v1892
    %2119 = vmatpush1.bf16.msra.mxu0 %v1891
    %2120 = vmatprep.subr.bf16.mxu0 %v1900
    %2121 = vmatpush1.bf16.msra.mxu0 %v1899
    %2122 = vmatprep.subr.bf16.mxu0 %v1908
    %2123 = vmatpush1.bf16.msra.mxu0 %v1907
    %2124 = vmatprep.subr.bf16.mxu0 %v1916
    %2125 = vmatpush1.bf16.msra.mxu0 %v1915
    %2126 = vmatprep.subr.bf16.mxu0 %v1924
    %2127 = vmatpush1.bf16.msra.mxu0 %v1923
    %2128 = vmatprep.subr.bf16.mxu0 0
    %2129 = vmatpush1.bf16.msra.mxu0 0
    %2130 = vmatprep.subr.bf16.mxu0 0
    %2131 = vmatpush1.bf16.msra.mxu0 0
    %2132 = vmatprep.subr.bf16.mxu0 0
    %2133 = vmatpush1.bf16.msra.mxu0 0
    %2134 = vmatprep.subr.bf16.mxu0 0
    %2135 = vmatpush1.bf16.msra.mxu0 0
    %2136 = vmatprep.subr.bf16.mxu0 0
    %2137 = vmatpush1.bf16.msra.mxu0 0
    %2138 = vmatprep.subr.bf16.mxu0 0
    %2139 = vmatpush1.bf16.msra.mxu0 0
    %2140 = vmatprep.subr.bf16.mxu0 0
    %2141 = vmatpush1.bf16.msra.mxu0 0
    %2142 = vmatprep.subr.bf16.mxu0 0
    %2143 = vmatpush1.bf16.msra.mxu0 0
    %2144 = vmatprep.mubr.bf16.mxu0 0
    %2145 = vmatmul.mubr.bf16.gmra.mrb[0].mxu0 %v1667
    %v2146 = vpop.f32.mrb[0].mxu0
    %v2147 = vadd.f32 0.0, %v2146
    %v2148 = vpop.f32.mrb[0].mxu0
    %v2149 = vadd.f32 0.0, %v2148
    %v2150 = vpop.f32.mrb[0].mxu0
    %v2151 = vpop.f32.mrb[0].mxu0
    %2152 = vdwg.mxu0
    %v2153 = vrot.slane %v1639, 7
    %v2154 = vsel %vm1647, %v2153, %v1638
    %v2155 = vrot.slane %v1640, 6
    %v2156 = vsel %vm1650, %v2155, %v2154
    %v2157 = vrot.slane %v1641, 5
    %v2158 = vsel %vm1653, %v2157, %v2156
    %v2159 = vrot.slane %v1642, 4
    %v2160 = vsel %vm1656, %v2159, %v2158
    %v2161 = vrot.slane %v1643, 3
    %v2162 = vsel %vm1659, %v2161, %v2160
    %v2163 = vrot.slane %v1644, 2
    %v2164 = vsel %vm1662, %v2163, %v2162
    %v2165 = vrot.slane %v1645, 1
    %v2166 = vsel %vm1665, %v2165, %v2164
    %v2167 = vpack.c.b16 %v2166, %v2166
    %v2233 = vunpack.c.l.b16 %v1501
    %v2234 = vunpack.c.h.b16 %v1501
    %v2235 = vunpack.c.l.b16 %v1502
    %v2236 = vunpack.c.h.b16 %v1502
    %v2237 = vunpack.c.l.b16 %v1503
    %v2238 = vunpack.c.h.b16 %v1503
    %v2239 = vunpack.c.l.b16 %v1504
    %v2240 = vunpack.c.h.b16 %v1504
    %v2241 = vunpack.c.l.b16 %v1505
    %v2242 = vunpack.c.h.b16 %v1505
    %v2243 = vunpack.c.l.b16 %v1506
    %v2244 = vunpack.c.h.b16 %v1506
    %v2245 = vunpack.c.l.b16 %v1507
    %v2246 = vunpack.c.h.b16 %v1507
    %v2247 = vunpack.c.l.b16 %v1508
    %v2248 = vunpack.c.h.b16 %v1508
    %v2249 = vunpack.c.l.b16 %v1509
    %v2250 = vunpack.c.h.b16 %v1509
    %v2251 = vunpack.c.l.b16 %v1510
    %v2252 = vunpack.c.h.b16 %v1510
    %v2253 = vunpack.c.l.b16 %v1511
    %v2254 = vunpack.c.h.b16 %v1511
    %v2255 = vunpack.c.l.b16 %v1512
    %v2256 = vunpack.c.h.b16 %v1512
    %v2257 = vunpack.c.l.b16 %v1513
    %v2258 = vunpack.c.h.b16 %v1513
    %v2259 = vunpack.c.l.b16 %v1514
    %v2260 = vunpack.c.h.b16 %v1514
    %v2261 = vunpack.c.l.b16 %v1515
    %v2262 = vunpack.c.h.b16 %v1515
    %v2263 = vunpack.c.l.b16 %v1516
    %v2264 = vunpack.c.h.b16 %v1516
    %v2265 = vunpack.c.l.b16 %v1517
    %v2266 = vunpack.c.h.b16 %v1517
    %v2267 = vunpack.c.l.b16 %v1518
    %v2268 = vunpack.c.h.b16 %v1518
    %v2269 = vunpack.c.l.b16 %v1519
    %v2270 = vunpack.c.h.b16 %v1519
    %v2271 = vunpack.c.l.b16 %v1520
    %v2272 = vunpack.c.h.b16 %v1520
    %v2273 = vunpack.c.l.b16 %v1521
    %v2274 = vunpack.c.h.b16 %v1521
    %v2275 = vunpack.c.l.b16 %v1522
    %v2276 = vunpack.c.h.b16 %v1522
    %v2277 = vunpack.c.l.b16 %v1523
    %v2278 = vunpack.c.h.b16 %v1523
    %v2279 = vunpack.c.l.b16 %v1524
    %v2280 = vunpack.c.h.b16 %v1524
    %v2281 = vunpack.c.l.b16 %v1525
    %v2282 = vunpack.c.h.b16 %v1525
    %v2283 = vunpack.c.l.b16 %v1526
    %v2284 = vunpack.c.h.b16 %v1526
    %v2285 = vunpack.c.l.b16 %v1527
    %v2286 = vunpack.c.h.b16 %v1527
    %v2287 = vunpack.c.l.b16 %v1528
    %v2288 = vunpack.c.h.b16 %v1528
    %v2289 = vunpack.c.l.b16 %v1529
    %v2290 = vunpack.c.h.b16 %v1529
    %v2291 = vunpack.c.l.b16 %v1530
    %v2292 = vunpack.c.h.b16 %v1530
    %v2293 = vunpack.c.l.b16 %v1531
    %v2294 = vunpack.c.h.b16 %v1531
    %v2295 = vunpack.c.l.b16 %v1532
    %v2296 = vunpack.c.h.b16 %v1532
    %v2297 = vunpack.c.l.b16 %v1533
    %v2298 = vunpack.c.h.b16 %v1533
    %v2299 = vunpack.c.l.b16 %v1534
    %v2300 = vunpack.c.h.b16 %v1534
    %v2301 = vunpack.c.l.b16 %v1535
    %v2302 = vunpack.c.h.b16 %v1535
    %v2303 = vunpack.c.l.b16 %v1536
    %v2304 = vunpack.c.h.b16 %v1536
    %v2305 = vunpack.c.l.b16 %v1537
    %v2306 = vunpack.c.h.b16 %v1537
    %v2307 = vunpack.c.l.b16 %v1538
    %v2308 = vunpack.c.h.b16 %v1538
    %v2309 = vunpack.c.l.b16 %v1539
    %v2310 = vunpack.c.h.b16 %v1539
    %v2311 = vunpack.c.l.b16 %v1540
    %v2312 = vunpack.c.h.b16 %v1540
    %v2313 = vunpack.c.l.b16 %v1541
    %v2314 = vunpack.c.h.b16 %v1541
    %v2315 = vunpack.c.l.b16 %v1542
    %v2316 = vunpack.c.h.b16 %v1542
    %v2317 = vunpack.c.l.b16 %v1543
    %v2318 = vunpack.c.h.b16 %v1543
    %v2319 = vunpack.c.l.b16 %v1544
    %v2320 = vunpack.c.h.b16 %v1544
    %v2321 = vunpack.c.l.b16 %v1545
    %v2322 = vunpack.c.h.b16 %v1545
    %v2323 = vunpack.c.l.b16 %v1546
    %v2324 = vunpack.c.h.b16 %v1546
    %v2325 = vunpack.c.l.b16 %v1547
    %v2326 = vunpack.c.h.b16 %v1547
    %v2327 = vunpack.c.l.b16 %v1548
    %v2328 = vunpack.c.h.b16 %v1548
    %v2329 = vunpack.c.l.b16 %v1549
    %v2330 = vunpack.c.h.b16 %v1549
    %v2331 = vunpack.c.l.b16 %v1550
    %v2332 = vunpack.c.h.b16 %v1550
    %v2333 = vunpack.c.l.b16 %v1551
    %v2334 = vunpack.c.h.b16 %v1551
    %v2335 = vunpack.c.l.b16 %v1552
    %v2336 = vunpack.c.h.b16 %v1552
    %v2337 = vunpack.c.l.b16 %v1553
    %v2338 = vunpack.c.h.b16 %v1553
    %v2339 = vunpack.c.l.b16 %v1554
    %v2340 = vunpack.c.h.b16 %v1554
    %v2341 = vunpack.c.l.b16 %v1555
    %v2342 = vunpack.c.h.b16 %v1555
    %v2343 = vunpack.c.l.b16 %v1556
    %v2344 = vunpack.c.h.b16 %v1556
    %v2345 = vunpack.c.l.b16 %v1557
    %v2346 = vunpack.c.h.b16 %v1557
    %v2347 = vunpack.c.l.b16 %v1558
    %v2348 = vunpack.c.h.b16 %v1558
    %v2349 = vunpack.c.l.b16 %v1559
    %v2350 = vunpack.c.h.b16 %v1559
    %v2351 = vunpack.c.l.b16 %v1560
    %v2352 = vunpack.c.h.b16 %v1560
    %v2353 = vunpack.c.l.b16 %v1561
    %v2354 = vunpack.c.h.b16 %v1561
    %v2355 = vunpack.c.l.b16 %v1562
    %v2356 = vunpack.c.h.b16 %v1562
    %v2357 = vunpack.c.l.b16 %v1563
    %v2358 = vunpack.c.h.b16 %v1563
    %v2359 = vunpack.c.l.b16 %v1564
    %v2360 = vunpack.c.h.b16 %v1564
    %v2361 = vpack.c.b16 %v2241, %v2233
    %v2362 = vpack.c.b16 %v2242, %v2234
    %v2363 = vpack.c.b16 %v2243, %v2235
    %v2364 = vpack.c.b16 %v2244, %v2236
    %v2365 = vpack.c.b16 %v2245, %v2237
    %v2366 = vpack.c.b16 %v2246, %v2238
    %v2367 = vpack.c.b16 %v2247, %v2239
    %v2368 = vpack.c.b16 %v2248, %v2240
    %v2369 = vpack.c.b16 %v2257, %v2249
    %v2370 = vpack.c.b16 %v2258, %v2250
    %v2371 = vpack.c.b16 %v2259, %v2251
    %v2372 = vpack.c.b16 %v2260, %v2252
    %v2373 = vpack.c.b16 %v2261, %v2253
    %v2374 = vpack.c.b16 %v2262, %v2254
    %v2375 = vpack.c.b16 %v2263, %v2255
    %v2376 = vpack.c.b16 %v2264, %v2256
    %v2377 = vpack.c.b16 %v2273, %v2265
    %v2378 = vpack.c.b16 %v2274, %v2266
    %v2379 = vpack.c.b16 %v2275, %v2267
    %v2380 = vpack.c.b16 %v2276, %v2268
    %v2381 = vpack.c.b16 %v2277, %v2269
    %v2382 = vpack.c.b16 %v2278, %v2270
    %v2383 = vpack.c.b16 %v2279, %v2271
    %v2384 = vpack.c.b16 %v2280, %v2272
    %v2385 = vpack.c.b16 %v2289, %v2281
    %v2386 = vpack.c.b16 %v2290, %v2282
    %v2387 = vpack.c.b16 %v2291, %v2283
    %v2388 = vpack.c.b16 %v2292, %v2284
    %v2389 = vpack.c.b16 %v2293, %v2285
    %v2390 = vpack.c.b16 %v2294, %v2286
    %v2391 = vpack.c.b16 %v2295, %v2287
    %v2392 = vpack.c.b16 %v2296, %v2288
    %v2393 = vpack.c.b16 %v2305, %v2297
    %v2394 = vpack.c.b16 %v2306, %v2298
    %v2395 = vpack.c.b16 %v2307, %v2299
    %v2396 = vpack.c.b16 %v2308, %v2300
    %v2397 = vpack.c.b16 %v2309, %v2301
    %v2398 = vpack.c.b16 %v2310, %v2302
    %v2399 = vpack.c.b16 %v2311, %v2303
    %v2400 = vpack.c.b16 %v2312, %v2304
    %v2401 = vpack.c.b16 %v2321, %v2313
    %v2402 = vpack.c.b16 %v2322, %v2314
    %v2403 = vpack.c.b16 %v2323, %v2315
    %v2404 = vpack.c.b16 %v2324, %v2316
    %v2405 = vpack.c.b16 %v2325, %v2317
    %v2406 = vpack.c.b16 %v2326, %v2318
    %v2407 = vpack.c.b16 %v2327, %v2319
    %v2408 = vpack.c.b16 %v2328, %v2320
    %v2409 = vpack.c.b16 %v2337, %v2329
    %v2410 = vpack.c.b16 %v2338, %v2330
    %v2411 = vpack.c.b16 %v2339, %v2331
    %v2412 = vpack.c.b16 %v2340, %v2332
    %v2413 = vpack.c.b16 %v2341, %v2333
    %v2414 = vpack.c.b16 %v2342, %v2334
    %v2415 = vpack.c.b16 %v2343, %v2335
    %v2416 = vpack.c.b16 %v2344, %v2336
    %v2417 = vpack.c.b16 %v2353, %v2345
    %v2418 = vpack.c.b16 %v2354, %v2346
    %v2419 = vpack.c.b16 %v2355, %v2347
    %v2420 = vpack.c.b16 %v2356, %v2348
    %v2421 = vpack.c.b16 %v2357, %v2349
    %v2422 = vpack.c.b16 %v2358, %v2350
    %v2423 = vpack.c.b16 %v2359, %v2351
    %v2424 = vpack.c.b16 %v2360, %v2352
    %2489 = vmatprep.subr.bf16.mxu0 %v2362
    %2490 = vmatpush1.bf16.msra.mxu0 %v2361
    %2491 = vmatprep.subr.bf16.mxu0 %v2370
    %2492 = vmatpush1.bf16.msra.mxu0 %v2369
    %2493 = vmatprep.subr.bf16.mxu0 %v2378
    %2494 = vmatpush1.bf16.msra.mxu0 %v2377
    %2495 = vmatprep.subr.bf16.mxu0 %v2386
    %2496 = vmatpush1.bf16.msra.mxu0 %v2385
    %2497 = vmatprep.subr.bf16.mxu0 %v2394
    %2498 = vmatpush1.bf16.msra.mxu0 %v2393
    %2499 = vmatprep.subr.bf16.mxu0 %v2402
    %2500 = vmatpush1.bf16.msra.mxu0 %v2401
    %2501 = vmatprep.subr.bf16.mxu0 %v2410
    %2502 = vmatpush1.bf16.msra.mxu0 %v2409
    %2503 = vmatprep.subr.bf16.mxu0 %v2418
    %2504 = vmatpush1.bf16.msra.mxu0 %v2417
    %2505 = vmatprep.subr.bf16.mxu0 0
    %2506 = vmatpush1.bf16.msra.mxu0 0
    %2507 = vmatprep.subr.bf16.mxu0 0
    %2508 = vmatpush1.bf16.msra.mxu0 0
    %2509 = vmatprep.subr.bf16.mxu0 0
    %2510 = vmatpush1.bf16.msra.mxu0 0
    %2511 = vmatprep.subr.bf16.mxu0 0
    %2512 = vmatpush1.bf16.msra.mxu0 0
    %2513 = vmatprep.subr.bf16.mxu0 0
    %2514 = vmatpush1.bf16.msra.mxu0 0
    %2515 = vmatprep.subr.bf16.mxu0 0
    %2516 = vmatpush1.bf16.msra.mxu0 0
    %2517 = vmatprep.subr.bf16.mxu0 0
    %2518 = vmatpush1.bf16.msra.mxu0 0
    %2519 = vmatprep.subr.bf16.mxu0 0
    %2520 = vmatpush1.bf16.msra.mxu0 0
    %2521 = vmatprep.mubr.bf16.mxu0 0
    %2522 = vmatmul.mubr.bf16.gmra.mrb[0].mxu0 %v2167
    %v2523 = vpop.f32.mrb[0].mxu0
    %v2524 = vadd.f32 %v2024, %v2523
    %v2525 = vpop.f32.mrb[0].mxu0
    %v2526 = vadd.f32 %v2026, %v2525
    %v2527 = vpop.f32.mrb[0].mxu0
    %v2528 = vpop.f32.mrb[0].mxu0
    %2529 = vdwg.mxu0
    %2530 = vmatprep.subr.bf16.mxu0 %v2364
    %2531 = vmatpush1.bf16.msra.mxu0 %v2363
    %2532 = vmatprep.subr.bf16.mxu0 %v2372
    %2533 = vmatpush1.bf16.msra.mxu0 %v2371
    %2534 = vmatprep.subr.bf16.mxu0 %v2380
    %2535 = vmatpush1.bf16.msra.mxu0 %v2379
    %2536 = vmatprep.subr.bf16.mxu0 %v2388
    %2537 = vmatpush1.bf16.msra.mxu0 %v2387
    %2538 = vmatprep.subr.bf16.mxu0 %v2396
    %2539 = vmatpush1.bf16.msra.mxu0 %v2395
    %2540 = vmatprep.subr.bf16.mxu0 %v2404
    %2541 = vmatpush1.bf16.msra.mxu0 %v2403
    %2542 = vmatprep.subr.bf16.mxu0 %v2412
    %2543 = vmatpush1.bf16.msra.mxu0 %v2411
    %2544 = vmatprep.subr.bf16.mxu0 %v2420
    %2545 = vmatpush1.bf16.msra.mxu0 %v2419
    %2546 = vmatprep.subr.bf16.mxu0 0
    %2547 = vmatpush1.bf16.msra.mxu0 0
    %2548 = vmatprep.subr.bf16.mxu0 0
    %2549 = vmatpush1.bf16.msra.mxu0 0
    %2550 = vmatprep.subr.bf16.mxu0 0
    %2551 = vmatpush1.bf16.msra.mxu0 0
    %2552 = vmatprep.subr.bf16.mxu0 0
    %2553 = vmatpush1.bf16.msra.mxu0 0
    %2554 = vmatprep.subr.bf16.mxu0 0
    %2555 = vmatpush1.bf16.msra.mxu0 0
    %2556 = vmatprep.subr.bf16.mxu0 0
    %2557 = vmatpush1.bf16.msra.mxu0 0
    %2558 = vmatprep.subr.bf16.mxu0 0
    %2559 = vmatpush1.bf16.msra.mxu0 0
    %2560 = vmatprep.subr.bf16.mxu0 0
    %2561 = vmatpush1.bf16.msra.mxu0 0
    %2562 = vmatprep.mubr.bf16.mxu0 0
    %2563 = vmatmul.mubr.bf16.gmra.mrb[0].mxu0 %v2167
    %v2564 = vpop.f32.mrb[0].mxu0
    %v2565 = vadd.f32 %v2065, %v2564
    %v2566 = vpop.f32.mrb[0].mxu0
    %v2567 = vadd.f32 %v2067, %v2566
    %v2568 = vpop.f32.mrb[0].mxu0
    %v2569 = vpop.f32.mrb[0].mxu0
    %2570 = vdwg.mxu0
    %2571 = vmatprep.subr.bf16.mxu0 %v2366
    %2572 = vmatpush1.bf16.msra.mxu0 %v2365
    %2573 = vmatprep.subr.bf16.mxu0 %v2374
    %2574 = vmatpush1.bf16.msra.mxu0 %v2373
    %2575 = vmatprep.subr.bf16.mxu0 %v2382
    %2576 = vmatpush1.bf16.msra.mxu0 %v2381
    %2577 = vmatprep.subr.bf16.mxu0 %v2390
    %2578 = vmatpush1.bf16.msra.mxu0 %v2389
    %2579 = vmatprep.subr.bf16.mxu0 %v2398
    %2580 = vmatpush1.bf16.msra.mxu0 %v2397
    %2581 = vmatprep.subr.bf16.mxu0 %v2406
    %2582 = vmatpush1.bf16.msra.mxu0 %v2405
    %2583 = vmatprep.subr.bf16.mxu0 %v2414
    %2584 = vmatpush1.bf16.msra.mxu0 %v2413
    %2585 = vmatprep.subr.bf16.mxu0 %v2422
    %2586 = vmatpush1.bf16.msra.mxu0 %v2421
    %2587 = vmatprep.subr.bf16.mxu0 0
    %2588 = vmatpush1.bf16.msra.mxu0 0
    %2589 = vmatprep.subr.bf16.mxu0 0
    %2590 = vmatpush1.bf16.msra.mxu0 0
    %2591 = vmatprep.subr.bf16.mxu0 0
    %2592 = vmatpush1.bf16.msra.mxu0 0
    %2593 = vmatprep.subr.bf16.mxu0 0
    %2594 = vmatpush1.bf16.msra.mxu0 0
    %2595 = vmatprep.subr.bf16.mxu0 0
    %2596 = vmatpush1.bf16.msra.mxu0 0
    %2597 = vmatprep.subr.bf16.mxu0 0
    %2598 = vmatpush1.bf16.msra.mxu0 0
    %2599 = vmatprep.subr.bf16.mxu0 0
    %2600 = vmatpush1.bf16.msra.mxu0 0
    %2601 = vmatprep.subr.bf16.mxu0 0
    %2602 = vmatpush1.bf16.msra.mxu0 0
    %2603 = vmatprep.mubr.bf16.mxu0 0
    %2604 = vmatmul.mubr.bf16.gmra.mrb[0].mxu0 %v2167
    %v2605 = vpop.f32.mrb[0].mxu0
    %v2606 = vadd.f32 %v2106, %v2605
    %v2607 = vpop.f32.mrb[0].mxu0
    %v2608 = vadd.f32 %v2108, %v2607
    %v2609 = vpop.f32.mrb[0].mxu0
    %v2610 = vpop.f32.mrb[0].mxu0
    %2611 = vdwg.mxu0
    %2612 = vmatprep.subr.bf16.mxu0 %v2368
    %2613 = vmatpush1.bf16.msra.mxu0 %v2367
    %2614 = vmatprep.subr.bf16.mxu0 %v2376
    %2615 = vmatpush1.bf16.msra.mxu0 %v2375
    %2616 = vmatprep.subr.bf16.mxu0 %v2384
    %2617 = vmatpush1.bf16.msra.mxu0 %v2383
    %2618 = vmatprep.subr.bf16.mxu0 %v2392
    %2619 = vmatpush1.bf16.msra.mxu0 %v2391
    %2620 = vmatprep.subr.bf16.mxu0 %v2400
    %2621 = vmatpush1.bf16.msra.mxu0 %v2399
    %2622 = vmatprep.subr.bf16.mxu0 %v2408
    %2623 = vmatpush1.bf16.msra.mxu0 %v2407
    %2624 = vmatprep.subr.bf16.mxu0 %v2416
    %2625 = vmatpush1.bf16.msra.mxu0 %v2415
    %2626 = vmatprep.subr.bf16.mxu0 %v2424
    %2627 = vmatpush1.bf16.msra.mxu0 %v2423
    %2628 = vmatprep.subr.bf16.mxu0 0
    %2629 = vmatpush1.bf16.msra.mxu0 0
    %2630 = vmatprep.subr.bf16.mxu0 0
    %2631 = vmatpush1.bf16.msra.mxu0 0
    %2632 = vmatprep.subr.bf16.mxu0 0
    %2633 = vmatpush1.bf16.msra.mxu0 0
    %2634 = vmatprep.subr.bf16.mxu0 0
    %2635 = vmatpush1.bf16.msra.mxu0 0
    %2636 = vmatprep.subr.bf16.mxu0 0
    %2637 = vmatpush1.bf16.msra.mxu0 0
    %2638 = vmatprep.subr.bf16.mxu0 0
    %2639 = vmatpush1.bf16.msra.mxu0 0
    %2640 = vmatprep.subr.bf16.mxu0 0
    %2641 = vmatpush1.bf16.msra.mxu0 0
    %2642 = vmatprep.subr.bf16.mxu0 0
    %2643 = vmatpush1.bf16.msra.mxu0 0
    %2644 = vmatprep.mubr.bf16.mxu0 0
    %2645 = vmatmul.mubr.bf16.gmra.mrb[0].mxu0 %v2167
    %v2646 = vpop.f32.mrb[0].mxu0
    %v2647 = vadd.f32 %v2147, %v2646
    %v2648 = vpop.f32.mrb[0].mxu0
    %v2649 = vadd.f32 %v2149, %v2648
    %v2650 = vpop.f32.mrb[0].mxu0
    %v2651 = vpop.f32.mrb[0].mxu0
    %2652 = vdwg.mxu0
    %s2653 = scalar_lea.vmem [#allocation10], 1024
    %v2654 = vld [vmem:[%s2653] sm:$0xff]
    %v2655 = vld [vmem:[%s2653 + $0x8] sm:$0xff]
    %v2656 = vld [vmem:[%s2653 + $0x10] sm:$0xff]
    %v2657 = vld [vmem:[%s2653 + $0x18] sm:$0xff]
    %v2658 = vld [vmem:[%s2653 + $0x20] sm:$0xff]
    %v2659 = vld [vmem:[%s2653 + $0x28] sm:$0xff]
    %v2660 = vld [vmem:[%s2653 + $0x30] sm:$0xff]
    %v2661 = vld [vmem:[%s2653 + $0x38] sm:$0xff]
    %v2662 = vld [vmem:[%s2653 + $0x40] sm:$0xff]
    %v2663 = vld [vmem:[%s2653 + $0x48] sm:$0xff]
    %v2664 = vld [vmem:[%s2653 + $0x50] sm:$0xff]
    %v2665 = vld [vmem:[%s2653 + $0x58] sm:$0xff]
    %v2666 = vld [vmem:[%s2653 + $0x60] sm:$0xff]
    %v2667 = vld [vmem:[%s2653 + $0x68] sm:$0xff]
    %v2668 = vld [vmem:[%s2653 + $0x70] sm:$0xff]
    %v2669 = vld [vmem:[%s2653 + $0x78] sm:$0xff]
    %v2670 = vld [vmem:[%s2653 + $0x80] sm:$0xff]
    %v2671 = vld [vmem:[%s2653 + $0x88] sm:$0xff]
    %v2672 = vld [vmem:[%s2653 + $0x90] sm:$0xff]
    %v2673 = vld [vmem:[%s2653 + $0x98] sm:$0xff]
    %v2674 = vld [vmem:[%s2653 + $0xa0] sm:$0xff]
    %v2675 = vld [vmem:[%s2653 + $0xa8] sm:$0xff]
    %v2676 = vld [vmem:[%s2653 + $0xb0] sm:$0xff]
    %v2677 = vld [vmem:[%s2653 + $0xb8] sm:$0xff]
    %v2678 = vld [vmem:[%s2653 + $0xc0] sm:$0xff]
    %v2679 = vld [vmem:[%s2653 + $0xc8] sm:$0xff]
    %v2680 = vld [vmem:[%s2653 + $0xd0] sm:$0xff]
    %v2681 = vld [vmem:[%s2653 + $0xd8] sm:$0xff]
    %v2682 = vld [vmem:[%s2653 + $0xe0] sm:$0xff]
    %v2683 = vld [vmem:[%s2653 + $0xe8] sm:$0xff]
    %v2684 = vld [vmem:[%s2653 + $0xf0] sm:$0xff]
    %v2685 = vld [vmem:[%s2653 + $0xf8] sm:$0xff]
    %v2686 = vld [vmem:[%s2653 + $0x100] sm:$0xff]
    %v2687 = vld [vmem:[%s2653 + $0x108] sm:$0xff]
    %v2688 = vld [vmem:[%s2653 + $0x110] sm:$0xff]
    %v2689 = vld [vmem:[%s2653 + $0x118] sm:$0xff]
    %v2690 = vld [vmem:[%s2653 + $0x120] sm:$0xff]
    %v2691 = vld [vmem:[%s2653 + $0x128] sm:$0xff]
    %v2692 = vld [vmem:[%s2653 + $0x130] sm:$0xff]
    %v2693 = vld [vmem:[%s2653 + $0x138] sm:$0xff]
    %v2694 = vld [vmem:[%s2653 + $0x140] sm:$0xff]
    %v2695 = vld [vmem:[%s2653 + $0x148] sm:$0xff]
    %v2696 = vld [vmem:[%s2653 + $0x150] sm:$0xff]
    %v2697 = vld [vmem:[%s2653 + $0x158] sm:$0xff]
    %v2698 = vld [vmem:[%s2653 + $0x160] sm:$0xff]
    %v2699 = vld [vmem:[%s2653 + $0x168] sm:$0xff]
    %v2700 = vld [vmem:[%s2653 + $0x170] sm:$0xff]
    %v2701 = vld [vmem:[%s2653 + $0x178] sm:$0xff]
    %v2702 = vld [vmem:[%s2653 + $0x180] sm:$0xff]
    %v2703 = vld [vmem:[%s2653 + $0x188] sm:$0xff]
    %v2704 = vld [vmem:[%s2653 + $0x190] sm:$0xff]
    %v2705 = vld [vmem:[%s2653 + $0x198] sm:$0xff]
    %v2706 = vld [vmem:[%s2653 + $0x1a0] sm:$0xff]
    %v2707 = vld [vmem:[%s2653 + $0x1a8] sm:$0xff]
    %v2708 = vld [vmem:[%s2653 + $0x1b0] sm:$0xff]
    %v2709 = vld [vmem:[%s2653 + $0x1b8] sm:$0xff]
    %v2710 = vld [vmem:[%s2653 + $0x1c0] sm:$0xff]
    %v2711 = vld [vmem:[%s2653 + $0x1c8] sm:$0xff]
    %v2712 = vld [vmem:[%s2653 + $0x1d0] sm:$0xff]
    %v2713 = vld [vmem:[%s2653 + $0x1d8] sm:$0xff]
    %v2714 = vld [vmem:[%s2653 + $0x1e0] sm:$0xff]
    %v2715 = vld [vmem:[%s2653 + $0x1e8] sm:$0xff]
    %v2716 = vld [vmem:[%s2653 + $0x1f0] sm:$0xff]
    %v2717 = vld [vmem:[%s2653 + $0x1f8] sm:$0xff]
    %v2718 = vrot.slane %v1638, 2
    %v2719 = vrot.slane %v1639, 1
    %v2720 = vsel %vm1647, %v2719, %v2718
    %v2721 = vsel %vm1650, %v1640, %v2720
    %v2722 = vrot.slane %v1641, 7
    %v2723 = vsel %vm1653, %v2722, %v2721
    %v2724 = vrot.slane %v1642, 6
    %v2725 = vsel %vm1656, %v2724, %v2723
    %v2726 = vrot.slane %v1643, 5
    %v2727 = vsel %vm1659, %v2726, %v2725
    %v2728 = vrot.slane %v1644, 4
    %v2729 = vsel %vm1662, %v2728, %v2727
    %v2730 = vrot.slane %v1645, 3
    %v2731 = vsel %vm1665, %v2730, %v2729
    %v2732 = vpack.c.b16 %v2731, %v2731
    %v2798 = vunpack.c.l.b16 %v2654
    %v2799 = vunpack.c.h.b16 %v2654
    %v2800 = vunpack.c.l.b16 %v2655
    %v2801 = vunpack.c.h.b16 %v2655
    %v2802 = vunpack.c.l.b16 %v2656
    %v2803 = vunpack.c.h.b16 %v2656
    %v2804 = vunpack.c.l.b16 %v2657
    %v2805 = vunpack.c.h.b16 %v2657
    %v2806 = vunpack.c.l.b16 %v2658
    %v2807 = vunpack.c.h.b16 %v2658
    %v2808 = vunpack.c.l.b16 %v2659
    %v2809 = vunpack.c.h.b16 %v2659
    %v2810 = vunpack.c.l.b16 %v2660
    %v2811 = vunpack.c.h.b16 %v2660
    %v2812 = vunpack.c.l.b16 %v2661
    %v2813 = vunpack.c.h.b16 %v2661
    %v2814 = vunpack.c.l.b16 %v2662
    %v2815 = vunpack.c.h.b16 %v2662
    %v2816 = vunpack.c.l.b16 %v2663
    %v2817 = vunpack.c.h.b16 %v2663
    %v2818 = vunpack.c.l.b16 %v2664
    %v2819 = vunpack.c.h.b16 %v2664
    %v2820 = vunpack.c.l.b16 %v2665
    %v2821 = vunpack.c.h.b16 %v2665
    %v2822 = vunpack.c.l.b16 %v2666
    %v2823 = vunpack.c.h.b16 %v2666
    %v2824 = vunpack.c.l.b16 %v2667
    %v2825 = vunpack.c.h.b16 %v2667
    %v2826 = vunpack.c.l.b16 %v2668
    %v2827 = vunpack.c.h.b16 %v2668
    %v2828 = vunpack.c.l.b16 %v2669
    %v2829 = vunpack.c.h.b16 %v2669
    %v2830 = vunpack.c.l.b16 %v2670
    %v2831 = vunpack.c.h.b16 %v2670
    %v2832 = vunpack.c.l.b16 %v2671
    %v2833 = vunpack.c.h.b16 %v2671
    %v2834 = vunpack.c.l.b16 %v2672
    %v2835 = vunpack.c.h.b16 %v2672
    %v2836 = vunpack.c.l.b16 %v2673
    %v2837 = vunpack.c.h.b16 %v2673
    %v2838 = vunpack.c.l.b16 %v2674
    %v2839 = vunpack.c.h.b16 %v2674
    %v2840 = vunpack.c.l.b16 %v2675
    %v2841 = vunpack.c.h.b16 %v2675
    %v2842 = vunpack.c.l.b16 %v2676
    %v2843 = vunpack.c.h.b16 %v2676
    %v2844 = vunpack.c.l.b16 %v2677
    %v2845 = vunpack.c.h.b16 %v2677
    %v2846 = vunpack.c.l.b16 %v2678
    %v2847 = vunpack.c.h.b16 %v2678
    %v2848 = vunpack.c.l.b16 %v2679
    %v2849 = vunpack.c.h.b16 %v2679
    %v2850 = vunpack.c.l.b16 %v2680
    %v2851 = vunpack.c.h.b16 %v2680
    %v2852 = vunpack.c.l.b16 %v2681
    %v2853 = vunpack.c.h.b16 %v2681
    %v2854 = vunpack.c.l.b16 %v2682
    %v2855 = vunpack.c.h.b16 %v2682
    %v2856 = vunpack.c.l.b16 %v2683
    %v2857 = vunpack.c.h.b16 %v2683
    %v2858 = vunpack.c.l.b16 %v2684
    %v2859 = vunpack.c.h.b16 %v2684
    %v2860 = vunpack.c.l.b16 %v2685
    %v2861 = vunpack.c.h.b16 %v2685
    %v2862 = vunpack.c.l.b16 %v2686
    %v2863 = vunpack.c.h.b16 %v2686
    %v2864 = vunpack.c.l.b16 %v2687
    %v2865 = vunpack.c.h.b16 %v2687
    %v2866 = vunpack.c.l.b16 %v2688
    %v2867 = vunpack.c.h.b16 %v2688
    %v2868 = vunpack.c.l.b16 %v2689
    %v2869 = vunpack.c.h.b16 %v2689
    %v2870 = vunpack.c.l.b16 %v2690
    %v2871 = vunpack.c.h.b16 %v2690
    %v2872 = vunpack.c.l.b16 %v2691
    %v2873 = vunpack.c.h.b16 %v2691
    %v2874 = vunpack.c.l.b16 %v2692
    %v2875 = vunpack.c.h.b16 %v2692
    %v2876 = vunpack.c.l.b16 %v2693
    %v2877 = vunpack.c.h.b16 %v2693
    %v2878 = vunpack.c.l.b16 %v2694
    %v2879 = vunpack.c.h.b16 %v2694
    %v2880 = vunpack.c.l.b16 %v2695
    %v2881 = vunpack.c.h.b16 %v2695
    %v2882 = vunpack.c.l.b16 %v2696
    %v2883 = vunpack.c.h.b16 %v2696
    %v2884 = vunpack.c.l.b16 %v2697
    %v2885 = vunpack.c.h.b16 %v2697
    %v2886 = vunpack.c.l.b16 %v2698
    %v2887 = vunpack.c.h.b16 %v2698
    %v2888 = vunpack.c.l.b16 %v2699
    %v2889 = vunpack.c.h.b16 %v2699
    %v2890 = vunpack.c.l.b16 %v2700
    %v2891 = vunpack.c.h.b16 %v2700
    %v2892 = vunpack.c.l.b16 %v2701
    %v2893 = vunpack.c.h.b16 %v2701
    %v2894 = vunpack.c.l.b16 %v2702
    %v2895 = vunpack.c.h.b16 %v2702
    %v2896 = vunpack.c.l.b16 %v2703
    %v2897 = vunpack.c.h.b16 %v2703
    %v2898 = vunpack.c.l.b16 %v2704
    %v2899 = vunpack.c.h.b16 %v2704
    %v2900 = vunpack.c.l.b16 %v2705
    %v2901 = vunpack.c.h.b16 %v2705
    %v2902 = vunpack.c.l.b16 %v2706
    %v2903 = vunpack.c.h.b16 %v2706
    %v2904 = vunpack.c.l.b16 %v2707
    %v2905 = vunpack.c.h.b16 %v2707
    %v2906 = vunpack.c.l.b16 %v2708
    %v2907 = vunpack.c.h.b16 %v2708
    %v2908 = vunpack.c.l.b16 %v2709
    %v2909 = vunpack.c.h.b16 %v2709
    %v2910 = vunpack.c.l.b16 %v2710
    %v2911 = vunpack.c.h.b16 %v2710
    %v2912 = vunpack.c.l.b16 %v2711
    %v2913 = vunpack.c.h.b16 %v2711
    %v2914 = vunpack.c.l.b16 %v2712
    %v2915 = vunpack.c.h.b16 %v2712
    %v2916 = vunpack.c.l.b16 %v2713
    %v2917 = vunpack.c.h.b16 %v2713
    %v2918 = vunpack.c.l.b16 %v2714
    %v2919 = vunpack.c.h.b16 %v2714
    %v2920 = vunpack.c.l.b16 %v2715
    %v2921 = vunpack.c.h.b16 %v2715
    %v2922 = vunpack.c.l.b16 %v2716
    %v2923 = vunpack.c.h.b16 %v2716
    %v2924 = vunpack.c.l.b16 %v2717
    %v2925 = vunpack.c.h.b16 %v2717
    %v2926 = vpack.c.b16 %v2806, %v2798
    %v2927 = vpack.c.b16 %v2807, %v2799
    %v2928 = vpack.c.b16 %v2808, %v2800
    %v2929 = vpack.c.b16 %v2809, %v2801
    %v2930 = vpack.c.b16 %v2810, %v2802
    %v2931 = vpack.c.b16 %v2811, %v2803
    %v2932 = vpack.c.b16 %v2812, %v2804
    %v2933 = vpack.c.b16 %v2813, %v2805
    %v2934 = vpack.c.b16 %v2822, %v2814
    %v2935 = vpack.c.b16 %v2823, %v2815
    %v2936 = vpack.c.b16 %v2824, %v2816
    %v2937 = vpack.c.b16 %v2825, %v2817
    %v2938 = vpack.c.b16 %v2826, %v2818
    %v2939 = vpack.c.b16 %v2827, %v2819
    %v2940 = vpack.c.b16 %v2828, %v2820
    %v2941 = vpack.c.b16 %v2829, %v2821
    %v2942 = vpack.c.b16 %v2838, %v2830
    %v2943 = vpack.c.b16 %v2839, %v2831
    %v2944 = vpack.c.b16 %v2840, %v2832
    %v2945 = vpack.c.b16 %v2841, %v2833
    %v2946 = vpack.c.b16 %v2842, %v2834
    %v2947 = vpack.c.b16 %v2843, %v2835
    %v2948 = vpack.c.b16 %v2844, %v2836
    %v2949 = vpack.c.b16 %v2845, %v2837
    %v2950 = vpack.c.b16 %v2854, %v2846
    %v2951 = vpack.c.b16 %v2855, %v2847
    %v2952 = vpack.c.b16 %v2856, %v2848
    %v2953 = vpack.c.b16 %v2857, %v2849
    %v2954 = vpack.c.b16 %v2858, %v2850
    %v2955 = vpack.c.b16 %v2859, %v2851
    %v2956 = vpack.c.b16 %v2860, %v2852
    %v2957 = vpack.c.b16 %v2861, %v2853
    %v2958 = vpack.c.b16 %v2870, %v2862
    %v2959 = vpack.c.b16 %v2871, %v2863
    %v2960 = vpack.c.b16 %v2872, %v2864
    %v2961 = vpack.c.b16 %v2873, %v2865
    %v2962 = vpack.c.b16 %v2874, %v2866
    %v2963 = vpack.c.b16 %v2875, %v2867
    %v2964 = vpack.c.b16 %v2876, %v2868
    %v2965 = vpack.c.b16 %v2877, %v2869
    %v2966 = vpack.c.b16 %v2886, %v2878
    %v2967 = vpack.c.b16 %v2887, %v2879
    %v2968 = vpack.c.b16 %v2888, %v2880
    %v2969 = vpack.c.b16 %v2889, %v2881
    %v2970 = vpack.c.b16 %v2890, %v2882
    %v2971 = vpack.c.b16 %v2891, %v2883
    %v2972 = vpack.c.b16 %v2892, %v2884
    %v2973 = vpack.c.b16 %v2893, %v2885
    %v2974 = vpack.c.b16 %v2902, %v2894
    %v2975 = vpack.c.b16 %v2903, %v2895
    %v2976 = vpack.c.b16 %v2904, %v2896
    %v2977 = vpack.c.b16 %v2905, %v2897
    %v2978 = vpack.c.b16 %v2906, %v2898
    %v2979 = vpack.c.b16 %v2907, %v2899
    %v2980 = vpack.c.b16 %v2908, %v2900
    %v2981 = vpack.c.b16 %v2909, %v2901
    %v2982 = vpack.c.b16 %v2918, %v2910
    %v2983 = vpack.c.b16 %v2919, %v2911
    %v2984 = vpack.c.b16 %v2920, %v2912
    %v2985 = vpack.c.b16 %v2921, %v2913
    %v2986 = vpack.c.b16 %v2922, %v2914
    %v2987 = vpack.c.b16 %v2923, %v2915
    %v2988 = vpack.c.b16 %v2924, %v2916
    %v2989 = vpack.c.b16 %v2925, %v2917
    %3054 = vmatprep.subr.bf16.mxu0 %v2927
    %3055 = vmatpush1.bf16.msra.mxu0 %v2926
    %3056 = vmatprep.subr.bf16.mxu0 %v2935
    %3057 = vmatpush1.bf16.msra.mxu0 %v2934
    %3058 = vmatprep.subr.bf16.mxu0 %v2943
    %3059 = vmatpush1.bf16.msra.mxu0 %v2942
    %3060 = vmatprep.subr.bf16.mxu0 %v2951
    %3061 = vmatpush1.bf16.msra.mxu0 %v2950
    %3062 = vmatprep.subr.bf16.mxu0 %v2959
    %3063 = vmatpush1.bf16.msra.mxu0 %v2958
    %3064 = vmatprep.subr.bf16.mxu0 %v2967
    %3065 = vmatpush1.bf16.msra.mxu0 %v2966
    %3066 = vmatprep.subr.bf16.mxu0 %v2975
    %3067 = vmatpush1.bf16.msra.mxu0 %v2974
    %3068 = vmatprep.subr.bf16.mxu0 %v2983
    %3069 = vmatpush1.bf16.msra.mxu0 %v2982
    %3070 = vmatprep.subr.bf16.mxu0 0
    %3071 = vmatpush1.bf16.msra.mxu0 0
    %3072 = vmatprep.subr.bf16.mxu0 0
    %3073 = vmatpush1.bf16.msra.mxu0 0
    %3074 = vmatprep.subr.bf16.mxu0 0
    %3075 = vmatpush1.bf16.msra.mxu0 0
    %3076 = vmatprep.subr.bf16.mxu0 0
    %3077 = vmatpush1.bf16.msra.mxu0 0
    %3078 = vmatprep.subr.bf16.mxu0 0
    %3079 = vmatpush1.bf16.msra.mxu0 0
    %3080 = vmatprep.subr.bf16.mxu0 0
    %3081 = vmatpush1.bf16.msra.mxu0 0
    %3082 = vmatprep.subr.bf16.mxu0 0
    %3083 = vmatpush1.bf16.msra.mxu0 0
    %3084 = vmatprep.subr.bf16.mxu0 0
    %3085 = vmatpush1.bf16.msra.mxu0 0
    %3086 = vmatprep.mubr.bf16.mxu0 0
    %3087 = vmatmul.mubr.bf16.gmra.mrb[0].mxu0 %v2732
    %v3088 = vpop.f32.mrb[0].mxu0
    %v3089 = vadd.f32 0.0, %v3088
    %v3090 = vpop.f32.mrb[0].mxu0
    %v3091 = vadd.f32 0.0, %v3090
    %v3092 = vpop.f32.mrb[0].mxu0
    %v3093 = vpop.f32.mrb[0].mxu0
    %3094 = vdwg.mxu0
    %3095 = vmatprep.subr.bf16.mxu0 %v2929
    %3096 = vmatpush1.bf16.msra.mxu0 %v2928
    %3097 = vmatprep.subr.bf16.mxu0 %v2937
    %3098 = vmatpush1.bf16.msra.mxu0 %v2936
    %3099 = vmatprep.subr.bf16.mxu0 %v2945
    %3100 = vmatpush1.bf16.msra.mxu0 %v2944
    %3101 = vmatprep.subr.bf16.mxu0 %v2953
    %3102 = vmatpush1.bf16.msra.mxu0 %v2952
    %3103 = vmatprep.subr.bf16.mxu0 %v2961
    %3104 = vmatpush1.bf16.msra.mxu0 %v2960
    %3105 = vmatprep.subr.bf16.mxu0 %v2969
    %3106 = vmatpush1.bf16.msra.mxu0 %v2968
    %3107 = vmatprep.subr.bf16.mxu0 %v2977
    %3108 = vmatpush1.bf16.msra.mxu0 %v2976
    %3109 = vmatprep.subr.bf16.mxu0 %v2985
    %3110 = vmatpush1.bf16.msra.mxu0 %v2984
    %3111 = vmatprep.subr.bf16.mxu0 0
    %3112 = vmatpush1.bf16.msra.mxu0 0
    %3113 = vmatprep.subr.bf16.mxu0 0
    %3114 = vmatpush1.bf16.msra.mxu0 0
    %3115 = vmatprep.subr.bf16.mxu0 0
    %3116 = vmatpush1.bf16.msra.mxu0 0
    %3117 = vmatprep.subr.bf16.mxu0 0
    %3118 = vmatpush1.bf16.msra.mxu0 0
    %3119 = vmatprep.subr.bf16.mxu0 0
    %3120 = vmatpush1.bf16.msra.mxu0 0
    %3121 = vmatprep.subr.bf16.mxu0 0
    %3122 = vmatpush1.bf16.msra.mxu0 0
    %3123 = vmatprep.subr.bf16.mxu0 0
    %3124 = vmatpush1.bf16.msra.mxu0 0
    %3125 = vmatprep.subr.bf16.mxu0 0
    %3126 = vmatpush1.bf16.msra.mxu0 0
    %3127 = vmatprep.mubr.bf16.mxu0 0
    %3128 = vmatmul.mubr.bf16.gmra.mrb[0].mxu0 %v2732
    %v3129 = vpop.f32.mrb[0].mxu0
    %v3130 = vadd.f32 0.0, %v3129
    %v3131 = vpop.f32.mrb[0].mxu0
    %v3132 = vadd.f32 0.0, %v3131
    %v3133 = vpop.f32.mrb[0].mxu0
    %v3134 = vpop.f32.mrb[0].mxu0
    %3135 = vdwg.mxu0
    %3136 = vmatprep.subr.bf16.mxu0 %v2931
    %3137 = vmatpush1.bf16.msra.mxu0 %v2930
    %3138 = vmatprep.subr.bf16.mxu0 %v2939
    %3139 = vmatpush1.bf16.msra.mxu0 %v2938
    %3140 = vmatprep.subr.bf16.mxu0 %v2947
    %3141 = vmatpush1.bf16.msra.mxu0 %v2946
    %3142 = vmatprep.subr.bf16.mxu0 %v2955
    %3143 = vmatpush1.bf16.msra.mxu0 %v2954
    %3144 = vmatprep.subr.bf16.mxu0 %v2963
    %3145 = vmatpush1.bf16.msra.mxu0 %v2962
    %3146 = vmatprep.subr.bf16.mxu0 %v2971
    %3147 = vmatpush1.bf16.msra.mxu0 %v2970
    %3148 = vmatprep.subr.bf16.mxu0 %v2979
    %3149 = vmatpush1.bf16.msra.mxu0 %v2978
    %3150 = vmatprep.subr.bf16.mxu0 %v2987
    %3151 = vmatpush1.bf16.msra.mxu0 %v2986
    %3152 = vmatprep.subr.bf16.mxu0 0
    %3153 = vmatpush1.bf16.msra.mxu0 0
    %3154 = vmatprep.subr.bf16.mxu0 0
    %3155 = vmatpush1.bf16.msra.mxu0 0
    %3156 = vmatprep.subr.bf16.mxu0 0
    %3157 = vmatpush1.bf16.msra.mxu0 0
    %3158 = vmatprep.subr.bf16.mxu0 0
    %3159 = vmatpush1.bf16.msra.mxu0 0
    %3160 = vmatprep.subr.bf16.mxu0 0
    %3161 = vmatpush1.bf16.msra.mxu0 0
    %3162 = vmatprep.subr.bf16.mxu0 0
    %3163 = vmatpush1.bf16.msra.mxu0 0
    %3164 = vmatprep.subr.bf16.mxu0 0
    %3165 = vmatpush1.bf16.msra.mxu0 0
    %3166 = vmatprep.subr.bf16.mxu0 0
    %3167 = vmatpush1.bf16.msra.mxu0 0
    %3168 = vmatprep.mubr.bf16.mxu0 0
    %3169 = vmatmul.mubr.bf16.gmra.mrb[0].mxu0 %v2732
    %v3170 = vpop.f32.mrb[0].mxu0
    %v3171 = vadd.f32 0.0, %v3170
    %v3172 = vpop.f32.mrb[0].mxu0
    %v3173 = vadd.f32 0.0, %v3172
    %v3174 = vpop.f32.mrb[0].mxu0
    %v3175 = vpop.f32.mrb[0].mxu0
    %3176 = vdwg.mxu0
    %3177 = vmatprep.subr.bf16.mxu0 %v2933
    %3178 = vmatpush1.bf16.msra.mxu0 %v2932
    %3179 = vmatprep.subr.bf16.mxu0 %v2941
    %3180 = vmatpush1.bf16.msra.mxu0 %v2940
    %3181 = vmatprep.subr.bf16.mxu0 %v2949
    %3182 = vmatpush1.bf16.msra.mxu0 %v2948
    %3183 = vmatprep.subr.bf16.mxu0 %v2957
    %3184 = vmatpush1.bf16.msra.mxu0 %v2956
    %3185 = vmatprep.subr.bf16.mxu0 %v2965
    %3186 = vmatpush1.bf16.msra.mxu0 %v2964
    %3187 = vmatprep.subr.bf16.mxu0 %v2973
    %3188 = vmatpush1.bf16.msra.mxu0 %v2972
    %3189 = vmatprep.subr.bf16.mxu0 %v2981
    %3190 = vmatpush1.bf16.msra.mxu0 %v2980
    %3191 = vmatprep.subr.bf16.mxu0 %v2989
    %3192 = vmatpush1.bf16.msra.mxu0 %v2988
    %3193 = vmatprep.subr.bf16.mxu0 0
    %3194 = vmatpush1.bf16.msra.mxu0 0
    %3195 = vmatprep.subr.bf16.mxu0 0
    %3196 = vmatpush1.bf16.msra.mxu0 0
    %3197 = vmatprep.subr.bf16.mxu0 0
    %3198 = vmatpush1.bf16.msra.mxu0 0
    %3199 = vmatprep.subr.bf16.mxu0 0
    %3200 = vmatpush1.bf16.msra.mxu0 0
    %3201 = vmatprep.subr.bf16.mxu0 0
    %3202 = vmatpush1.bf16.msra.mxu0 0
    %3203 = vmatprep.subr.bf16.mxu0 0
    %3204 = vmatpush1.bf16.msra.mxu0 0
    %3205 = vmatprep.subr.bf16.mxu0 0
    %3206 = vmatpush1.bf16.msra.mxu0 0
    %3207 = vmatprep.subr.bf16.mxu0 0
    %3208 = vmatpush1.bf16.msra.mxu0 0
    %3209 = vmatprep.mubr.bf16.mxu0 0
    %3210 = vmatmul.mubr.bf16.gmra.mrb[0].mxu0 %v2732
    %v3211 = vpop.f32.mrb[0].mxu0
    %v3212 = vadd.f32 0.0, %v3211
    %v3213 = vpop.f32.mrb[0].mxu0
    %v3214 = vadd.f32 0.0, %v3213
    %v3215 = vpop.f32.mrb[0].mxu0
    %v3216 = vpop.f32.mrb[0].mxu0
    %3217 = vdwg.mxu0
    %v3218 = vadd.f32 %v2524, %v3089
    %v3219 = vadd.f32 %v2526, %v3091
    %v3220 = vadd.f32 %v2565, %v3130
    %v3221 = vadd.f32 %v2567, %v3132
    %v3222 = vadd.f32 %v2606, %v3171
    %v3223 = vadd.f32 %v2608, %v3173
    %v3224 = vadd.f32 %v2647, %v3212
    %v3225 = vadd.f32 %v2649, %v3214
    %s3226 = scalar_lea.vmem [#allocation10], 1536
    %v3227 = vld [vmem:[%s3226] sm:$0xff]
    %v3228 = vld [vmem:[%s3226 + $0x8] sm:$0xff]
    %v3229 = vld [vmem:[%s3226 + $0x10] sm:$0xff]
    %v3230 = vld [vmem:[%s3226 + $0x18] sm:$0xff]
    %v3231 = vld [vmem:[%s3226 + $0x20] sm:$0xff]
    %v3232 = vld [vmem:[%s3226 + $0x28] sm:$0xff]
    %v3233 = vld [vmem:[%s3226 + $0x30] sm:$0xff]
    %v3234 = vld [vmem:[%s3226 + $0x38] sm:$0xff]
    %v3235 = vld [vmem:[%s3226 + $0x40] sm:$0xff]
    %v3236 = vld [vmem:[%s3226 + $0x48] sm:$0xff]
    %v3237 = vld [vmem:[%s3226 + $0x50] sm:$0xff]
    %v3238 = vld [vmem:[%s3226 + $0x58] sm:$0xff]
    %v3239 = vld [vmem:[%s3226 + $0x60] sm:$0xff]
    %v3240 = vld [vmem:[%s3226 + $0x68] sm:$0xff]
    %v3241 = vld [vmem:[%s3226 + $0x70] sm:$0xff]
    %v3242 = vld [vmem:[%s3226 + $0x78] sm:$0xff]
    %v3243 = vld [vmem:[%s3226 + $0x80] sm:$0xff]
    %v3244 = vld [vmem:[%s3226 + $0x88] sm:$0xff]
    %v3245 = vld [vmem:[%s3226 + $0x90] sm:$0xff]
    %v3246 = vld [vmem:[%s3226 + $0x98] sm:$0xff]
    %v3247 = vld [vmem:[%s3226 + $0xa0] sm:$0xff]
    %v3248 = vld [vmem:[%s3226 + $0xa8] sm:$0xff]
    %v3249 = vld [vmem:[%s3226 + $0xb0] sm:$0xff]
    %v3250 = vld [vmem:[%s3226 + $0xb8] sm:$0xff]
    %v3251 = vld [vmem:[%s3226 + $0xc0] sm:$0xff]
    %v3252 = vld [vmem:[%s3226 + $0xc8] sm:$0xff]
    %v3253 = vld [vmem:[%s3226 + $0xd0] sm:$0xff]
    %v3254 = vld [vmem:[%s3226 + $0xd8] sm:$0xff]
    %v3255 = vld [vmem:[%s3226 + $0xe0] sm:$0xff]
    %v3256 = vld [vmem:[%s3226 + $0xe8] sm:$0xff]
    %v3257 = vld [vmem:[%s3226 + $0xf0] sm:$0xff]
    %v3258 = vld [vmem:[%s3226 + $0xf8] sm:$0xff]
    %v3259 = vld [vmem:[%s3226 + $0x100] sm:$0xff]
    %v3260 = vld [vmem:[%s3226 + $0x108] sm:$0xff]
    %v3261 = vld [vmem:[%s3226 + $0x110] sm:$0xff]
    %v3262 = vld [vmem:[%s3226 + $0x118] sm:$0xff]
    %v3263 = vld [vmem:[%s3226 + $0x120] sm:$0xff]
    %v3264 = vld [vmem:[%s3226 + $0x128] sm:$0xff]
    %v3265 = vld [vmem:[%s3226 + $0x130] sm:$0xff]
    %v3266 = vld [vmem:[%s3226 + $0x138] sm:$0xff]
    %v3267 = vld [vmem:[%s3226 + $0x140] sm:$0xff]
    %v3268 = vld [vmem:[%s3226 + $0x148] sm:$0xff]
    %v3269 = vld [vmem:[%s3226 + $0x150] sm:$0xff]
    %v3270 = vld [vmem:[%s3226 + $0x158] sm:$0xff]
    %v3271 = vld [vmem:[%s3226 + $0x160] sm:$0xff]
    %v3272 = vld [vmem:[%s3226 + $0x168] sm:$0xff]
    %v3273 = vld [vmem:[%s3226 + $0x170] sm:$0xff]
    %v3274 = vld [vmem:[%s3226 + $0x178] sm:$0xff]
    %v3275 = vld [vmem:[%s3226 + $0x180] sm:$0xff]
    %v3276 = vld [vmem:[%s3226 + $0x188] sm:$0xff]
    %v3277 = vld [vmem:[%s3226 + $0x190] sm:$0xff]
    %v3278 = vld [vmem:[%s3226 + $0x198] sm:$0xff]
    %v3279 = vld [vmem:[%s3226 + $0x1a0] sm:$0xff]
    %v3280 = vld [vmem:[%s3226 + $0x1a8] sm:$0xff]
    %v3281 = vld [vmem:[%s3226 + $0x1b0] sm:$0xff]
    %v3282 = vld [vmem:[%s3226 + $0x1b8] sm:$0xff]
    %v3283 = vld [vmem:[%s3226 + $0x1c0] sm:$0xff]
    %v3284 = vld [vmem:[%s3226 + $0x1c8] sm:$0xff]
    %v3285 = vld [vmem:[%s3226 + $0x1d0] sm:$0xff]
    %v3286 = vld [vmem:[%s3226 + $0x1d8] sm:$0xff]
    %v3287 = vld [vmem:[%s3226 + $0x1e0] sm:$0xff]
    %v3288 = vld [vmem:[%s3226 + $0x1e8] sm:$0xff]
    %v3289 = vld [vmem:[%s3226 + $0x1f0] sm:$0xff]
    %v3290 = vld [vmem:[%s3226 + $0x1f8] sm:$0xff]
    %v3291 = vrot.slane %v1638, 3
    %v3292 = vrot.slane %v1639, 2
    %v3293 = vsel %vm1647, %v3292, %v3291
    %v3294 = vrot.slane %v1640, 1
    %v3295 = vsel %vm1650, %v3294, %v3293
    %v3296 = vsel %vm1653, %v1641, %v3295
    %v3297 = vrot.slane %v1642, 7
    %v3298 = vsel %vm1656, %v3297, %v3296
    %v3299 = vrot.slane %v1643, 6
    %v3300 = vsel %vm1659, %v3299, %v3298
    %v3301 = vrot.slane %v1644, 5
    %v3302 = vsel %vm1662, %v3301, %v3300
    %v3303 = vrot.slane %v1645, 4
    %v3304 = vsel %vm1665, %v3303, %v3302
    %v3305 = vpack.c.b16 %v3304, %v3304
    %v3371 = vunpack.c.l.b16 %v3227
    %v3372 = vunpack.c.h.b16 %v3227
    %v3373 = vunpack.c.l.b16 %v3228
    %v3374 = vunpack.c.h.b16 %v3228
    %v3375 = vunpack.c.l.b16 %v3229
    %v3376 = vunpack.c.h.b16 %v3229
    %v3377 = vunpack.c.l.b16 %v3230
    %v3378 = vunpack.c.h.b16 %v3230
    %v3379 = vunpack.c.l.b16 %v3231
    %v3380 = vunpack.c.h.b16 %v3231
    %v3381 = vunpack.c.l.b16 %v3232
    %v3382 = vunpack.c.h.b16 %v3232
    %v3383 = vunpack.c.l.b16 %v3233
    %v3384 = vunpack.c.h.b16 %v3233
    %v3385 = vunpack.c.l.b16 %v3234
    %v3386 = vunpack.c.h.b16 %v3234
    %v3387 = vunpack.c.l.b16 %v3235
    %v3388 = vunpack.c.h.b16 %v3235
    %v3389 = vunpack.c.l.b16 %v3236
    %v3390 = vunpack.c.h.b16 %v3236
    %v3391 = vunpack.c.l.b16 %v3237
    %v3392 = vunpack.c.h.b16 %v3237
    %v3393 = vunpack.c.l.b16 %v3238
    %v3394 = vunpack.c.h.b16 %v3238
    %v3395 = vunpack.c.l.b16 %v3239
    %v3396 = vunpack.c.h.b16 %v3239
    %v3397 = vunpack.c.l.b16 %v3240
    %v3398 = vunpack.c.h.b16 %v3240
    %v3399 = vunpack.c.l.b16 %v3241
    %v3400 = vunpack.c.h.b16 %v3241
    %v3401 = vunpack.c.l.b16 %v3242
    %v3402 = vunpack.c.h.b16 %v3242
    %v3403 = vunpack.c.l.b16 %v3243
    %v3404 = vunpack.c.h.b16 %v3243
    %v3405 = vunpack.c.l.b16 %v3244
    %v3406 = vunpack.c.h.b16 %v3244
    %v3407 = vunpack.c.l.b16 %v3245
    %v3408 = vunpack.c.h.b16 %v3245
    %v3409 = vunpack.c.l.b16 %v3246
    %v3410 = vunpack.c.h.b16 %v3246
    %v3411 = vunpack.c.l.b16 %v3247
    %v3412 = vunpack.c.h.b16 %v3247
    %v3413 = vunpack.c.l.b16 %v3248
    %v3414 = vunpack.c.h.b16 %v3248
    %v3415 = vunpack.c.l.b16 %v3249
    %v3416 = vunpack.c.h.b16 %v3249
    %v3417 = vunpack.c.l.b16 %v3250
    %v3418 = vunpack.c.h.b16 %v3250
    %v3419 = vunpack.c.l.b16 %v3251
    %v3420 = vunpack.c.h.b16 %v3251
    %v3421 = vunpack.c.l.b16 %v3252
    %v3422 = vunpack.c.h.b16 %v3252
    %v3423 = vunpack.c.l.b16 %v3253
    %v3424 = vunpack.c.h.b16 %v3253
    %v3425 = vunpack.c.l.b16 %v3254
    %v3426 = vunpack.c.h.b16 %v3254
    %v3427 = vunpack.c.l.b16 %v3255
    %v3428 = vunpack.c.h.b16 %v3255
    %v3429 = vunpack.c.l.b16 %v3256
    %v3430 = vunpack.c.h.b16 %v3256
    %v3431 = vunpack.c.l.b16 %v3257
    %v3432 = vunpack.c.h.b16 %v3257
    %v3433 = vunpack.c.l.b16 %v3258
    %v3434 = vunpack.c.h.b16 %v3258
    %v3435 = vunpack.c.l.b16 %v3259
    %v3436 = vunpack.c.h.b16 %v3259
    %v3437 = vunpack.c.l.b16 %v3260
    %v3438 = vunpack.c.h.b16 %v3260
    %v3439 = vunpack.c.l.b16 %v3261
    %v3440 = vunpack.c.h.b16 %v3261
    %v3441 = vunpack.c.l.b16 %v3262
    %v3442 = vunpack.c.h.b16 %v3262
    %v3443 = vunpack.c.l.b16 %v3263
    %v3444 = vunpack.c.h.b16 %v3263
    %v3445 = vunpack.c.l.b16 %v3264
    %v3446 = vunpack.c.h.b16 %v3264
    %v3447 = vunpack.c.l.b16 %v3265
    %v3448 = vunpack.c.h.b16 %v3265
    %v3449 = vunpack.c.l.b16 %v3266
    %v3450 = vunpack.c.h.b16 %v3266
    %v3451 = vunpack.c.l.b16 %v3267
    %v3452 = vunpack.c.h.b16 %v3267
    %v3453 = vunpack.c.l.b16 %v3268
    %v3454 = vunpack.c.h.b16 %v3268
    %v3455 = vunpack.c.l.b16 %v3269
    %v3456 = vunpack.c.h.b16 %v3269
    %v3457 = vunpack.c.l.b16 %v3270
    %v3458 = vunpack.c.h.b16 %v3270
    %v3459 = vunpack.c.l.b16 %v3271
    %v3460 = vunpack.c.h.b16 %v3271
    %v3461 = vunpack.c.l.b16 %v3272
    %v3462 = vunpack.c.h.b16 %v3272
    %v3463 = vunpack.c.l.b16 %v3273
    %v3464 = vunpack.c.h.b16 %v3273
    %v3465 = vunpack.c.l.b16 %v3274
    %v3466 = vunpack.c.h.b16 %v3274
    %v3467 = vunpack.c.l.b16 %v3275
    %v3468 = vunpack.c.h.b16 %v3275
    %v3469 = vunpack.c.l.b16 %v3276
    %v3470 = vunpack.c.h.b16 %v3276
    %v3471 = vunpack.c.l.b16 %v3277
    %v3472 = vunpack.c.h.b16 %v3277
    %v3473 = vunpack.c.l.b16 %v3278
    %v3474 = vunpack.c.h.b16 %v3278
    %v3475 = vunpack.c.l.b16 %v3279
    %v3476 = vunpack.c.h.b16 %v3279
    %v3477 = vunpack.c.l.b16 %v3280
    %v3478 = vunpack.c.h.b16 %v3280
    %v3479 = vunpack.c.l.b16 %v3281
    %v3480 = vunpack.c.h.b16 %v3281
    %v3481 = vunpack.c.l.b16 %v3282
    %v3482 = vunpack.c.h.b16 %v3282
    %v3483 = vunpack.c.l.b16 %v3283
    %v3484 = vunpack.c.h.b16 %v3283
    %v3485 = vunpack.c.l.b16 %v3284
    %v3486 = vunpack.c.h.b16 %v3284
    %v3487 = vunpack.c.l.b16 %v3285
    %v3488 = vunpack.c.h.b16 %v3285
    %v3489 = vunpack.c.l.b16 %v3286
    %v3490 = vunpack.c.h.b16 %v3286
    %v3491 = vunpack.c.l.b16 %v3287
    %v3492 = vunpack.c.h.b16 %v3287
    %v3493 = vunpack.c.l.b16 %v3288
    %v3494 = vunpack.c.h.b16 %v3288
    %v3495 = vunpack.c.l.b16 %v3289
    %v3496 = vunpack.c.h.b16 %v3289
    %v3497 = vunpack.c.l.b16 %v3290
    %v3498 = vunpack.c.h.b16 %v3290
    %v3499 = vpack.c.b16 %v3379, %v3371
    %v3500 = vpack.c.b16 %v3380, %v3372
    %v3501 = vpack.c.b16 %v3381, %v3373
    %v3502 = vpack.c.b16 %v3382, %v3374
    %v3503 = vpack.c.b16 %v3383, %v3375
    %v3504 = vpack.c.b16 %v3384, %v3376
    %v3505 = vpack.c.b16 %v3385, %v3377
    %v3506 = vpack.c.b16 %v3386, %v3378
    %v3507 = vpack.c.b16 %v3395, %v3387
    %v3508 = vpack.c.b16 %v3396, %v3388
    %v3509 = vpack.c.b16 %v3397, %v3389
    %v3510 = vpack.c.b16 %v3398, %v3390
    %v3511 = vpack.c.b16 %v3399, %v3391
    %v3512 = vpack.c.b16 %v3400, %v3392
    %v3513 = vpack.c.b16 %v3401, %v3393
    %v3514 = vpack.c.b16 %v3402, %v3394
    %v3515 = vpack.c.b16 %v3411, %v3403
    %v3516 = vpack.c.b16 %v3412, %v3404
    %v3517 = vpack.c.b16 %v3413, %v3405
    %v3518 = vpack.c.b16 %v3414, %v3406
    %v3519 = vpack.c.b16 %v3415, %v3407
    %v3520 = vpack.c.b16 %v3416, %v3408
    %v3521 = vpack.c.b16 %v3417, %v3409
    %v3522 = vpack.c.b16 %v3418, %v3410
    %v3523 = vpack.c.b16 %v3427, %v3419
    %v3524 = vpack.c.b16 %v3428, %v3420
    %v3525 = vpack.c.b16 %v3429, %v3421
    %v3526 = vpack.c.b16 %v3430, %v3422
    %v3527 = vpack.c.b16 %v3431, %v3423
    %v3528 = vpack.c.b16 %v3432, %v3424
    %v3529 = vpack.c.b16 %v3433, %v3425
    %v3530 = vpack.c.b16 %v3434, %v3426
    %v3531 = vpack.c.b16 %v3443, %v3435
    %v3532 = vpack.c.b16 %v3444, %v3436
    %v3533 = vpack.c.b16 %v3445, %v3437
    %v3534 = vpack.c.b16 %v3446, %v3438
    %v3535 = vpack.c.b16 %v3447, %v3439
    %v3536 = vpack.c.b16 %v3448, %v3440
    %v3537 = vpack.c.b16 %v3449, %v3441
    %v3538 = vpack.c.b16 %v3450, %v3442
    %v3539 = vpack.c.b16 %v3459, %v3451
    %v3540 = vpack.c.b16 %v3460, %v3452
    %v3541 = vpack.c.b16 %v3461, %v3453
    %v3542 = vpack.c.b16 %v3462, %v3454
    %v3543 = vpack.c.b16 %v3463, %v3455
    %v3544 = vpack.c.b16 %v3464, %v3456
    %v3545 = vpack.c.b16 %v3465, %v3457
    %v3546 = vpack.c.b16 %v3466, %v3458
    %v3547 = vpack.c.b16 %v3475, %v3467
    %v3548 = vpack.c.b16 %v3476, %v3468
    %v3549 = vpack.c.b16 %v3477, %v3469
    %v3550 = vpack.c.b16 %v3478, %v3470
    %v3551 = vpack.c.b16 %v3479, %v3471
    %v3552 = vpack.c.b16 %v3480, %v3472
    %v3553 = vpack.c.b16 %v3481, %v3473
    %v3554 = vpack.c.b16 %v3482, %v3474
    %v3555 = vpack.c.b16 %v3491, %v3483
    %v3556 = vpack.c.b16 %v3492, %v3484
    %v3557 = vpack.c.b16 %v3493, %v3485
    %v3558 = vpack.c.b16 %v3494, %v3486
    %v3559 = vpack.c.b16 %v3495, %v3487
    %v3560 = vpack.c.b16 %v3496, %v3488
    %v3561 = vpack.c.b16 %v3497, %v3489
    %v3562 = vpack.c.b16 %v3498, %v3490
    %3627 = vmatprep.subr.bf16.mxu0 %v3500
    %3628 = vmatpush1.bf16.msra.mxu0 %v3499
    %3629 = vmatprep.subr.bf16.mxu0 %v3508
    %3630 = vmatpush1.bf16.msra.mxu0 %v3507
    %3631 = vmatprep.subr.bf16.mxu0 %v3516
    %3632 = vmatpush1.bf16.msra.mxu0 %v3515
    %3633 = vmatprep.subr.bf16.mxu0 %v3524
    %3634 = vmatpush1.bf16.msra.mxu0 %v3523
    %3635 = vmatprep.subr.bf16.mxu0 %v3532
    %3636 = vmatpush1.bf16.msra.mxu0 %v3531
    %3637 = vmatprep.subr.bf16.mxu0 %v3540
    %3638 = vmatpush1.bf16.msra.mxu0 %v3539
    %3639 = vmatprep.subr.bf16.mxu0 %v3548
    %3640 = vmatpush1.bf16.msra.mxu0 %v3547
    %3641 = vmatprep.subr.bf16.mxu0 %v3556
    %3642 = vmatpush1.bf16.msra.mxu0 %v3555
    %3643 = vmatprep.subr.bf16.mxu0 0
    %3644 = vmatpush1.bf16.msra.mxu0 0
    %3645 = vmatprep.subr.bf16.mxu0 0
    %3646 = vmatpush1.bf16.msra.mxu0 0
    %3647 = vmatprep.subr.bf16.mxu0 0
    %3648 = vmatpush1.bf16.msra.mxu0 0
    %3649 = vmatprep.subr.bf16.mxu0 0
    %3650 = vmatpush1.bf16.msra.mxu0 0
    %3651 = vmatprep.subr.bf16.mxu0 0
    %3652 = vmatpush1.bf16.msra.mxu0 0
    %3653 = vmatprep.subr.bf16.mxu0 0
    %3654 = vmatpush1.bf16.msra.mxu0 0
    %3655 = vmatprep.subr.bf16.mxu0 0
    %3656 = vmatpush1.bf16.msra.mxu0 0
    %3657 = vmatprep.subr.bf16.mxu0 0
    %3658 = vmatpush1.bf16.msra.mxu0 0
    %3659 = vmatprep.mubr.bf16.mxu0 0
    %3660 = vmatmul.mubr.bf16.gmra.mrb[0].mxu0 %v3305
    %v3661 = vpop.f32.mrb[0].mxu0
    %v3662 = vadd.f32 0.0, %v3661
    %v3663 = vpop.f32.mrb[0].mxu0
    %v3664 = vadd.f32 0.0, %v3663
    %v3665 = vpop.f32.mrb[0].mxu0
    %v3666 = vpop.f32.mrb[0].mxu0
    %3667 = vdwg.mxu0
    %3668 = vmatprep.subr.bf16.mxu0 %v3502
    %3669 = vmatpush1.bf16.msra.mxu0 %v3501
    %3670 = vmatprep.subr.bf16.mxu0 %v3510
    %3671 = vmatpush1.bf16.msra.mxu0 %v3509
    %3672 = vmatprep.subr.bf16.mxu0 %v3518
    %3673 = vmatpush1.bf16.msra.mxu0 %v3517
    %3674 = vmatprep.subr.bf16.mxu0 %v3526
    %3675 = vmatpush1.bf16.msra.mxu0 %v3525
    %3676 = vmatprep.subr.bf16.mxu0 %v3534
    %3677 = vmatpush1.bf16.msra.mxu0 %v3533
    %3678 = vmatprep.subr.bf16.mxu0 %v3542
    %3679 = vmatpush1.bf16.msra.mxu0 %v3541
    %3680 = vmatprep.subr.bf16.mxu0 %v3550
    %3681 = vmatpush1.bf16.msra.mxu0 %v3549
    %3682 = vmatprep.subr.bf16.mxu0 %v3558
    %3683 = vmatpush1.bf16.msra.mxu0 %v3557
    %3684 = vmatprep.subr.bf16.mxu0 0
    %3685 = vmatpush1.bf16.msra.mxu0 0
    %3686 = vmatprep.subr.bf16.mxu0 0
    %3687 = vmatpush1.bf16.msra.mxu0 0
    %3688 = vmatprep.subr.bf16.mxu0 0
    %3689 = vmatpush1.bf16.msra.mxu0 0
    %3690 = vmatprep.subr.bf16.mxu0 0
    %3691 = vmatpush1.bf16.msra.mxu0 0
    %3692 = vmatprep.subr.bf16.mxu0 0
    %3693 = vmatpush1.bf16.msra.mxu0 0
    %3694 = vmatprep.subr.bf16.mxu0 0
    %3695 = vmatpush1.bf16.msra.mxu0 0
    %3696 = vmatprep.subr.bf16.mxu0 0
    %3697 = vmatpush1.bf16.msra.mxu0 0
    %3698 = vmatprep.subr.bf16.mxu0 0
    %3699 = vmatpush1.bf16.msra.mxu0 0
    %3700 = vmatprep.mubr.bf16.mxu0 0
    %3701 = vmatmul.mubr.bf16.gmra.mrb[0].mxu0 %v3305
    %v3702 = vpop.f32.mrb[0].mxu0
    %v3703 = vadd.f32 0.0, %v3702
    %v3704 = vpop.f32.mrb[0].mxu0
    %v3705 = vadd.f32 0.0, %v3704
    %v3706 = vpop.f32.mrb[0].mxu0
    %v3707 = vpop.f32.mrb[0].mxu0
    %3708 = vdwg.mxu0
    %3709 = vmatprep.subr.bf16.mxu0 %v3504
    %3710 = vmatpush1.bf16.msra.mxu0 %v3503
    %3711 = vmatprep.subr.bf16.mxu0 %v3512
    %3712 = vmatpush1.bf16.msra.mxu0 %v3511
    %3713 = vmatprep.subr.bf16.mxu0 %v3520
    %3714 = vmatpush1.bf16.msra.mxu0 %v3519
    %3715 = vmatprep.subr.bf16.mxu0 %v3528
    %3716 = vmatpush1.bf16.msra.mxu0 %v3527
    %3717 = vmatprep.subr.bf16.mxu0 %v3536
    %3718 = vmatpush1.bf16.msra.mxu0 %v3535
    %3719 = vmatprep.subr.bf16.mxu0 %v3544
    %3720 = vmatpush1.bf16.msra.mxu0 %v3543
    %3721 = vmatprep.subr.bf16.mxu0 %v3552
    %3722 = vmatpush1.bf16.msra.mxu0 %v3551
    %3723 = vmatprep.subr.bf16.mxu0 %v3560
    %3724 = vmatpush1.bf16.msra.mxu0 %v3559
    %3725 = vmatprep.subr.bf16.mxu0 0
    %3726 = vmatpush1.bf16.msra.mxu0 0
    %3727 = vmatprep.subr.bf16.mxu0 0
    %3728 = vmatpush1.bf16.msra.mxu0 0
    %3729 = vmatprep.subr.bf16.mxu0 0
    %3730 = vmatpush1.bf16.msra.mxu0 0
    %3731 = vmatprep.subr.bf16.mxu0 0
    %3732 = vmatpush1.bf16.msra.mxu0 0
    %3733 = vmatprep.subr.bf16.mxu0 0
    %3734 = vmatpush1.bf16.msra.mxu0 0
    %3735 = vmatprep.subr.bf16.mxu0 0
    %3736 = vmatpush1.bf16.msra.mxu0 0
    %3737 = vmatprep.subr.bf16.mxu0 0
    %3738 = vmatpush1.bf16.msra.mxu0 0
    %3739 = vmatprep.subr.bf16.mxu0 0
    %3740 = vmatpush1.bf16.msra.mxu0 0
    %3741 = vmatprep.mubr.bf16.mxu0 0
    %3742 = vmatmul.mubr.bf16.gmra.mrb[0].mxu0 %v3305
    %v3743 = vpop.f32.mrb[0].mxu0
    %v3744 = vadd.f32 0.0, %v3743
    %v3745 = vpop.f32.mrb[0].mxu0
    %v3746 = vadd.f32 0.0, %v3745
    %v3747 = vpop.f32.mrb[0].mxu0
    %v3748 = vpop.f32.mrb[0].mxu0
    %3749 = vdwg.mxu0
    %3750 = vmatprep.subr.bf16.mxu0 %v3506
    %3751 = vmatpush1.bf16.msra.mxu0 %v3505
    %3752 = vmatprep.subr.bf16.mxu0 %v3514
    %3753 = vmatpush1.bf16.msra.mxu0 %v3513
    %3754 = vmatprep.subr.bf16.mxu0 %v3522
    %3755 = vmatpush1.bf16.msra.mxu0 %v3521
    %3756 = vmatprep.subr.bf16.mxu0 %v3530
    %3757 = vmatpush1.bf16.msra.mxu0 %v3529
    %3758 = vmatprep.subr.bf16.mxu0 %v3538
    %3759 = vmatpush1.bf16.msra.mxu0 %v3537
    %3760 = vmatprep.subr.bf16.mxu0 %v3546
    %3761 = vmatpush1.bf16.msra.mxu0 %v3545
    %3762 = vmatprep.subr.bf16.mxu0 %v3554
    %3763 = vmatpush1.bf16.msra.mxu0 %v3553
    %3764 = vmatprep.subr.bf16.mxu0 %v3562
    %3765 = vmatpush1.bf16.msra.mxu0 %v3561
    %3766 = vmatprep.subr.bf16.mxu0 0
    %3767 = vmatpush1.bf16.msra.mxu0 0
    %3768 = vmatprep.subr.bf16.mxu0 0
    %3769 = vmatpush1.bf16.msra.mxu0 0
    %3770 = vmatprep.subr.bf16.mxu0 0
    %3771 = vmatpush1.bf16.msra.mxu0 0
    %3772 = vmatprep.subr.bf16.mxu0 0
    %3773 = vmatpush1.bf16.msra.mxu0 0
    %3774 = vmatprep.subr.bf16.mxu0 0
    %3775 = vmatpush1.bf16.msra.mxu0 0
    %3776 = vmatprep.subr.bf16.mxu0 0
    %3777 = vmatpush1.bf16.msra.mxu0 0
    %3778 = vmatprep.subr.bf16.mxu0 0
    %3779 = vmatpush1.bf16.msra.mxu0 0
    %3780 = vmatprep.subr.bf16.mxu0 0
    %3781 = vmatpush1.bf16.msra.mxu0 0
    %3782 = vmatprep.mubr.bf16.mxu0 0
    %3783 = vmatmul.mubr.bf16.gmra.mrb[0].mxu0 %v3305
    %v3784 = vpop.f32.mrb[0].mxu0
    %v3785 = vadd.f32 0.0, %v3784
    %v3786 = vpop.f32.mrb[0].mxu0
    %v3787 = vadd.f32 0.0, %v3786
    %v3788 = vpop.f32.mrb[0].mxu0
    %v3789 = vpop.f32.mrb[0].mxu0
    %3790 = vdwg.mxu0
    %v3791 = vadd.f32 %v3218, %v3662
    %v3792 = vadd.f32 %v3219, %v3664
    %v3793 = vadd.f32 %v3220, %v3703
    %v3794 = vadd.f32 %v3221, %v3705
    %v3795 = vadd.f32 %v3222, %v3744
    %v3796 = vadd.f32 %v3223, %v3746
    %v3797 = vadd.f32 %v3224, %v3785
    %v3798 = vadd.f32 %v3225, %v3787
    %s3799 = scalar_lea.vmem [#allocation10], 2048
    %v3800 = vld [vmem:[%s3799] sm:$0xff]
    %v3801 = vld [vmem:[%s3799 + $0x8] sm:$0xff]
    %v3802 = vld [vmem:[%s3799 + $0x10] sm:$0xff]
    %v3803 = vld [vmem:[%s3799 + $0x18] sm:$0xff]
    %v3804 = vld [vmem:[%s3799 + $0x20] sm:$0xff]
    %v3805 = vld [vmem:[%s3799 + $0x28] sm:$0xff]
    %v3806 = vld [vmem:[%s3799 + $0x30] sm:$0xff]
    %v3807 = vld [vmem:[%s3799 + $0x38] sm:$0xff]
    %v3808 = vld [vmem:[%s3799 + $0x40] sm:$0xff]
    %v3809 = vld [vmem:[%s3799 + $0x48] sm:$0xff]
    %v3810 = vld [vmem:[%s3799 + $0x50] sm:$0xff]
    %v3811 = vld [vmem:[%s3799 + $0x58] sm:$0xff]
    %v3812 = vld [vmem:[%s3799 + $0x60] sm:$0xff]
    %v3813 = vld [vmem:[%s3799 + $0x68] sm:$0xff]
    %v3814 = vld [vmem:[%s3799 + $0x70] sm:$0xff]
    %v3815 = vld [vmem:[%s3799 + $0x78] sm:$0xff]
    %v3816 = vld [vmem:[%s3799 + $0x80] sm:$0xff]
    %v3817 = vld [vmem:[%s3799 + $0x88] sm:$0xff]
    %v3818 = vld [vmem:[%s3799 + $0x90] sm:$0xff]
    %v3819 = vld [vmem:[%s3799 + $0x98] sm:$0xff]
    %v3820 = vld [vmem:[%s3799 + $0xa0] sm:$0xff]
    %v3821 = vld [vmem:[%s3799 + $0xa8] sm:$0xff]
    %v3822 = vld [vmem:[%s3799 + $0xb0] sm:$0xff]
    %v3823 = vld [vmem:[%s3799 + $0xb8] sm:$0xff]
    %v3824 = vld [vmem:[%s3799 + $0xc0] sm:$0xff]
    %v3825 = vld [vmem:[%s3799 + $0xc8] sm:$0xff]
    %v3826 = vld [vmem:[%s3799 + $0xd0] sm:$0xff]
    %v3827 = vld [vmem:[%s3799 + $0xd8] sm:$0xff]
    %v3828 = vld [vmem:[%s3799 + $0xe0] sm:$0xff]
    %v3829 = vld [vmem:[%s3799 + $0xe8] sm:$0xff]
    %v3830 = vld [vmem:[%s3799 + $0xf0] sm:$0xff]
    %v3831 = vld [vmem:[%s3799 + $0xf8] sm:$0xff]
    %v3832 = vld [vmem:[%s3799 + $0x100] sm:$0xff]
    %v3833 = vld [vmem:[%s3799 + $0x108] sm:$0xff]
    %v3834 = vld [vmem:[%s3799 + $0x110] sm:$0xff]
    %v3835 = vld [vmem:[%s3799 + $0x118] sm:$0xff]
    %v3836 = vld [vmem:[%s3799 + $0x120] sm:$0xff]
    %v3837 = vld [vmem:[%s3799 + $0x128] sm:$0xff]
    %v3838 = vld [vmem:[%s3799 + $0x130] sm:$0xff]
    %v3839 = vld [vmem:[%s3799 + $0x138] sm:$0xff]
    %v3840 = vld [vmem:[%s3799 + $0x140] sm:$0xff]
    %v3841 = vld [vmem:[%s3799 + $0x148] sm:$0xff]
    %v3842 = vld [vmem:[%s3799 + $0x150] sm:$0xff]
    %v3843 = vld [vmem:[%s3799 + $0x158] sm:$0xff]
    %v3844 = vld [vmem:[%s3799 + $0x160] sm:$0xff]
    %v3845 = vld [vmem:[%s3799 + $0x168] sm:$0xff]
    %v3846 = vld [vmem:[%s3799 + $0x170] sm:$0xff]
    %v3847 = vld [vmem:[%s3799 + $0x178] sm:$0xff]
    %v3848 = vld [vmem:[%s3799 + $0x180] sm:$0xff]
    %v3849 = vld [vmem:[%s3799 + $0x188] sm:$0xff]
    %v3850 = vld [vmem:[%s3799 + $0x190] sm:$0xff]
    %v3851 = vld [vmem:[%s3799 + $0x198] sm:$0xff]
    %v3852 = vld [vmem:[%s3799 + $0x1a0] sm:$0xff]
    %v3853 = vld [vmem:[%s3799 + $0x1a8] sm:$0xff]
    %v3854 = vld [vmem:[%s3799 + $0x1b0] sm:$0xff]
    %v3855 = vld [vmem:[%s3799 + $0x1b8] sm:$0xff]
    %v3856 = vld [vmem:[%s3799 + $0x1c0] sm:$0xff]
    %v3857 = vld [vmem:[%s3799 + $0x1c8] sm:$0xff]
    %v3858 = vld [vmem:[%s3799 + $0x1d0] sm:$0xff]
    %v3859 = vld [vmem:[%s3799 + $0x1d8] sm:$0xff]
    %v3860 = vld [vmem:[%s3799 + $0x1e0] sm:$0xff]
    %v3861 = vld [vmem:[%s3799 + $0x1e8] sm:$0xff]
    %v3862 = vld [vmem:[%s3799 + $0x1f0] sm:$0xff]
    %v3863 = vld [vmem:[%s3799 + $0x1f8] sm:$0xff]
    %v3864 = vrot.slane %v1638, 4
    %v3865 = vrot.slane %v1639, 3
    %v3866 = vsel %vm1647, %v3865, %v3864
    %v3867 = vrot.slane %v1640, 2
    %v3868 = vsel %vm1650, %v3867, %v3866
    %v3869 = vrot.slane %v1641, 1
    %v3870 = vsel %vm1653, %v3869, %v3868
    %v3871 = vsel %vm1656, %v1642, %v3870
    %v3872 = vrot.slane %v1643, 7
    %v3873 = vsel %vm1659, %v3872, %v3871
    %v3874 = vrot.slane %v1644, 6
    %v3875 = vsel %vm1662, %v3874, %v3873
    %v3876 = vrot.slane %v1645, 5
    %v3877 = vsel %vm1665, %v3876, %v3875
    %v3878 = vpack.c.b16 %v3877, %v3877
    %v3944 = vunpack.c.l.b16 %v3800
    %v3945 = vunpack.c.h.b16 %v3800
    %v3946 = vunpack.c.l.b16 %v3801
    %v3947 = vunpack.c.h.b16 %v3801
    %v3948 = vunpack.c.l.b16 %v3802
    %v3949 = vunpack.c.h.b16 %v3802
    %v3950 = vunpack.c.l.b16 %v3803
    %v3951 = vunpack.c.h.b16 %v3803
    %v3952 = vunpack.c.l.b16 %v3804
    %v3953 = vunpack.c.h.b16 %v3804
    %v3954 = vunpack.c.l.b16 %v3805
    %v3955 = vunpack.c.h.b16 %v3805
    %v3956 = vunpack.c.l.b16 %v3806
    %v3957 = vunpack.c.h.b16 %v3806
    %v3958 = vunpack.c.l.b16 %v3807
    %v3959 = vunpack.c.h.b16 %v3807
    %v3960 = vunpack.c.l.b16 %v3808
    %v3961 = vunpack.c.h.b16 %v3808
    %v3962 = vunpack.c.l.b16 %v3809
    %v3963 = vunpack.c.h.b16 %v3809
    %v3964 = vunpack.c.l.b16 %v3810
    %v3965 = vunpack.c.h.b16 %v3810
    %v3966 = vunpack.c.l.b16 %v3811
    %v3967 = vunpack.c.h.b16 %v3811
    %v3968 = vunpack.c.l.b16 %v3812
    %v3969 = vunpack.c.h.b16 %v3812
    %v3970 = vunpack.c.l.b16 %v3813
    %v3971 = vunpack.c.h.b16 %v3813
    %v3972 = vunpack.c.l.b16 %v3814
    %v3973 = vunpack.c.h.b16 %v3814
    %v3974 = vunpack.c.l.b16 %v3815
    %v3975 = vunpack.c.h.b16 %v3815
    %v3976 = vunpack.c.l.b16 %v3816
    %v3977 = vunpack.c.h.b16 %v3816
    %v3978 = vunpack.c.l.b16 %v3817
    %v3979 = vunpack.c.h.b16 %v3817
    %v3980 = vunpack.c.l.b16 %v3818
    %v3981 = vunpack.c.h.b16 %v3818
    %v3982 = vunpack.c.l.b16 %v3819
    %v3983 = vunpack.c.h.b16 %v3819
    %v3984 = vunpack.c.l.b16 %v3820
    %v3985 = vunpack.c.h.b16 %v3820
    %v3986 = vunpack.c.l.b16 %v3821
    %v3987 = vunpack.c.h.b16 %v3821
    %v3988 = vunpack.c.l.b16 %v3822
    %v3989 = vunpack.c.h.b16 %v3822
    %v3990 = vunpack.c.l.b16 %v3823
    %v3991 = vunpack.c.h.b16 %v3823
    %v3992 = vunpack.c.l.b16 %v3824
    %v3993 = vunpack.c.h.b16 %v3824
    %v3994 = vunpack.c.l.b16 %v3825
    %v3995 = vunpack.c.h.b16 %v3825
    %v3996 = vunpack.c.l.b16 %v3826
    %v3997 = vunpack.c.h.b16 %v3826
    %v3998 = vunpack.c.l.b16 %v3827
    %v3999 = vunpack.c.h.b16 %v3827
    %v4000 = vunpack.c.l.b16 %v3828
    %v4001 = vunpack.c.h.b16 %v3828
    %v4002 = vunpack.c.l.b16 %v3829
    %v4003 = vunpack.c.h.b16 %v3829
    %v4004 = vunpack.c.l.b16 %v3830
    %v4005 = vunpack.c.h.b16 %v3830
    %v4006 = vunpack.c.l.b16 %v3831
    %v4007 = vunpack.c.h.b16 %v3831
    %v4008 = vunpack.c.l.b16 %v3832
    %v4009 = vunpack.c.h.b16 %v3832
    %v4010 = vunpack.c.l.b16 %v3833
    %v4011 = vunpack.c.h.b16 %v3833
    %v4012 = vunpack.c.l.b16 %v3834
    %v4013 = vunpack.c.h.b16 %v3834
    %v4014 = vunpack.c.l.b16 %v3835
    %v4015 = vunpack.c.h.b16 %v3835
    %v4016 = vunpack.c.l.b16 %v3836
    %v4017 = vunpack.c.h.b16 %v3836
    %v4018 = vunpack.c.l.b16 %v3837
    %v4019 = vunpack.c.h.b16 %v3837
    %v4020 = vunpack.c.l.b16 %v3838
    %v4021 = vunpack.c.h.b16 %v3838
    %v4022 = vunpack.c.l.b16 %v3839
    %v4023 = vunpack.c.h.b16 %v3839
    %v4024 = vunpack.c.l.b16 %v3840
    %v4025 = vunpack.c.h.b16 %v3840
    %v4026 = vunpack.c.l.b16 %v3841
    %v4027 = vunpack.c.h.b16 %v3841
    %v4028 = vunpack.c.l.b16 %v3842
    %v4029 = vunpack.c.h.b16 %v3842
    %v4030 = vunpack.c.l.b16 %v3843
    %v4031 = vunpack.c.h.b16 %v3843
    %v4032 = vunpack.c.l.b16 %v3844
    %v4033 = vunpack.c.h.b16 %v3844
    %v4034 = vunpack.c.l.b16 %v3845
    %v4035 = vunpack.c.h.b16 %v3845
    %v4036 = vunpack.c.l.b16 %v3846
    %v4037 = vunpack.c.h.b16 %v3846
    %v4038 = vunpack.c.l.b16 %v3847
    %v4039 = vunpack.c.h.b16 %v3847
    %v4040 = vunpack.c.l.b16 %v3848
    %v4041 = vunpack.c.h.b16 %v3848
    %v4042 = vunpack.c.l.b16 %v3849
    %v4043 = vunpack.c.h.b16 %v3849
    %v4044 = vunpack.c.l.b16 %v3850
    %v4045 = vunpack.c.h.b16 %v3850
    %v4046 = vunpack.c.l.b16 %v3851
    %v4047 = vunpack.c.h.b16 %v3851
    %v4048 = vunpack.c.l.b16 %v3852
    %v4049 = vunpack.c.h.b16 %v3852
    %v4050 = vunpack.c.l.b16 %v3853
    %v4051 = vunpack.c.h.b16 %v3853
    %v4052 = vunpack.c.l.b16 %v3854
    %v4053 = vunpack.c.h.b16 %v3854
    %v4054 = vunpack.c.l.b16 %v3855
    %v4055 = vunpack.c.h.b16 %v3855
    %v4056 = vunpack.c.l.b16 %v3856
    %v4057 = vunpack.c.h.b16 %v3856
    %v4058 = vunpack.c.l.b16 %v3857
    %v4059 = vunpack.c.h.b16 %v3857
    %v4060 = vunpack.c.l.b16 %v3858
    %v4061 = vunpack.c.h.b16 %v3858
    %v4062 = vunpack.c.l.b16 %v3859
    %v4063 = vunpack.c.h.b16 %v3859
    %v4064 = vunpack.c.l.b16 %v3860
    %v4065 = vunpack.c.h.b16 %v3860
    %v4066 = vunpack.c.l.b16 %v3861
    %v4067 = vunpack.c.h.b16 %v3861
    %v4068 = vunpack.c.l.b16 %v3862
    %v4069 = vunpack.c.h.b16 %v3862
    %v4070 = vunpack.c.l.b16 %v3863
    %v4071 = vunpack.c.h.b16 %v3863
    %v4072 = vpack.c.b16 %v3952, %v3944
    %v4073 = vpack.c.b16 %v3953, %v3945
    %v4074 = vpack.c.b16 %v3954, %v3946
    %v4075 = vpack.c.b16 %v3955, %v3947
    %v4076 = vpack.c.b16 %v3956, %v3948
    %v4077 = vpack.c.b16 %v3957, %v3949
    %v4078 = vpack.c.b16 %v3958, %v3950
    %v4079 = vpack.c.b16 %v3959, %v3951
    %v4080 = vpack.c.b16 %v3968, %v3960
    %v4081 = vpack.c.b16 %v3969, %v3961
    %v4082 = vpack.c.b16 %v3970, %v3962
    %v4083 = vpack.c.b16 %v3971, %v3963
    %v4084 = vpack.c.b16 %v3972, %v3964
    %v4085 = vpack.c.b16 %v3973, %v3965
    %v4086 = vpack.c.b16 %v3974, %v3966
    %v4087 = vpack.c.b16 %v3975, %v3967
    %v4088 = vpack.c.b16 %v3984, %v3976
    %v4089 = vpack.c.b16 %v3985, %v3977
    %v4090 = vpack.c.b16 %v3986, %v3978
    %v4091 = vpack.c.b16 %v3987, %v3979
    %v4092 = vpack.c.b16 %v3988, %v3980
    %v4093 = vpack.c.b16 %v3989, %v3981
    %v4094 = vpack.c.b16 %v3990, %v3982
    %v4095 = vpack.c.b16 %v3991, %v3983
    %v4096 = vpack.c.b16 %v4000, %v3992
    %v4097 = vpack.c.b16 %v4001, %v3993
    %v4098 = vpack.c.b16 %v4002, %v3994
    %v4099 = vpack.c.b16 %v4003, %v3995
    %v4100 = vpack.c.b16 %v4004, %v3996
    %v4101 = vpack.c.b16 %v4005, %v3997
    %v4102 = vpack.c.b16 %v4006, %v3998
    %v4103 = vpack.c.b16 %v4007, %v3999
    %v4104 = vpack.c.b16 %v4016, %v4008
    %v4105 = vpack.c.b16 %v4017, %v4009
    %v4106 = vpack.c.b16 %v4018, %v4010
    %v4107 = vpack.c.b16 %v4019, %v4011
    %v4108 = vpack.c.b16 %v4020, %v4012
    %v4109 = vpack.c.b16 %v4021, %v4013
    %v4110 = vpack.c.b16 %v4022, %v4014
    %v4111 = vpack.c.b16 %v4023, %v4015
    %v4112 = vpack.c.b16 %v4032, %v4024
    %v4113 = vpack.c.b16 %v4033, %v4025
    %v4114 = vpack.c.b16 %v4034, %v4026
    %v4115 = vpack.c.b16 %v4035, %v4027
    %v4116 = vpack.c.b16 %v4036, %v4028
    %v4117 = vpack.c.b16 %v4037, %v4029
    %v4118 = vpack.c.b16 %v4038, %v4030
    %v4119 = vpack.c.b16 %v4039, %v4031
    %v4120 = vpack.c.b16 %v4048, %v4040
    %v4121 = vpack.c.b16 %v4049, %v4041
    %v4122 = vpack.c.b16 %v4050, %v4042
    %v4123 = vpack.c.b16 %v4051, %v4043
    %v4124 = vpack.c.b16 %v4052, %v4044
    %v4125 = vpack.c.b16 %v4053, %v4045
    %v4126 = vpack.c.b16 %v4054, %v4046
    %v4127 = vpack.c.b16 %v4055, %v4047
    %v4128 = vpack.c.b16 %v4064, %v4056
    %v4129 = vpack.c.b16 %v4065, %v4057
    %v4130 = vpack.c.b16 %v4066, %v4058
    %v4131 = vpack.c.b16 %v4067, %v4059
    %v4132 = vpack.c.b16 %v4068, %v4060
    %v4133 = vpack.c.b16 %v4069, %v4061
    %v4134 = vpack.c.b16 %v4070, %v4062
    %v4135 = vpack.c.b16 %v4071, %v4063
    %4200 = vmatprep.subr.bf16.mxu0 %v4073
    %4201 = vmatpush1.bf16.msra.mxu0 %v4072
    %4202 = vmatprep.subr.bf16.mxu0 %v4081
    %4203 = vmatpush1.bf16.msra.mxu0 %v4080
    %4204 = vmatprep.subr.bf16.mxu0 %v4089
    %4205 = vmatpush1.bf16.msra.mxu0 %v4088
    %4206 = vmatprep.subr.bf16.mxu0 %v4097
    %4207 = vmatpush1.bf16.msra.mxu0 %v4096
    %4208 = vmatprep.subr.bf16.mxu0 %v4105
    %4209 = vmatpush1.bf16.msra.mxu0 %v4104
    %4210 = vmatprep.subr.bf16.mxu0 %v4113
    %4211 = vmatpush1.bf16.msra.mxu0 %v4112
    %4212 = vmatprep.subr.bf16.mxu0 %v4121
    %4213 = vmatpush1.bf16.msra.mxu0 %v4120
    %4214 = vmatprep.subr.bf16.mxu0 %v4129
    %4215 = vmatpush1.bf16.msra.mxu0 %v4128
    %4216 = vmatprep.subr.bf16.mxu0 0
    %4217 = vmatpush1.bf16.msra.mxu0 0
    %4218 = vmatprep.subr.bf16.mxu0 0
    %4219 = vmatpush1.bf16.msra.mxu0 0
    %4220 = vmatprep.subr.bf16.mxu0 0
    %4221 = vmatpush1.bf16.msra.mxu0 0
    %4222 = vmatprep.subr.bf16.mxu0 0
    %4223 = vmatpush1.bf16.msra.mxu0 0
    %4224 = vmatprep.subr.bf16.mxu0 0
    %4225 = vmatpush1.bf16.msra.mxu0 0
    %4226 = vmatprep.subr.bf16.mxu0 0
    %4227 = vmatpush1.bf16.msra.mxu0 0
    %4228 = vmatprep.subr.bf16.mxu0 0
    %4229 = vmatpush1.bf16.msra.mxu0 0
    %4230 = vmatprep.subr.bf16.mxu0 0
    %4231 = vmatpush1.bf16.msra.mxu0 0
    %4232 = vmatprep.mubr.bf16.mxu0 0
    %4233 = vmatmul.mubr.bf16.gmra.mrb[0].mxu0 %v3878
    %v4234 = vpop.f32.mrb[0].mxu0
    %v4235 = vadd.f32 0.0, %v4234
    %v4236 = vpop.f32.mrb[0].mxu0
    %v4237 = vadd.f32 0.0, %v4236
    %v4238 = vpop.f32.mrb[0].mxu0
    %v4239 = vpop.f32.mrb[0].mxu0
    %4240 = vdwg.mxu0
    %4241 = vmatprep.subr.bf16.mxu0 %v4075
    %4242 = vmatpush1.bf16.msra.mxu0 %v4074
    %4243 = vmatprep.subr.bf16.mxu0 %v4083
    %4244 = vmatpush1.bf16.msra.mxu0 %v4082
    %4245 = vmatprep.subr.bf16.mxu0 %v4091
    %4246 = vmatpush1.bf16.msra.mxu0 %v4090
    %4247 = vmatprep.subr.bf16.mxu0 %v4099
    %4248 = vmatpush1.bf16.msra.mxu0 %v4098
    %4249 = vmatprep.subr.bf16.mxu0 %v4107
    %4250 = vmatpush1.bf16.msra.mxu0 %v4106
    %4251 = vmatprep.subr.bf16.mxu0 %v4115
    %4252 = vmatpush1.bf16.msra.mxu0 %v4114
    %4253 = vmatprep.subr.bf16.mxu0 %v4123
    %4254 = vmatpush1.bf16.msra.mxu0 %v4122
    %4255 = vmatprep.subr.bf16.mxu0 %v4131
    %4256 = vmatpush1.bf16.msra.mxu0 %v4130
    %4257 = vmatprep.subr.bf16.mxu0 0
    %4258 = vmatpush1.bf16.msra.mxu0 0
    %4259 = vmatprep.subr.bf16.mxu0 0
    %4260 = vmatpush1.bf16.msra.mxu0 0
    %4261 = vmatprep.subr.bf16.mxu0 0
    %4262 = vmatpush1.bf16.msra.mxu0 0
    %4263 = vmatprep.subr.bf16.mxu0 0
    %4264 = vmatpush1.bf16.msra.mxu0 0
    %4265 = vmatprep.subr.bf16.mxu0 0
    %4266 = vmatpush1.bf16.msra.mxu0 0
    %4267 = vmatprep.subr.bf16.mxu0 0
    %4268 = vmatpush1.bf16.msra.mxu0 0
    %4269 = vmatprep.subr.bf16.mxu0 0
    %4270 = vmatpush1.bf16.msra.mxu0 0
    %4271 = vmatprep.subr.bf16.mxu0 0
    %4272 = vmatpush1.bf16.msra.mxu0 0
    %4273 = vmatprep.mubr.bf16.mxu0 0
    %4274 = vmatmul.mubr.bf16.gmra.mrb[0].mxu0 %v3878
    %v4275 = vpop.f32.mrb[0].mxu0
    %v4276 = vadd.f32 0.0, %v4275
    %v4277 = vpop.f32.mrb[0].mxu0
    %v4278 = vadd.f32 0.0, %v4277
    %v4279 = vpop.f32.mrb[0].mxu0
    %v4280 = vpop.f32.mrb[0].mxu0
    %4281 = vdwg.mxu0
    %4282 = vmatprep.subr.bf16.mxu0 %v4077
    %4283 = vmatpush1.bf16.msra.mxu0 %v4076
    %4284 = vmatprep.subr.bf16.mxu0 %v4085
    %4285 = vmatpush1.bf16.msra.mxu0 %v4084
    %4286 = vmatprep.subr.bf16.mxu0 %v4093
    %4287 = vmatpush1.bf16.msra.mxu0 %v4092
    %4288 = vmatprep.subr.bf16.mxu0 %v4101
    %4289 = vmatpush1.bf16.msra.mxu0 %v4100
    %4290 = vmatprep.subr.bf16.mxu0 %v4109
    %4291 = vmatpush1.bf16.msra.mxu0 %v4108
    %4292 = vmatprep.subr.bf16.mxu0 %v4117
    %4293 = vmatpush1.bf16.msra.mxu0 %v4116
    %4294 = vmatprep.subr.bf16.mxu0 %v4125
    %4295 = vmatpush1.bf16.msra.mxu0 %v4124
    %4296 = vmatprep.subr.bf16.mxu0 %v4133
    %4297 = vmatpush1.bf16.msra.mxu0 %v4132
    %4298 = vmatprep.subr.bf16.mxu0 0
    %4299 = vmatpush1.bf16.msra.mxu0 0
    %4300 = vmatprep.subr.bf16.mxu0 0
    %4301 = vmatpush1.bf16.msra.mxu0 0
    %4302 = vmatprep.subr.bf16.mxu0 0
    %4303 = vmatpush1.bf16.msra.mxu0 0
    %4304 = vmatprep.subr.bf16.mxu0 0
    %4305 = vmatpush1.bf16.msra.mxu0 0
    %4306 = vmatprep.subr.bf16.mxu0 0
    %4307 = vmatpush1.bf16.msra.mxu0 0
    %4308 = vmatprep.subr.bf16.mxu0 0
    %4309 = vmatpush1.bf16.msra.mxu0 0
    %4310 = vmatprep.subr.bf16.mxu0 0
    %4311 = vmatpush1.bf16.msra.mxu0 0
    %4312 = vmatprep.subr.bf16.mxu0 0
    %4313 = vmatpush1.bf16.msra.mxu0 0
    %4314 = vmatprep.mubr.bf16.mxu0 0
    %4315 = vmatmul.mubr.bf16.gmra.mrb[0].mxu0 %v3878
    %v4316 = vpop.f32.mrb[0].mxu0
    %v4317 = vadd.f32 0.0, %v4316
    %v4318 = vpop.f32.mrb[0].mxu0
    %v4319 = vadd.f32 0.0, %v4318
    %v4320 = vpop.f32.mrb[0].mxu0
    %v4321 = vpop.f32.mrb[0].mxu0
    %4322 = vdwg.mxu0
    %4323 = vmatprep.subr.bf16.mxu0 %v4079
    %4324 = vmatpush1.bf16.msra.mxu0 %v4078
    %4325 = vmatprep.subr.bf16.mxu0 %v4087
    %4326 = vmatpush1.bf16.msra.mxu0 %v4086
    %4327 = vmatprep.subr.bf16.mxu0 %v4095
    %4328 = vmatpush1.bf16.msra.mxu0 %v4094
    %4329 = vmatprep.subr.bf16.mxu0 %v4103
    %4330 = vmatpush1.bf16.msra.mxu0 %v4102
    %4331 = vmatprep.subr.bf16.mxu0 %v4111
    %4332 = vmatpush1.bf16.msra.mxu0 %v4110
    %4333 = vmatprep.subr.bf16.mxu0 %v4119
    %4334 = vmatpush1.bf16.msra.mxu0 %v4118
    %4335 = vmatprep.subr.bf16.mxu0 %v4127
    %4336 = vmatpush1.bf16.msra.mxu0 %v4126
    %4337 = vmatprep.subr.bf16.mxu0 %v4135
    %4338 = vmatpush1.bf16.msra.mxu0 %v4134
    %4339 = vmatprep.subr.bf16.mxu0 0
    %4340 = vmatpush1.bf16.msra.mxu0 0
    %4341 = vmatprep.subr.bf16.mxu0 0
    %4342 = vmatpush1.bf16.msra.mxu0 0
    %4343 = vmatprep.subr.bf16.mxu0 0
    %4344 = vmatpush1.bf16.msra.mxu0 0
    %4345 = vmatprep.subr.bf16.mxu0 0
    %4346 = vmatpush1.bf16.msra.mxu0 0
    %4347 = vmatprep.subr.bf16.mxu0 0
    %4348 = vmatpush1.bf16.msra.mxu0 0
    %4349 = vmatprep.subr.bf16.mxu0 0
    %4350 = vmatpush1.bf16.msra.mxu0 0
    %4351 = vmatprep.subr.bf16.mxu0 0
    %4352 = vmatpush1.bf16.msra.mxu0 0
    %4353 = vmatprep.subr.bf16.mxu0 0
    %4354 = vmatpush1.bf16.msra.mxu0 0
    %4355 = vmatprep.mubr.bf16.mxu0 0
    %4356 = vmatmul.mubr.bf16.gmra.mrb[0].mxu0 %v3878
    %v4357 = vpop.f32.mrb[0].mxu0
    %v4358 = vadd.f32 0.0, %v4357
    %v4359 = vpop.f32.mrb[0].mxu0
    %v4360 = vadd.f32 0.0, %v4359
    %v4361 = vpop.f32.mrb[0].mxu0
    %v4362 = vpop.f32.mrb[0].mxu0
    %4363 = vdwg.mxu0
    %v4364 = vadd.f32 %v3791, %v4235
    %v4365 = vadd.f32 %v3792, %v4237
    %v4366 = vadd.f32 %v3793, %v4276
    %v4367 = vadd.f32 %v3794, %v4278
    %v4368 = vadd.f32 %v3795, %v4317
    %v4369 = vadd.f32 %v3796, %v4319
    %v4370 = vadd.f32 %v3797, %v4358
    %v4371 = vadd.f32 %v3798, %v4360
    %s4372 = scalar_lea.vmem [#allocation10], 2560
    %v4373 = vld [vmem:[%s4372] sm:$0xff]
    %v4374 = vld [vmem:[%s4372 + $0x8] sm:$0xff]
    %v4375 = vld [vmem:[%s4372 + $0x10] sm:$0xff]
    %v4376 = vld [vmem:[%s4372 + $0x18] sm:$0xff]
    %v4377 = vld [vmem:[%s4372 + $0x20] sm:$0xff]
    %v4378 = vld [vmem:[%s4372 + $0x28] sm:$0xff]
    %v4379 = vld [vmem:[%s4372 + $0x30] sm:$0xff]
    %v4380 = vld [vmem:[%s4372 + $0x38] sm:$0xff]
    %v4381 = vld [vmem:[%s4372 + $0x40] sm:$0xff]
    %v4382 = vld [vmem:[%s4372 + $0x48] sm:$0xff]
    %v4383 = vld [vmem:[%s4372 + $0x50] sm:$0xff]
    %v4384 = vld [vmem:[%s4372 + $0x58] sm:$0xff]
    %v4385 = vld [vmem:[%s4372 + $0x60] sm:$0xff]
    %v4386 = vld [vmem:[%s4372 + $0x68] sm:$0xff]
    %v4387 = vld [vmem:[%s4372 + $0x70] sm:$0xff]
    %v4388 = vld [vmem:[%s4372 + $0x78] sm:$0xff]
    %v4389 = vld [vmem:[%s4372 + $0x80] sm:$0xff]
    %v4390 = vld [vmem:[%s4372 + $0x88] sm:$0xff]
    %v4391 = vld [vmem:[%s4372 + $0x90] sm:$0xff]
    %v4392 = vld [vmem:[%s4372 + $0x98] sm:$0xff]
    %v4393 = vld [vmem:[%s4372 + $0xa0] sm:$0xff]
    %v4394 = vld [vmem:[%s4372 + $0xa8] sm:$0xff]
    %v4395 = vld [vmem:[%s4372 + $0xb0] sm:$0xff]
    %v4396 = vld [vmem:[%s4372 + $0xb8] sm:$0xff]
    %v4397 = vld [vmem:[%s4372 + $0xc0] sm:$0xff]
    %v4398 = vld [vmem:[%s4372 + $0xc8] sm:$0xff]
    %v4399 = vld [vmem:[%s4372 + $0xd0] sm:$0xff]
    %v4400 = vld [vmem:[%s4372 + $0xd8] sm:$0xff]
    %v4401 = vld [vmem:[%s4372 + $0xe0] sm:$0xff]
    %v4402 = vld [vmem:[%s4372 + $0xe8] sm:$0xff]
    %v4403 = vld [vmem:[%s4372 + $0xf0] sm:$0xff]
    %v4404 = vld [vmem:[%s4372 + $0xf8] sm:$0xff]
    %v4405 = vld [vmem:[%s4372 + $0x100] sm:$0xff]
    %v4406 = vld [vmem:[%s4372 + $0x108] sm:$0xff]
    %v4407 = vld [vmem:[%s4372 + $0x110] sm:$0xff]
    %v4408 = vld [vmem:[%s4372 + $0x118] sm:$0xff]
    %v4409 = vld [vmem:[%s4372 + $0x120] sm:$0xff]
    %v4410 = vld [vmem:[%s4372 + $0x128] sm:$0xff]
    %v4411 = vld [vmem:[%s4372 + $0x130] sm:$0xff]
    %v4412 = vld [vmem:[%s4372 + $0x138] sm:$0xff]
    %v4413 = vld [vmem:[%s4372 + $0x140] sm:$0xff]
    %v4414 = vld [vmem:[%s4372 + $0x148] sm:$0xff]
    %v4415 = vld [vmem:[%s4372 + $0x150] sm:$0xff]
    %v4416 = vld [vmem:[%s4372 + $0x158] sm:$0xff]
    %v4417 = vld [vmem:[%s4372 + $0x160] sm:$0xff]
    %v4418 = vld [vmem:[%s4372 + $0x168] sm:$0xff]
    %v4419 = vld [vmem:[%s4372 + $0x170] sm:$0xff]
    %v4420 = vld [vmem:[%s4372 + $0x178] sm:$0xff]
    %v4421 = vld [vmem:[%s4372 + $0x180] sm:$0xff]
    %v4422 = vld [vmem:[%s4372 + $0x188] sm:$0xff]
    %v4423 = vld [vmem:[%s4372 + $0x190] sm:$0xff]
    %v4424 = vld [vmem:[%s4372 + $0x198] sm:$0xff]
    %v4425 = vld [vmem:[%s4372 + $0x1a0] sm:$0xff]
    %v4426 = vld [vmem:[%s4372 + $0x1a8] sm:$0xff]
    %v4427 = vld [vmem:[%s4372 + $0x1b0] sm:$0xff]
    %v4428 = vld [vmem:[%s4372 + $0x1b8] sm:$0xff]
    %v4429 = vld [vmem:[%s4372 + $0x1c0] sm:$0xff]
    %v4430 = vld [vmem:[%s4372 + $0x1c8] sm:$0xff]
    %v4431 = vld [vmem:[%s4372 + $0x1d0] sm:$0xff]
    %v4432 = vld [vmem:[%s4372 + $0x1d8] sm:$0xff]
    %v4433 = vld [vmem:[%s4372 + $0x1e0] sm:$0xff]
    %v4434 = vld [vmem:[%s4372 + $0x1e8] sm:$0xff]
    %v4435 = vld [vmem:[%s4372 + $0x1f0] sm:$0xff]
    %v4436 = vld [vmem:[%s4372 + $0x1f8] sm:$0xff]
    %v4437 = vrot.slane %v1638, 5
    %v4438 = vrot.slane %v1639, 4
    %v4439 = vsel %vm1647, %v4438, %v4437
    %v4440 = vrot.slane %v1640, 3
    %v4441 = vsel %vm1650, %v4440, %v4439
    %v4442 = vrot.slane %v1641, 2
    %v4443 = vsel %vm1653, %v4442, %v4441
    %v4444 = vrot.slane %v1642, 1
    %v4445 = vsel %vm1656, %v4444, %v4443
    %v4446 = vsel %vm1659, %v1643, %v4445
    %v4447 = vrot.slane %v1644, 7
    %v4448 = vsel %vm1662, %v4447, %v4446
    %v4449 = vrot.slane %v1645, 6
    %v4450 = vsel %vm1665, %v4449, %v4448
    %v4451 = vpack.c.b16 %v4450, %v4450
    %v4517 = vunpack.c.l.b16 %v4373
    %v4518 = vunpack.c.h.b16 %v4373
    %v4519 = vunpack.c.l.b16 %v4374
    %v4520 = vunpack.c.h.b16 %v4374
    %v4521 = vunpack.c.l.b16 %v4375
    %v4522 = vunpack.c.h.b16 %v4375
    %v4523 = vunpack.c.l.b16 %v4376
    %v4524 = vunpack.c.h.b16 %v4376
    %v4525 = vunpack.c.l.b16 %v4377
    %v4526 = vunpack.c.h.b16 %v4377
    %v4527 = vunpack.c.l.b16 %v4378
    %v4528 = vunpack.c.h.b16 %v4378
    %v4529 = vunpack.c.l.b16 %v4379
    %v4530 = vunpack.c.h.b16 %v4379
    %v4531 = vunpack.c.l.b16 %v4380
    %v4532 = vunpack.c.h.b16 %v4380
    %v4533 = vunpack.c.l.b16 %v4381
    %v4534 = vunpack.c.h.b16 %v4381
    %v4535 = vunpack.c.l.b16 %v4382
    %v4536 = vunpack.c.h.b16 %v4382
    %v4537 = vunpack.c.l.b16 %v4383
    %v4538 = vunpack.c.h.b16 %v4383
    %v4539 = vunpack.c.l.b16 %v4384
    %v4540 = vunpack.c.h.b16 %v4384
    %v4541 = vunpack.c.l.b16 %v4385
    %v4542 = vunpack.c.h.b16 %v4385
    %v4543 = vunpack.c.l.b16 %v4386
    %v4544 = vunpack.c.h.b16 %v4386
    %v4545 = vunpack.c.l.b16 %v4387
    %v4546 = vunpack.c.h.b16 %v4387
    %v4547 = vunpack.c.l.b16 %v4388
    %v4548 = vunpack.c.h.b16 %v4388
    %v4549 = vunpack.c.l.b16 %v4389
    %v4550 = vunpack.c.h.b16 %v4389
    %v4551 = vunpack.c.l.b16 %v4390
    %v4552 = vunpack.c.h.b16 %v4390
    %v4553 = vunpack.c.l.b16 %v4391
    %v4554 = vunpack.c.h.b16 %v4391
    %v4555 = vunpack.c.l.b16 %v4392
    %v4556 = vunpack.c.h.b16 %v4392
    %v4557 = vunpack.c.l.b16 %v4393
    %v4558 = vunpack.c.h.b16 %v4393
    %v4559 = vunpack.c.l.b16 %v4394
    %v4560 = vunpack.c.h.b16 %v4394
    %v4561 = vunpack.c.l.b16 %v4395
    %v4562 = vunpack.c.h.b16 %v4395
    %v4563 = vunpack.c.l.b16 %v4396
    %v4564 = vunpack.c.h.b16 %v4396
    %v4565 = vunpack.c.l.b16 %v4397
    %v4566 = vunpack.c.h.b16 %v4397
    %v4567 = vunpack.c.l.b16 %v4398
    %v4568 = vunpack.c.h.b16 %v4398
    %v4569 = vunpack.c.l.b16 %v4399
    %v4570 = vunpack.c.h.b16 %v4399
    %v4571 = vunpack.c.l.b16 %v4400
    %v4572 = vunpack.c.h.b16 %v4400
    %v4573 = vunpack.c.l.b16 %v4401
    %v4574 = vunpack.c.h.b16 %v4401
    %v4575 = vunpack.c.l.b16 %v4402
    %v4576 = vunpack.c.h.b16 %v4402
    %v4577 = vunpack.c.l.b16 %v4403
    %v4578 = vunpack.c.h.b16 %v4403
    %v4579 = vunpack.c.l.b16 %v4404
    %v4580 = vunpack.c.h.b16 %v4404
    %v4581 = vunpack.c.l.b16 %v4405
    %v4582 = vunpack.c.h.b16 %v4405
    %v4583 = vunpack.c.l.b16 %v4406
    %v4584 = vunpack.c.h.b16 %v4406
    %v4585 = vunpack.c.l.b16 %v4407
    %v4586 = vunpack.c.h.b16 %v4407
    %v4587 = vunpack.c.l.b16 %v4408
    %v4588 = vunpack.c.h.b16 %v4408
    %v4589 = vunpack.c.l.b16 %v4409
    %v4590 = vunpack.c.h.b16 %v4409
    %v4591 = vunpack.c.l.b16 %v4410
    %v4592 = vunpack.c.h.b16 %v4410
    %v4593 = vunpack.c.l.b16 %v4411
    %v4594 = vunpack.c.h.b16 %v4411
    %v4595 = vunpack.c.l.b16 %v4412
    %v4596 = vunpack.c.h.b16 %v4412
    %v4597 = vunpack.c.l.b16 %v4413
    %v4598 = vunpack.c.h.b16 %v4413
    %v4599 = vunpack.c.l.b16 %v4414
    %v4600 = vunpack.c.h.b16 %v4414
    %v4601 = vunpack.c.l.b16 %v4415
    %v4602 = vunpack.c.h.b16 %v4415
    %v4603 = vunpack.c.l.b16 %v4416
    %v4604 = vunpack.c.h.b16 %v4416
    %v4605 = vunpack.c.l.b16 %v4417
    %v4606 = vunpack.c.h.b16 %v4417
    %v4607 = vunpack.c.l.b16 %v4418
    %v4608 = vunpack.c.h.b16 %v4418
    %v4609 = vunpack.c.l.b16 %v4419
    %v4610 = vunpack.c.h.b16 %v4419
    %v4611 = vunpack.c.l.b16 %v4420
    %v4612 = vunpack.c.h.b16 %v4420
    %v4613 = vunpack.c.l.b16 %v4421
    %v4614 = vunpack.c.h.b16 %v4421
    %v4615 = vunpack.c.l.b16 %v4422
    %v4616 = vunpack.c.h.b16 %v4422
    %v4617 = vunpack.c.l.b16 %v4423
    %v4618 = vunpack.c.h.b16 %v4423
    %v4619 = vunpack.c.l.b16 %v4424
    %v4620 = vunpack.c.h.b16 %v4424
    %v4621 = vunpack.c.l.b16 %v4425
    %v4622 = vunpack.c.h.b16 %v4425
    %v4623 = vunpack.c.l.b16 %v4426
    %v4624 = vunpack.c.h.b16 %v4426
    %v4625 = vunpack.c.l.b16 %v4427
    %v4626 = vunpack.c.h.b16 %v4427
    %v4627 = vunpack.c.l.b16 %v4428
    %v4628 = vunpack.c.h.b16 %v4428
    %v4629 = vunpack.c.l.b16 %v4429
    %v4630 = vunpack.c.h.b16 %v4429
    %v4631 = vunpack.c.l.b16 %v4430
    %v4632 = vunpack.c.h.b16 %v4430
    %v4633 = vunpack.c.l.b16 %v4431
    %v4634 = vunpack.c.h.b16 %v4431
    %v4635 = vunpack.c.l.b16 %v4432
    %v4636 = vunpack.c.h.b16 %v4432
    %v4637 = vunpack.c.l.b16 %v4433
    %v4638 = vunpack.c.h.b16 %v4433
    %v4639 = vunpack.c.l.b16 %v4434
    %v4640 = vunpack.c.h.b16 %v4434
    %v4641 = vunpack.c.l.b16 %v4435
    %v4642 = vunpack.c.h.b16 %v4435
    %v4643 = vunpack.c.l.b16 %v4436
    %v4644 = vunpack.c.h.b16 %v4436
    %v4645 = vpack.c.b16 %v4525, %v4517
    %v4646 = vpack.c.b16 %v4526, %v4518
    %v4647 = vpack.c.b16 %v4527, %v4519
    %v4648 = vpack.c.b16 %v4528, %v4520
    %v4649 = vpack.c.b16 %v4529, %v4521
    %v4650 = vpack.c.b16 %v4530, %v4522
    %v4651 = vpack.c.b16 %v4531, %v4523
    %v4652 = vpack.c.b16 %v4532, %v4524
    %v4653 = vpack.c.b16 %v4541, %v4533
    %v4654 = vpack.c.b16 %v4542, %v4534
    %v4655 = vpack.c.b16 %v4543, %v4535
    %v4656 = vpack.c.b16 %v4544, %v4536
    %v4657 = vpack.c.b16 %v4545, %v4537
    %v4658 = vpack.c.b16 %v4546, %v4538
    %v4659 = vpack.c.b16 %v4547, %v4539
    %v4660 = vpack.c.b16 %v4548, %v4540
    %v4661 = vpack.c.b16 %v4557, %v4549
    %v4662 = vpack.c.b16 %v4558, %v4550
    %v4663 = vpack.c.b16 %v4559, %v4551
    %v4664 = vpack.c.b16 %v4560, %v4552
    %v4665 = vpack.c.b16 %v4561, %v4553
    %v4666 = vpack.c.b16 %v4562, %v4554
    %v4667 = vpack.c.b16 %v4563, %v4555
    %v4668 = vpack.c.b16 %v4564, %v4556
    %v4669 = vpack.c.b16 %v4573, %v4565
    %v4670 = vpack.c.b16 %v4574, %v4566
    %v4671 = vpack.c.b16 %v4575, %v4567
    %v4672 = vpack.c.b16 %v4576, %v4568
    %v4673 = vpack.c.b16 %v4577, %v4569
    %v4674 = vpack.c.b16 %v4578, %v4570
    %v4675 = vpack.c.b16 %v4579, %v4571
    %v4676 = vpack.c.b16 %v4580, %v4572
    %v4677 = vpack.c.b16 %v4589, %v4581
    %v4678 = vpack.c.b16 %v4590, %v4582
    %v4679 = vpack.c.b16 %v4591, %v4583
    %v4680 = vpack.c.b16 %v4592, %v4584
    %v4681 = vpack.c.b16 %v4593, %v4585
    %v4682 = vpack.c.b16 %v4594, %v4586
    %v4683 = vpack.c.b16 %v4595, %v4587
    %v4684 = vpack.c.b16 %v4596, %v4588
    %v4685 = vpack.c.b16 %v4605, %v4597
    %v4686 = vpack.c.b16 %v4606, %v4598
    %v4687 = vpack.c.b16 %v4607, %v4599
    %v4688 = vpack.c.b16 %v4608, %v4600
    %v4689 = vpack.c.b16 %v4609, %v4601
    %v4690 = vpack.c.b16 %v4610, %v4602
    %v4691 = vpack.c.b16 %v4611, %v4603
    %v4692 = vpack.c.b16 %v4612, %v4604
    %v4693 = vpack.c.b16 %v4621, %v4613
    %v4694 = vpack.c.b16 %v4622, %v4614
    %v4695 = vpack.c.b16 %v4623, %v4615
    %v4696 = vpack.c.b16 %v4624, %v4616
    %v4697 = vpack.c.b16 %v4625, %v4617
    %v4698 = vpack.c.b16 %v4626, %v4618
    %v4699 = vpack.c.b16 %v4627, %v4619
    %v4700 = vpack.c.b16 %v4628, %v4620
    %v4701 = vpack.c.b16 %v4637, %v4629
    %v4702 = vpack.c.b16 %v4638, %v4630
    %v4703 = vpack.c.b16 %v4639, %v4631
    %v4704 = vpack.c.b16 %v4640, %v4632
    %v4705 = vpack.c.b16 %v4641, %v4633
    %v4706 = vpack.c.b16 %v4642, %v4634
    %v4707 = vpack.c.b16 %v4643, %v4635
    %v4708 = vpack.c.b16 %v4644, %v4636
    %4773 = vmatprep.subr.bf16.mxu0 %v4646
    %4774 = vmatpush1.bf16.msra.mxu0 %v4645
    %4775 = vmatprep.subr.bf16.mxu0 %v4654
    %4776 = vmatpush1.bf16.msra.mxu0 %v4653
    %4777 = vmatprep.subr.bf16.mxu0 %v4662
    %4778 = vmatpush1.bf16.msra.mxu0 %v4661
    %4779 = vmatprep.subr.bf16.mxu0 %v4670
    %4780 = vmatpush1.bf16.msra.mxu0 %v4669
    %4781 = vmatprep.subr.bf16.mxu0 %v4678
    %4782 = vmatpush1.bf16.msra.mxu0 %v4677
    %4783 = vmatprep.subr.bf16.mxu0 %v4686
    %4784 = vmatpush1.bf16.msra.mxu0 %v4685
    %4785 = vmatprep.subr.bf16.mxu0 %v4694
    %4786 = vmatpush1.bf16.msra.mxu0 %v4693
    %4787 = vmatprep.subr.bf16.mxu0 %v4702
    %4788 = vmatpush1.bf16.msra.mxu0 %v4701
    %4789 = vmatprep.subr.bf16.mxu0 0
    %4790 = vmatpush1.bf16.msra.mxu0 0
    %4791 = vmatprep.subr.bf16.mxu0 0
    %4792 = vmatpush1.bf16.msra.mxu0 0
    %4793 = vmatprep.subr.bf16.mxu0 0
    %4794 = vmatpush1.bf16.msra.mxu0 0
    %4795 = vmatprep.subr.bf16.mxu0 0
    %4796 = vmatpush1.bf16.msra.mxu0 0
    %4797 = vmatprep.subr.bf16.mxu0 0
    %4798 = vmatpush1.bf16.msra.mxu0 0
    %4799 = vmatprep.subr.bf16.mxu0 0
    %4800 = vmatpush1.bf16.msra.mxu0 0
    %4801 = vmatprep.subr.bf16.mxu0 0
    %4802 = vmatpush1.bf16.msra.mxu0 0
    %4803 = vmatprep.subr.bf16.mxu0 0
    %4804 = vmatpush1.bf16.msra.mxu0 0
    %4805 = vmatprep.mubr.bf16.mxu0 0
    %4806 = vmatmul.mubr.bf16.gmra.mrb[0].mxu0 %v4451
    %v4807 = vpop.f32.mrb[0].mxu0
    %v4808 = vadd.f32 0.0, %v4807
    %v4809 = vpop.f32.mrb[0].mxu0
    %v4810 = vadd.f32 0.0, %v4809
    %v4811 = vpop.f32.mrb[0].mxu0
    %v4812 = vpop.f32.mrb[0].mxu0
    %4813 = vdwg.mxu0
    %4814 = vmatprep.subr.bf16.mxu0 %v4648
    %4815 = vmatpush1.bf16.msra.mxu0 %v4647
    %4816 = vmatprep.subr.bf16.mxu0 %v4656
    %4817 = vmatpush1.bf16.msra.mxu0 %v4655
    %4818 = vmatprep.subr.bf16.mxu0 %v4664
    %4819 = vmatpush1.bf16.msra.mxu0 %v4663
    %4820 = vmatprep.subr.bf16.mxu0 %v4672
    %4821 = vmatpush1.bf16.msra.mxu0 %v4671
    %4822 = vmatprep.subr.bf16.mxu0 %v4680
    %4823 = vmatpush1.bf16.msra.mxu0 %v4679
    %4824 = vmatprep.subr.bf16.mxu0 %v4688
    %4825 = vmatpush1.bf16.msra.mxu0 %v4687
    %4826 = vmatprep.subr.bf16.mxu0 %v4696
    %4827 = vmatpush1.bf16.msra.mxu0 %v4695
    %4828 = vmatprep.subr.bf16.mxu0 %v4704
    %4829 = vmatpush1.bf16.msra.mxu0 %v4703
    %4830 = vmatprep.subr.bf16.mxu0 0
    %4831 = vmatpush1.bf16.msra.mxu0 0
    %4832 = vmatprep.subr.bf16.mxu0 0
    %4833 = vmatpush1.bf16.msra.mxu0 0
    %4834 = vmatprep.subr.bf16.mxu0 0
    %4835 = vmatpush1.bf16.msra.mxu0 0
    %4836 = vmatprep.subr.bf16.mxu0 0
    %4837 = vmatpush1.bf16.msra.mxu0 0
    %4838 = vmatprep.subr.bf16.mxu0 0
    %4839 = vmatpush1.bf16.msra.mxu0 0
    %4840 = vmatprep.subr.bf16.mxu0 0
    %4841 = vmatpush1.bf16.msra.mxu0 0
    %4842 = vmatprep.subr.bf16.mxu0 0
    %4843 = vmatpush1.bf16.msra.mxu0 0
    %4844 = vmatprep.subr.bf16.mxu0 0
    %4845 = vmatpush1.bf16.msra.mxu0 0
    %4846 = vmatprep.mubr.bf16.mxu0 0
    %4847 = vmatmul.mubr.bf16.gmra.mrb[0].mxu0 %v4451
    %v4848 = vpop.f32.mrb[0].mxu0
    %v4849 = vadd.f32 0.0, %v4848
    %v4850 = vpop.f32.mrb[0].mxu0
    %v4851 = vadd.f32 0.0, %v4850
    %v4852 = vpop.f32.mrb[0].mxu0
    %v4853 = vpop.f32.mrb[0].mxu0
    %4854 = vdwg.mxu0
    %4855 = vmatprep.subr.bf16.mxu0 %v4650
    %4856 = vmatpush1.bf16.msra.mxu0 %v4649
    %4857 = vmatprep.subr.bf16.mxu0 %v4658
    %4858 = vmatpush1.bf16.msra.mxu0 %v4657
    %4859 = vmatprep.subr.bf16.mxu0 %v4666
    %4860 = vmatpush1.bf16.msra.mxu0 %v4665
    %4861 = vmatprep.subr.bf16.mxu0 %v4674
    %4862 = vmatpush1.bf16.msra.mxu0 %v4673
    %4863 = vmatprep.subr.bf16.mxu0 %v4682
    %4864 = vmatpush1.bf16.msra.mxu0 %v4681
    %4865 = vmatprep.subr.bf16.mxu0 %v4690
    %4866 = vmatpush1.bf16.msra.mxu0 %v4689
    %4867 = vmatprep.subr.bf16.mxu0 %v4698
    %4868 = vmatpush1.bf16.msra.mxu0 %v4697
    %4869 = vmatprep.subr.bf16.mxu0 %v4706
    %4870 = vmatpush1.bf16.msra.mxu0 %v4705
    %4871 = vmatprep.subr.bf16.mxu0 0
    %4872 = vmatpush1.bf16.msra.mxu0 0
    %4873 = vmatprep.subr.bf16.mxu0 0
    %4874 = vmatpush1.bf16.msra.mxu0 0
    %4875 = vmatprep.subr.bf16.mxu0 0
    %4876 = vmatpush1.bf16.msra.mxu0 0
    %4877 = vmatprep.subr.bf16.mxu0 0
    %4878 = vmatpush1.bf16.msra.mxu0 0
    %4879 = vmatprep.subr.bf16.mxu0 0
    %4880 = vmatpush1.bf16.msra.mxu0 0
    %4881 = vmatprep.subr.bf16.mxu0 0
    %4882 = vmatpush1.bf16.msra.mxu0 0
    %4883 = vmatprep.subr.bf16.mxu0 0
    %4884 = vmatpush1.bf16.msra.mxu0 0
    %4885 = vmatprep.subr.bf16.mxu0 0
    %4886 = vmatpush1.bf16.msra.mxu0 0
    %4887 = vmatprep.mubr.bf16.mxu0 0
    %4888 = vmatmul.mubr.bf16.gmra.mrb[0].mxu0 %v4451
    %v4889 = vpop.f32.mrb[0].mxu0
    %v4890 = vadd.f32 0.0, %v4889
    %v4891 = vpop.f32.mrb[0].mxu0
    %v4892 = vadd.f32 0.0, %v4891
    %v4893 = vpop.f32.mrb[0].mxu0
    %v4894 = vpop.f32.mrb[0].mxu0
    %4895 = vdwg.mxu0
    %4896 = vmatprep.subr.bf16.mxu0 %v4652
    %4897 = vmatpush1.bf16.msra.mxu0 %v4651
    %4898 = vmatprep.subr.bf16.mxu0 %v4660
    %4899 = vmatpush1.bf16.msra.mxu0 %v4659
    %4900 = vmatprep.subr.bf16.mxu0 %v4668
    %4901 = vmatpush1.bf16.msra.mxu0 %v4667
    %4902 = vmatprep.subr.bf16.mxu0 %v4676
    %4903 = vmatpush1.bf16.msra.mxu0 %v4675
    %4904 = vmatprep.subr.bf16.mxu0 %v4684
    %4905 = vmatpush1.bf16.msra.mxu0 %v4683
    %4906 = vmatprep.subr.bf16.mxu0 %v4692
    %4907 = vmatpush1.bf16.msra.mxu0 %v4691
    %4908 = vmatprep.subr.bf16.mxu0 %v4700
    %4909 = vmatpush1.bf16.msra.mxu0 %v4699
    %4910 = vmatprep.subr.bf16.mxu0 %v4708
    %4911 = vmatpush1.bf16.msra.mxu0 %v4707
    %4912 = vmatprep.subr.bf16.mxu0 0
    %4913 = vmatpush1.bf16.msra.mxu0 0
    %4914 = vmatprep.subr.bf16.mxu0 0
    %4915 = vmatpush1.bf16.msra.mxu0 0
    %4916 = vmatprep.subr.bf16.mxu0 0
    %4917 = vmatpush1.bf16.msra.mxu0 0
    %4918 = vmatprep.subr.bf16.mxu0 0
    %4919 = vmatpush1.bf16.msra.mxu0 0
    %4920 = vmatprep.subr.bf16.mxu0 0
    %4921 = vmatpush1.bf16.msra.mxu0 0
    %4922 = vmatprep.subr.bf16.mxu0 0
    %4923 = vmatpush1.bf16.msra.mxu0 0
    %4924 = vmatprep.subr.bf16.mxu0 0
    %4925 = vmatpush1.bf16.msra.mxu0 0
    %4926 = vmatprep.subr.bf16.mxu0 0
    %4927 = vmatpush1.bf16.msra.mxu0 0
    %4928 = vmatprep.mubr.bf16.mxu0 0
    %4929 = vmatmul.mubr.bf16.gmra.mrb[0].mxu0 %v4451
    %v4930 = vpop.f32.mrb[0].mxu0
    %v4931 = vadd.f32 0.0, %v4930
    %v4932 = vpop.f32.mrb[0].mxu0
    %v4933 = vadd.f32 0.0, %v4932
    %v4934 = vpop.f32.mrb[0].mxu0
    %v4935 = vpop.f32.mrb[0].mxu0
    %4936 = vdwg.mxu0
    %v4937 = vadd.f32 %v4364, %v4808
    %v4938 = vadd.f32 %v4365, %v4810
    %v4939 = vadd.f32 %v4366, %v4849
    %v4940 = vadd.f32 %v4367, %v4851
    %v4941 = vadd.f32 %v4368, %v4890
    %v4942 = vadd.f32 %v4369, %v4892
    %v4943 = vadd.f32 %v4370, %v4931
    %v4944 = vadd.f32 %v4371, %v4933
    %s4945 = scalar_lea.vmem [#allocation10], 3072
    %v4946 = vld [vmem:[%s4945] sm:$0xff]
    %v4947 = vld [vmem:[%s4945 + $0x8] sm:$0xff]
    %v4948 = vld [vmem:[%s4945 + $0x10] sm:$0xff]
    %v4949 = vld [vmem:[%s4945 + $0x18] sm:$0xff]
    %v4950 = vld [vmem:[%s4945 + $0x20] sm:$0xff]
    %v4951 = vld [vmem:[%s4945 + $0x28] sm:$0xff]
    %v4952 = vld [vmem:[%s4945 + $0x30] sm:$0xff]
    %v4953 = vld [vmem:[%s4945 + $0x38] sm:$0xff]
    %v4954 = vld [vmem:[%s4945 + $0x40] sm:$0xff]
    %v4955 = vld [vmem:[%s4945 + $0x48] sm:$0xff]
    %v4956 = vld [vmem:[%s4945 + $0x50] sm:$0xff]
    %v4957 = vld [vmem:[%s4945 + $0x58] sm:$0xff]
    %v4958 = vld [vmem:[%s4945 + $0x60] sm:$0xff]
    %v4959 = vld [vmem:[%s4945 + $0x68] sm:$0xff]
    %v4960 = vld [vmem:[%s4945 + $0x70] sm:$0xff]
    %v4961 = vld [vmem:[%s4945 + $0x78] sm:$0xff]
    %v4962 = vld [vmem:[%s4945 + $0x80] sm:$0xff]
    %v4963 = vld [vmem:[%s4945 + $0x88] sm:$0xff]
    %v4964 = vld [vmem:[%s4945 + $0x90] sm:$0xff]
    %v4965 = vld [vmem:[%s4945 + $0x98] sm:$0xff]
    %v4966 = vld [vmem:[%s4945 + $0xa0] sm:$0xff]
    %v4967 = vld [vmem:[%s4945 + $0xa8] sm:$0xff]
    %v4968 = vld [vmem:[%s4945 + $0xb0] sm:$0xff]
    %v4969 = vld [vmem:[%s4945 + $0xb8] sm:$0xff]
    %v4970 = vld [vmem:[%s4945 + $0xc0] sm:$0xff]
    %v4971 = vld [vmem:[%s4945 + $0xc8] sm:$0xff]
    %v4972 = vld [vmem:[%s4945 + $0xd0] sm:$0xff]
    %v4973 = vld [vmem:[%s4945 + $0xd8] sm:$0xff]
    %v4974 = vld [vmem:[%s4945 + $0xe0] sm:$0xff]
    %v4975 = vld [vmem:[%s4945 + $0xe8] sm:$0xff]
    %v4976 = vld [vmem:[%s4945 + $0xf0] sm:$0xff]
    %v4977 = vld [vmem:[%s4945 + $0xf8] sm:$0xff]
    %v4978 = vld [vmem:[%s4945 + $0x100] sm:$0xff]
    %v4979 = vld [vmem:[%s4945 + $0x108] sm:$0xff]
    %v4980 = vld [vmem:[%s4945 + $0x110] sm:$0xff]
    %v4981 = vld [vmem:[%s4945 + $0x118] sm:$0xff]
    %v4982 = vld [vmem:[%s4945 + $0x120] sm:$0xff]
    %v4983 = vld [vmem:[%s4945 + $0x128] sm:$0xff]
    %v4984 = vld [vmem:[%s4945 + $0x130] sm:$0xff]
    %v4985 = vld [vmem:[%s4945 + $0x138] sm:$0xff]
    %v4986 = vld [vmem:[%s4945 + $0x140] sm:$0xff]
    %v4987 = vld [vmem:[%s4945 + $0x148] sm:$0xff]
    %v4988 = vld [vmem:[%s4945 + $0x150] sm:$0xff]
    %v4989 = vld [vmem:[%s4945 + $0x158] sm:$0xff]
    %v4990 = vld [vmem:[%s4945 + $0x160] sm:$0xff]
    %v4991 = vld [vmem:[%s4945 + $0x168] sm:$0xff]
    %v4992 = vld [vmem:[%s4945 + $0x170] sm:$0xff]
    %v4993 = vld [vmem:[%s4945 + $0x178] sm:$0xff]
    %v4994 = vld [vmem:[%s4945 + $0x180] sm:$0xff]
    %v4995 = vld [vmem:[%s4945 + $0x188] sm:$0xff]
    %v4996 = vld [vmem:[%s4945 + $0x190] sm:$0xff]
    %v4997 = vld [vmem:[%s4945 + $0x198] sm:$0xff]
    %v4998 = vld [vmem:[%s4945 + $0x1a0] sm:$0xff]
    %v4999 = vld [vmem:[%s4945 + $0x1a8] sm:$0xff]
    %v5000 = vld [vmem:[%s4945 + $0x1b0] sm:$0xff]
    %v5001 = vld [vmem:[%s4945 + $0x1b8] sm:$0xff]
    %v5002 = vld [vmem:[%s4945 + $0x1c0] sm:$0xff]
    %v5003 = vld [vmem:[%s4945 + $0x1c8] sm:$0xff]
    %v5004 = vld [vmem:[%s4945 + $0x1d0] sm:$0xff]
    %v5005 = vld [vmem:[%s4945 + $0x1d8] sm:$0xff]
    %v5006 = vld [vmem:[%s4945 + $0x1e0] sm:$0xff]
    %v5007 = vld [vmem:[%s4945 + $0x1e8] sm:$0xff]
    %v5008 = vld [vmem:[%s4945 + $0x1f0] sm:$0xff]
    %v5009 = vld [vmem:[%s4945 + $0x1f8] sm:$0xff]
    %v5010 = vrot.slane %v1638, 6
    %v5011 = vrot.slane %v1639, 5
    %v5012 = vsel %vm1647, %v5011, %v5010
    %v5013 = vrot.slane %v1640, 4
    %v5014 = vsel %vm1650, %v5013, %v5012
    %v5015 = vrot.slane %v1641, 3
    %v5016 = vsel %vm1653, %v5015, %v5014
    %v5017 = vrot.slane %v1642, 2
    %v5018 = vsel %vm1656, %v5017, %v5016
    %v5019 = vrot.slane %v1643, 1
    %v5020 = vsel %vm1659, %v5019, %v5018
    %v5021 = vsel %vm1662, %v1644, %v5020
    %v5022 = vrot.slane %v1645, 7
    %v5023 = vsel %vm1665, %v5022, %v5021
    %v5024 = vpack.c.b16 %v5023, %v5023
    %v5090 = vunpack.c.l.b16 %v4946
    %v5091 = vunpack.c.h.b16 %v4946
    %v5092 = vunpack.c.l.b16 %v4947
    %v5093 = vunpack.c.h.b16 %v4947
    %v5094 = vunpack.c.l.b16 %v4948
    %v5095 = vunpack.c.h.b16 %v4948
    %v5096 = vunpack.c.l.b16 %v4949
    %v5097 = vunpack.c.h.b16 %v4949
    %v5098 = vunpack.c.l.b16 %v4950
    %v5099 = vunpack.c.h.b16 %v4950
    %v5100 = vunpack.c.l.b16 %v4951
    %v5101 = vunpack.c.h.b16 %v4951
    %v5102 = vunpack.c.l.b16 %v4952
    %v5103 = vunpack.c.h.b16 %v4952
    %v5104 = vunpack.c.l.b16 %v4953
    %v5105 = vunpack.c.h.b16 %v4953
    %v5106 = vunpack.c.l.b16 %v4954
    %v5107 = vunpack.c.h.b16 %v4954
    %v5108 = vunpack.c.l.b16 %v4955
    %v5109 = vunpack.c.h.b16 %v4955
    %v5110 = vunpack.c.l.b16 %v4956
    %v5111 = vunpack.c.h.b16 %v4956
    %v5112 = vunpack.c.l.b16 %v4957
    %v5113 = vunpack.c.h.b16 %v4957
    %v5114 = vunpack.c.l.b16 %v4958
    %v5115 = vunpack.c.h.b16 %v4958
    %v5116 = vunpack.c.l.b16 %v4959
    %v5117 = vunpack.c.h.b16 %v4959
    %v5118 = vunpack.c.l.b16 %v4960
    %v5119 = vunpack.c.h.b16 %v4960
    %v5120 = vunpack.c.l.b16 %v4961
    %v5121 = vunpack.c.h.b16 %v4961
    %v5122 = vunpack.c.l.b16 %v4962
    %v5123 = vunpack.c.h.b16 %v4962
    %v5124 = vunpack.c.l.b16 %v4963
    %v5125 = vunpack.c.h.b16 %v4963
    %v5126 = vunpack.c.l.b16 %v4964
    %v5127 = vunpack.c.h.b16 %v4964
    %v5128 = vunpack.c.l.b16 %v4965
    %v5129 = vunpack.c.h.b16 %v4965
    %v5130 = vunpack.c.l.b16 %v4966
    %v5131 = vunpack.c.h.b16 %v4966
    %v5132 = vunpack.c.l.b16 %v4967
    %v5133 = vunpack.c.h.b16 %v4967
    %v5134 = vunpack.c.l.b16 %v4968
    %v5135 = vunpack.c.h.b16 %v4968
    %v5136 = vunpack.c.l.b16 %v4969
    %v5137 = vunpack.c.h.b16 %v4969
    %v5138 = vunpack.c.l.b16 %v4970
    %v5139 = vunpack.c.h.b16 %v4970
    %v5140 = vunpack.c.l.b16 %v4971
    %v5141 = vunpack.c.h.b16 %v4971
    %v5142 = vunpack.c.l.b16 %v4972
    %v5143 = vunpack.c.h.b16 %v4972
    %v5144 = vunpack.c.l.b16 %v4973
    %v5145 = vunpack.c.h.b16 %v4973
    %v5146 = vunpack.c.l.b16 %v4974
    %v5147 = vunpack.c.h.b16 %v4974
    %v5148 = vunpack.c.l.b16 %v4975
    %v5149 = vunpack.c.h.b16 %v4975
    %v5150 = vunpack.c.l.b16 %v4976
    %v5151 = vunpack.c.h.b16 %v4976
    %v5152 = vunpack.c.l.b16 %v4977
    %v5153 = vunpack.c.h.b16 %v4977
    %v5154 = vunpack.c.l.b16 %v4978
    %v5155 = vunpack.c.h.b16 %v4978
    %v5156 = vunpack.c.l.b16 %v4979
    %v5157 = vunpack.c.h.b16 %v4979
    %v5158 = vunpack.c.l.b16 %v4980
    %v5159 = vunpack.c.h.b16 %v4980
    %v5160 = vunpack.c.l.b16 %v4981
    %v5161 = vunpack.c.h.b16 %v4981
    %v5162 = vunpack.c.l.b16 %v4982
    %v5163 = vunpack.c.h.b16 %v4982
    %v5164 = vunpack.c.l.b16 %v4983
    %v5165 = vunpack.c.h.b16 %v4983
    %v5166 = vunpack.c.l.b16 %v4984
    %v5167 = vunpack.c.h.b16 %v4984
    %v5168 = vunpack.c.l.b16 %v4985
    %v5169 = vunpack.c.h.b16 %v4985
    %v5170 = vunpack.c.l.b16 %v4986
    %v5171 = vunpack.c.h.b16 %v4986
    %v5172 = vunpack.c.l.b16 %v4987
    %v5173 = vunpack.c.h.b16 %v4987
    %v5174 = vunpack.c.l.b16 %v4988
    %v5175 = vunpack.c.h.b16 %v4988
    %v5176 = vunpack.c.l.b16 %v4989
    %v5177 = vunpack.c.h.b16 %v4989
    %v5178 = vunpack.c.l.b16 %v4990
    %v5179 = vunpack.c.h.b16 %v4990
    %v5180 = vunpack.c.l.b16 %v4991
    %v5181 = vunpack.c.h.b16 %v4991
    %v5182 = vunpack.c.l.b16 %v4992
    %v5183 = vunpack.c.h.b16 %v4992
    %v5184 = vunpack.c.l.b16 %v4993
    %v5185 = vunpack.c.h.b16 %v4993
    %v5186 = vunpack.c.l.b16 %v4994
    %v5187 = vunpack.c.h.b16 %v4994
    %v5188 = vunpack.c.l.b16 %v4995
    %v5189 = vunpack.c.h.b16 %v4995
    %v5190 = vunpack.c.l.b16 %v4996
    %v5191 = vunpack.c.h.b16 %v4996
    %v5192 = vunpack.c.l.b16 %v4997
    %v5193 = vunpack.c.h.b16 %v4997
    %v5194 = vunpack.c.l.b16 %v4998
    %v5195 = vunpack.c.h.b16 %v4998
    %v5196 = vunpack.c.l.b16 %v4999
    %v5197 = vunpack.c.h.b16 %v4999
    %v5198 = vunpack.c.l.b16 %v5000
    %v5199 = vunpack.c.h.b16 %v5000
    %v5200 = vunpack.c.l.b16 %v5001
    %v5201 = vunpack.c.h.b16 %v5001
    %v5202 = vunpack.c.l.b16 %v5002
    %v5203 = vunpack.c.h.b16 %v5002
    %v5204 = vunpack.c.l.b16 %v5003
    %v5205 = vunpack.c.h.b16 %v5003
    %v5206 = vunpack.c.l.b16 %v5004
    %v5207 = vunpack.c.h.b16 %v5004
    %v5208 = vunpack.c.l.b16 %v5005
    %v5209 = vunpack.c.h.b16 %v5005
    %v5210 = vunpack.c.l.b16 %v5006
    %v5211 = vunpack.c.h.b16 %v5006
    %v5212 = vunpack.c.l.b16 %v5007
    %v5213 = vunpack.c.h.b16 %v5007
    %v5214 = vunpack.c.l.b16 %v5008
    %v5215 = vunpack.c.h.b16 %v5008
    %v5216 = vunpack.c.l.b16 %v5009
    %v5217 = vunpack.c.h.b16 %v5009
    %v5218 = vpack.c.b16 %v5098, %v5090
    %v5219 = vpack.c.b16 %v5099, %v5091
    %v5220 = vpack.c.b16 %v5100, %v5092
    %v5221 = vpack.c.b16 %v5101, %v5093
    %v5222 = vpack.c.b16 %v5102, %v5094
    %v5223 = vpack.c.b16 %v5103, %v5095
    %v5224 = vpack.c.b16 %v5104, %v5096
    %v5225 = vpack.c.b16 %v5105, %v5097
    %v5226 = vpack.c.b16 %v5114, %v5106
    %v5227 = vpack.c.b16 %v5115, %v5107
    %v5228 = vpack.c.b16 %v5116, %v5108
    %v5229 = vpack.c.b16 %v5117, %v5109
    %v5230 = vpack.c.b16 %v5118, %v5110
    %v5231 = vpack.c.b16 %v5119, %v5111
    %v5232 = vpack.c.b16 %v5120, %v5112
    %v5233 = vpack.c.b16 %v5121, %v5113
    %v5234 = vpack.c.b16 %v5130, %v5122
    %v5235 = vpack.c.b16 %v5131, %v5123
    %v5236 = vpack.c.b16 %v5132, %v5124
    %v5237 = vpack.c.b16 %v5133, %v5125
    %v5238 = vpack.c.b16 %v5134, %v5126
    %v5239 = vpack.c.b16 %v5135, %v5127
    %v5240 = vpack.c.b16 %v5136, %v5128
    %v5241 = vpack.c.b16 %v5137, %v5129
    %v5242 = vpack.c.b16 %v5146, %v5138
    %v5243 = vpack.c.b16 %v5147, %v5139
    %v5244 = vpack.c.b16 %v5148, %v5140
    %v5245 = vpack.c.b16 %v5149, %v5141
    %v5246 = vpack.c.b16 %v5150, %v5142
    %v5247 = vpack.c.b16 %v5151, %v5143
    %v5248 = vpack.c.b16 %v5152, %v5144
    %v5249 = vpack.c.b16 %v5153, %v5145
    %v5250 = vpack.c.b16 %v5162, %v5154
    %v5251 = vpack.c.b16 %v5163, %v5155
    %v5252 = vpack.c.b16 %v5164, %v5156
    %v5253 = vpack.c.b16 %v5165, %v5157
    %v5254 = vpack.c.b16 %v5166, %v5158
    %v5255 = vpack.c.b16 %v5167, %v5159
    %v5256 = vpack.c.b16 %v5168, %v5160
    %v5257 = vpack.c.b16 %v5169, %v5161
    %v5258 = vpack.c.b16 %v5178, %v5170
    %v5259 = vpack.c.b16 %v5179, %v5171
    %v5260 = vpack.c.b16 %v5180, %v5172
    %v5261 = vpack.c.b16 %v5181, %v5173
    %v5262 = vpack.c.b16 %v5182, %v5174
    %v5263 = vpack.c.b16 %v5183, %v5175
    %v5264 = vpack.c.b16 %v5184, %v5176
    %v5265 = vpack.c.b16 %v5185, %v5177
    %v5266 = vpack.c.b16 %v5194, %v5186
    %v5267 = vpack.c.b16 %v5195, %v5187
    %v5268 = vpack.c.b16 %v5196, %v5188
    %v5269 = vpack.c.b16 %v5197, %v5189
    %v5270 = vpack.c.b16 %v5198, %v5190
    %v5271 = vpack.c.b16 %v5199, %v5191
    %v5272 = vpack.c.b16 %v5200, %v5192
    %v5273 = vpack.c.b16 %v5201, %v5193
    %v5274 = vpack.c.b16 %v5210, %v5202
    %v5275 = vpack.c.b16 %v5211, %v5203
    %v5276 = vpack.c.b16 %v5212, %v5204
    %v5277 = vpack.c.b16 %v5213, %v5205
    %v5278 = vpack.c.b16 %v5214, %v5206
    %v5279 = vpack.c.b16 %v5215, %v5207
    %v5280 = vpack.c.b16 %v5216, %v5208
    %v5281 = vpack.c.b16 %v5217, %v5209
    %5346 = vmatprep.subr.bf16.mxu0 %v5219
    %5347 = vmatpush1.bf16.msra.mxu0 %v5218
    %5348 = vmatprep.subr.bf16.mxu0 %v5227
    %5349 = vmatpush1.bf16.msra.mxu0 %v5226
    %5350 = vmatprep.subr.bf16.mxu0 %v5235
    %5351 = vmatpush1.bf16.msra.mxu0 %v5234
    %5352 = vmatprep.subr.bf16.mxu0 %v5243
    %5353 = vmatpush1.bf16.msra.mxu0 %v5242
    %5354 = vmatprep.subr.bf16.mxu0 %v5251
    %5355 = vmatpush1.bf16.msra.mxu0 %v5250
    %5356 = vmatprep.subr.bf16.mxu0 %v5259
    %5357 = vmatpush1.bf16.msra.mxu0 %v5258
    %5358 = vmatprep.subr.bf16.mxu0 %v5267
    %5359 = vmatpush1.bf16.msra.mxu0 %v5266
    %5360 = vmatprep.subr.bf16.mxu0 %v5275
    %5361 = vmatpush1.bf16.msra.mxu0 %v5274
    %5362 = vmatprep.subr.bf16.mxu0 0
    %5363 = vmatpush1.bf16.msra.mxu0 0
    %5364 = vmatprep.subr.bf16.mxu0 0
    %5365 = vmatpush1.bf16.msra.mxu0 0
    %5366 = vmatprep.subr.bf16.mxu0 0
    %5367 = vmatpush1.bf16.msra.mxu0 0
    %5368 = vmatprep.subr.bf16.mxu0 0
    %5369 = vmatpush1.bf16.msra.mxu0 0
    %5370 = vmatprep.subr.bf16.mxu0 0
    %5371 = vmatpush1.bf16.msra.mxu0 0
    %5372 = vmatprep.subr.bf16.mxu0 0
    %5373 = vmatpush1.bf16.msra.mxu0 0
    %5374 = vmatprep.subr.bf16.mxu0 0
    %5375 = vmatpush1.bf16.msra.mxu0 0
    %5376 = vmatprep.subr.bf16.mxu0 0
    %5377 = vmatpush1.bf16.msra.mxu0 0
    %5378 = vmatprep.mubr.bf16.mxu0 0
    %5379 = vmatmul.mubr.bf16.gmra.mrb[0].mxu0 %v5024
    %v5380 = vpop.f32.mrb[0].mxu0
    %v5381 = vadd.f32 0.0, %v5380
    %v5382 = vpop.f32.mrb[0].mxu0
    %v5383 = vadd.f32 0.0, %v5382
    %v5384 = vpop.f32.mrb[0].mxu0
    %v5385 = vpop.f32.mrb[0].mxu0
    %5386 = vdwg.mxu0
    %5387 = vmatprep.subr.bf16.mxu0 %v5221
    %5388 = vmatpush1.bf16.msra.mxu0 %v5220
    %5389 = vmatprep.subr.bf16.mxu0 %v5229
    %5390 = vmatpush1.bf16.msra.mxu0 %v5228
    %5391 = vmatprep.subr.bf16.mxu0 %v5237
    %5392 = vmatpush1.bf16.msra.mxu0 %v5236
    %5393 = vmatprep.subr.bf16.mxu0 %v5245
    %5394 = vmatpush1.bf16.msra.mxu0 %v5244
    %5395 = vmatprep.subr.bf16.mxu0 %v5253
    %5396 = vmatpush1.bf16.msra.mxu0 %v5252
    %5397 = vmatprep.subr.bf16.mxu0 %v5261
    %5398 = vmatpush1.bf16.msra.mxu0 %v5260
    %5399 = vmatprep.subr.bf16.mxu0 %v5269
    %5400 = vmatpush1.bf16.msra.mxu0 %v5268
    %5401 = vmatprep.subr.bf16.mxu0 %v5277
    %5402 = vmatpush1.bf16.msra.mxu0 %v5276
    %5403 = vmatprep.subr.bf16.mxu0 0
    %5404 = vmatpush1.bf16.msra.mxu0 0
    %5405 = vmatprep.subr.bf16.mxu0 0
    %5406 = vmatpush1.bf16.msra.mxu0 0
    %5407 = vmatprep.subr.bf16.mxu0 0
    %5408 = vmatpush1.bf16.msra.mxu0 0
    %5409 = vmatprep.subr.bf16.mxu0 0
    %5410 = vmatpush1.bf16.msra.mxu0 0
    %5411 = vmatprep.subr.bf16.mxu0 0
    %5412 = vmatpush1.bf16.msra.mxu0 0
    %5413 = vmatprep.subr.bf16.mxu0 0
    %5414 = vmatpush1.bf16.msra.mxu0 0
    %5415 = vmatprep.subr.bf16.mxu0 0
    %5416 = vmatpush1.bf16.msra.mxu0 0
    %5417 = vmatprep.subr.bf16.mxu0 0
    %5418 = vmatpush1.bf16.msra.mxu0 0
    %5419 = vmatprep.mubr.bf16.mxu0 0
    %5420 = vmatmul.mubr.bf16.gmra.mrb[0].mxu0 %v5024
    %v5421 = vpop.f32.mrb[0].mxu0
    %v5422 = vadd.f32 0.0, %v5421
    %v5423 = vpop.f32.mrb[0].mxu0
    %v5424 = vadd.f32 0.0, %v5423
    %v5425 = vpop.f32.mrb[0].mxu0
    %v5426 = vpop.f32.mrb[0].mxu0
    %5427 = vdwg.mxu0
    %5428 = vmatprep.subr.bf16.mxu0 %v5223
    %5429 = vmatpush1.bf16.msra.mxu0 %v5222
    %5430 = vmatprep.subr.bf16.mxu0 %v5231
    %5431 = vmatpush1.bf16.msra.mxu0 %v5230
    %5432 = vmatprep.subr.bf16.mxu0 %v5239
    %5433 = vmatpush1.bf16.msra.mxu0 %v5238
    %5434 = vmatprep.subr.bf16.mxu0 %v5247
    %5435 = vmatpush1.bf16.msra.mxu0 %v5246
    %5436 = vmatprep.subr.bf16.mxu0 %v5255
    %5437 = vmatpush1.bf16.msra.mxu0 %v5254
    %5438 = vmatprep.subr.bf16.mxu0 %v5263
    %5439 = vmatpush1.bf16.msra.mxu0 %v5262
    %5440 = vmatprep.subr.bf16.mxu0 %v5271
    %5441 = vmatpush1.bf16.msra.mxu0 %v5270
    %5442 = vmatprep.subr.bf16.mxu0 %v5279
    %5443 = vmatpush1.bf16.msra.mxu0 %v5278
    %5444 = vmatprep.subr.bf16.mxu0 0
    %5445 = vmatpush1.bf16.msra.mxu0 0
    %5446 = vmatprep.subr.bf16.mxu0 0
    %5447 = vmatpush1.bf16.msra.mxu0 0
    %5448 = vmatprep.subr.bf16.mxu0 0
    %5449 = vmatpush1.bf16.msra.mxu0 0
    %5450 = vmatprep.subr.bf16.mxu0 0
    %5451 = vmatpush1.bf16.msra.mxu0 0
    %5452 = vmatprep.subr.bf16.mxu0 0
    %5453 = vmatpush1.bf16.msra.mxu0 0
    %5454 = vmatprep.subr.bf16.mxu0 0
    %5455 = vmatpush1.bf16.msra.mxu0 0
    %5456 = vmatprep.subr.bf16.mxu0 0
    %5457 = vmatpush1.bf16.msra.mxu0 0
    %5458 = vmatprep.subr.bf16.mxu0 0
    %5459 = vmatpush1.bf16.msra.mxu0 0
    %5460 = vmatprep.mubr.bf16.mxu0 0
    %5461 = vmatmul.mubr.bf16.gmra.mrb[0].mxu0 %v5024
    %v5462 = vpop.f32.mrb[0].mxu0
    %v5463 = vadd.f32 0.0, %v5462
    %v5464 = vpop.f32.mrb[0].mxu0
    %v5465 = vadd.f32 0.0, %v5464
    %v5466 = vpop.f32.mrb[0].mxu0
    %v5467 = vpop.f32.mrb[0].mxu0
    %5468 = vdwg.mxu0
    %5469 = vmatprep.subr.bf16.mxu0 %v5225
    %5470 = vmatpush1.bf16.msra.mxu0 %v5224
    %5471 = vmatprep.subr.bf16.mxu0 %v5233
    %5472 = vmatpush1.bf16.msra.mxu0 %v5232
    %5473 = vmatprep.subr.bf16.mxu0 %v5241
    %5474 = vmatpush1.bf16.msra.mxu0 %v5240
    %5475 = vmatprep.subr.bf16.mxu0 %v5249
    %5476 = vmatpush1.bf16.msra.mxu0 %v5248
    %5477 = vmatprep.subr.bf16.mxu0 %v5257
    %5478 = vmatpush1.bf16.msra.mxu0 %v5256
    %5479 = vmatprep.subr.bf16.mxu0 %v5265
    %5480 = vmatpush1.bf16.msra.mxu0 %v5264
    %5481 = vmatprep.subr.bf16.mxu0 %v5273
    %5482 = vmatpush1.bf16.msra.mxu0 %v5272
    %5483 = vmatprep.subr.bf16.mxu0 %v5281
    %5484 = vmatpush1.bf16.msra.mxu0 %v5280
    %5485 = vmatprep.subr.bf16.mxu0 0
    %5486 = vmatpush1.bf16.msra.mxu0 0
    %5487 = vmatprep.subr.bf16.mxu0 0
    %5488 = vmatpush1.bf16.msra.mxu0 0
    %5489 = vmatprep.subr.bf16.mxu0 0
    %5490 = vmatpush1.bf16.msra.mxu0 0
    %5491 = vmatprep.subr.bf16.mxu0 0
    %5492 = vmatpush1.bf16.msra.mxu0 0
    %5493 = vmatprep.subr.bf16.mxu0 0
    %5494 = vmatpush1.bf16.msra.mxu0 0
    %5495 = vmatprep.subr.bf16.mxu0 0
    %5496 = vmatpush1.bf16.msra.mxu0 0
    %5497 = vmatprep.subr.bf16.mxu0 0
    %5498 = vmatpush1.bf16.msra.mxu0 0
    %5499 = vmatprep.subr.bf16.mxu0 0
    %5500 = vmatpush1.bf16.msra.mxu0 0
    %5501 = vmatprep.mubr.bf16.mxu0 0
    %5502 = vmatmul.mubr.bf16.gmra.mrb[0].mxu0 %v5024
    %v5503 = vpop.f32.mrb[0].mxu0
    %v5504 = vadd.f32 0.0, %v5503
    %v5505 = vpop.f32.mrb[0].mxu0
    %v5506 = vadd.f32 0.0, %v5505
    %v5507 = vpop.f32.mrb[0].mxu0
    %v5508 = vpop.f32.mrb[0].mxu0
    %5509 = vdwg.mxu0
    %v5510 = vadd.f32 %v4937, %v5381
    %v5511 = vadd.f32 %v4938, %v5383
    %v5512 = vadd.f32 %v4939, %v5422
    %v5513 = vadd.f32 %v4940, %v5424
    %v5514 = vadd.f32 %v4941, %v5463
    %v5515 = vadd.f32 %v4942, %v5465
    %v5516 = vadd.f32 %v4943, %v5504
    %v5517 = vadd.f32 %v4944, %v5506
    %s5518 = scalar_lea.vmem [#allocation10], 3584
    %v5519 = vld [vmem:[%s5518] sm:$0xff]
    %v5520 = vld [vmem:[%s5518 + $0x8] sm:$0xff]
    %v5521 = vld [vmem:[%s5518 + $0x10] sm:$0xff]
    %v5522 = vld [vmem:[%s5518 + $0x18] sm:$0xff]
    %v5523 = vld [vmem:[%s5518 + $0x20] sm:$0xff]
    %v5524 = vld [vmem:[%s5518 + $0x28] sm:$0xff]
    %v5525 = vld [vmem:[%s5518 + $0x30] sm:$0xff]
    %v5526 = vld [vmem:[%s5518 + $0x38] sm:$0xff]
    %v5527 = vld [vmem:[%s5518 + $0x40] sm:$0xff]
    %v5528 = vld [vmem:[%s5518 + $0x48] sm:$0xff]
    %v5529 = vld [vmem:[%s5518 + $0x50] sm:$0xff]
    %v5530 = vld [vmem:[%s5518 + $0x58] sm:$0xff]
    %v5531 = vld [vmem:[%s5518 + $0x60] sm:$0xff]
    %v5532 = vld [vmem:[%s5518 + $0x68] sm:$0xff]
    %v5533 = vld [vmem:[%s5518 + $0x70] sm:$0xff]
    %v5534 = vld [vmem:[%s5518 + $0x78] sm:$0xff]
    %v5535 = vld [vmem:[%s5518 + $0x80] sm:$0xff]
    %v5536 = vld [vmem:[%s5518 + $0x88] sm:$0xff]
    %v5537 = vld [vmem:[%s5518 + $0x90] sm:$0xff]
    %v5538 = vld [vmem:[%s5518 + $0x98] sm:$0xff]
    %v5539 = vld [vmem:[%s5518 + $0xa0] sm:$0xff]
    %v5540 = vld [vmem:[%s5518 + $0xa8] sm:$0xff]
    %v5541 = vld [vmem:[%s5518 + $0xb0] sm:$0xff]
    %v5542 = vld [vmem:[%s5518 + $0xb8] sm:$0xff]
    %v5543 = vld [vmem:[%s5518 + $0xc0] sm:$0xff]
    %v5544 = vld [vmem:[%s5518 + $0xc8] sm:$0xff]
    %v5545 = vld [vmem:[%s5518 + $0xd0] sm:$0xff]
    %v5546 = vld [vmem:[%s5518 + $0xd8] sm:$0xff]
    %v5547 = vld [vmem:[%s5518 + $0xe0] sm:$0xff]
    %v5548 = vld [vmem:[%s5518 + $0xe8] sm:$0xff]
    %v5549 = vld [vmem:[%s5518 + $0xf0] sm:$0xff]
    %v5550 = vld [vmem:[%s5518 + $0xf8] sm:$0xff]
    %v5551 = vld [vmem:[%s5518 + $0x100] sm:$0xff]
    %v5552 = vld [vmem:[%s5518 + $0x108] sm:$0xff]
    %v5553 = vld [vmem:[%s5518 + $0x110] sm:$0xff]
    %v5554 = vld [vmem:[%s5518 + $0x118] sm:$0xff]
    %v5555 = vld [vmem:[%s5518 + $0x120] sm:$0xff]
    %v5556 = vld [vmem:[%s5518 + $0x128] sm:$0xff]
    %v5557 = vld [vmem:[%s5518 + $0x130] sm:$0xff]
    %v5558 = vld [vmem:[%s5518 + $0x138] sm:$0xff]
    %v5559 = vld [vmem:[%s5518 + $0x140] sm:$0xff]
    %v5560 = vld [vmem:[%s5518 + $0x148] sm:$0xff]
    %v5561 = vld [vmem:[%s5518 + $0x150] sm:$0xff]
    %v5562 = vld [vmem:[%s5518 + $0x158] sm:$0xff]
    %v5563 = vld [vmem:[%s5518 + $0x160] sm:$0xff]
    %v5564 = vld [vmem:[%s5518 + $0x168] sm:$0xff]
    %v5565 = vld [vmem:[%s5518 + $0x170] sm:$0xff]
    %v5566 = vld [vmem:[%s5518 + $0x178] sm:$0xff]
    %v5567 = vld [vmem:[%s5518 + $0x180] sm:$0xff]
    %v5568 = vld [vmem:[%s5518 + $0x188] sm:$0xff]
    %v5569 = vld [vmem:[%s5518 + $0x190] sm:$0xff]
    %v5570 = vld [vmem:[%s5518 + $0x198] sm:$0xff]
    %v5571 = vld [vmem:[%s5518 + $0x1a0] sm:$0xff]
    %v5572 = vld [vmem:[%s5518 + $0x1a8] sm:$0xff]
    %v5573 = vld [vmem:[%s5518 + $0x1b0] sm:$0xff]
    %v5574 = vld [vmem:[%s5518 + $0x1b8] sm:$0xff]
    %v5575 = vld [vmem:[%s5518 + $0x1c0] sm:$0xff]
    %v5576 = vld [vmem:[%s5518 + $0x1c8] sm:$0xff]
    %v5577 = vld [vmem:[%s5518 + $0x1d0] sm:$0xff]
    %v5578 = vld [vmem:[%s5518 + $0x1d8] sm:$0xff]
    %v5579 = vld [vmem:[%s5518 + $0x1e0] sm:$0xff]
    %v5580 = vld [vmem:[%s5518 + $0x1e8] sm:$0xff]
    %v5581 = vld [vmem:[%s5518 + $0x1f0] sm:$0xff]
    %v5582 = vld [vmem:[%s5518 + $0x1f8] sm:$0xff]
    %v5583 = vrot.slane %v1638, 7
    %v5584 = vrot.slane %v1639, 6
    %v5585 = vsel %vm1647, %v5584, %v5583
    %v5586 = vrot.slane %v1640, 5
    %v5587 = vsel %vm1650, %v5586, %v5585
    %v5588 = vrot.slane %v1641, 4
    %v5589 = vsel %vm1653, %v5588, %v5587
    %v5590 = vrot.slane %v1642, 3
    %v5591 = vsel %vm1656, %v5590, %v5589
    %v5592 = vrot.slane %v1643, 2
    %v5593 = vsel %vm1659, %v5592, %v5591
    %v5594 = vrot.slane %v1644, 1
    %v5595 = vsel %vm1662, %v5594, %v5593
    %v5596 = vsel %vm1665, %v1645, %v5595
    %v5597 = vpack.c.b16 %v5596, %v5596
    %v5663 = vunpack.c.l.b16 %v5519
    %v5664 = vunpack.c.h.b16 %v5519
    %v5665 = vunpack.c.l.b16 %v5520
    %v5666 = vunpack.c.h.b16 %v5520
    %v5667 = vunpack.c.l.b16 %v5521
    %v5668 = vunpack.c.h.b16 %v5521
    %v5669 = vunpack.c.l.b16 %v5522
    %v5670 = vunpack.c.h.b16 %v5522
    %v5671 = vunpack.c.l.b16 %v5523
    %v5672 = vunpack.c.h.b16 %v5523
    %v5673 = vunpack.c.l.b16 %v5524
    %v5674 = vunpack.c.h.b16 %v5524
    %v5675 = vunpack.c.l.b16 %v5525
    %v5676 = vunpack.c.h.b16 %v5525
    %v5677 = vunpack.c.l.b16 %v5526
    %v5678 = vunpack.c.h.b16 %v5526
    %v5679 = vunpack.c.l.b16 %v5527
    %v5680 = vunpack.c.h.b16 %v5527
    %v5681 = vunpack.c.l.b16 %v5528
    %v5682 = vunpack.c.h.b16 %v5528
    %v5683 = vunpack.c.l.b16 %v5529
    %v5684 = vunpack.c.h.b16 %v5529
    %v5685 = vunpack.c.l.b16 %v5530
    %v5686 = vunpack.c.h.b16 %v5530
    %v5687 = vunpack.c.l.b16 %v5531
    %v5688 = vunpack.c.h.b16 %v5531
    %v5689 = vunpack.c.l.b16 %v5532
    %v5690 = vunpack.c.h.b16 %v5532
    %v5691 = vunpack.c.l.b16 %v5533
    %v5692 = vunpack.c.h.b16 %v5533
    %v5693 = vunpack.c.l.b16 %v5534
    %v5694 = vunpack.c.h.b16 %v5534
    %v5695 = vunpack.c.l.b16 %v5535
    %v5696 = vunpack.c.h.b16 %v5535
    %v5697 = vunpack.c.l.b16 %v5536
    %v5698 = vunpack.c.h.b16 %v5536
    %v5699 = vunpack.c.l.b16 %v5537
    %v5700 = vunpack.c.h.b16 %v5537
    %v5701 = vunpack.c.l.b16 %v5538
    %v5702 = vunpack.c.h.b16 %v5538
    %v5703 = vunpack.c.l.b16 %v5539
    %v5704 = vunpack.c.h.b16 %v5539
    %v5705 = vunpack.c.l.b16 %v5540
    %v5706 = vunpack.c.h.b16 %v5540
    %v5707 = vunpack.c.l.b16 %v5541
    %v5708 = vunpack.c.h.b16 %v5541
    %v5709 = vunpack.c.l.b16 %v5542
    %v5710 = vunpack.c.h.b16 %v5542
    %v5711 = vunpack.c.l.b16 %v5543
    %v5712 = vunpack.c.h.b16 %v5543
    %v5713 = vunpack.c.l.b16 %v5544
    %v5714 = vunpack.c.h.b16 %v5544
    %v5715 = vunpack.c.l.b16 %v5545
    %v5716 = vunpack.c.h.b16 %v5545
    %v5717 = vunpack.c.l.b16 %v5546
    %v5718 = vunpack.c.h.b16 %v5546
    %v5719 = vunpack.c.l.b16 %v5547
    %v5720 = vunpack.c.h.b16 %v5547
    %v5721 = vunpack.c.l.b16 %v5548
    %v5722 = vunpack.c.h.b16 %v5548
    %v5723 = vunpack.c.l.b16 %v5549
    %v5724 = vunpack.c.h.b16 %v5549
    %v5725 = vunpack.c.l.b16 %v5550
    %v5726 = vunpack.c.h.b16 %v5550
    %v5727 = vunpack.c.l.b16 %v5551
    %v5728 = vunpack.c.h.b16 %v5551
    %v5729 = vunpack.c.l.b16 %v5552
    %v5730 = vunpack.c.h.b16 %v5552
    %v5731 = vunpack.c.l.b16 %v5553
    %v5732 = vunpack.c.h.b16 %v5553
    %v5733 = vunpack.c.l.b16 %v5554
    %v5734 = vunpack.c.h.b16 %v5554
    %v5735 = vunpack.c.l.b16 %v5555
    %v5736 = vunpack.c.h.b16 %v5555
    %v5737 = vunpack.c.l.b16 %v5556
    %v5738 = vunpack.c.h.b16 %v5556
    %v5739 = vunpack.c.l.b16 %v5557
    %v5740 = vunpack.c.h.b16 %v5557
    %v5741 = vunpack.c.l.b16 %v5558
    %v5742 = vunpack.c.h.b16 %v5558
    %v5743 = vunpack.c.l.b16 %v5559
    %v5744 = vunpack.c.h.b16 %v5559
    %v5745 = vunpack.c.l.b16 %v5560
    %v5746 = vunpack.c.h.b16 %v5560
    %v5747 = vunpack.c.l.b16 %v5561
    %v5748 = vunpack.c.h.b16 %v5561
    %v5749 = vunpack.c.l.b16 %v5562
    %v5750 = vunpack.c.h.b16 %v5562
    %v5751 = vunpack.c.l.b16 %v5563
    %v5752 = vunpack.c.h.b16 %v5563
    %v5753 = vunpack.c.l.b16 %v5564
    %v5754 = vunpack.c.h.b16 %v5564
    %v5755 = vunpack.c.l.b16 %v5565
    %v5756 = vunpack.c.h.b16 %v5565
    %v5757 = vunpack.c.l.b16 %v5566
    %v5758 = vunpack.c.h.b16 %v5566
    %v5759 = vunpack.c.l.b16 %v5567
    %v5760 = vunpack.c.h.b16 %v5567
    %v5761 = vunpack.c.l.b16 %v5568
    %v5762 = vunpack.c.h.b16 %v5568
    %v5763 = vunpack.c.l.b16 %v5569
    %v5764 = vunpack.c.h.b16 %v5569
    %v5765 = vunpack.c.l.b16 %v5570
    %v5766 = vunpack.c.h.b16 %v5570
    %v5767 = vunpack.c.l.b16 %v5571
    %v5768 = vunpack.c.h.b16 %v5571
    %v5769 = vunpack.c.l.b16 %v5572
    %v5770 = vunpack.c.h.b16 %v5572
    %v5771 = vunpack.c.l.b16 %v5573
    %v5772 = vunpack.c.h.b16 %v5573
    %v5773 = vunpack.c.l.b16 %v5574
    %v5774 = vunpack.c.h.b16 %v5574
    %v5775 = vunpack.c.l.b16 %v5575
    %v5776 = vunpack.c.h.b16 %v5575
    %v5777 = vunpack.c.l.b16 %v5576
    %v5778 = vunpack.c.h.b16 %v5576
    %v5779 = vunpack.c.l.b16 %v5577
    %v5780 = vunpack.c.h.b16 %v5577
    %v5781 = vunpack.c.l.b16 %v5578
    %v5782 = vunpack.c.h.b16 %v5578
    %v5783 = vunpack.c.l.b16 %v5579
    %v5784 = vunpack.c.h.b16 %v5579
    %v5785 = vunpack.c.l.b16 %v5580
    %v5786 = vunpack.c.h.b16 %v5580
    %v5787 = vunpack.c.l.b16 %v5581
    %v5788 = vunpack.c.h.b16 %v5581
    %v5789 = vunpack.c.l.b16 %v5582
    %v5790 = vunpack.c.h.b16 %v5582
    %v5791 = vpack.c.b16 %v5671, %v5663
    %v5792 = vpack.c.b16 %v5672, %v5664
    %v5793 = vpack.c.b16 %v5673, %v5665
    %v5794 = vpack.c.b16 %v5674, %v5666
    %v5795 = vpack.c.b16 %v5675, %v5667
    %v5796 = vpack.c.b16 %v5676, %v5668
    %v5797 = vpack.c.b16 %v5677, %v5669
    %v5798 = vpack.c.b16 %v5678, %v5670
    %v5799 = vpack.c.b16 %v5687, %v5679
    %v5800 = vpack.c.b16 %v5688, %v5680
    %v5801 = vpack.c.b16 %v5689, %v5681
    %v5802 = vpack.c.b16 %v5690, %v5682
    %v5803 = vpack.c.b16 %v5691, %v5683
    %v5804 = vpack.c.b16 %v5692, %v5684
    %v5805 = vpack.c.b16 %v5693, %v5685
    %v5806 = vpack.c.b16 %v5694, %v5686
    %v5807 = vpack.c.b16 %v5703, %v5695
    %v5808 = vpack.c.b16 %v5704, %v5696
    %v5809 = vpack.c.b16 %v5705, %v5697
    %v5810 = vpack.c.b16 %v5706, %v5698
    %v5811 = vpack.c.b16 %v5707, %v5699
    %v5812 = vpack.c.b16 %v5708, %v5700
    %v5813 = vpack.c.b16 %v5709, %v5701
    %v5814 = vpack.c.b16 %v5710, %v5702
    %v5815 = vpack.c.b16 %v5719, %v5711
    %v5816 = vpack.c.b16 %v5720, %v5712
    %v5817 = vpack.c.b16 %v5721, %v5713
    %v5818 = vpack.c.b16 %v5722, %v5714
    %v5819 = vpack.c.b16 %v5723, %v5715
    %v5820 = vpack.c.b16 %v5724, %v5716
    %v5821 = vpack.c.b16 %v5725, %v5717
    %v5822 = vpack.c.b16 %v5726, %v5718
    %v5823 = vpack.c.b16 %v5735, %v5727
    %v5824 = vpack.c.b16 %v5736, %v5728
    %v5825 = vpack.c.b16 %v5737, %v5729
    %v5826 = vpack.c.b16 %v5738, %v5730
    %v5827 = vpack.c.b16 %v5739, %v5731
    %v5828 = vpack.c.b16 %v5740, %v5732
    %v5829 = vpack.c.b16 %v5741, %v5733
    %v5830 = vpack.c.b16 %v5742, %v5734
    %v5831 = vpack.c.b16 %v5751, %v5743
    %v5832 = vpack.c.b16 %v5752, %v5744
    %v5833 = vpack.c.b16 %v5753, %v5745
    %v5834 = vpack.c.b16 %v5754, %v5746
    %v5835 = vpack.c.b16 %v5755, %v5747
    %v5836 = vpack.c.b16 %v5756, %v5748
    %v5837 = vpack.c.b16 %v5757, %v5749
    %v5838 = vpack.c.b16 %v5758, %v5750
    %v5839 = vpack.c.b16 %v5767, %v5759
    %v5840 = vpack.c.b16 %v5768, %v5760
    %v5841 = vpack.c.b16 %v5769, %v5761
    %v5842 = vpack.c.b16 %v5770, %v5762
    %v5843 = vpack.c.b16 %v5771, %v5763
    %v5844 = vpack.c.b16 %v5772, %v5764
    %v5845 = vpack.c.b16 %v5773, %v5765
    %v5846 = vpack.c.b16 %v5774, %v5766
    %v5847 = vpack.c.b16 %v5783, %v5775
    %v5848 = vpack.c.b16 %v5784, %v5776
    %v5849 = vpack.c.b16 %v5785, %v5777
    %v5850 = vpack.c.b16 %v5786, %v5778
    %v5851 = vpack.c.b16 %v5787, %v5779
    %v5852 = vpack.c.b16 %v5788, %v5780
    %v5853 = vpack.c.b16 %v5789, %v5781
    %v5854 = vpack.c.b16 %v5790, %v5782
    %5919 = vmatprep.subr.bf16.mxu0 %v5792
    %5920 = vmatpush1.bf16.msra.mxu0 %v5791
    %5921 = vmatprep.subr.bf16.mxu0 %v5800
    %5922 = vmatpush1.bf16.msra.mxu0 %v5799
    %5923 = vmatprep.subr.bf16.mxu0 %v5808
    %5924 = vmatpush1.bf16.msra.mxu0 %v5807
    %5925 = vmatprep.subr.bf16.mxu0 %v5816
    %5926 = vmatpush1.bf16.msra.mxu0 %v5815
    %5927 = vmatprep.subr.bf16.mxu0 %v5824
    %5928 = vmatpush1.bf16.msra.mxu0 %v5823
    %5929 = vmatprep.subr.bf16.mxu0 %v5832
    %5930 = vmatpush1.bf16.msra.mxu0 %v5831
    %5931 = vmatprep.subr.bf16.mxu0 %v5840
    %5932 = vmatpush1.bf16.msra.mxu0 %v5839
    %5933 = vmatprep.subr.bf16.mxu0 %v5848
    %5934 = vmatpush1.bf16.msra.mxu0 %v5847
    %5935 = vmatprep.subr.bf16.mxu0 0
    %5936 = vmatpush1.bf16.msra.mxu0 0
    %5937 = vmatprep.subr.bf16.mxu0 0
    %5938 = vmatpush1.bf16.msra.mxu0 0
    %5939 = vmatprep.subr.bf16.mxu0 0
    %5940 = vmatpush1.bf16.msra.mxu0 0
    %5941 = vmatprep.subr.bf16.mxu0 0
    %5942 = vmatpush1.bf16.msra.mxu0 0
    %5943 = vmatprep.subr.bf16.mxu0 0
    %5944 = vmatpush1.bf16.msra.mxu0 0
    %5945 = vmatprep.subr.bf16.mxu0 0
    %5946 = vmatpush1.bf16.msra.mxu0 0
    %5947 = vmatprep.subr.bf16.mxu0 0
    %5948 = vmatpush1.bf16.msra.mxu0 0
    %5949 = vmatprep.subr.bf16.mxu0 0
    %5950 = vmatpush1.bf16.msra.mxu0 0
    %5951 = vmatprep.mubr.bf16.mxu0 0
    %5952 = vmatmul.mubr.bf16.gmra.mrb[0].mxu0 %v5597
    %v5953 = vpop.f32.mrb[0].mxu0
    %v5954 = vadd.f32 0.0, %v5953
    %v5955 = vpop.f32.mrb[0].mxu0
    %v5956 = vadd.f32 0.0, %v5955
    %v5957 = vpop.f32.mrb[0].mxu0
    %v5958 = vpop.f32.mrb[0].mxu0
    %5959 = vdwg.mxu0
    %5960 = vmatprep.subr.bf16.mxu0 %v5794
    %5961 = vmatpush1.bf16.msra.mxu0 %v5793
    %5962 = vmatprep.subr.bf16.mxu0 %v5802
    %5963 = vmatpush1.bf16.msra.mxu0 %v5801
    %5964 = vmatprep.subr.bf16.mxu0 %v5810
    %5965 = vmatpush1.bf16.msra.mxu0 %v5809
    %5966 = vmatprep.subr.bf16.mxu0 %v5818
    %5967 = vmatpush1.bf16.msra.mxu0 %v5817
    %5968 = vmatprep.subr.bf16.mxu0 %v5826
    %5969 = vmatpush1.bf16.msra.mxu0 %v5825
    %5970 = vmatprep.subr.bf16.mxu0 %v5834
    %5971 = vmatpush1.bf16.msra.mxu0 %v5833
    %5972 = vmatprep.subr.bf16.mxu0 %v5842
    %5973 = vmatpush1.bf16.msra.mxu0 %v5841
    %5974 = vmatprep.subr.bf16.mxu0 %v5850
    %5975 = vmatpush1.bf16.msra.mxu0 %v5849
    %5976 = vmatprep.subr.bf16.mxu0 0
    %5977 = vmatpush1.bf16.msra.mxu0 0
    %5978 = vmatprep.subr.bf16.mxu0 0
    %5979 = vmatpush1.bf16.msra.mxu0 0
    %5980 = vmatprep.subr.bf16.mxu0 0
    %5981 = vmatpush1.bf16.msra.mxu0 0
    %5982 = vmatprep.subr.bf16.mxu0 0
    %5983 = vmatpush1.bf16.msra.mxu0 0
    %5984 = vmatprep.subr.bf16.mxu0 0
    %5985 = vmatpush1.bf16.msra.mxu0 0
    %5986 = vmatprep.subr.bf16.mxu0 0
    %5987 = vmatpush1.bf16.msra.mxu0 0
    %5988 = vmatprep.subr.bf16.mxu0 0
    %5989 = vmatpush1.bf16.msra.mxu0 0
    %5990 = vmatprep.subr.bf16.mxu0 0
    %5991 = vmatpush1.bf16.msra.mxu0 0
    %5992 = vmatprep.mubr.bf16.mxu0 0
    %5993 = vmatmul.mubr.bf16.gmra.mrb[0].mxu0 %v5597
    %v5994 = vpop.f32.mrb[0].mxu0
    %v5995 = vadd.f32 0.0, %v5994
    %v5996 = vpop.f32.mrb[0].mxu0
    %v5997 = vadd.f32 0.0, %v5996
    %v5998 = vpop.f32.mrb[0].mxu0
    %v5999 = vpop.f32.mrb[0].mxu0
    %6000 = vdwg.mxu0
    %6001 = vmatprep.subr.bf16.mxu0 %v5796
    %6002 = vmatpush1.bf16.msra.mxu0 %v5795
    %6003 = vmatprep.subr.bf16.mxu0 %v5804
    %6004 = vmatpush1.bf16.msra.mxu0 %v5803
    %6005 = vmatprep.subr.bf16.mxu0 %v5812
    %6006 = vmatpush1.bf16.msra.mxu0 %v5811
    %6007 = vmatprep.subr.bf16.mxu0 %v5820
    %6008 = vmatpush1.bf16.msra.mxu0 %v5819
    %6009 = vmatprep.subr.bf16.mxu0 %v5828
    %6010 = vmatpush1.bf16.msra.mxu0 %v5827
    %6011 = vmatprep.subr.bf16.mxu0 %v5836
    %6012 = vmatpush1.bf16.msra.mxu0 %v5835
    %6013 = vmatprep.subr.bf16.mxu0 %v5844
    %6014 = vmatpush1.bf16.msra.mxu0 %v5843
    %6015 = vmatprep.subr.bf16.mxu0 %v5852
    %6016 = vmatpush1.bf16.msra.mxu0 %v5851
    %6017 = vmatprep.subr.bf16.mxu0 0
    %6018 = vmatpush1.bf16.msra.mxu0 0
    %6019 = vmatprep.subr.bf16.mxu0 0
    %6020 = vmatpush1.bf16.msra.mxu0 0
    %6021 = vmatprep.subr.bf16.mxu0 0
    %6022 = vmatpush1.bf16.msra.mxu0 0
    %6023 = vmatprep.subr.bf16.mxu0 0
    %6024 = vmatpush1.bf16.msra.mxu0 0
    %6025 = vmatprep.subr.bf16.mxu0 0
    %6026 = vmatpush1.bf16.msra.mxu0 0
    %6027 = vmatprep.subr.bf16.mxu0 0
    %6028 = vmatpush1.bf16.msra.mxu0 0
    %6029 = vmatprep.subr.bf16.mxu0 0
    %6030 = vmatpush1.bf16.msra.mxu0 0
    %6031 = vmatprep.subr.bf16.mxu0 0
    %6032 = vmatpush1.bf16.msra.mxu0 0
    %6033 = vmatprep.mubr.bf16.mxu0 0
    %6034 = vmatmul.mubr.bf16.gmra.mrb[0].mxu0 %v5597
    %v6035 = vpop.f32.mrb[0].mxu0
    %v6036 = vadd.f32 0.0, %v6035
    %v6037 = vpop.f32.mrb[0].mxu0
    %v6038 = vadd.f32 0.0, %v6037
    %v6039 = vpop.f32.mrb[0].mxu0
    %v6040 = vpop.f32.mrb[0].mxu0
    %6041 = vdwg.mxu0
    %6042 = vmatprep.subr.bf16.mxu0 %v5798
    %6043 = vmatpush1.bf16.msra.mxu0 %v5797
    %6044 = vmatprep.subr.bf16.mxu0 %v5806
    %6045 = vmatpush1.bf16.msra.mxu0 %v5805
    %6046 = vmatprep.subr.bf16.mxu0 %v5814
    %6047 = vmatpush1.bf16.msra.mxu0 %v5813
    %6048 = vmatprep.subr.bf16.mxu0 %v5822
    %6049 = vmatpush1.bf16.msra.mxu0 %v5821
    %6050 = vmatprep.subr.bf16.mxu0 %v5830
    %6051 = vmatpush1.bf16.msra.mxu0 %v5829
    %6052 = vmatprep.subr.bf16.mxu0 %v5838
    %6053 = vmatpush1.bf16.msra.mxu0 %v5837
    %6054 = vmatprep.subr.bf16.mxu0 %v5846
    %6055 = vmatpush1.bf16.msra.mxu0 %v5845
    %6056 = vmatprep.subr.bf16.mxu0 %v5854
    %6057 = vmatpush1.bf16.msra.mxu0 %v5853
    %6058 = vmatprep.subr.bf16.mxu0 0
    %6059 = vmatpush1.bf16.msra.mxu0 0
    %6060 = vmatprep.subr.bf16.mxu0 0
    %6061 = vmatpush1.bf16.msra.mxu0 0
    %6062 = vmatprep.subr.bf16.mxu0 0
    %6063 = vmatpush1.bf16.msra.mxu0 0
    %6064 = vmatprep.subr.bf16.mxu0 0
    %6065 = vmatpush1.bf16.msra.mxu0 0
    %6066 = vmatprep.subr.bf16.mxu0 0
    %6067 = vmatpush1.bf16.msra.mxu0 0
    %6068 = vmatprep.subr.bf16.mxu0 0
    %6069 = vmatpush1.bf16.msra.mxu0 0
    %6070 = vmatprep.subr.bf16.mxu0 0
    %6071 = vmatpush1.bf16.msra.mxu0 0
    %6072 = vmatprep.subr.bf16.mxu0 0
    %6073 = vmatpush1.bf16.msra.mxu0 0
    %6074 = vmatprep.mubr.bf16.mxu0 0
    %6075 = vmatmul.mubr.bf16.gmra.mrb[0].mxu0 %v5597
    %v6076 = vpop.f32.mrb[0].mxu0
    %v6077 = vadd.f32 0.0, %v6076
    %v6078 = vpop.f32.mrb[0].mxu0
    %v6079 = vadd.f32 0.0, %v6078
    %v6080 = vpop.f32.mrb[0].mxu0
    %v6081 = vpop.f32.mrb[0].mxu0
    %6082 = vdwg.mxu0
    %v6083 = vadd.f32 %v5510, %v5954
    %v6084 = vadd.f32 %v5511, %v5956
    %v6085 = vadd.f32 %v5512, %v5995
    %v6086 = vadd.f32 %v5513, %v5997
    %v6087 = vadd.f32 %v5514, %v6036
    %v6088 = vadd.f32 %v5515, %v6038
    %v6089 = vadd.f32 %v5516, %v6077
    %v6090 = vadd.f32 %v5517, %v6079
    %s6091 = scalar_lea.vmem [#allocation10], 4096
    %v6092 = vld [vmem:[%s6091] sm:$0xff]
    %v6093 = vld [vmem:[%s6091 + $0x8] sm:$0xff]
    %v6094 = vld [vmem:[%s6091 + $0x10] sm:$0xff]
    %v6095 = vld [vmem:[%s6091 + $0x18] sm:$0xff]
    %v6096 = vld [vmem:[%s6091 + $0x20] sm:$0xff]
    %v6097 = vld [vmem:[%s6091 + $0x28] sm:$0xff]
    %v6098 = vld [vmem:[%s6091 + $0x30] sm:$0xff]
    %v6099 = vld [vmem:[%s6091 + $0x38] sm:$0xff]
    %v6100 = vld [vmem:[%s6091 + $0x40] sm:$0xff]
    %v6101 = vld [vmem:[%s6091 + $0x48] sm:$0xff]
    %v6102 = vld [vmem:[%s6091 + $0x50] sm:$0xff]
    %v6103 = vld [vmem:[%s6091 + $0x58] sm:$0xff]
    %v6104 = vld [vmem:[%s6091 + $0x60] sm:$0xff]
    %v6105 = vld [vmem:[%s6091 + $0x68] sm:$0xff]
    %v6106 = vld [vmem:[%s6091 + $0x70] sm:$0xff]
    %v6107 = vld [vmem:[%s6091 + $0x78] sm:$0xff]
    %v6108 = vld [vmem:[%s6091 + $0x80] sm:$0xff]
    %v6109 = vld [vmem:[%s6091 + $0x88] sm:$0xff]
    %v6110 = vld [vmem:[%s6091 + $0x90] sm:$0xff]
    %v6111 = vld [vmem:[%s6091 + $0x98] sm:$0xff]
    %v6112 = vld [vmem:[%s6091 + $0xa0] sm:$0xff]
    %v6113 = vld [vmem:[%s6091 + $0xa8] sm:$0xff]
    %v6114 = vld [vmem:[%s6091 + $0xb0] sm:$0xff]
    %v6115 = vld [vmem:[%s6091 + $0xb8] sm:$0xff]
    %v6116 = vld [vmem:[%s6091 + $0xc0] sm:$0xff]
    %v6117 = vld [vmem:[%s6091 + $0xc8] sm:$0xff]
    %v6118 = vld [vmem:[%s6091 + $0xd0] sm:$0xff]
    %v6119 = vld [vmem:[%s6091 + $0xd8] sm:$0xff]
    %v6120 = vld [vmem:[%s6091 + $0xe0] sm:$0xff]
    %v6121 = vld [vmem:[%s6091 + $0xe8] sm:$0xff]
    %v6122 = vld [vmem:[%s6091 + $0xf0] sm:$0xff]
    %v6123 = vld [vmem:[%s6091 + $0xf8] sm:$0xff]
    %v6124 = vld [vmem:[%s6091 + $0x100] sm:$0xff]
    %v6125 = vld [vmem:[%s6091 + $0x108] sm:$0xff]
    %v6126 = vld [vmem:[%s6091 + $0x110] sm:$0xff]
    %v6127 = vld [vmem:[%s6091 + $0x118] sm:$0xff]
    %v6128 = vld [vmem:[%s6091 + $0x120] sm:$0xff]
    %v6129 = vld [vmem:[%s6091 + $0x128] sm:$0xff]
    %v6130 = vld [vmem:[%s6091 + $0x130] sm:$0xff]
    %v6131 = vld [vmem:[%s6091 + $0x138] sm:$0xff]
    %v6132 = vld [vmem:[%s6091 + $0x140] sm:$0xff]
    %v6133 = vld [vmem:[%s6091 + $0x148] sm:$0xff]
    %v6134 = vld [vmem:[%s6091 + $0x150] sm:$0xff]
    %v6135 = vld [vmem:[%s6091 + $0x158] sm:$0xff]
    %v6136 = vld [vmem:[%s6091 + $0x160] sm:$0xff]
    %v6137 = vld [vmem:[%s6091 + $0x168] sm:$0xff]
    %v6138 = vld [vmem:[%s6091 + $0x170] sm:$0xff]
    %v6139 = vld [vmem:[%s6091 + $0x178] sm:$0xff]
    %v6140 = vld [vmem:[%s6091 + $0x180] sm:$0xff]
    %v6141 = vld [vmem:[%s6091 + $0x188] sm:$0xff]
    %v6142 = vld [vmem:[%s6091 + $0x190] sm:$0xff]
    %v6143 = vld [vmem:[%s6091 + $0x198] sm:$0xff]
    %v6144 = vld [vmem:[%s6091 + $0x1a0] sm:$0xff]
    %v6145 = vld [vmem:[%s6091 + $0x1a8] sm:$0xff]
    %v6146 = vld [vmem:[%s6091 + $0x1b0] sm:$0xff]
    %v6147 = vld [vmem:[%s6091 + $0x1b8] sm:$0xff]
    %v6148 = vld [vmem:[%s6091 + $0x1c0] sm:$0xff]
    %v6149 = vld [vmem:[%s6091 + $0x1c8] sm:$0xff]
    %v6150 = vld [vmem:[%s6091 + $0x1d0] sm:$0xff]
    %v6151 = vld [vmem:[%s6091 + $0x1d8] sm:$0xff]
    %v6152 = vld [vmem:[%s6091 + $0x1e0] sm:$0xff]
    %v6153 = vld [vmem:[%s6091 + $0x1e8] sm:$0xff]
    %v6154 = vld [vmem:[%s6091 + $0x1f0] sm:$0xff]
    %v6155 = vld [vmem:[%s6091 + $0x1f8] sm:$0xff]
    %v6156 = vunpack.c.h.b16 %v1493
    %v6157 = vunpack.c.h.b16 %v1494
    %v6158 = vunpack.c.h.b16 %v1495
    %v6159 = vunpack.c.h.b16 %v1496
    %v6160 = vunpack.c.h.b16 %v1497
    %v6161 = vunpack.c.h.b16 %v1498
    %v6162 = vunpack.c.h.b16 %v1499
    %v6163 = vunpack.c.h.b16 %v1500
    %v6164 = vrot.slane %v6157, 7
    %v6165 = vsel %vm1647, %v6164, %v6156
    %v6166 = vrot.slane %v6158, 6
    %v6167 = vsel %vm1650, %v6166, %v6165
    %v6168 = vrot.slane %v6159, 5
    %v6169 = vsel %vm1653, %v6168, %v6167
    %v6170 = vrot.slane %v6160, 4
    %v6171 = vsel %vm1656, %v6170, %v6169
    %v6172 = vrot.slane %v6161, 3
    %v6173 = vsel %vm1659, %v6172, %v6171
    %v6174 = vrot.slane %v6162, 2
    %v6175 = vsel %vm1662, %v6174, %v6173
    %v6176 = vrot.slane %v6163, 1
    %v6177 = vsel %vm1665, %v6176, %v6175
    %v6178 = vpack.c.b16 %v6177, %v6177
    %v6244 = vunpack.c.l.b16 %v6092
    %v6245 = vunpack.c.h.b16 %v6092
    %v6246 = vunpack.c.l.b16 %v6093
    %v6247 = vunpack.c.h.b16 %v6093
    %v6248 = vunpack.c.l.b16 %v6094
    %v6249 = vunpack.c.h.b16 %v6094
    %v6250 = vunpack.c.l.b16 %v6095
    %v6251 = vunpack.c.h.b16 %v6095
    %v6252 = vunpack.c.l.b16 %v6096
    %v6253 = vunpack.c.h.b16 %v6096
    %v6254 = vunpack.c.l.b16 %v6097
    %v6255 = vunpack.c.h.b16 %v6097
    %v6256 = vunpack.c.l.b16 %v6098
    %v6257 = vunpack.c.h.b16 %v6098
    %v6258 = vunpack.c.l.b16 %v6099
    %v6259 = vunpack.c.h.b16 %v6099
    %v6260 = vunpack.c.l.b16 %v6100
    %v6261 = vunpack.c.h.b16 %v6100
    %v6262 = vunpack.c.l.b16 %v6101
    %v6263 = vunpack.c.h.b16 %v6101
    %v6264 = vunpack.c.l.b16 %v6102
    %v6265 = vunpack.c.h.b16 %v6102
    %v6266 = vunpack.c.l.b16 %v6103
    %v6267 = vunpack.c.h.b16 %v6103
    %v6268 = vunpack.c.l.b16 %v6104
    %v6269 = vunpack.c.h.b16 %v6104
    %v6270 = vunpack.c.l.b16 %v6105
    %v6271 = vunpack.c.h.b16 %v6105
    %v6272 = vunpack.c.l.b16 %v6106
    %v6273 = vunpack.c.h.b16 %v6106
    %v6274 = vunpack.c.l.b16 %v6107
    %v6275 = vunpack.c.h.b16 %v6107
    %v6276 = vunpack.c.l.b16 %v6108
    %v6277 = vunpack.c.h.b16 %v6108
    %v6278 = vunpack.c.l.b16 %v6109
    %v6279 = vunpack.c.h.b16 %v6109
    %v6280 = vunpack.c.l.b16 %v6110
    %v6281 = vunpack.c.h.b16 %v6110
    %v6282 = vunpack.c.l.b16 %v6111
    %v6283 = vunpack.c.h.b16 %v6111
    %v6284 = vunpack.c.l.b16 %v6112
    %v6285 = vunpack.c.h.b16 %v6112
    %v6286 = vunpack.c.l.b16 %v6113
    %v6287 = vunpack.c.h.b16 %v6113
    %v6288 = vunpack.c.l.b16 %v6114
    %v6289 = vunpack.c.h.b16 %v6114
    %v6290 = vunpack.c.l.b16 %v6115
    %v6291 = vunpack.c.h.b16 %v6115
    %v6292 = vunpack.c.l.b16 %v6116
    %v6293 = vunpack.c.h.b16 %v6116
    %v6294 = vunpack.c.l.b16 %v6117
    %v6295 = vunpack.c.h.b16 %v6117
    %v6296 = vunpack.c.l.b16 %v6118
    %v6297 = vunpack.c.h.b16 %v6118
    %v6298 = vunpack.c.l.b16 %v6119
    %v6299 = vunpack.c.h.b16 %v6119
    %v6300 = vunpack.c.l.b16 %v6120
    %v6301 = vunpack.c.h.b16 %v6120
    %v6302 = vunpack.c.l.b16 %v6121
    %v6303 = vunpack.c.h.b16 %v6121
    %v6304 = vunpack.c.l.b16 %v6122
    %v6305 = vunpack.c.h.b16 %v6122
    %v6306 = vunpack.c.l.b16 %v6123
    %v6307 = vunpack.c.h.b16 %v6123
    %v6308 = vunpack.c.l.b16 %v6124
    %v6309 = vunpack.c.h.b16 %v6124
    %v6310 = vunpack.c.l.b16 %v6125
    %v6311 = vunpack.c.h.b16 %v6125
    %v6312 = vunpack.c.l.b16 %v6126
    %v6313 = vunpack.c.h.b16 %v6126
    %v6314 = vunpack.c.l.b16 %v6127
    %v6315 = vunpack.c.h.b16 %v6127
    %v6316 = vunpack.c.l.b16 %v6128
    %v6317 = vunpack.c.h.b16 %v6128
    %v6318 = vunpack.c.l.b16 %v6129
    %v6319 = vunpack.c.h.b16 %v6129
    %v6320 = vunpack.c.l.b16 %v6130
    %v6321 = vunpack.c.h.b16 %v6130
    %v6322 = vunpack.c.l.b16 %v6131
    %v6323 = vunpack.c.h.b16 %v6131
    %v6324 = vunpack.c.l.b16 %v6132
    %v6325 = vunpack.c.h.b16 %v6132
    %v6326 = vunpack.c.l.b16 %v6133
    %v6327 = vunpack.c.h.b16 %v6133
    %v6328 = vunpack.c.l.b16 %v6134
    %v6329 = vunpack.c.h.b16 %v6134
    %v6330 = vunpack.c.l.b16 %v6135
    %v6331 = vunpack.c.h.b16 %v6135
    %v6332 = vunpack.c.l.b16 %v6136
    %v6333 = vunpack.c.h.b16 %v6136
    %v6334 = vunpack.c.l.b16 %v6137
    %v6335 = vunpack.c.h.b16 %v6137
    %v6336 = vunpack.c.l.b16 %v6138
    %v6337 = vunpack.c.h.b16 %v6138
    %v6338 = vunpack.c.l.b16 %v6139
    %v6339 = vunpack.c.h.b16 %v6139
    %v6340 = vunpack.c.l.b16 %v6140
    %v6341 = vunpack.c.h.b16 %v6140
    %v6342 = vunpack.c.l.b16 %v6141
    %v6343 = vunpack.c.h.b16 %v6141
    %v6344 = vunpack.c.l.b16 %v6142
    %v6345 = vunpack.c.h.b16 %v6142
    %v6346 = vunpack.c.l.b16 %v6143
    %v6347 = vunpack.c.h.b16 %v6143
    %v6348 = vunpack.c.l.b16 %v6144
    %v6349 = vunpack.c.h.b16 %v6144
    %v6350 = vunpack.c.l.b16 %v6145
    %v6351 = vunpack.c.h.b16 %v6145
    %v6352 = vunpack.c.l.b16 %v6146
    %v6353 = vunpack.c.h.b16 %v6146
    %v6354 = vunpack.c.l.b16 %v6147
    %v6355 = vunpack.c.h.b16 %v6147
    %v6356 = vunpack.c.l.b16 %v6148
    %v6357 = vunpack.c.h.b16 %v6148
    %v6358 = vunpack.c.l.b16 %v6149
    %v6359 = vunpack.c.h.b16 %v6149
    %v6360 = vunpack.c.l.b16 %v6150
    %v6361 = vunpack.c.h.b16 %v6150
    %v6362 = vunpack.c.l.b16 %v6151
    %v6363 = vunpack.c.h.b16 %v6151
    %v6364 = vunpack.c.l.b16 %v6152
    %v6365 = vunpack.c.h.b16 %v6152
    %v6366 = vunpack.c.l.b16 %v6153
    %v6367 = vunpack.c.h.b16 %v6153
    %v6368 = vunpack.c.l.b16 %v6154
    %v6369 = vunpack.c.h.b16 %v6154
    %v6370 = vunpack.c.l.b16 %v6155
    %v6371 = vunpack.c.h.b16 %v6155
    %v6372 = vpack.c.b16 %v6252, %v6244
    %v6373 = vpack.c.b16 %v6253, %v6245
    %v6374 = vpack.c.b16 %v6254, %v6246
    %v6375 = vpack.c.b16 %v6255, %v6247
    %v6376 = vpack.c.b16 %v6256, %v6248
    %v6377 = vpack.c.b16 %v6257, %v6249
    %v6378 = vpack.c.b16 %v6258, %v6250
    %v6379 = vpack.c.b16 %v6259, %v6251
    %v6380 = vpack.c.b16 %v6268, %v6260
    %v6381 = vpack.c.b16 %v6269, %v6261
    %v6382 = vpack.c.b16 %v6270, %v6262
    %v6383 = vpack.c.b16 %v6271, %v6263
    %v6384 = vpack.c.b16 %v6272, %v6264
    %v6385 = vpack.c.b16 %v6273, %v6265
    %v6386 = vpack.c.b16 %v6274, %v6266
    %v6387 = vpack.c.b16 %v6275, %v6267
    %v6388 = vpack.c.b16 %v6284, %v6276
    %v6389 = vpack.c.b16 %v6285, %v6277
    %v6390 = vpack.c.b16 %v6286, %v6278
    %v6391 = vpack.c.b16 %v6287, %v6279
    %v6392 = vpack.c.b16 %v6288, %v6280
    %v6393 = vpack.c.b16 %v6289, %v6281
    %v6394 = vpack.c.b16 %v6290, %v6282
    %v6395 = vpack.c.b16 %v6291, %v6283
    %v6396 = vpack.c.b16 %v6300, %v6292
    %v6397 = vpack.c.b16 %v6301, %v6293
    %v6398 = vpack.c.b16 %v6302, %v6294
    %v6399 = vpack.c.b16 %v6303, %v6295
    %v6400 = vpack.c.b16 %v6304, %v6296
    %v6401 = vpack.c.b16 %v6305, %v6297
    %v6402 = vpack.c.b16 %v6306, %v6298
    %v6403 = vpack.c.b16 %v6307, %v6299
    %v6404 = vpack.c.b16 %v6316, %v6308
    %v6405 = vpack.c.b16 %v6317, %v6309
    %v6406 = vpack.c.b16 %v6318, %v6310
    %v6407 = vpack.c.b16 %v6319, %v6311
    %v6408 = vpack.c.b16 %v6320, %v6312
    %v6409 = vpack.c.b16 %v6321, %v6313
    %v6410 = vpack.c.b16 %v6322, %v6314
    %v6411 = vpack.c.b16 %v6323, %v6315
    %v6412 = vpack.c.b16 %v6332, %v6324
    %v6413 = vpack.c.b16 %v6333, %v6325
    %v6414 = vpack.c.b16 %v6334, %v6326
    %v6415 = vpack.c.b16 %v6335, %v6327
    %v6416 = vpack.c.b16 %v6336, %v6328
    %v6417 = vpack.c.b16 %v6337, %v6329
    %v6418 = vpack.c.b16 %v6338, %v6330
    %v6419 = vpack.c.b16 %v6339, %v6331
    %v6420 = vpack.c.b16 %v6348, %v6340
    %v6421 = vpack.c.b16 %v6349, %v6341
    %v6422 = vpack.c.b16 %v6350, %v6342
    %v6423 = vpack.c.b16 %v6351, %v6343
    %v6424 = vpack.c.b16 %v6352, %v6344
    %v6425 = vpack.c.b16 %v6353, %v6345
    %v6426 = vpack.c.b16 %v6354, %v6346
    %v6427 = vpack.c.b16 %v6355, %v6347
    %v6428 = vpack.c.b16 %v6364, %v6356
    %v6429 = vpack.c.b16 %v6365, %v6357
    %v6430 = vpack.c.b16 %v6366, %v6358
    %v6431 = vpack.c.b16 %v6367, %v6359
    %v6432 = vpack.c.b16 %v6368, %v6360
    %v6433 = vpack.c.b16 %v6369, %v6361
    %v6434 = vpack.c.b16 %v6370, %v6362
    %v6435 = vpack.c.b16 %v6371, %v6363
    %6500 = vmatprep.subr.bf16.mxu0 %v6373
    %6501 = vmatpush1.bf16.msra.mxu0 %v6372
    %6502 = vmatprep.subr.bf16.mxu0 %v6381
    %6503 = vmatpush1.bf16.msra.mxu0 %v6380
    %6504 = vmatprep.subr.bf16.mxu0 %v6389
    %6505 = vmatpush1.bf16.msra.mxu0 %v6388
    %6506 = vmatprep.subr.bf16.mxu0 %v6397
    %6507 = vmatpush1.bf16.msra.mxu0 %v6396
    %6508 = vmatprep.subr.bf16.mxu0 %v6405
    %6509 = vmatpush1.bf16.msra.mxu0 %v6404
    %6510 = vmatprep.subr.bf16.mxu0 %v6413
    %6511 = vmatpush1.bf16.msra.mxu0 %v6412
    %6512 = vmatprep.subr.bf16.mxu0 %v6421
    %6513 = vmatpush1.bf16.msra.mxu0 %v6420
    %6514 = vmatprep.subr.bf16.mxu0 %v6429
    %6515 = vmatpush1.bf16.msra.mxu0 %v6428
    %6516 = vmatprep.subr.bf16.mxu0 0
    %6517 = vmatpush1.bf16.msra.mxu0 0
    %6518 = vmatprep.subr.bf16.mxu0 0
    %6519 = vmatpush1.bf16.msra.mxu0 0
    %6520 = vmatprep.subr.bf16.mxu0 0
    %6521 = vmatpush1.bf16.msra.mxu0 0
    %6522 = vmatprep.subr.bf16.mxu0 0
    %6523 = vmatpush1.bf16.msra.mxu0 0
    %6524 = vmatprep.subr.bf16.mxu0 0
    %6525 = vmatpush1.bf16.msra.mxu0 0
    %6526 = vmatprep.subr.bf16.mxu0 0
    %6527 = vmatpush1.bf16.msra.mxu0 0
    %6528 = vmatprep.subr.bf16.mxu0 0
    %6529 = vmatpush1.bf16.msra.mxu0 0
    %6530 = vmatprep.subr.bf16.mxu0 0
    %6531 = vmatpush1.bf16.msra.mxu0 0
    %6532 = vmatprep.mubr.bf16.mxu0 0
    %6533 = vmatmul.mubr.bf16.gmra.mrb[0].mxu0 %v6178
    %v6534 = vpop.f32.mrb[0].mxu0
    %v6535 = vadd.f32 0.0, %v6534
    %v6536 = vpop.f32.mrb[0].mxu0
    %v6537 = vadd.f32 0.0, %v6536
    %v6538 = vpop.f32.mrb[0].mxu0
    %v6539 = vpop.f32.mrb[0].mxu0
    %6540 = vdwg.mxu0
    %6541 = vmatprep.subr.bf16.mxu0 %v6375
    %6542 = vmatpush1.bf16.msra.mxu0 %v6374
    %6543 = vmatprep.subr.bf16.mxu0 %v6383
    %6544 = vmatpush1.bf16.msra.mxu0 %v6382
    %6545 = vmatprep.subr.bf16.mxu0 %v6391
    %6546 = vmatpush1.bf16.msra.mxu0 %v6390
    %6547 = vmatprep.subr.bf16.mxu0 %v6399
    %6548 = vmatpush1.bf16.msra.mxu0 %v6398
    %6549 = vmatprep.subr.bf16.mxu0 %v6407
    %6550 = vmatpush1.bf16.msra.mxu0 %v6406
    %6551 = vmatprep.subr.bf16.mxu0 %v6415
    %6552 = vmatpush1.bf16.msra.mxu0 %v6414
    %6553 = vmatprep.subr.bf16.mxu0 %v6423
    %6554 = vmatpush1.bf16.msra.mxu0 %v6422
    %6555 = vmatprep.subr.bf16.mxu0 %v6431
    %6556 = vmatpush1.bf16.msra.mxu0 %v6430
    %6557 = vmatprep.subr.bf16.mxu0 0
    %6558 = vmatpush1.bf16.msra.mxu0 0
    %6559 = vmatprep.subr.bf16.mxu0 0
    %6560 = vmatpush1.bf16.msra.mxu0 0
    %6561 = vmatprep.subr.bf16.mxu0 0
    %6562 = vmatpush1.bf16.msra.mxu0 0
    %6563 = vmatprep.subr.bf16.mxu0 0
    %6564 = vmatpush1.bf16.msra.mxu0 0
    %6565 = vmatprep.subr.bf16.mxu0 0
    %6566 = vmatpush1.bf16.msra.mxu0 0
    %6567 = vmatprep.subr.bf16.mxu0 0
    %6568 = vmatpush1.bf16.msra.mxu0 0
    %6569 = vmatprep.subr.bf16.mxu0 0
    %6570 = vmatpush1.bf16.msra.mxu0 0
    %6571 = vmatprep.subr.bf16.mxu0 0
    %6572 = vmatpush1.bf16.msra.mxu0 0
    %6573 = vmatprep.mubr.bf16.mxu0 0
    %6574 = vmatmul.mubr.bf16.gmra.mrb[0].mxu0 %v6178
    %v6575 = vpop.f32.mrb[0].mxu0
    %v6576 = vadd.f32 0.0, %v6575
    %v6577 = vpop.f32.mrb[0].mxu0
    %v6578 = vadd.f32 0.0, %v6577
    %v6579 = vpop.f32.mrb[0].mxu0
    %v6580 = vpop.f32.mrb[0].mxu0
    %6581 = vdwg.mxu0
    %6582 = vmatprep.subr.bf16.mxu0 %v6377
    %6583 = vmatpush1.bf16.msra.mxu0 %v6376
    %6584 = vmatprep.subr.bf16.mxu0 %v6385
    %6585 = vmatpush1.bf16.msra.mxu0 %v6384
    %6586 = vmatprep.subr.bf16.mxu0 %v6393
    %6587 = vmatpush1.bf16.msra.mxu0 %v6392
    %6588 = vmatprep.subr.bf16.mxu0 %v6401
    %6589 = vmatpush1.bf16.msra.mxu0 %v6400
    %6590 = vmatprep.subr.bf16.mxu0 %v6409
    %6591 = vmatpush1.bf16.msra.mxu0 %v6408
    %6592 = vmatprep.subr.bf16.mxu0 %v6417
    %6593 = vmatpush1.bf16.msra.mxu0 %v6416
    %6594 = vmatprep.subr.bf16.mxu0 %v6425
    %6595 = vmatpush1.bf16.msra.mxu0 %v6424
    %6596 = vmatprep.subr.bf16.mxu0 %v6433
    %6597 = vmatpush1.bf16.msra.mxu0 %v6432
    %6598 = vmatprep.subr.bf16.mxu0 0
    %6599 = vmatpush1.bf16.msra.mxu0 0
    %6600 = vmatprep.subr.bf16.mxu0 0
    %6601 = vmatpush1.bf16.msra.mxu0 0
    %6602 = vmatprep.subr.bf16.mxu0 0
    %6603 = vmatpush1.bf16.msra.mxu0 0
    %6604 = vmatprep.subr.bf16.mxu0 0
    %6605 = vmatpush1.bf16.msra.mxu0 0
    %6606 = vmatprep.subr.bf16.mxu0 0
    %6607 = vmatpush1.bf16.msra.mxu0 0
    %6608 = vmatprep.subr.bf16.mxu0 0
    %6609 = vmatpush1.bf16.msra.mxu0 0
    %6610 = vmatprep.subr.bf16.mxu0 0
    %6611 = vmatpush1.bf16.msra.mxu0 0
    %6612 = vmatprep.subr.bf16.mxu0 0
    %6613 = vmatpush1.bf16.msra.mxu0 0
    %6614 = vmatprep.mubr.bf16.mxu0 0
    %6615 = vmatmul.mubr.bf16.gmra.mrb[0].mxu0 %v6178
    %v6616 = vpop.f32.mrb[0].mxu0
    %v6617 = vadd.f32 0.0, %v6616
    %v6618 = vpop.f32.mrb[0].mxu0
    %v6619 = vadd.f32 0.0, %v6618
    %v6620 = vpop.f32.mrb[0].mxu0
    %v6621 = vpop.f32.mrb[0].mxu0
    %6622 = vdwg.mxu0
    %6623 = vmatprep.subr.bf16.mxu0 %v6379
    %6624 = vmatpush1.bf16.msra.mxu0 %v6378
    %6625 = vmatprep.subr.bf16.mxu0 %v6387
    %6626 = vmatpush1.bf16.msra.mxu0 %v6386
    %6627 = vmatprep.subr.bf16.mxu0 %v6395
    %6628 = vmatpush1.bf16.msra.mxu0 %v6394
    %6629 = vmatprep.subr.bf16.mxu0 %v6403
    %6630 = vmatpush1.bf16.msra.mxu0 %v6402
    %6631 = vmatprep.subr.bf16.mxu0 %v6411
    %6632 = vmatpush1.bf16.msra.mxu0 %v6410
    %6633 = vmatprep.subr.bf16.mxu0 %v6419
    %6634 = vmatpush1.bf16.msra.mxu0 %v6418
    %6635 = vmatprep.subr.bf16.mxu0 %v6427
    %6636 = vmatpush1.bf16.msra.mxu0 %v6426
    %6637 = vmatprep.subr.bf16.mxu0 %v6435
    %6638 = vmatpush1.bf16.msra.mxu0 %v6434
    %6639 = vmatprep.subr.bf16.mxu0 0
    %6640 = vmatpush1.bf16.msra.mxu0 0
    %6641 = vmatprep.subr.bf16.mxu0 0
    %6642 = vmatpush1.bf16.msra.mxu0 0
    %6643 = vmatprep.subr.bf16.mxu0 0
    %6644 = vmatpush1.bf16.msra.mxu0 0
    %6645 = vmatprep.subr.bf16.mxu0 0
    %6646 = vmatpush1.bf16.msra.mxu0 0
    %6647 = vmatprep.subr.bf16.mxu0 0
    %6648 = vmatpush1.bf16.msra.mxu0 0
    %6649 = vmatprep.subr.bf16.mxu0 0
    %6650 = vmatpush1.bf16.msra.mxu0 0
    %6651 = vmatprep.subr.bf16.mxu0 0
    %6652 = vmatpush1.bf16.msra.mxu0 0
    %6653 = vmatprep.subr.bf16.mxu0 0
    %6654 = vmatpush1.bf16.msra.mxu0 0
    %6655 = vmatprep.mubr.bf16.mxu0 0
    %6656 = vmatmul.mubr.bf16.gmra.mrb[0].mxu0 %v6178
    %v6657 = vpop.f32.mrb[0].mxu0
    %v6658 = vadd.f32 0.0, %v6657
    %v6659 = vpop.f32.mrb[0].mxu0
    %v6660 = vadd.f32 0.0, %v6659
    %v6661 = vpop.f32.mrb[0].mxu0
    %v6662 = vpop.f32.mrb[0].mxu0
    %6663 = vdwg.mxu0
    %v6664 = vadd.f32 %v6083, %v6535
    %v6665 = vadd.f32 %v6084, %v6537
    %v6666 = vadd.f32 %v6085, %v6576
    %v6667 = vadd.f32 %v6086, %v6578
    %v6668 = vadd.f32 %v6087, %v6617
    %v6669 = vadd.f32 %v6088, %v6619
    %v6670 = vadd.f32 %v6089, %v6658
    %v6671 = vadd.f32 %v6090, %v6660
    %s6672 = scalar_lea.vmem [#allocation10], 4608
    %v6673 = vld [vmem:[%s6672] sm:$0xff]
    %v6674 = vld [vmem:[%s6672 + $0x8] sm:$0xff]
    %v6675 = vld [vmem:[%s6672 + $0x10] sm:$0xff]
    %v6676 = vld [vmem:[%s6672 + $0x18] sm:$0xff]
    %v6677 = vld [vmem:[%s6672 + $0x20] sm:$0xff]
    %v6678 = vld [vmem:[%s6672 + $0x28] sm:$0xff]
    %v6679 = vld [vmem:[%s6672 + $0x30] sm:$0xff]
    %v6680 = vld [vmem:[%s6672 + $0x38] sm:$0xff]
    %v6681 = vld [vmem:[%s6672 + $0x40] sm:$0xff]
    %v6682 = vld [vmem:[%s6672 + $0x48] sm:$0xff]
    %v6683 = vld [vmem:[%s6672 + $0x50] sm:$0xff]
    %v6684 = vld [vmem:[%s6672 + $0x58] sm:$0xff]
    %v6685 = vld [vmem:[%s6672 + $0x60] sm:$0xff]
    %v6686 = vld [vmem:[%s6672 + $0x68] sm:$0xff]
    %v6687 = vld [vmem:[%s6672 + $0x70] sm:$0xff]
    %v6688 = vld [vmem:[%s6672 + $0x78] sm:$0xff]
    %v6689 = vld [vmem:[%s6672 + $0x80] sm:$0xff]
    %v6690 = vld [vmem:[%s6672 + $0x88] sm:$0xff]
    %v6691 = vld [vmem:[%s6672 + $0x90] sm:$0xff]
    %v6692 = vld [vmem:[%s6672 + $0x98] sm:$0xff]
    %v6693 = vld [vmem:[%s6672 + $0xa0] sm:$0xff]
    %v6694 = vld [vmem:[%s6672 + $0xa8] sm:$0xff]
    %v6695 = vld [vmem:[%s6672 + $0xb0] sm:$0xff]
    %v6696 = vld [vmem:[%s6672 + $0xb8] sm:$0xff]
    %v6697 = vld [vmem:[%s6672 + $0xc0] sm:$0xff]
    %v6698 = vld [vmem:[%s6672 + $0xc8] sm:$0xff]
    %v6699 = vld [vmem:[%s6672 + $0xd0] sm:$0xff]
    %v6700 = vld [vmem:[%s6672 + $0xd8] sm:$0xff]
    %v6701 = vld [vmem:[%s6672 + $0xe0] sm:$0xff]
    %v6702 = vld [vmem:[%s6672 + $0xe8] sm:$0xff]
    %v6703 = vld [vmem:[%s6672 + $0xf0] sm:$0xff]
    %v6704 = vld [vmem:[%s6672 + $0xf8] sm:$0xff]
    %v6705 = vld [vmem:[%s6672 + $0x100] sm:$0xff]
    %v6706 = vld [vmem:[%s6672 + $0x108] sm:$0xff]
    %v6707 = vld [vmem:[%s6672 + $0x110] sm:$0xff]
    %v6708 = vld [vmem:[%s6672 + $0x118] sm:$0xff]
    %v6709 = vld [vmem:[%s6672 + $0x120] sm:$0xff]
    %v6710 = vld [vmem:[%s6672 + $0x128] sm:$0xff]
    %v6711 = vld [vmem:[%s6672 + $0x130] sm:$0xff]
    %v6712 = vld [vmem:[%s6672 + $0x138] sm:$0xff]
    %v6713 = vld [vmem:[%s6672 + $0x140] sm:$0xff]
    %v6714 = vld [vmem:[%s6672 + $0x148] sm:$0xff]
    %v6715 = vld [vmem:[%s6672 + $0x150] sm:$0xff]
    %v6716 = vld [vmem:[%s6672 + $0x158] sm:$0xff]
    %v6717 = vld [vmem:[%s6672 + $0x160] sm:$0xff]
    %v6718 = vld [vmem:[%s6672 + $0x168] sm:$0xff]
    %v6719 = vld [vmem:[%s6672 + $0x170] sm:$0xff]
    %v6720 = vld [vmem:[%s6672 + $0x178] sm:$0xff]
    %v6721 = vld [vmem:[%s6672 + $0x180] sm:$0xff]
    %v6722 = vld [vmem:[%s6672 + $0x188] sm:$0xff]
    %v6723 = vld [vmem:[%s6672 + $0x190] sm:$0xff]
    %v6724 = vld [vmem:[%s6672 + $0x198] sm:$0xff]
    %v6725 = vld [vmem:[%s6672 + $0x1a0] sm:$0xff]
    %v6726 = vld [vmem:[%s6672 + $0x1a8] sm:$0xff]
    %v6727 = vld [vmem:[%s6672 + $0x1b0] sm:$0xff]
    %v6728 = vld [vmem:[%s6672 + $0x1b8] sm:$0xff]
    %v6729 = vld [vmem:[%s6672 + $0x1c0] sm:$0xff]
    %v6730 = vld [vmem:[%s6672 + $0x1c8] sm:$0xff]
    %v6731 = vld [vmem:[%s6672 + $0x1d0] sm:$0xff]
    %v6732 = vld [vmem:[%s6672 + $0x1d8] sm:$0xff]
    %v6733 = vld [vmem:[%s6672 + $0x1e0] sm:$0xff]
    %v6734 = vld [vmem:[%s6672 + $0x1e8] sm:$0xff]
    %v6735 = vld [vmem:[%s6672 + $0x1f0] sm:$0xff]
    %v6736 = vld [vmem:[%s6672 + $0x1f8] sm:$0xff]
    %v6737 = vrot.slane %v6156, 1
    %v6738 = vsel %vm1647, %v6157, %v6737
    %v6739 = vrot.slane %v6158, 7
    %v6740 = vsel %vm1650, %v6739, %v6738
    %v6741 = vrot.slane %v6159, 6
    %v6742 = vsel %vm1653, %v6741, %v6740
    %v6743 = vrot.slane %v6160, 5
    %v6744 = vsel %vm1656, %v6743, %v6742
    %v6745 = vrot.slane %v6161, 4
    %v6746 = vsel %vm1659, %v6745, %v6744
    %v6747 = vrot.slane %v6162, 3
    %v6748 = vsel %vm1662, %v6747, %v6746
    %v6749 = vrot.slane %v6163, 2
    %v6750 = vsel %vm1665, %v6749, %v6748
    %v6751 = vpack.c.b16 %v6750, %v6750
    %v6817 = vunpack.c.l.b16 %v6673
    %v6818 = vunpack.c.h.b16 %v6673
    %v6819 = vunpack.c.l.b16 %v6674
    %v6820 = vunpack.c.h.b16 %v6674
    %v6821 = vunpack.c.l.b16 %v6675
    %v6822 = vunpack.c.h.b16 %v6675
    %v6823 = vunpack.c.l.b16 %v6676
    %v6824 = vunpack.c.h.b16 %v6676
    %v6825 = vunpack.c.l.b16 %v6677
    %v6826 = vunpack.c.h.b16 %v6677
    %v6827 = vunpack.c.l.b16 %v6678
    %v6828 = vunpack.c.h.b16 %v6678
    %v6829 = vunpack.c.l.b16 %v6679
    %v6830 = vunpack.c.h.b16 %v6679
    %v6831 = vunpack.c.l.b16 %v6680
    %v6832 = vunpack.c.h.b16 %v6680
    %v6833 = vunpack.c.l.b16 %v6681
    %v6834 = vunpack.c.h.b16 %v6681
    %v6835 = vunpack.c.l.b16 %v6682
    %v6836 = vunpack.c.h.b16 %v6682
    %v6837 = vunpack.c.l.b16 %v6683
    %v6838 = vunpack.c.h.b16 %v6683
    %v6839 = vunpack.c.l.b16 %v6684
    %v6840 = vunpack.c.h.b16 %v6684
    %v6841 = vunpack.c.l.b16 %v6685
    %v6842 = vunpack.c.h.b16 %v6685
    %v6843 = vunpack.c.l.b16 %v6686
    %v6844 = vunpack.c.h.b16 %v6686
    %v6845 = vunpack.c.l.b16 %v6687
    %v6846 = vunpack.c.h.b16 %v6687
    %v6847 = vunpack.c.l.b16 %v6688
    %v6848 = vunpack.c.h.b16 %v6688
    %v6849 = vunpack.c.l.b16 %v6689
    %v6850 = vunpack.c.h.b16 %v6689
    %v6851 = vunpack.c.l.b16 %v6690
    %v6852 = vunpack.c.h.b16 %v6690
    %v6853 = vunpack.c.l.b16 %v6691
    %v6854 = vunpack.c.h.b16 %v6691
    %v6855 = vunpack.c.l.b16 %v6692
    %v6856 = vunpack.c.h.b16 %v6692
    %v6857 = vunpack.c.l.b16 %v6693
    %v6858 = vunpack.c.h.b16 %v6693
    %v6859 = vunpack.c.l.b16 %v6694
    %v6860 = vunpack.c.h.b16 %v6694
    %v6861 = vunpack.c.l.b16 %v6695
    %v6862 = vunpack.c.h.b16 %v6695
    %v6863 = vunpack.c.l.b16 %v6696
    %v6864 = vunpack.c.h.b16 %v6696
    %v6865 = vunpack.c.l.b16 %v6697
    %v6866 = vunpack.c.h.b16 %v6697
    %v6867 = vunpack.c.l.b16 %v6698
    %v6868 = vunpack.c.h.b16 %v6698
    %v6869 = vunpack.c.l.b16 %v6699
    %v6870 = vunpack.c.h.b16 %v6699
    %v6871 = vunpack.c.l.b16 %v6700
    %v6872 = vunpack.c.h.b16 %v6700
    %v6873 = vunpack.c.l.b16 %v6701
    %v6874 = vunpack.c.h.b16 %v6701
    %v6875 = vunpack.c.l.b16 %v6702
    %v6876 = vunpack.c.h.b16 %v6702
    %v6877 = vunpack.c.l.b16 %v6703
    %v6878 = vunpack.c.h.b16 %v6703
    %v6879 = vunpack.c.l.b16 %v6704
    %v6880 = vunpack.c.h.b16 %v6704
    %v6881 = vunpack.c.l.b16 %v6705
    %v6882 = vunpack.c.h.b16 %v6705
    %v6883 = vunpack.c.l.b16 %v6706
    %v6884 = vunpack.c.h.b16 %v6706
    %v6885 = vunpack.c.l.b16 %v6707
    %v6886 = vunpack.c.h.b16 %v6707
    %v6887 = vunpack.c.l.b16 %v6708
    %v6888 = vunpack.c.h.b16 %v6708
    %v6889 = vunpack.c.l.b16 %v6709
    %v6890 = vunpack.c.h.b16 %v6709
    %v6891 = vunpack.c.l.b16 %v6710
    %v6892 = vunpack.c.h.b16 %v6710
    %v6893 = vunpack.c.l.b16 %v6711
    %v6894 = vunpack.c.h.b16 %v6711
    %v6895 = vunpack.c.l.b16 %v6712
    %v6896 = vunpack.c.h.b16 %v6712
    %v6897 = vunpack.c.l.b16 %v6713
    %v6898 = vunpack.c.h.b16 %v6713
    %v6899 = vunpack.c.l.b16 %v6714
    %v6900 = vunpack.c.h.b16 %v6714
    %v6901 = vunpack.c.l.b16 %v6715
    %v6902 = vunpack.c.h.b16 %v6715
    %v6903 = vunpack.c.l.b16 %v6716
    %v6904 = vunpack.c.h.b16 %v6716
    %v6905 = vunpack.c.l.b16 %v6717
    %v6906 = vunpack.c.h.b16 %v6717
    %v6907 = vunpack.c.l.b16 %v6718
    %v6908 = vunpack.c.h.b16 %v6718
    %v6909 = vunpack.c.l.b16 %v6719
    %v6910 = vunpack.c.h.b16 %v6719
    %v6911 = vunpack.c.l.b16 %v6720
    %v6912 = vunpack.c.h.b16 %v6720
    %v6913 = vunpack.c.l.b16 %v6721
    %v6914 = vunpack.c.h.b16 %v6721
    %v6915 = vunpack.c.l.b16 %v6722
    %v6916 = vunpack.c.h.b16 %v6722
    %v6917 = vunpack.c.l.b16 %v6723
    %v6918 = vunpack.c.h.b16 %v6723
    %v6919 = vunpack.c.l.b16 %v6724
    %v6920 = vunpack.c.h.b16 %v6724
    %v6921 = vunpack.c.l.b16 %v6725
    %v6922 = vunpack.c.h.b16 %v6725
    %v6923 = vunpack.c.l.b16 %v6726
    %v6924 = vunpack.c.h.b16 %v6726
    %v6925 = vunpack.c.l.b16 %v6727
    %v6926 = vunpack.c.h.b16 %v6727
    %v6927 = vunpack.c.l.b16 %v6728
    %v6928 = vunpack.c.h.b16 %v6728
    %v6929 = vunpack.c.l.b16 %v6729
    %v6930 = vunpack.c.h.b16 %v6729
    %v6931 = vunpack.c.l.b16 %v6730
    %v6932 = vunpack.c.h.b16 %v6730
    %v6933 = vunpack.c.l.b16 %v6731
    %v6934 = vunpack.c.h.b16 %v6731
    %v6935 = vunpack.c.l.b16 %v6732
    %v6936 = vunpack.c.h.b16 %v6732
    %v6937 = vunpack.c.l.b16 %v6733
    %v6938 = vunpack.c.h.b16 %v6733
    %v6939 = vunpack.c.l.b16 %v6734
    %v6940 = vunpack.c.h.b16 %v6734
    %v6941 = vunpack.c.l.b16 %v6735
    %v6942 = vunpack.c.h.b16 %v6735
    %v6943 = vunpack.c.l.b16 %v6736
    %v6944 = vunpack.c.h.b16 %v6736
    %v6945 = vpack.c.b16 %v6825, %v6817
    %v6946 = vpack.c.b16 %v6826, %v6818
    %v6947 = vpack.c.b16 %v6827, %v6819
    %v6948 = vpack.c.b16 %v6828, %v6820
    %v6949 = vpack.c.b16 %v6829, %v6821
    %v6950 = vpack.c.b16 %v6830, %v6822
    %v6951 = vpack.c.b16 %v6831, %v6823
    %v6952 = vpack.c.b16 %v6832, %v6824
    %v6953 = vpack.c.b16 %v6841, %v6833
    %v6954 = vpack.c.b16 %v6842, %v6834
    %v6955 = vpack.c.b16 %v6843, %v6835
    %v6956 = vpack.c.b16 %v6844, %v6836
    %v6957 = vpack.c.b16 %v6845, %v6837
    %v6958 = vpack.c.b16 %v6846, %v6838
    %v6959 = vpack.c.b16 %v6847, %v6839
    %v6960 = vpack.c.b16 %v6848, %v6840
    %v6961 = vpack.c.b16 %v6857, %v6849
    %v6962 = vpack.c.b16 %v6858, %v6850
    %v6963 = vpack.c.b16 %v6859, %v6851
    %v6964 = vpack.c.b16 %v6860, %v6852
    %v6965 = vpack.c.b16 %v6861, %v6853
    %v6966 = vpack.c.b16 %v6862, %v6854
    %v6967 = vpack.c.b16 %v6863, %v6855
    %v6968 = vpack.c.b16 %v6864, %v6856
    %v6969 = vpack.c.b16 %v6873, %v6865
    %v6970 = vpack.c.b16 %v6874, %v6866
    %v6971 = vpack.c.b16 %v6875, %v6867
    %v6972 = vpack.c.b16 %v6876, %v6868
    %v6973 = vpack.c.b16 %v6877, %v6869
    %v6974 = vpack.c.b16 %v6878, %v6870
    %v6975 = vpack.c.b16 %v6879, %v6871
    %v6976 = vpack.c.b16 %v6880, %v6872
    %v6977 = vpack.c.b16 %v6889, %v6881
    %v6978 = vpack.c.b16 %v6890, %v6882
    %v6979 = vpack.c.b16 %v6891, %v6883
    %v6980 = vpack.c.b16 %v6892, %v6884
    %v6981 = vpack.c.b16 %v6893, %v6885
    %v6982 = vpack.c.b16 %v6894, %v6886
    %v6983 = vpack.c.b16 %v6895, %v6887
    %v6984 = vpack.c.b16 %v6896, %v6888
    %v6985 = vpack.c.b16 %v6905, %v6897
    %v6986 = vpack.c.b16 %v6906, %v6898
    %v6987 = vpack.c.b16 %v6907, %v6899
    %v6988 = vpack.c.b16 %v6908, %v6900
    %v6989 = vpack.c.b16 %v6909, %v6901
    %v6990 = vpack.c.b16 %v6910, %v6902
    %v6991 = vpack.c.b16 %v6911, %v6903
    %v6992 = vpack.c.b16 %v6912, %v6904
    %v6993 = vpack.c.b16 %v6921, %v6913
    %v6994 = vpack.c.b16 %v6922, %v6914
    %v6995 = vpack.c.b16 %v6923, %v6915
    %v6996 = vpack.c.b16 %v6924, %v6916
    %v6997 = vpack.c.b16 %v6925, %v6917
    %v6998 = vpack.c.b16 %v6926, %v6918
    %v6999 = vpack.c.b16 %v6927, %v6919
    %v7000 = vpack.c.b16 %v6928, %v6920
    %v7001 = vpack.c.b16 %v6937, %v6929
    %v7002 = vpack.c.b16 %v6938, %v6930
    %v7003 = vpack.c.b16 %v6939, %v6931
    %v7004 = vpack.c.b16 %v6940, %v6932
    %v7005 = vpack.c.b16 %v6941, %v6933
    %v7006 = vpack.c.b16 %v6942, %v6934
    %v7007 = vpack.c.b16 %v6943, %v6935
    %v7008 = vpack.c.b16 %v6944, %v6936
    %7073 = vmatprep.subr.bf16.mxu0 %v6946
    %7074 = vmatpush1.bf16.msra.mxu0 %v6945
    %7075 = vmatprep.subr.bf16.mxu0 %v6954
    %7076 = vmatpush1.bf16.msra.mxu0 %v6953
    %7077 = vmatprep.subr.bf16.mxu0 %v6962
    %7078 = vmatpush1.bf16.msra.mxu0 %v6961
    %7079 = vmatprep.subr.bf16.mxu0 %v6970
    %7080 = vmatpush1.bf16.msra.mxu0 %v6969
    %7081 = vmatprep.subr.bf16.mxu0 %v6978
    %7082 = vmatpush1.bf16.msra.mxu0 %v6977
    %7083 = vmatprep.subr.bf16.mxu0 %v6986
    %7084 = vmatpush1.bf16.msra.mxu0 %v6985
    %7085 = vmatprep.subr.bf16.mxu0 %v6994
    %7086 = vmatpush1.bf16.msra.mxu0 %v6993
    %7087 = vmatprep.subr.bf16.mxu0 %v7002
    %7088 = vmatpush1.bf16.msra.mxu0 %v7001
    %7089 = vmatprep.subr.bf16.mxu0 0
    %7090 = vmatpush1.bf16.msra.mxu0 0
    %7091 = vmatprep.subr.bf16.mxu0 0
    %7092 = vmatpush1.bf16.msra.mxu0 0
    %7093 = vmatprep.subr.bf16.mxu0 0
    %7094 = vmatpush1.bf16.msra.mxu0 0
    %7095 = vmatprep.subr.bf16.mxu0 0
    %7096 = vmatpush1.bf16.msra.mxu0 0
    %7097 = vmatprep.subr.bf16.mxu0 0
    %7098 = vmatpush1.bf16.msra.mxu0 0
    %7099 = vmatprep.subr.bf16.mxu0 0
    %7100 = vmatpush1.bf16.msra.mxu0 0
    %7101 = vmatprep.subr.bf16.mxu0 0
    %7102 = vmatpush1.bf16.msra.mxu0 0
    %7103 = vmatprep.subr.bf16.mxu0 0
    %7104 = vmatpush1.bf16.msra.mxu0 0
    %7105 = vmatprep.mubr.bf16.mxu0 0
    %7106 = vmatmul.mubr.bf16.gmra.mrb[0].mxu0 %v6751
    %v7107 = vpop.f32.mrb[0].mxu0
    %v7108 = vadd.f32 0.0, %v7107
    %v7109 = vpop.f32.mrb[0].mxu0
    %v7110 = vadd.f32 0.0, %v7109
    %v7111 = vpop.f32.mrb[0].mxu0
    %v7112 = vpop.f32.mrb[0].mxu0
    %7113 = vdwg.mxu0
    %7114 = vmatprep.subr.bf16.mxu0 %v6948
    %7115 = vmatpush1.bf16.msra.mxu0 %v6947
    %7116 = vmatprep.subr.bf16.mxu0 %v6956
    %7117 = vmatpush1.bf16.msra.mxu0 %v6955
    %7118 = vmatprep.subr.bf16.mxu0 %v6964
    %7119 = vmatpush1.bf16.msra.mxu0 %v6963
    %7120 = vmatprep.subr.bf16.mxu0 %v6972
    %7121 = vmatpush1.bf16.msra.mxu0 %v6971
    %7122 = vmatprep.subr.bf16.mxu0 %v6980
    %7123 = vmatpush1.bf16.msra.mxu0 %v6979
    %7124 = vmatprep.subr.bf16.mxu0 %v6988
    %7125 = vmatpush1.bf16.msra.mxu0 %v6987
    %7126 = vmatprep.subr.bf16.mxu0 %v6996
    %7127 = vmatpush1.bf16.msra.mxu0 %v6995
    %7128 = vmatprep.subr.bf16.mxu0 %v7004
    %7129 = vmatpush1.bf16.msra.mxu0 %v7003
    %7130 = vmatprep.subr.bf16.mxu0 0
    %7131 = vmatpush1.bf16.msra.mxu0 0
    %7132 = vmatprep.subr.bf16.mxu0 0
    %7133 = vmatpush1.bf16.msra.mxu0 0
    %7134 = vmatprep.subr.bf16.mxu0 0
    %7135 = vmatpush1.bf16.msra.mxu0 0
    %7136 = vmatprep.subr.bf16.mxu0 0
    %7137 = vmatpush1.bf16.msra.mxu0 0
    %7138 = vmatprep.subr.bf16.mxu0 0
    %7139 = vmatpush1.bf16.msra.mxu0 0
    %7140 = vmatprep.subr.bf16.mxu0 0
    %7141 = vmatpush1.bf16.msra.mxu0 0
    %7142 = vmatprep.subr.bf16.mxu0 0
    %7143 = vmatpush1.bf16.msra.mxu0 0
    %7144 = vmatprep.subr.bf16.mxu0 0
    %7145 = vmatpush1.bf16.msra.mxu0 0
    %7146 = vmatprep.mubr.bf16.mxu0 0
    %7147 = vmatmul.mubr.bf16.gmra.mrb[0].mxu0 %v6751
    %v7148 = vpop.f32.mrb[0].mxu0
    %v7149 = vadd.f32 0.0, %v7148
    %v7150 = vpop.f32.mrb[0].mxu0
    %v7151 = vadd.f32 0.0, %v7150
    %v7152 = vpop.f32.mrb[0].mxu0
    %v7153 = vpop.f32.mrb[0].mxu0
    %7154 = vdwg.mxu0
    %7155 = vmatprep.subr.bf16.mxu0 %v6950
    %7156 = vmatpush1.bf16.msra.mxu0 %v6949
    %7157 = vmatprep.subr.bf16.mxu0 %v6958
    %7158 = vmatpush1.bf16.msra.mxu0 %v6957
    %7159 = vmatprep.subr.bf16.mxu0 %v6966
    %7160 = vmatpush1.bf16.msra.mxu0 %v6965
    %7161 = vmatprep.subr.bf16.mxu0 %v6974
    %7162 = vmatpush1.bf16.msra.mxu0 %v6973
    %7163 = vmatprep.subr.bf16.mxu0 %v6982
    %7164 = vmatpush1.bf16.msra.mxu0 %v6981
    %7165 = vmatprep.subr.bf16.mxu0 %v6990
    %7166 = vmatpush1.bf16.msra.mxu0 %v6989
    %7167 = vmatprep.subr.bf16.mxu0 %v6998
    %7168 = vmatpush1.bf16.msra.mxu0 %v6997
    %7169 = vmatprep.subr.bf16.mxu0 %v7006
    %7170 = vmatpush1.bf16.msra.mxu0 %v7005
    %7171 = vmatprep.subr.bf16.mxu0 0
    %7172 = vmatpush1.bf16.msra.mxu0 0
    %7173 = vmatprep.subr.bf16.mxu0 0
    %7174 = vmatpush1.bf16.msra.mxu0 0
    %7175 = vmatprep.subr.bf16.mxu0 0
    %7176 = vmatpush1.bf16.msra.mxu0 0
    %7177 = vmatprep.subr.bf16.mxu0 0
    %7178 = vmatpush1.bf16.msra.mxu0 0
    %7179 = vmatprep.subr.bf16.mxu0 0
    %7180 = vmatpush1.bf16.msra.mxu0 0
    %7181 = vmatprep.subr.bf16.mxu0 0
    %7182 = vmatpush1.bf16.msra.mxu0 0
    %7183 = vmatprep.subr.bf16.mxu0 0
    %7184 = vmatpush1.bf16.msra.mxu0 0
    %7185 = vmatprep.subr.bf16.mxu0 0
    %7186 = vmatpush1.bf16.msra.mxu0 0
    %7187 = vmatprep.mubr.bf16.mxu0 0
    %7188 = vmatmul.mubr.bf16.gmra.mrb[0].mxu0 %v6751
    %v7189 = vpop.f32.mrb[0].mxu0
    %v7190 = vadd.f32 0.0, %v7189
    %v7191 = vpop.f32.mrb[0].mxu0
    %v7192 = vadd.f32 0.0, %v7191
    %v7193 = vpop.f32.mrb[0].mxu0
    %v7194 = vpop.f32.mrb[0].mxu0
    %7195 = vdwg.mxu0
    %7196 = vmatprep.subr.bf16.mxu0 %v6952
    %7197 = vmatpush1.bf16.msra.mxu0 %v6951
    %7198 = vmatprep.subr.bf16.mxu0 %v6960
    %7199 = vmatpush1.bf16.msra.mxu0 %v6959
    %7200 = vmatprep.subr.bf16.mxu0 %v6968
    %7201 = vmatpush1.bf16.msra.mxu0 %v6967
    %7202 = vmatprep.subr.bf16.mxu0 %v6976
    %7203 = vmatpush1.bf16.msra.mxu0 %v6975
    %7204 = vmatprep.subr.bf16.mxu0 %v6984
    %7205 = vmatpush1.bf16.msra.mxu0 %v6983
    %7206 = vmatprep.subr.bf16.mxu0 %v6992
    %7207 = vmatpush1.bf16.msra.mxu0 %v6991
    %7208 = vmatprep.subr.bf16.mxu0 %v7000
    %7209 = vmatpush1.bf16.msra.mxu0 %v6999
    %7210 = vmatprep.subr.bf16.mxu0 %v7008
    %7211 = vmatpush1.bf16.msra.mxu0 %v7007
    %7212 = vmatprep.subr.bf16.mxu0 0
    %7213 = vmatpush1.bf16.msra.mxu0 0
    %7214 = vmatprep.subr.bf16.mxu0 0
    %7215 = vmatpush1.bf16.msra.mxu0 0
    %7216 = vmatprep.subr.bf16.mxu0 0
    %7217 = vmatpush1.bf16.msra.mxu0 0
    %7218 = vmatprep.subr.bf16.mxu0 0
    %7219 = vmatpush1.bf16.msra.mxu0 0
    %7220 = vmatprep.subr.bf16.mxu0 0
    %7221 = vmatpush1.bf16.msra.mxu0 0
    %7222 = vmatprep.subr.bf16.mxu0 0
    %7223 = vmatpush1.bf16.msra.mxu0 0
    %7224 = vmatprep.subr.bf16.mxu0 0
    %7225 = vmatpush1.bf16.msra.mxu0 0
    %7226 = vmatprep.subr.bf16.mxu0 0
    %7227 = vmatpush1.bf16.msra.mxu0 0
    %7228 = vmatprep.mubr.bf16.mxu0 0
    %7229 = vmatmul.mubr.bf16.gmra.mrb[0].mxu0 %v6751
    %v7230 = vpop.f32.mrb[0].mxu0
    %v7231 = vadd.f32 0.0, %v7230
    %v7232 = vpop.f32.mrb[0].mxu0
    %v7233 = vadd.f32 0.0, %v7232
    %v7234 = vpop.f32.mrb[0].mxu0
    %v7235 = vpop.f32.mrb[0].mxu0
    %7236 = vdwg.mxu0
    %v7237 = vadd.f32 %v6664, %v7108
    %v7238 = vadd.f32 %v6665, %v7110
    %v7239 = vadd.f32 %v6666, %v7149
    %v7240 = vadd.f32 %v6667, %v7151
    %v7241 = vadd.f32 %v6668, %v7190
    %v7242 = vadd.f32 %v6669, %v7192
    %v7243 = vadd.f32 %v6670, %v7231
    %v7244 = vadd.f32 %v6671, %v7233
    %s7245 = scalar_lea.vmem [#allocation10], 5120
    %v7246 = vld [vmem:[%s7245] sm:$0xff]
    %v7247 = vld [vmem:[%s7245 + $0x8] sm:$0xff]
    %v7248 = vld [vmem:[%s7245 + $0x10] sm:$0xff]
    %v7249 = vld [vmem:[%s7245 + $0x18] sm:$0xff]
    %v7250 = vld [vmem:[%s7245 + $0x20] sm:$0xff]
    %v7251 = vld [vmem:[%s7245 + $0x28] sm:$0xff]
    %v7252 = vld [vmem:[%s7245 + $0x30] sm:$0xff]
    %v7253 = vld [vmem:[%s7245 + $0x38] sm:$0xff]
    %v7254 = vld [vmem:[%s7245 + $0x40] sm:$0xff]
    %v7255 = vld [vmem:[%s7245 + $0x48] sm:$0xff]
    %v7256 = vld [vmem:[%s7245 + $0x50] sm:$0xff]
    %v7257 = vld [vmem:[%s7245 + $0x58] sm:$0xff]
    %v7258 = vld [vmem:[%s7245 + $0x60] sm:$0xff]
    %v7259 = vld [vmem:[%s7245 + $0x68] sm:$0xff]
    %v7260 = vld [vmem:[%s7245 + $0x70] sm:$0xff]
    %v7261 = vld [vmem:[%s7245 + $0x78] sm:$0xff]
    %v7262 = vld [vmem:[%s7245 + $0x80] sm:$0xff]
    %v7263 = vld [vmem:[%s7245 + $0x88] sm:$0xff]
    %v7264 = vld [vmem:[%s7245 + $0x90] sm:$0xff]
    %v7265 = vld [vmem:[%s7245 + $0x98] sm:$0xff]
    %v7266 = vld [vmem:[%s7245 + $0xa0] sm:$0xff]
    %v7267 = vld [vmem:[%s7245 + $0xa8] sm:$0xff]
    %v7268 = vld [vmem:[%s7245 + $0xb0] sm:$0xff]
    %v7269 = vld [vmem:[%s7245 + $0xb8] sm:$0xff]
    %v7270 = vld [vmem:[%s7245 + $0xc0] sm:$0xff]
    %v7271 = vld [vmem:[%s7245 + $0xc8] sm:$0xff]
    %v7272 = vld [vmem:[%s7245 + $0xd0] sm:$0xff]
    %v7273 = vld [vmem:[%s7245 + $0xd8] sm:$0xff]
    %v7274 = vld [vmem:[%s7245 + $0xe0] sm:$0xff]
    %v7275 = vld [vmem:[%s7245 + $0xe8] sm:$0xff]
    %v7276 = vld [vmem:[%s7245 + $0xf0] sm:$0xff]
    %v7277 = vld [vmem:[%s7245 + $0xf8] sm:$0xff]
    %v7278 = vld [vmem:[%s7245 + $0x100] sm:$0xff]
    %v7279 = vld [vmem:[%s7245 + $0x108] sm:$0xff]
    %v7280 = vld [vmem:[%s7245 + $0x110] sm:$0xff]
    %v7281 = vld [vmem:[%s7245 + $0x118] sm:$0xff]
    %v7282 = vld [vmem:[%s7245 + $0x120] sm:$0xff]
    %v7283 = vld [vmem:[%s7245 + $0x128] sm:$0xff]
    %v7284 = vld [vmem:[%s7245 + $0x130] sm:$0xff]
    %v7285 = vld [vmem:[%s7245 + $0x138] sm:$0xff]
    %v7286 = vld [vmem:[%s7245 + $0x140] sm:$0xff]
    %v7287 = vld [vmem:[%s7245 + $0x148] sm:$0xff]
    %v7288 = vld [vmem:[%s7245 + $0x150] sm:$0xff]
    %v7289 = vld [vmem:[%s7245 + $0x158] sm:$0xff]
    %v7290 = vld [vmem:[%s7245 + $0x160] sm:$0xff]
    %v7291 = vld [vmem:[%s7245 + $0x168] sm:$0xff]
    %v7292 = vld [vmem:[%s7245 + $0x170] sm:$0xff]
    %v7293 = vld [vmem:[%s7245 + $0x178] sm:$0xff]
    %v7294 = vld [vmem:[%s7245 + $0x180] sm:$0xff]
    %v7295 = vld [vmem:[%s7245 + $0x188] sm:$0xff]
    %v7296 = vld [vmem:[%s7245 + $0x190] sm:$0xff]
    %v7297 = vld [vmem:[%s7245 + $0x198] sm:$0xff]
    %v7298 = vld [vmem:[%s7245 + $0x1a0] sm:$0xff]
    %v7299 = vld [vmem:[%s7245 + $0x1a8] sm:$0xff]
    %v7300 = vld [vmem:[%s7245 + $0x1b0] sm:$0xff]
    %v7301 = vld [vmem:[%s7245 + $0x1b8] sm:$0xff]
    %v7302 = vld [vmem:[%s7245 + $0x1c0] sm:$0xff]
    %v7303 = vld [vmem:[%s7245 + $0x1c8] sm:$0xff]
    %v7304 = vld [vmem:[%s7245 + $0x1d0] sm:$0xff]
    %v7305 = vld [vmem:[%s7245 + $0x1d8] sm:$0xff]
    %v7306 = vld [vmem:[%s7245 + $0x1e0] sm:$0xff]
    %v7307 = vld [vmem:[%s7245 + $0x1e8] sm:$0xff]
    %v7308 = vld [vmem:[%s7245 + $0x1f0] sm:$0xff]
    %v7309 = vld [vmem:[%s7245 + $0x1f8] sm:$0xff]
    %v7310 = vrot.slane %v6156, 2
    %v7311 = vrot.slane %v6157, 1
    %v7312 = vsel %vm1647, %v7311, %v7310
    %v7313 = vsel %vm1650, %v6158, %v7312
    %v7314 = vrot.slane %v6159, 7
    %v7315 = vsel %vm1653, %v7314, %v7313
    %v7316 = vrot.slane %v6160, 6
    %v7317 = vsel %vm1656, %v7316, %v7315
    %v7318 = vrot.slane %v6161, 5
    %v7319 = vsel %vm1659, %v7318, %v7317
    %v7320 = vrot.slane %v6162, 4
    %v7321 = vsel %vm1662, %v7320, %v7319
    %v7322 = vrot.slane %v6163, 3
    %v7323 = vsel %vm1665, %v7322, %v7321
    %v7324 = vpack.c.b16 %v7323, %v7323
    %v7390 = vunpack.c.l.b16 %v7246
    %v7391 = vunpack.c.h.b16 %v7246
    %v7392 = vunpack.c.l.b16 %v7247
    %v7393 = vunpack.c.h.b16 %v7247
    %v7394 = vunpack.c.l.b16 %v7248
    %v7395 = vunpack.c.h.b16 %v7248
    %v7396 = vunpack.c.l.b16 %v7249
    %v7397 = vunpack.c.h.b16 %v7249
    %v7398 = vunpack.c.l.b16 %v7250
    %v7399 = vunpack.c.h.b16 %v7250
    %v7400 = vunpack.c.l.b16 %v7251
    %v7401 = vunpack.c.h.b16 %v7251
    %v7402 = vunpack.c.l.b16 %v7252
    %v7403 = vunpack.c.h.b16 %v7252
    %v7404 = vunpack.c.l.b16 %v7253
    %v7405 = vunpack.c.h.b16 %v7253
    %v7406 = vunpack.c.l.b16 %v7254
    %v7407 = vunpack.c.h.b16 %v7254
    %v7408 = vunpack.c.l.b16 %v7255
    %v7409 = vunpack.c.h.b16 %v7255
    %v7410 = vunpack.c.l.b16 %v7256
    %v7411 = vunpack.c.h.b16 %v7256
    %v7412 = vunpack.c.l.b16 %v7257
    %v7413 = vunpack.c.h.b16 %v7257
    %v7414 = vunpack.c.l.b16 %v7258
    %v7415 = vunpack.c.h.b16 %v7258
    %v7416 = vunpack.c.l.b16 %v7259
    %v7417 = vunpack.c.h.b16 %v7259
    %v7418 = vunpack.c.l.b16 %v7260
    %v7419 = vunpack.c.h.b16 %v7260
    %v7420 = vunpack.c.l.b16 %v7261
    %v7421 = vunpack.c.h.b16 %v7261
    %v7422 = vunpack.c.l.b16 %v7262
    %v7423 = vunpack.c.h.b16 %v7262
    %v7424 = vunpack.c.l.b16 %v7263
    %v7425 = vunpack.c.h.b16 %v7263
    %v7426 = vunpack.c.l.b16 %v7264
    %v7427 = vunpack.c.h.b16 %v7264
    %v7428 = vunpack.c.l.b16 %v7265
    %v7429 = vunpack.c.h.b16 %v7265
    %v7430 = vunpack.c.l.b16 %v7266
    %v7431 = vunpack.c.h.b16 %v7266
    %v7432 = vunpack.c.l.b16 %v7267
    %v7433 = vunpack.c.h.b16 %v7267
    %v7434 = vunpack.c.l.b16 %v7268
    %v7435 = vunpack.c.h.b16 %v7268
    %v7436 = vunpack.c.l.b16 %v7269
    %v7437 = vunpack.c.h.b16 %v7269
    %v7438 = vunpack.c.l.b16 %v7270
    %v7439 = vunpack.c.h.b16 %v7270
    %v7440 = vunpack.c.l.b16 %v7271
    %v7441 = vunpack.c.h.b16 %v7271
    %v7442 = vunpack.c.l.b16 %v7272
    %v7443 = vunpack.c.h.b16 %v7272
    %v7444 = vunpack.c.l.b16 %v7273
    %v7445 = vunpack.c.h.b16 %v7273
    %v7446 = vunpack.c.l.b16 %v7274
    %v7447 = vunpack.c.h.b16 %v7274
    %v7448 = vunpack.c.l.b16 %v7275
    %v7449 = vunpack.c.h.b16 %v7275
    %v7450 = vunpack.c.l.b16 %v7276
    %v7451 = vunpack.c.h.b16 %v7276
    %v7452 = vunpack.c.l.b16 %v7277
    %v7453 = vunpack.c.h.b16 %v7277
    %v7454 = vunpack.c.l.b16 %v7278
    %v7455 = vunpack.c.h.b16 %v7278
    %v7456 = vunpack.c.l.b16 %v7279
    %v7457 = vunpack.c.h.b16 %v7279
    %v7458 = vunpack.c.l.b16 %v7280
    %v7459 = vunpack.c.h.b16 %v7280
    %v7460 = vunpack.c.l.b16 %v7281
    %v7461 = vunpack.c.h.b16 %v7281
    %v7462 = vunpack.c.l.b16 %v7282
    %v7463 = vunpack.c.h.b16 %v7282
    %v7464 = vunpack.c.l.b16 %v7283
    %v7465 = vunpack.c.h.b16 %v7283
    %v7466 = vunpack.c.l.b16 %v7284
    %v7467 = vunpack.c.h.b16 %v7284
    %v7468 = vunpack.c.l.b16 %v7285
    %v7469 = vunpack.c.h.b16 %v7285
    %v7470 = vunpack.c.l.b16 %v7286
    %v7471 = vunpack.c.h.b16 %v7286
    %v7472 = vunpack.c.l.b16 %v7287
    %v7473 = vunpack.c.h.b16 %v7287
    %v7474 = vunpack.c.l.b16 %v7288
    %v7475 = vunpack.c.h.b16 %v7288
    %v7476 = vunpack.c.l.b16 %v7289
    %v7477 = vunpack.c.h.b16 %v7289
    %v7478 = vunpack.c.l.b16 %v7290
    %v7479 = vunpack.c.h.b16 %v7290
    %v7480 = vunpack.c.l.b16 %v7291
    %v7481 = vunpack.c.h.b16 %v7291
    %v7482 = vunpack.c.l.b16 %v7292
    %v7483 = vunpack.c.h.b16 %v7292
    %v7484 = vunpack.c.l.b16 %v7293
    %v7485 = vunpack.c.h.b16 %v7293
    %v7486 = vunpack.c.l.b16 %v7294
    %v7487 = vunpack.c.h.b16 %v7294
    %v7488 = vunpack.c.l.b16 %v7295
    %v7489 = vunpack.c.h.b16 %v7295
    %v7490 = vunpack.c.l.b16 %v7296
    %v7491 = vunpack.c.h.b16 %v7296
    %v7492 = vunpack.c.l.b16 %v7297
    %v7493 = vunpack.c.h.b16 %v7297
    %v7494 = vunpack.c.l.b16 %v7298
    %v7495 = vunpack.c.h.b16 %v7298
    %v7496 = vunpack.c.l.b16 %v7299
    %v7497 = vunpack.c.h.b16 %v7299
    %v7498 = vunpack.c.l.b16 %v7300
    %v7499 = vunpack.c.h.b16 %v7300
    %v7500 = vunpack.c.l.b16 %v7301
    %v7501 = vunpack.c.h.b16 %v7301
    %v7502 = vunpack.c.l.b16 %v7302
    %v7503 = vunpack.c.h.b16 %v7302
    %v7504 = vunpack.c.l.b16 %v7303
    %v7505 = vunpack.c.h.b16 %v7303
    %v7506 = vunpack.c.l.b16 %v7304
    %v7507 = vunpack.c.h.b16 %v7304
    %v7508 = vunpack.c.l.b16 %v7305
    %v7509 = vunpack.c.h.b16 %v7305
    %v7510 = vunpack.c.l.b16 %v7306
    %v7511 = vunpack.c.h.b16 %v7306
    %v7512 = vunpack.c.l.b16 %v7307
    %v7513 = vunpack.c.h.b16 %v7307
    %v7514 = vunpack.c.l.b16 %v7308
    %v7515 = vunpack.c.h.b16 %v7308
    %v7516 = vunpack.c.l.b16 %v7309
    %v7517 = vunpack.c.h.b16 %v7309
    %v7518 = vpack.c.b16 %v7398, %v7390
    %v7519 = vpack.c.b16 %v7399, %v7391
    %v7520 = vpack.c.b16 %v7400, %v7392
    %v7521 = vpack.c.b16 %v7401, %v7393
    %v7522 = vpack.c.b16 %v7402, %v7394
    %v7523 = vpack.c.b16 %v7403, %v7395
    %v7524 = vpack.c.b16 %v7404, %v7396
    %v7525 = vpack.c.b16 %v7405, %v7397
    %v7526 = vpack.c.b16 %v7414, %v7406
    %v7527 = vpack.c.b16 %v7415, %v7407
    %v7528 = vpack.c.b16 %v7416, %v7408
    %v7529 = vpack.c.b16 %v7417, %v7409
    %v7530 = vpack.c.b16 %v7418, %v7410
    %v7531 = vpack.c.b16 %v7419, %v7411
    %v7532 = vpack.c.b16 %v7420, %v7412
    %v7533 = vpack.c.b16 %v7421, %v7413
    %v7534 = vpack.c.b16 %v7430, %v7422
    %v7535 = vpack.c.b16 %v7431, %v7423
    %v7536 = vpack.c.b16 %v7432, %v7424
    %v7537 = vpack.c.b16 %v7433, %v7425
    %v7538 = vpack.c.b16 %v7434, %v7426
    %v7539 = vpack.c.b16 %v7435, %v7427
    %v7540 = vpack.c.b16 %v7436, %v7428
    %v7541 = vpack.c.b16 %v7437, %v7429
    %v7542 = vpack.c.b16 %v7446, %v7438
    %v7543 = vpack.c.b16 %v7447, %v7439
    %v7544 = vpack.c.b16 %v7448, %v7440
    %v7545 = vpack.c.b16 %v7449, %v7441
    %v7546 = vpack.c.b16 %v7450, %v7442
    %v7547 = vpack.c.b16 %v7451, %v7443
    %v7548 = vpack.c.b16 %v7452, %v7444
    %v7549 = vpack.c.b16 %v7453, %v7445
    %v7550 = vpack.c.b16 %v7462, %v7454
    %v7551 = vpack.c.b16 %v7463, %v7455
    %v7552 = vpack.c.b16 %v7464, %v7456
    %v7553 = vpack.c.b16 %v7465, %v7457
    %v7554 = vpack.c.b16 %v7466, %v7458
    %v7555 = vpack.c.b16 %v7467, %v7459
    %v7556 = vpack.c.b16 %v7468, %v7460
    %v7557 = vpack.c.b16 %v7469, %v7461
    %v7558 = vpack.c.b16 %v7478, %v7470
    %v7559 = vpack.c.b16 %v7479, %v7471
    %v7560 = vpack.c.b16 %v7480, %v7472
    %v7561 = vpack.c.b16 %v7481, %v7473
    %v7562 = vpack.c.b16 %v7482, %v7474
    %v7563 = vpack.c.b16 %v7483, %v7475
    %v7564 = vpack.c.b16 %v7484, %v7476
    %v7565 = vpack.c.b16 %v7485, %v7477
    %v7566 = vpack.c.b16 %v7494, %v7486
    %v7567 = vpack.c.b16 %v7495, %v7487
    %v7568 = vpack.c.b16 %v7496, %v7488
    %v7569 = vpack.c.b16 %v7497, %v7489
    %v7570 = vpack.c.b16 %v7498, %v7490
    %v7571 = vpack.c.b16 %v7499, %v7491
    %v7572 = vpack.c.b16 %v7500, %v7492
    %v7573 = vpack.c.b16 %v7501, %v7493
    %v7574 = vpack.c.b16 %v7510, %v7502
    %v7575 = vpack.c.b16 %v7511, %v7503
    %v7576 = vpack.c.b16 %v7512, %v7504
    %v7577 = vpack.c.b16 %v7513, %v7505
    %v7578 = vpack.c.b16 %v7514, %v7506
    %v7579 = vpack.c.b16 %v7515, %v7507
    %v7580 = vpack.c.b16 %v7516, %v7508
    %v7581 = vpack.c.b16 %v7517, %v7509
    %7646 = vmatprep.subr.bf16.mxu0 %v7519
    %7647 = vmatpush1.bf16.msra.mxu0 %v7518
    %7648 = vmatprep.subr.bf16.mxu0 %v7527
    %7649 = vmatpush1.bf16.msra.mxu0 %v7526
    %7650 = vmatprep.subr.bf16.mxu0 %v7535
    %7651 = vmatpush1.bf16.msra.mxu0 %v7534
    %7652 = vmatprep.subr.bf16.mxu0 %v7543
    %7653 = vmatpush1.bf16.msra.mxu0 %v7542
    %7654 = vmatprep.subr.bf16.mxu0 %v7551
    %7655 = vmatpush1.bf16.msra.mxu0 %v7550
    %7656 = vmatprep.subr.bf16.mxu0 %v7559
    %7657 = vmatpush1.bf16.msra.mxu0 %v7558
    %7658 = vmatprep.subr.bf16.mxu0 %v7567
    %7659 = vmatpush1.bf16.msra.mxu0 %v7566
    %7660 = vmatprep.subr.bf16.mxu0 %v7575
    %7661 = vmatpush1.bf16.msra.mxu0 %v7574
    %7662 = vmatprep.subr.bf16.mxu0 0
    %7663 = vmatpush1.bf16.msra.mxu0 0
    %7664 = vmatprep.subr.bf16.mxu0 0
    %7665 = vmatpush1.bf16.msra.mxu0 0
    %7666 = vmatprep.subr.bf16.mxu0 0
    %7667 = vmatpush1.bf16.msra.mxu0 0
    %7668 = vmatprep.subr.bf16.mxu0 0
    %7669 = vmatpush1.bf16.msra.mxu0 0
    %7670 = vmatprep.subr.bf16.mxu0 0
    %7671 = vmatpush1.bf16.msra.mxu0 0
    %7672 = vmatprep.subr.bf16.mxu0 0
    %7673 = vmatpush1.bf16.msra.mxu0 0
    %7674 = vmatprep.subr.bf16.mxu0 0
    %7675 = vmatpush1.bf16.msra.mxu0 0
    %7676 = vmatprep.subr.bf16.mxu0 0
    %7677 = vmatpush1.bf16.msra.mxu0 0
    %7678 = vmatprep.mubr.bf16.mxu0 0
    %7679 = vmatmul.mubr.bf16.gmra.mrb[0].mxu0 %v7324
    %v7680 = vpop.f32.mrb[0].mxu0
    %v7681 = vadd.f32 0.0, %v7680
    %v7682 = vpop.f32.mrb[0].mxu0
    %v7683 = vadd.f32 0.0, %v7682
    %v7684 = vpop.f32.mrb[0].mxu0
    %v7685 = vpop.f32.mrb[0].mxu0
    %7686 = vdwg.mxu0
    %7687 = vmatprep.subr.bf16.mxu0 %v7521
    %7688 = vmatpush1.bf16.msra.mxu0 %v7520
    %7689 = vmatprep.subr.bf16.mxu0 %v7529
    %7690 = vmatpush1.bf16.msra.mxu0 %v7528
    %7691 = vmatprep.subr.bf16.mxu0 %v7537
    %7692 = vmatpush1.bf16.msra.mxu0 %v7536
    %7693 = vmatprep.subr.bf16.mxu0 %v7545
    %7694 = vmatpush1.bf16.msra.mxu0 %v7544
    %7695 = vmatprep.subr.bf16.mxu0 %v7553
    %7696 = vmatpush1.bf16.msra.mxu0 %v7552
    %7697 = vmatprep.subr.bf16.mxu0 %v7561
    %7698 = vmatpush1.bf16.msra.mxu0 %v7560
    %7699 = vmatprep.subr.bf16.mxu0 %v7569
    %7700 = vmatpush1.bf16.msra.mxu0 %v7568
    %7701 = vmatprep.subr.bf16.mxu0 %v7577
    %7702 = vmatpush1.bf16.msra.mxu0 %v7576
    %7703 = vmatprep.subr.bf16.mxu0 0
    %7704 = vmatpush1.bf16.msra.mxu0 0
    %7705 = vmatprep.subr.bf16.mxu0 0
    %7706 = vmatpush1.bf16.msra.mxu0 0
    %7707 = vmatprep.subr.bf16.mxu0 0
    %7708 = vmatpush1.bf16.msra.mxu0 0
    %7709 = vmatprep.subr.bf16.mxu0 0
    %7710 = vmatpush1.bf16.msra.mxu0 0
    %7711 = vmatprep.subr.bf16.mxu0 0
    %7712 = vmatpush1.bf16.msra.mxu0 0
    %7713 = vmatprep.subr.bf16.mxu0 0
    %7714 = vmatpush1.bf16.msra.mxu0 0
    %7715 = vmatprep.subr.bf16.mxu0 0
    %7716 = vmatpush1.bf16.msra.mxu0 0
    %7717 = vmatprep.subr.bf16.mxu0 0
    %7718 = vmatpush1.bf16.msra.mxu0 0
    %7719 = vmatprep.mubr.bf16.mxu0 0
    %7720 = vmatmul.mubr.bf16.gmra.mrb[0].mxu0 %v7324
    %v7721 = vpop.f32.mrb[0].mxu0
    %v7722 = vadd.f32 0.0, %v7721
    %v7723 = vpop.f32.mrb[0].mxu0
    %v7724 = vadd.f32 0.0, %v7723
    %v7725 = vpop.f32.mrb[0].mxu0
    %v7726 = vpop.f32.mrb[0].mxu0
    %7727 = vdwg.mxu0
    %7728 = vmatprep.subr.bf16.mxu0 %v7523
    %7729 = vmatpush1.bf16.msra.mxu0 %v7522
    %7730 = vmatprep.subr.bf16.mxu0 %v7531
    %7731 = vmatpush1.bf16.msra.mxu0 %v7530
    %7732 = vmatprep.subr.bf16.mxu0 %v7539
    %7733 = vmatpush1.bf16.msra.mxu0 %v7538
    %7734 = vmatprep.subr.bf16.mxu0 %v7547
    %7735 = vmatpush1.bf16.msra.mxu0 %v7546
    %7736 = vmatprep.subr.bf16.mxu0 %v7555
    %7737 = vmatpush1.bf16.msra.mxu0 %v7554
    %7738 = vmatprep.subr.bf16.mxu0 %v7563
    %7739 = vmatpush1.bf16.msra.mxu0 %v7562
    %7740 = vmatprep.subr.bf16.mxu0 %v7571
    %7741 = vmatpush1.bf16.msra.mxu0 %v7570
    %7742 = vmatprep.subr.bf16.mxu0 %v7579
    %7743 = vmatpush1.bf16.msra.mxu0 %v7578
    %7744 = vmatprep.subr.bf16.mxu0 0
    %7745 = vmatpush1.bf16.msra.mxu0 0
    %7746 = vmatprep.subr.bf16.mxu0 0
    %7747 = vmatpush1.bf16.msra.mxu0 0
    %7748 = vmatprep.subr.bf16.mxu0 0
    %7749 = vmatpush1.bf16.msra.mxu0 0
    %7750 = vmatprep.subr.bf16.mxu0 0
    %7751 = vmatpush1.bf16.msra.mxu0 0
    %7752 = vmatprep.subr.bf16.mxu0 0
    %7753 = vmatpush1.bf16.msra.mxu0 0
    %7754 = vmatprep.subr.bf16.mxu0 0
    %7755 = vmatpush1.bf16.msra.mxu0 0
    %7756 = vmatprep.subr.bf16.mxu0 0
    %7757 = vmatpush1.bf16.msra.mxu0 0
    %7758 = vmatprep.subr.bf16.mxu0 0
    %7759 = vmatpush1.bf16.msra.mxu0 0
    %7760 = vmatprep.mubr.bf16.mxu0 0
    %7761 = vmatmul.mubr.bf16.gmra.mrb[0].mxu0 %v7324
    %v7762 = vpop.f32.mrb[0].mxu0
    %v7763 = vadd.f32 0.0, %v7762
    %v7764 = vpop.f32.mrb[0].mxu0
    %v7765 = vadd.f32 0.0, %v7764
    %v7766 = vpop.f32.mrb[0].mxu0
    %v7767 = vpop.f32.mrb[0].mxu0
    %7768 = vdwg.mxu0
    %7769 = vmatprep.subr.bf16.mxu0 %v7525
    %7770 = vmatpush1.bf16.msra.mxu0 %v7524
    %7771 = vmatprep.subr.bf16.mxu0 %v7533
    %7772 = vmatpush1.bf16.msra.mxu0 %v7532
    %7773 = vmatprep.subr.bf16.mxu0 %v7541
    %7774 = vmatpush1.bf16.msra.mxu0 %v7540
    %7775 = vmatprep.subr.bf16.mxu0 %v7549
    %7776 = vmatpush1.bf16.msra.mxu0 %v7548
    %7777 = vmatprep.subr.bf16.mxu0 %v7557
    %7778 = vmatpush1.bf16.msra.mxu0 %v7556
    %7779 = vmatprep.subr.bf16.mxu0 %v7565
    %7780 = vmatpush1.bf16.msra.mxu0 %v7564
    %7781 = vmatprep.subr.bf16.mxu0 %v7573
    %7782 = vmatpush1.bf16.msra.mxu0 %v7572
    %7783 = vmatprep.subr.bf16.mxu0 %v7581
    %7784 = vmatpush1.bf16.msra.mxu0 %v7580
    %7785 = vmatprep.subr.bf16.mxu0 0
    %7786 = vmatpush1.bf16.msra.mxu0 0
    %7787 = vmatprep.subr.bf16.mxu0 0
    %7788 = vmatpush1.bf16.msra.mxu0 0
    %7789 = vmatprep.subr.bf16.mxu0 0
    %7790 = vmatpush1.bf16.msra.mxu0 0
    %7791 = vmatprep.subr.bf16.mxu0 0
    %7792 = vmatpush1.bf16.msra.mxu0 0
    %7793 = vmatprep.subr.bf16.mxu0 0
    %7794 = vmatpush1.bf16.msra.mxu0 0
    %7795 = vmatprep.subr.bf16.mxu0 0
    %7796 = vmatpush1.bf16.msra.mxu0 0
    %7797 = vmatprep.subr.bf16.mxu0 0
    %7798 = vmatpush1.bf16.msra.mxu0 0
    %7799 = vmatprep.subr.bf16.mxu0 0
    %7800 = vmatpush1.bf16.msra.mxu0 0
    %7801 = vmatprep.mubr.bf16.mxu0 0
    %7802 = vmatmul.mubr.bf16.gmra.mrb[0].mxu0 %v7324
    %v7803 = vpop.f32.mrb[0].mxu0
    %v7804 = vadd.f32 0.0, %v7803
    %v7805 = vpop.f32.mrb[0].mxu0
    %v7806 = vadd.f32 0.0, %v7805
    %v7807 = vpop.f32.mrb[0].mxu0
    %v7808 = vpop.f32.mrb[0].mxu0
    %7809 = vdwg.mxu0
    %v7810 = vadd.f32 %v7237, %v7681
    %v7811 = vadd.f32 %v7238, %v7683
    %v7812 = vadd.f32 %v7239, %v7722
    %v7813 = vadd.f32 %v7240, %v7724
    %v7814 = vadd.f32 %v7241, %v7763
    %v7815 = vadd.f32 %v7242, %v7765
    %v7816 = vadd.f32 %v7243, %v7804
    %v7817 = vadd.f32 %v7244, %v7806
    %s7818 = scalar_lea.vmem [#allocation10], 5632
    %v7819 = vld [vmem:[%s7818] sm:$0xff]
    %v7820 = vld [vmem:[%s7818 + $0x8] sm:$0xff]
    %v7821 = vld [vmem:[%s7818 + $0x10] sm:$0xff]
    %v7822 = vld [vmem:[%s7818 + $0x18] sm:$0xff]
    %v7823 = vld [vmem:[%s7818 + $0x20] sm:$0xff]
    %v7824 = vld [vmem:[%s7818 + $0x28] sm:$0xff]
    %v7825 = vld [vmem:[%s7818 + $0x30] sm:$0xff]
    %v7826 = vld [vmem:[%s7818 + $0x38] sm:$0xff]
    %v7827 = vld [vmem:[%s7818 + $0x40] sm:$0xff]
    %v7828 = vld [vmem:[%s7818 + $0x48] sm:$0xff]
    %v7829 = vld [vmem:[%s7818 + $0x50] sm:$0xff]
    %v7830 = vld [vmem:[%s7818 + $0x58] sm:$0xff]
    %v7831 = vld [vmem:[%s7818 + $0x60] sm:$0xff]
    %v7832 = vld [vmem:[%s7818 + $0x68] sm:$0xff]
    %v7833 = vld [vmem:[%s7818 + $0x70] sm:$0xff]
    %v7834 = vld [vmem:[%s7818 + $0x78] sm:$0xff]
    %v7835 = vld [vmem:[%s7818 + $0x80] sm:$0xff]
    %v7836 = vld [vmem:[%s7818 + $0x88] sm:$0xff]
    %v7837 = vld [vmem:[%s7818 + $0x90] sm:$0xff]
    %v7838 = vld [vmem:[%s7818 + $0x98] sm:$0xff]
    %v7839 = vld [vmem:[%s7818 + $0xa0] sm:$0xff]
    %v7840 = vld [vmem:[%s7818 + $0xa8] sm:$0xff]
    %v7841 = vld [vmem:[%s7818 + $0xb0] sm:$0xff]
    %v7842 = vld [vmem:[%s7818 + $0xb8] sm:$0xff]
    %v7843 = vld [vmem:[%s7818 + $0xc0] sm:$0xff]
    %v7844 = vld [vmem:[%s7818 + $0xc8] sm:$0xff]
    %v7845 = vld [vmem:[%s7818 + $0xd0] sm:$0xff]
    %v7846 = vld [vmem:[%s7818 + $0xd8] sm:$0xff]
    %v7847 = vld [vmem:[%s7818 + $0xe0] sm:$0xff]
    %v7848 = vld [vmem:[%s7818 + $0xe8] sm:$0xff]
    %v7849 = vld [vmem:[%s7818 + $0xf0] sm:$0xff]
    %v7850 = vld [vmem:[%s7818 + $0xf8] sm:$0xff]
    %v7851 = vld [vmem:[%s7818 + $0x100] sm:$0xff]
    %v7852 = vld [vmem:[%s7818 + $0x108] sm:$0xff]
    %v7853 = vld [vmem:[%s7818 + $0x110] sm:$0xff]
    %v7854 = vld [vmem:[%s7818 + $0x118] sm:$0xff]
    %v7855 = vld [vmem:[%s7818 + $0x120] sm:$0xff]
    %v7856 = vld [vmem:[%s7818 + $0x128] sm:$0xff]
    %v7857 = vld [vmem:[%s7818 + $0x130] sm:$0xff]
    %v7858 = vld [vmem:[%s7818 + $0x138] sm:$0xff]
    %v7859 = vld [vmem:[%s7818 + $0x140] sm:$0xff]
    %v7860 = vld [vmem:[%s7818 + $0x148] sm:$0xff]
    %v7861 = vld [vmem:[%s7818 + $0x150] sm:$0xff]
    %v7862 = vld [vmem:[%s7818 + $0x158] sm:$0xff]
    %v7863 = vld [vmem:[%s7818 + $0x160] sm:$0xff]
    %v7864 = vld [vmem:[%s7818 + $0x168] sm:$0xff]
    %v7865 = vld [vmem:[%s7818 + $0x170] sm:$0xff]
    %v7866 = vld [vmem:[%s7818 + $0x178] sm:$0xff]
    %v7867 = vld [vmem:[%s7818 + $0x180] sm:$0xff]
    %v7868 = vld [vmem:[%s7818 + $0x188] sm:$0xff]
    %v7869 = vld [vmem:[%s7818 + $0x190] sm:$0xff]
    %v7870 = vld [vmem:[%s7818 + $0x198] sm:$0xff]
    %v7871 = vld [vmem:[%s7818 + $0x1a0] sm:$0xff]
    %v7872 = vld [vmem:[%s7818 + $0x1a8] sm:$0xff]
    %v7873 = vld [vmem:[%s7818 + $0x1b0] sm:$0xff]
    %v7874 = vld [vmem:[%s7818 + $0x1b8] sm:$0xff]
    %v7875 = vld [vmem:[%s7818 + $0x1c0] sm:$0xff]
    %v7876 = vld [vmem:[%s7818 + $0x1c8] sm:$0xff]
    %v7877 = vld [vmem:[%s7818 + $0x1d0] sm:$0xff]
    %v7878 = vld [vmem:[%s7818 + $0x1d8] sm:$0xff]
    %v7879 = vld [vmem:[%s7818 + $0x1e0] sm:$0xff]
    %v7880 = vld [vmem:[%s7818 + $0x1e8] sm:$0xff]
    %v7881 = vld [vmem:[%s7818 + $0x1f0] sm:$0xff]
    %v7882 = vld [vmem:[%s7818 + $0x1f8] sm:$0xff]
    %v7883 = vrot.slane %v6156, 3
    %v7884 = vrot.slane %v6157, 2
    %v7885 = vsel %vm1647, %v7884, %v7883
    %v7886 = vrot.slane %v6158, 1
    %v7887 = vsel %vm1650, %v7886, %v7885
    %v7888 = vsel %vm1653, %v6159, %v7887
    %v7889 = vrot.slane %v6160, 7
    %v7890 = vsel %vm1656, %v7889, %v7888
    %v7891 = vrot.slane %v6161, 6
    %v7892 = vsel %vm1659, %v7891, %v7890
    %v7893 = vrot.slane %v6162, 5
    %v7894 = vsel %vm1662, %v7893, %v7892
    %v7895 = vrot.slane %v6163, 4
    %v7896 = vsel %vm1665, %v7895, %v7894
    %v7897 = vpack.c.b16 %v7896, %v7896
    %v7963 = vunpack.c.l.b16 %v7819
    %v7964 = vunpack.c.h.b16 %v7819
    %v7965 = vunpack.c.l.b16 %v7820
    %v7966 = vunpack.c.h.b16 %v7820
    %v7967 = vunpack.c.l.b16 %v7821
    %v7968 = vunpack.c.h.b16 %v7821
    %v7969 = vunpack.c.l.b16 %v7822
    %v7970 = vunpack.c.h.b16 %v7822
    %v7971 = vunpack.c.l.b16 %v7823
    %v7972 = vunpack.c.h.b16 %v7823
    %v7973 = vunpack.c.l.b16 %v7824
    %v7974 = vunpack.c.h.b16 %v7824
    %v7975 = vunpack.c.l.b16 %v7825
    %v7976 = vunpack.c.h.b16 %v7825
    %v7977 = vunpack.c.l.b16 %v7826
    %v7978 = vunpack.c.h.b16 %v7826
    %v7979 = vunpack.c.l.b16 %v7827
    %v7980 = vunpack.c.h.b16 %v7827
    %v7981 = vunpack.c.l.b16 %v7828
    %v7982 = vunpack.c.h.b16 %v7828
    %v7983 = vunpack.c.l.b16 %v7829
    %v7984 = vunpack.c.h.b16 %v7829
    %v7985 = vunpack.c.l.b16 %v7830
    %v7986 = vunpack.c.h.b16 %v7830
    %v7987 = vunpack.c.l.b16 %v7831
    %v7988 = vunpack.c.h.b16 %v7831
    %v7989 = vunpack.c.l.b16 %v7832
    %v7990 = vunpack.c.h.b16 %v7832
    %v7991 = vunpack.c.l.b16 %v7833
    %v7992 = vunpack.c.h.b16 %v7833
    %v7993 = vunpack.c.l.b16 %v7834
    %v7994 = vunpack.c.h.b16 %v7834
    %v7995 = vunpack.c.l.b16 %v7835
    %v7996 = vunpack.c.h.b16 %v7835
    %v7997 = vunpack.c.l.b16 %v7836
    %v7998 = vunpack.c.h.b16 %v7836
    %v7999 = vunpack.c.l.b16 %v7837
    %v8000 = vunpack.c.h.b16 %v7837
    %v8001 = vunpack.c.l.b16 %v7838
    %v8002 = vunpack.c.h.b16 %v7838
    %v8003 = vunpack.c.l.b16 %v7839
    %v8004 = vunpack.c.h.b16 %v7839
    %v8005 = vunpack.c.l.b16 %v7840
    %v8006 = vunpack.c.h.b16 %v7840
    %v8007 = vunpack.c.l.b16 %v7841
    %v8008 = vunpack.c.h.b16 %v7841
    %v8009 = vunpack.c.l.b16 %v7842
    %v8010 = vunpack.c.h.b16 %v7842
    %v8011 = vunpack.c.l.b16 %v7843
    %v8012 = vunpack.c.h.b16 %v7843
    %v8013 = vunpack.c.l.b16 %v7844
    %v8014 = vunpack.c.h.b16 %v7844
    %v8015 = vunpack.c.l.b16 %v7845
    %v8016 = vunpack.c.h.b16 %v7845
    %v8017 = vunpack.c.l.b16 %v7846
    %v8018 = vunpack.c.h.b16 %v7846
    %v8019 = vunpack.c.l.b16 %v7847
    %v8020 = vunpack.c.h.b16 %v7847
    %v8021 = vunpack.c.l.b16 %v7848
    %v8022 = vunpack.c.h.b16 %v7848
    %v8023 = vunpack.c.l.b16 %v7849
    %v8024 = vunpack.c.h.b16 %v7849
    %v8025 = vunpack.c.l.b16 %v7850
    %v8026 = vunpack.c.h.b16 %v7850
    %v8027 = vunpack.c.l.b16 %v7851
    %v8028 = vunpack.c.h.b16 %v7851
    %v8029 = vunpack.c.l.b16 %v7852
    %v8030 = vunpack.c.h.b16 %v7852
    %v8031 = vunpack.c.l.b16 %v7853
    %v8032 = vunpack.c.h.b16 %v7853
    %v8033 = vunpack.c.l.b16 %v7854
    %v8034 = vunpack.c.h.b16 %v7854
    %v8035 = vunpack.c.l.b16 %v7855
    %v8036 = vunpack.c.h.b16 %v7855
    %v8037 = vunpack.c.l.b16 %v7856
    %v8038 = vunpack.c.h.b16 %v7856
    %v8039 = vunpack.c.l.b16 %v7857
    %v8040 = vunpack.c.h.b16 %v7857
    %v8041 = vunpack.c.l.b16 %v7858
    %v8042 = vunpack.c.h.b16 %v7858
    %v8043 = vunpack.c.l.b16 %v7859
    %v8044 = vunpack.c.h.b16 %v7859
    %v8045 = vunpack.c.l.b16 %v7860
    %v8046 = vunpack.c.h.b16 %v7860
    %v8047 = vunpack.c.l.b16 %v7861
    %v8048 = vunpack.c.h.b16 %v7861
    %v8049 = vunpack.c.l.b16 %v7862
    %v8050 = vunpack.c.h.b16 %v7862
    %v8051 = vunpack.c.l.b16 %v7863
    %v8052 = vunpack.c.h.b16 %v7863
    %v8053 = vunpack.c.l.b16 %v7864
    %v8054 = vunpack.c.h.b16 %v7864
    %v8055 = vunpack.c.l.b16 %v7865
    %v8056 = vunpack.c.h.b16 %v7865
    %v8057 = vunpack.c.l.b16 %v7866
    %v8058 = vunpack.c.h.b16 %v7866
    %v8059 = vunpack.c.l.b16 %v7867
    %v8060 = vunpack.c.h.b16 %v7867
    %v8061 = vunpack.c.l.b16 %v7868
    %v8062 = vunpack.c.h.b16 %v7868
    %v8063 = vunpack.c.l.b16 %v7869
    %v8064 = vunpack.c.h.b16 %v7869
    %v8065 = vunpack.c.l.b16 %v7870
    %v8066 = vunpack.c.h.b16 %v7870
    %v8067 = vunpack.c.l.b16 %v7871
    %v8068 = vunpack.c.h.b16 %v7871
    %v8069 = vunpack.c.l.b16 %v7872
    %v8070 = vunpack.c.h.b16 %v7872
    %v8071 = vunpack.c.l.b16 %v7873
    %v8072 = vunpack.c.h.b16 %v7873
    %v8073 = vunpack.c.l.b16 %v7874
    %v8074 = vunpack.c.h.b16 %v7874
    %v8075 = vunpack.c.l.b16 %v7875
    %v8076 = vunpack.c.h.b16 %v7875
    %v8077 = vunpack.c.l.b16 %v7876
    %v8078 = vunpack.c.h.b16 %v7876
    %v8079 = vunpack.c.l.b16 %v7877
    %v8080 = vunpack.c.h.b16 %v7877
    %v8081 = vunpack.c.l.b16 %v7878
    %v8082 = vunpack.c.h.b16 %v7878
    %v8083 = vunpack.c.l.b16 %v7879
    %v8084 = vunpack.c.h.b16 %v7879
    %v8085 = vunpack.c.l.b16 %v7880
    %v8086 = vunpack.c.h.b16 %v7880
    %v8087 = vunpack.c.l.b16 %v7881
    %v8088 = vunpack.c.h.b16 %v7881
    %v8089 = vunpack.c.l.b16 %v7882
    %v8090 = vunpack.c.h.b16 %v7882
    %v8091 = vpack.c.b16 %v7971, %v7963
    %v8092 = vpack.c.b16 %v7972, %v7964
    %v8093 = vpack.c.b16 %v7973, %v7965
    %v8094 = vpack.c.b16 %v7974, %v7966
    %v8095 = vpack.c.b16 %v7975, %v7967
    %v8096 = vpack.c.b16 %v7976, %v7968
    %v8097 = vpack.c.b16 %v7977, %v7969
    %v8098 = vpack.c.b16 %v7978, %v7970
    %v8099 = vpack.c.b16 %v7987, %v7979
    %v8100 = vpack.c.b16 %v7988, %v7980
    %v8101 = vpack.c.b16 %v7989, %v7981
    %v8102 = vpack.c.b16 %v7990, %v7982
    %v8103 = vpack.c.b16 %v7991, %v7983
    %v8104 = vpack.c.b16 %v7992, %v7984
    %v8105 = vpack.c.b16 %v7993, %v7985
    %v8106 = vpack.c.b16 %v7994, %v7986
    %v8107 = vpack.c.b16 %v8003, %v7995
    %v8108 = vpack.c.b16 %v8004, %v7996
    %v8109 = vpack.c.b16 %v8005, %v7997
    %v8110 = vpack.c.b16 %v8006, %v7998
    %v8111 = vpack.c.b16 %v8007, %v7999
    %v8112 = vpack.c.b16 %v8008, %v8000
    %v8113 = vpack.c.b16 %v8009, %v8001
    %v8114 = vpack.c.b16 %v8010, %v8002
    %v8115 = vpack.c.b16 %v8019, %v8011
    %v8116 = vpack.c.b16 %v8020, %v8012
    %v8117 = vpack.c.b16 %v8021, %v8013
    %v8118 = vpack.c.b16 %v8022, %v8014
    %v8119 = vpack.c.b16 %v8023, %v8015
    %v8120 = vpack.c.b16 %v8024, %v8016
    %v8121 = vpack.c.b16 %v8025, %v8017
    %v8122 = vpack.c.b16 %v8026, %v8018
    %v8123 = vpack.c.b16 %v8035, %v8027
    %v8124 = vpack.c.b16 %v8036, %v8028
    %v8125 = vpack.c.b16 %v8037, %v8029
    %v8126 = vpack.c.b16 %v8038, %v8030
    %v8127 = vpack.c.b16 %v8039, %v8031
    %v8128 = vpack.c.b16 %v8040, %v8032
    %v8129 = vpack.c.b16 %v8041, %v8033
    %v8130 = vpack.c.b16 %v8042, %v8034
    %v8131 = vpack.c.b16 %v8051, %v8043
    %v8132 = vpack.c.b16 %v8052, %v8044
    %v8133 = vpack.c.b16 %v8053, %v8045
    %v8134 = vpack.c.b16 %v8054, %v8046
    %v8135 = vpack.c.b16 %v8055, %v8047
    %v8136 = vpack.c.b16 %v8056, %v8048
    %v8137 = vpack.c.b16 %v8057, %v8049
    %v8138 = vpack.c.b16 %v8058, %v8050
    %v8139 = vpack.c.b16 %v8067, %v8059
    %v8140 = vpack.c.b16 %v8068, %v8060
    %v8141 = vpack.c.b16 %v8069, %v8061
    %v8142 = vpack.c.b16 %v8070, %v8062
    %v8143 = vpack.c.b16 %v8071, %v8063
    %v8144 = vpack.c.b16 %v8072, %v8064
    %v8145 = vpack.c.b16 %v8073, %v8065
    %v8146 = vpack.c.b16 %v8074, %v8066
    %v8147 = vpack.c.b16 %v8083, %v8075
    %v8148 = vpack.c.b16 %v8084, %v8076
    %v8149 = vpack.c.b16 %v8085, %v8077
    %v8150 = vpack.c.b16 %v8086, %v8078
    %v8151 = vpack.c.b16 %v8087, %v8079
    %v8152 = vpack.c.b16 %v8088, %v8080
    %v8153 = vpack.c.b16 %v8089, %v8081
    %v8154 = vpack.c.b16 %v8090, %v8082
    %8219 = vmatprep.subr.bf16.mxu0 %v8092
    %8220 = vmatpush1.bf16.msra.mxu0 %v8091
    %8221 = vmatprep.subr.bf16.mxu0 %v8100
    %8222 = vmatpush1.bf16.msra.mxu0 %v8099
    %8223 = vmatprep.subr.bf16.mxu0 %v8108
    %8224 = vmatpush1.bf16.msra.mxu0 %v8107
    %8225 = vmatprep.subr.bf16.mxu0 %v8116
    %8226 = vmatpush1.bf16.msra.mxu0 %v8115
    %8227 = vmatprep.subr.bf16.mxu0 %v8124
    %8228 = vmatpush1.bf16.msra.mxu0 %v8123
    %8229 = vmatprep.subr.bf16.mxu0 %v8132
    %8230 = vmatpush1.bf16.msra.mxu0 %v8131
    %8231 = vmatprep.subr.bf16.mxu0 %v8140
    %8232 = vmatpush1.bf16.msra.mxu0 %v8139
    %8233 = vmatprep.subr.bf16.mxu0 %v8148
    %8234 = vmatpush1.bf16.msra.mxu0 %v8147
    %8235 = vmatprep.subr.bf16.mxu0 0
    %8236 = vmatpush1.bf16.msra.mxu0 0
    %8237 = vmatprep.subr.bf16.mxu0 0
    %8238 = vmatpush1.bf16.msra.mxu0 0
    %8239 = vmatprep.subr.bf16.mxu0 0
    %8240 = vmatpush1.bf16.msra.mxu0 0
    %8241 = vmatprep.subr.bf16.mxu0 0
    %8242 = vmatpush1.bf16.msra.mxu0 0
    %8243 = vmatprep.subr.bf16.mxu0 0
    %8244 = vmatpush1.bf16.msra.mxu0 0
    %8245 = vmatprep.subr.bf16.mxu0 0
    %8246 = vmatpush1.bf16.msra.mxu0 0
    %8247 = vmatprep.subr.bf16.mxu0 0
    %8248 = vmatpush1.bf16.msra.mxu0 0
    %8249 = vmatprep.subr.bf16.mxu0 0
    %8250 = vmatpush1.bf16.msra.mxu0 0
    %8251 = vmatprep.mubr.bf16.mxu0 0
    %8252 = vmatmul.mubr.bf16.gmra.mrb[0].mxu0 %v7897
    %v8253 = vpop.f32.mrb[0].mxu0
    %v8254 = vadd.f32 0.0, %v8253
    %v8255 = vpop.f32.mrb[0].mxu0
    %v8256 = vadd.f32 0.0, %v8255
    %v8257 = vpop.f32.mrb[0].mxu0
    %v8258 = vpop.f32.mrb[0].mxu0
    %8259 = vdwg.mxu0
    %8260 = vmatprep.subr.bf16.mxu0 %v8094
    %8261 = vmatpush1.bf16.msra.mxu0 %v8093
    %8262 = vmatprep.subr.bf16.mxu0 %v8102
    %8263 = vmatpush1.bf16.msra.mxu0 %v8101
    %8264 = vmatprep.subr.bf16.mxu0 %v8110
    %8265 = vmatpush1.bf16.msra.mxu0 %v8109
    %8266 = vmatprep.subr.bf16.mxu0 %v8118
    %8267 = vmatpush1.bf16.msra.mxu0 %v8117
    %8268 = vmatprep.subr.bf16.mxu0 %v8126
    %8269 = vmatpush1.bf16.msra.mxu0 %v8125
    %8270 = vmatprep.subr.bf16.mxu0 %v8134
    %8271 = vmatpush1.bf16.msra.mxu0 %v8133
    %8272 = vmatprep.subr.bf16.mxu0 %v8142
    %8273 = vmatpush1.bf16.msra.mxu0 %v8141
    %8274 = vmatprep.subr.bf16.mxu0 %v8150
    %8275 = vmatpush1.bf16.msra.mxu0 %v8149
    %8276 = vmatprep.subr.bf16.mxu0 0
    %8277 = vmatpush1.bf16.msra.mxu0 0
    %8278 = vmatprep.subr.bf16.mxu0 0
    %8279 = vmatpush1.bf16.msra.mxu0 0
    %8280 = vmatprep.subr.bf16.mxu0 0
    %8281 = vmatpush1.bf16.msra.mxu0 0
    %8282 = vmatprep.subr.bf16.mxu0 0
    %8283 = vmatpush1.bf16.msra.mxu0 0
    %8284 = vmatprep.subr.bf16.mxu0 0
    %8285 = vmatpush1.bf16.msra.mxu0 0
    %8286 = vmatprep.subr.bf16.mxu0 0
    %8287 = vmatpush1.bf16.msra.mxu0 0
    %8288 = vmatprep.subr.bf16.mxu0 0
    %8289 = vmatpush1.bf16.msra.mxu0 0
    %8290 = vmatprep.subr.bf16.mxu0 0
    %8291 = vmatpush1.bf16.msra.mxu0 0
    %8292 = vmatprep.mubr.bf16.mxu0 0
    %8293 = vmatmul.mubr.bf16.gmra.mrb[0].mxu0 %v7897
    %v8294 = vpop.f32.mrb[0].mxu0
    %v8295 = vadd.f32 0.0, %v8294
    %v8296 = vpop.f32.mrb[0].mxu0
    %v8297 = vadd.f32 0.0, %v8296
    %v8298 = vpop.f32.mrb[0].mxu0
    %v8299 = vpop.f32.mrb[0].mxu0
    %8300 = vdwg.mxu0
    %8301 = vmatprep.subr.bf16.mxu0 %v8096
    %8302 = vmatpush1.bf16.msra.mxu0 %v8095
    %8303 = vmatprep.subr.bf16.mxu0 %v8104
    %8304 = vmatpush1.bf16.msra.mxu0 %v8103
    %8305 = vmatprep.subr.bf16.mxu0 %v8112
    %8306 = vmatpush1.bf16.msra.mxu0 %v8111
    %8307 = vmatprep.subr.bf16.mxu0 %v8120
    %8308 = vmatpush1.bf16.msra.mxu0 %v8119
    %8309 = vmatprep.subr.bf16.mxu0 %v8128
    %8310 = vmatpush1.bf16.msra.mxu0 %v8127
    %8311 = vmatprep.subr.bf16.mxu0 %v8136
    %8312 = vmatpush1.bf16.msra.mxu0 %v8135
    %8313 = vmatprep.subr.bf16.mxu0 %v8144
    %8314 = vmatpush1.bf16.msra.mxu0 %v8143
    %8315 = vmatprep.subr.bf16.mxu0 %v8152
    %8316 = vmatpush1.bf16.msra.mxu0 %v8151
    %8317 = vmatprep.subr.bf16.mxu0 0
    %8318 = vmatpush1.bf16.msra.mxu0 0
    %8319 = vmatprep.subr.bf16.mxu0 0
    %8320 = vmatpush1.bf16.msra.mxu0 0
    %8321 = vmatprep.subr.bf16.mxu0 0
    %8322 = vmatpush1.bf16.msra.mxu0 0
    %8323 = vmatprep.subr.bf16.mxu0 0
    %8324 = vmatpush1.bf16.msra.mxu0 0
    %8325 = vmatprep.subr.bf16.mxu0 0
    %8326 = vmatpush1.bf16.msra.mxu0 0
    %8327 = vmatprep.subr.bf16.mxu0 0
    %8328 = vmatpush1.bf16.msra.mxu0 0
    %8329 = vmatprep.subr.bf16.mxu0 0
    %8330 = vmatpush1.bf16.msra.mxu0 0
    %8331 = vmatprep.subr.bf16.mxu0 0
    %8332 = vmatpush1.bf16.msra.mxu0 0
    %8333 = vmatprep.mubr.bf16.mxu0 0
    %8334 = vmatmul.mubr.bf16.gmra.mrb[0].mxu0 %v7897
    %v8335 = vpop.f32.mrb[0].mxu0
    %v8336 = vadd.f32 0.0, %v8335
    %v8337 = vpop.f32.mrb[0].mxu0
    %v8338 = vadd.f32 0.0, %v8337
    %v8339 = vpop.f32.mrb[0].mxu0
    %v8340 = vpop.f32.mrb[0].mxu0
    %8341 = vdwg.mxu0
    %8342 = vmatprep.subr.bf16.mxu0 %v8098
    %8343 = vmatpush1.bf16.msra.mxu0 %v8097
    %8344 = vmatprep.subr.bf16.mxu0 %v8106
    %8345 = vmatpush1.bf16.msra.mxu0 %v8105
    %8346 = vmatprep.subr.bf16.mxu0 %v8114
    %8347 = vmatpush1.bf16.msra.mxu0 %v8113
    %8348 = vmatprep.subr.bf16.mxu0 %v8122
    %8349 = vmatpush1.bf16.msra.mxu0 %v8121
    %8350 = vmatprep.subr.bf16.mxu0 %v8130
    %8351 = vmatpush1.bf16.msra.mxu0 %v8129
    %8352 = vmatprep.subr.bf16.mxu0 %v8138
    %8353 = vmatpush1.bf16.msra.mxu0 %v8137
    %8354 = vmatprep.subr.bf16.mxu0 %v8146
    %8355 = vmatpush1.bf16.msra.mxu0 %v8145
    %8356 = vmatprep.subr.bf16.mxu0 %v8154
    %8357 = vmatpush1.bf16.msra.mxu0 %v8153
    %8358 = vmatprep.subr.bf16.mxu0 0
    %8359 = vmatpush1.bf16.msra.mxu0 0
    %8360 = vmatprep.subr.bf16.mxu0 0
    %8361 = vmatpush1.bf16.msra.mxu0 0
    %8362 = vmatprep.subr.bf16.mxu0 0
    %8363 = vmatpush1.bf16.msra.mxu0 0
    %8364 = vmatprep.subr.bf16.mxu0 0
    %8365 = vmatpush1.bf16.msra.mxu0 0
    %8366 = vmatprep.subr.bf16.mxu0 0
    %8367 = vmatpush1.bf16.msra.mxu0 0
    %8368 = vmatprep.subr.bf16.mxu0 0
    %8369 = vmatpush1.bf16.msra.mxu0 0
    %8370 = vmatprep.subr.bf16.mxu0 0
    %8371 = vmatpush1.bf16.msra.mxu0 0
    %8372 = vmatprep.subr.bf16.mxu0 0
    %8373 = vmatpush1.bf16.msra.mxu0 0
    %8374 = vmatprep.mubr.bf16.mxu0 0
    %8375 = vmatmul.mubr.bf16.gmra.mrb[0].mxu0 %v7897
    %v8376 = vpop.f32.mrb[0].mxu0
    %v8377 = vadd.f32 0.0, %v8376
    %v8378 = vpop.f32.mrb[0].mxu0
    %v8379 = vadd.f32 0.0, %v8378
    %v8380 = vpop.f32.mrb[0].mxu0
    %v8381 = vpop.f32.mrb[0].mxu0
    %8382 = vdwg.mxu0
    %v8383 = vadd.f32 %v7810, %v8254
    %v8384 = vadd.f32 %v7811, %v8256
    %v8385 = vadd.f32 %v7812, %v8295
    %v8386 = vadd.f32 %v7813, %v8297
    %v8387 = vadd.f32 %v7814, %v8336
    %v8388 = vadd.f32 %v7815, %v8338
    %v8389 = vadd.f32 %v7816, %v8377
    %v8390 = vadd.f32 %v7817, %v8379
    %s8391 = scalar_lea.vmem [#allocation10], 6144
    %v8392 = vld [vmem:[%s8391] sm:$0xff]
    %v8393 = vld [vmem:[%s8391 + $0x8] sm:$0xff]
    %v8394 = vld [vmem:[%s8391 + $0x10] sm:$0xff]
    %v8395 = vld [vmem:[%s8391 + $0x18] sm:$0xff]
    %v8396 = vld [vmem:[%s8391 + $0x20] sm:$0xff]
    %v8397 = vld [vmem:[%s8391 + $0x28] sm:$0xff]
    %v8398 = vld [vmem:[%s8391 + $0x30] sm:$0xff]
    %v8399 = vld [vmem:[%s8391 + $0x38] sm:$0xff]
    %v8400 = vld [vmem:[%s8391 + $0x40] sm:$0xff]
    %v8401 = vld [vmem:[%s8391 + $0x48] sm:$0xff]
    %v8402 = vld [vmem:[%s8391 + $0x50] sm:$0xff]
    %v8403 = vld [vmem:[%s8391 + $0x58] sm:$0xff]
    %v8404 = vld [vmem:[%s8391 + $0x60] sm:$0xff]
    %v8405 = vld [vmem:[%s8391 + $0x68] sm:$0xff]
    %v8406 = vld [vmem:[%s8391 + $0x70] sm:$0xff]
    %v8407 = vld [vmem:[%s8391 + $0x78] sm:$0xff]
    %v8408 = vld [vmem:[%s8391 + $0x80] sm:$0xff]
    %v8409 = vld [vmem:[%s8391 + $0x88] sm:$0xff]
    %v8410 = vld [vmem:[%s8391 + $0x90] sm:$0xff]
    %v8411 = vld [vmem:[%s8391 + $0x98] sm:$0xff]
    %v8412 = vld [vmem:[%s8391 + $0xa0] sm:$0xff]
    %v8413 = vld [vmem:[%s8391 + $0xa8] sm:$0xff]
    %v8414 = vld [vmem:[%s8391 + $0xb0] sm:$0xff]
    %v8415 = vld [vmem:[%s8391 + $0xb8] sm:$0xff]
    %v8416 = vld [vmem:[%s8391 + $0xc0] sm:$0xff]
    %v8417 = vld [vmem:[%s8391 + $0xc8] sm:$0xff]
    %v8418 = vld [vmem:[%s8391 + $0xd0] sm:$0xff]
    %v8419 = vld [vmem:[%s8391 + $0xd8] sm:$0xff]
    %v8420 = vld [vmem:[%s8391 + $0xe0] sm:$0xff]
    %v8421 = vld [vmem:[%s8391 + $0xe8] sm:$0xff]
    %v8422 = vld [vmem:[%s8391 + $0xf0] sm:$0xff]
    %v8423 = vld [vmem:[%s8391 + $0xf8] sm:$0xff]
    %v8424 = vld [vmem:[%s8391 + $0x100] sm:$0xff]
    %v8425 = vld [vmem:[%s8391 + $0x108] sm:$0xff]
    %v8426 = vld [vmem:[%s8391 + $0x110] sm:$0xff]
    %v8427 = vld [vmem:[%s8391 + $0x118] sm:$0xff]
    %v8428 = vld [vmem:[%s8391 + $0x120] sm:$0xff]
    %v8429 = vld [vmem:[%s8391 + $0x128] sm:$0xff]
    %v8430 = vld [vmem:[%s8391 + $0x130] sm:$0xff]
    %v8431 = vld [vmem:[%s8391 + $0x138] sm:$0xff]
    %v8432 = vld [vmem:[%s8391 + $0x140] sm:$0xff]
    %v8433 = vld [vmem:[%s8391 + $0x148] sm:$0xff]
    %v8434 = vld [vmem:[%s8391 + $0x150] sm:$0xff]
    %v8435 = vld [vmem:[%s8391 + $0x158] sm:$0xff]
    %v8436 = vld [vmem:[%s8391 + $0x160] sm:$0xff]
    %v8437 = vld [vmem:[%s8391 + $0x168] sm:$0xff]
    %v8438 = vld [vmem:[%s8391 + $0x170] sm:$0xff]
    %v8439 = vld [vmem:[%s8391 + $0x178] sm:$0xff]
    %v8440 = vld [vmem:[%s8391 + $0x180] sm:$0xff]
    %v8441 = vld [vmem:[%s8391 + $0x188] sm:$0xff]
    %v8442 = vld [vmem:[%s8391 + $0x190] sm:$0xff]
    %v8443 = vld [vmem:[%s8391 + $0x198] sm:$0xff]
    %v8444 = vld [vmem:[%s8391 + $0x1a0] sm:$0xff]
    %v8445 = vld [vmem:[%s8391 + $0x1a8] sm:$0xff]
    %v8446 = vld [vmem:[%s8391 + $0x1b0] sm:$0xff]
    %v8447 = vld [vmem:[%s8391 + $0x1b8] sm:$0xff]
    %v8448 = vld [vmem:[%s8391 + $0x1c0] sm:$0xff]
    %v8449 = vld [vmem:[%s8391 + $0x1c8] sm:$0xff]
    %v8450 = vld [vmem:[%s8391 + $0x1d0] sm:$0xff]
    %v8451 = vld [vmem:[%s8391 + $0x1d8] sm:$0xff]
    %v8452 = vld [vmem:[%s8391 + $0x1e0] sm:$0xff]
    %v8453 = vld [vmem:[%s8391 + $0x1e8] sm:$0xff]
    %v8454 = vld [vmem:[%s8391 + $0x1f0] sm:$0xff]
    %v8455 = vld [vmem:[%s8391 + $0x1f8] sm:$0xff]
    %v8456 = vrot.slane %v6156, 4
    %v8457 = vrot.slane %v6157, 3
    %v8458 = vsel %vm1647, %v8457, %v8456
    %v8459 = vrot.slane %v6158, 2
    %v8460 = vsel %vm1650, %v8459, %v8458
    %v8461 = vrot.slane %v6159, 1
    %v8462 = vsel %vm1653, %v8461, %v8460
    %v8463 = vsel %vm1656, %v6160, %v8462
    %v8464 = vrot.slane %v6161, 7
    %v8465 = vsel %vm1659, %v8464, %v8463
    %v8466 = vrot.slane %v6162, 6
    %v8467 = vsel %vm1662, %v8466, %v8465
    %v8468 = vrot.slane %v6163, 5
    %v8469 = vsel %vm1665, %v8468, %v8467
    %v8470 = vpack.c.b16 %v8469, %v8469
    %v8536 = vunpack.c.l.b16 %v8392
    %v8537 = vunpack.c.h.b16 %v8392
    %v8538 = vunpack.c.l.b16 %v8393
    %v8539 = vunpack.c.h.b16 %v8393
    %v8540 = vunpack.c.l.b16 %v8394
    %v8541 = vunpack.c.h.b16 %v8394
    %v8542 = vunpack.c.l.b16 %v8395
    %v8543 = vunpack.c.h.b16 %v8395
    %v8544 = vunpack.c.l.b16 %v8396
    %v8545 = vunpack.c.h.b16 %v8396
    %v8546 = vunpack.c.l.b16 %v8397
    %v8547 = vunpack.c.h.b16 %v8397
    %v8548 = vunpack.c.l.b16 %v8398
    %v8549 = vunpack.c.h.b16 %v8398
    %v8550 = vunpack.c.l.b16 %v8399
    %v8551 = vunpack.c.h.b16 %v8399
    %v8552 = vunpack.c.l.b16 %v8400
    %v8553 = vunpack.c.h.b16 %v8400
    %v8554 = vunpack.c.l.b16 %v8401
    %v8555 = vunpack.c.h.b16 %v8401
    %v8556 = vunpack.c.l.b16 %v8402
    %v8557 = vunpack.c.h.b16 %v8402
    %v8558 = vunpack.c.l.b16 %v8403
    %v8559 = vunpack.c.h.b16 %v8403
    %v8560 = vunpack.c.l.b16 %v8404
    %v8561 = vunpack.c.h.b16 %v8404
    %v8562 = vunpack.c.l.b16 %v8405
    %v8563 = vunpack.c.h.b16 %v8405
    %v8564 = vunpack.c.l.b16 %v8406
    %v8565 = vunpack.c.h.b16 %v8406
    %v8566 = vunpack.c.l.b16 %v8407
    %v8567 = vunpack.c.h.b16 %v8407
    %v8568 = vunpack.c.l.b16 %v8408
    %v8569 = vunpack.c.h.b16 %v8408
    %v8570 = vunpack.c.l.b16 %v8409
    %v8571 = vunpack.c.h.b16 %v8409
    %v8572 = vunpack.c.l.b16 %v8410
    %v8573 = vunpack.c.h.b16 %v8410
    %v8574 = vunpack.c.l.b16 %v8411
    %v8575 = vunpack.c.h.b16 %v8411
    %v8576 = vunpack.c.l.b16 %v8412
    %v8577 = vunpack.c.h.b16 %v8412
    %v8578 = vunpack.c.l.b16 %v8413
    %v8579 = vunpack.c.h.b16 %v8413
    %v8580 = vunpack.c.l.b16 %v8414
    %v8581 = vunpack.c.h.b16 %v8414
    %v8582 = vunpack.c.l.b16 %v8415
    %v8583 = vunpack.c.h.b16 %v8415
    %v8584 = vunpack.c.l.b16 %v8416
    %v8585 = vunpack.c.h.b16 %v8416
    %v8586 = vunpack.c.l.b16 %v8417
    %v8587 = vunpack.c.h.b16 %v8417
    %v8588 = vunpack.c.l.b16 %v8418
    %v8589 = vunpack.c.h.b16 %v8418
    %v8590 = vunpack.c.l.b16 %v8419
    %v8591 = vunpack.c.h.b16 %v8419
    %v8592 = vunpack.c.l.b16 %v8420
    %v8593 = vunpack.c.h.b16 %v8420
    %v8594 = vunpack.c.l.b16 %v8421
    %v8595 = vunpack.c.h.b16 %v8421
    %v8596 = vunpack.c.l.b16 %v8422
    %v8597 = vunpack.c.h.b16 %v8422
    %v8598 = vunpack.c.l.b16 %v8423
    %v8599 = vunpack.c.h.b16 %v8423
    %v8600 = vunpack.c.l.b16 %v8424
    %v8601 = vunpack.c.h.b16 %v8424
    %v8602 = vunpack.c.l.b16 %v8425
    %v8603 = vunpack.c.h.b16 %v8425
    %v8604 = vunpack.c.l.b16 %v8426
    %v8605 = vunpack.c.h.b16 %v8426
    %v8606 = vunpack.c.l.b16 %v8427
    %v8607 = vunpack.c.h.b16 %v8427
    %v8608 = vunpack.c.l.b16 %v8428
    %v8609 = vunpack.c.h.b16 %v8428
    %v8610 = vunpack.c.l.b16 %v8429
    %v8611 = vunpack.c.h.b16 %v8429
    %v8612 = vunpack.c.l.b16 %v8430
    %v8613 = vunpack.c.h.b16 %v8430
    %v8614 = vunpack.c.l.b16 %v8431
    %v8615 = vunpack.c.h.b16 %v8431
    %v8616 = vunpack.c.l.b16 %v8432
    %v8617 = vunpack.c.h.b16 %v8432
    %v8618 = vunpack.c.l.b16 %v8433
    %v8619 = vunpack.c.h.b16 %v8433
    %v8620 = vunpack.c.l.b16 %v8434
    %v8621 = vunpack.c.h.b16 %v8434
    %v8622 = vunpack.c.l.b16 %v8435
    %v8623 = vunpack.c.h.b16 %v8435
    %v8624 = vunpack.c.l.b16 %v8436
    %v8625 = vunpack.c.h.b16 %v8436
    %v8626 = vunpack.c.l.b16 %v8437
    %v8627 = vunpack.c.h.b16 %v8437
    %v8628 = vunpack.c.l.b16 %v8438
    %v8629 = vunpack.c.h.b16 %v8438
    %v8630 = vunpack.c.l.b16 %v8439
    %v8631 = vunpack.c.h.b16 %v8439
    %v8632 = vunpack.c.l.b16 %v8440
    %v8633 = vunpack.c.h.b16 %v8440
    %v8634 = vunpack.c.l.b16 %v8441
    %v8635 = vunpack.c.h.b16 %v8441
    %v8636 = vunpack.c.l.b16 %v8442
    %v8637 = vunpack.c.h.b16 %v8442
    %v8638 = vunpack.c.l.b16 %v8443
    %v8639 = vunpack.c.h.b16 %v8443
    %v8640 = vunpack.c.l.b16 %v8444
    %v8641 = vunpack.c.h.b16 %v8444
    %v8642 = vunpack.c.l.b16 %v8445
    %v8643 = vunpack.c.h.b16 %v8445
    %v8644 = vunpack.c.l.b16 %v8446
    %v8645 = vunpack.c.h.b16 %v8446
    %v8646 = vunpack.c.l.b16 %v8447
    %v8647 = vunpack.c.h.b16 %v8447
    %v8648 = vunpack.c.l.b16 %v8448
    %v8649 = vunpack.c.h.b16 %v8448
    %v8650 = vunpack.c.l.b16 %v8449
    %v8651 = vunpack.c.h.b16 %v8449
    %v8652 = vunpack.c.l.b16 %v8450
    %v8653 = vunpack.c.h.b16 %v8450
    %v8654 = vunpack.c.l.b16 %v8451
    %v8655 = vunpack.c.h.b16 %v8451
    %v8656 = vunpack.c.l.b16 %v8452
    %v8657 = vunpack.c.h.b16 %v8452
    %v8658 = vunpack.c.l.b16 %v8453
    %v8659 = vunpack.c.h.b16 %v8453
    %v8660 = vunpack.c.l.b16 %v8454
    %v8661 = vunpack.c.h.b16 %v8454
    %v8662 = vunpack.c.l.b16 %v8455
    %v8663 = vunpack.c.h.b16 %v8455
    %v8664 = vpack.c.b16 %v8544, %v8536
    %v8665 = vpack.c.b16 %v8545, %v8537
    %v8666 = vpack.c.b16 %v8546, %v8538
    %v8667 = vpack.c.b16 %v8547, %v8539
    %v8668 = vpack.c.b16 %v8548, %v8540
    %v8669 = vpack.c.b16 %v8549, %v8541
    %v8670 = vpack.c.b16 %v8550, %v8542
    %v8671 = vpack.c.b16 %v8551, %v8543
    %v8672 = vpack.c.b16 %v8560, %v8552
    %v8673 = vpack.c.b16 %v8561, %v8553
    %v8674 = vpack.c.b16 %v8562, %v8554
    %v8675 = vpack.c.b16 %v8563, %v8555
    %v8676 = vpack.c.b16 %v8564, %v8556
    %v8677 = vpack.c.b16 %v8565, %v8557
    %v8678 = vpack.c.b16 %v8566, %v8558
    %v8679 = vpack.c.b16 %v8567, %v8559
    %v8680 = vpack.c.b16 %v8576, %v8568
    %v8681 = vpack.c.b16 %v8577, %v8569
    %v8682 = vpack.c.b16 %v8578, %v8570
    %v8683 = vpack.c.b16 %v8579, %v8571
    %v8684 = vpack.c.b16 %v8580, %v8572
    %v8685 = vpack.c.b16 %v8581, %v8573
    %v8686 = vpack.c.b16 %v8582, %v8574
    %v8687 = vpack.c.b16 %v8583, %v8575
    %v8688 = vpack.c.b16 %v8592, %v8584
    %v8689 = vpack.c.b16 %v8593, %v8585
    %v8690 = vpack.c.b16 %v8594, %v8586
    %v8691 = vpack.c.b16 %v8595, %v8587
    %v8692 = vpack.c.b16 %v8596, %v8588
    %v8693 = vpack.c.b16 %v8597, %v8589
    %v8694 = vpack.c.b16 %v8598, %v8590
    %v8695 = vpack.c.b16 %v8599, %v8591
    %v8696 = vpack.c.b16 %v8608, %v8600
    %v8697 = vpack.c.b16 %v8609, %v8601
    %v8698 = vpack.c.b16 %v8610, %v8602
    %v8699 = vpack.c.b16 %v8611, %v8603
    %v8700 = vpack.c.b16 %v8612, %v8604
    %v8701 = vpack.c.b16 %v8613, %v8605
    %v8702 = vpack.c.b16 %v8614, %v8606
    %v8703 = vpack.c.b16 %v8615, %v8607
    %v8704 = vpack.c.b16 %v8624, %v8616
    %v8705 = vpack.c.b16 %v8625, %v8617
    %v8706 = vpack.c.b16 %v8626, %v8618
    %v8707 = vpack.c.b16 %v8627, %v8619
    %v8708 = vpack.c.b16 %v8628, %v8620
    %v8709 = vpack.c.b16 %v8629, %v8621
    %v8710 = vpack.c.b16 %v8630, %v8622
    %v8711 = vpack.c.b16 %v8631, %v8623
    %v8712 = vpack.c.b16 %v8640, %v8632
    %v8713 = vpack.c.b16 %v8641, %v8633
    %v8714 = vpack.c.b16 %v8642, %v8634
    %v8715 = vpack.c.b16 %v8643, %v8635
    %v8716 = vpack.c.b16 %v8644, %v8636
    %v8717 = vpack.c.b16 %v8645, %v8637
    %v8718 = vpack.c.b16 %v8646, %v8638
    %v8719 = vpack.c.b16 %v8647, %v8639
    %v8720 = vpack.c.b16 %v8656, %v8648
    %v8721 = vpack.c.b16 %v8657, %v8649
    %v8722 = vpack.c.b16 %v8658, %v8650
    %v8723 = vpack.c.b16 %v8659, %v8651
    %v8724 = vpack.c.b16 %v8660, %v8652
    %v8725 = vpack.c.b16 %v8661, %v8653
    %v8726 = vpack.c.b16 %v8662, %v8654
    %v8727 = vpack.c.b16 %v8663, %v8655
    %8792 = vmatprep.subr.bf16.mxu0 %v8665
    %8793 = vmatpush1.bf16.msra.mxu0 %v8664
    %8794 = vmatprep.subr.bf16.mxu0 %v8673
    %8795 = vmatpush1.bf16.msra.mxu0 %v8672
    %8796 = vmatprep.subr.bf16.mxu0 %v8681
    %8797 = vmatpush1.bf16.msra.mxu0 %v8680
    %8798 = vmatprep.subr.bf16.mxu0 %v8689
    %8799 = vmatpush1.bf16.msra.mxu0 %v8688
    %8800 = vmatprep.subr.bf16.mxu0 %v8697
    %8801 = vmatpush1.bf16.msra.mxu0 %v8696
    %8802 = vmatprep.subr.bf16.mxu0 %v8705
    %8803 = vmatpush1.bf16.msra.mxu0 %v8704
    %8804 = vmatprep.subr.bf16.mxu0 %v8713
    %8805 = vmatpush1.bf16.msra.mxu0 %v8712
    %8806 = vmatprep.subr.bf16.mxu0 %v8721
    %8807 = vmatpush1.bf16.msra.mxu0 %v8720
    %8808 = vmatprep.subr.bf16.mxu0 0
    %8809 = vmatpush1.bf16.msra.mxu0 0
    %8810 = vmatprep.subr.bf16.mxu0 0
    %8811 = vmatpush1.bf16.msra.mxu0 0
    %8812 = vmatprep.subr.bf16.mxu0 0
    %8813 = vmatpush1.bf16.msra.mxu0 0
    %8814 = vmatprep.subr.bf16.mxu0 0
    %8815 = vmatpush1.bf16.msra.mxu0 0
    %8816 = vmatprep.subr.bf16.mxu0 0
    %8817 = vmatpush1.bf16.msra.mxu0 0
    %8818 = vmatprep.subr.bf16.mxu0 0
    %8819 = vmatpush1.bf16.msra.mxu0 0
    %8820 = vmatprep.subr.bf16.mxu0 0
    %8821 = vmatpush1.bf16.msra.mxu0 0
    %8822 = vmatprep.subr.bf16.mxu0 0
    %8823 = vmatpush1.bf16.msra.mxu0 0
    %8824 = vmatprep.mubr.bf16.mxu0 0
    %8825 = vmatmul.mubr.bf16.gmra.mrb[0].mxu0 %v8470
    %v8826 = vpop.f32.mrb[0].mxu0
    %v8827 = vadd.f32 0.0, %v8826
    %v8828 = vpop.f32.mrb[0].mxu0
    %v8829 = vadd.f32 0.0, %v8828
    %v8830 = vpop.f32.mrb[0].mxu0
    %v8831 = vpop.f32.mrb[0].mxu0
    %8832 = vdwg.mxu0
    %8833 = vmatprep.subr.bf16.mxu0 %v8667
    %8834 = vmatpush1.bf16.msra.mxu0 %v8666
    %8835 = vmatprep.subr.bf16.mxu0 %v8675
    %8836 = vmatpush1.bf16.msra.mxu0 %v8674
    %8837 = vmatprep.subr.bf16.mxu0 %v8683
    %8838 = vmatpush1.bf16.msra.mxu0 %v8682
    %8839 = vmatprep.subr.bf16.mxu0 %v8691
    %8840 = vmatpush1.bf16.msra.mxu0 %v8690
    %8841 = vmatprep.subr.bf16.mxu0 %v8699
    %8842 = vmatpush1.bf16.msra.mxu0 %v8698
    %8843 = vmatprep.subr.bf16.mxu0 %v8707
    %8844 = vmatpush1.bf16.msra.mxu0 %v8706
    %8845 = vmatprep.subr.bf16.mxu0 %v8715
    %8846 = vmatpush1.bf16.msra.mxu0 %v8714
    %8847 = vmatprep.subr.bf16.mxu0 %v8723
    %8848 = vmatpush1.bf16.msra.mxu0 %v8722
    %8849 = vmatprep.subr.bf16.mxu0 0
    %8850 = vmatpush1.bf16.msra.mxu0 0
    %8851 = vmatprep.subr.bf16.mxu0 0
    %8852 = vmatpush1.bf16.msra.mxu0 0
    %8853 = vmatprep.subr.bf16.mxu0 0
    %8854 = vmatpush1.bf16.msra.mxu0 0
    %8855 = vmatprep.subr.bf16.mxu0 0
    %8856 = vmatpush1.bf16.msra.mxu0 0
    %8857 = vmatprep.subr.bf16.mxu0 0
    %8858 = vmatpush1.bf16.msra.mxu0 0
    %8859 = vmatprep.subr.bf16.mxu0 0
    %8860 = vmatpush1.bf16.msra.mxu0 0
    %8861 = vmatprep.subr.bf16.mxu0 0
    %8862 = vmatpush1.bf16.msra.mxu0 0
    %8863 = vmatprep.subr.bf16.mxu0 0
    %8864 = vmatpush1.bf16.msra.mxu0 0
    %8865 = vmatprep.mubr.bf16.mxu0 0
    %8866 = vmatmul.mubr.bf16.gmra.mrb[0].mxu0 %v8470
    %v8867 = vpop.f32.mrb[0].mxu0
    %v8868 = vadd.f32 0.0, %v8867
    %v8869 = vpop.f32.mrb[0].mxu0
    %v8870 = vadd.f32 0.0, %v8869
    %v8871 = vpop.f32.mrb[0].mxu0
    %v8872 = vpop.f32.mrb[0].mxu0
    %8873 = vdwg.mxu0
    %8874 = vmatprep.subr.bf16.mxu0 %v8669
    %8875 = vmatpush1.bf16.msra.mxu0 %v8668
    %8876 = vmatprep.subr.bf16.mxu0 %v8677
    %8877 = vmatpush1.bf16.msra.mxu0 %v8676
    %8878 = vmatprep.subr.bf16.mxu0 %v8685
    %8879 = vmatpush1.bf16.msra.mxu0 %v8684
    %8880 = vmatprep.subr.bf16.mxu0 %v8693
    %8881 = vmatpush1.bf16.msra.mxu0 %v8692
    %8882 = vmatprep.subr.bf16.mxu0 %v8701
    %8883 = vmatpush1.bf16.msra.mxu0 %v8700
    %8884 = vmatprep.subr.bf16.mxu0 %v8709
    %8885 = vmatpush1.bf16.msra.mxu0 %v8708
    %8886 = vmatprep.subr.bf16.mxu0 %v8717
    %8887 = vmatpush1.bf16.msra.mxu0 %v8716
    %8888 = vmatprep.subr.bf16.mxu0 %v8725
    %8889 = vmatpush1.bf16.msra.mxu0 %v8724
    %8890 = vmatprep.subr.bf16.mxu0 0
    %8891 = vmatpush1.bf16.msra.mxu0 0
    %8892 = vmatprep.subr.bf16.mxu0 0
    %8893 = vmatpush1.bf16.msra.mxu0 0
    %8894 = vmatprep.subr.bf16.mxu0 0
    %8895 = vmatpush1.bf16.msra.mxu0 0
    %8896 = vmatprep.subr.bf16.mxu0 0
    %8897 = vmatpush1.bf16.msra.mxu0 0
    %8898 = vmatprep.subr.bf16.mxu0 0
    %8899 = vmatpush1.bf16.msra.mxu0 0
    %8900 = vmatprep.subr.bf16.mxu0 0
    %8901 = vmatpush1.bf16.msra.mxu0 0
    %8902 = vmatprep.subr.bf16.mxu0 0
    %8903 = vmatpush1.bf16.msra.mxu0 0
    %8904 = vmatprep.subr.bf16.mxu0 0
    %8905 = vmatpush1.bf16.msra.mxu0 0
    %8906 = vmatprep.mubr.bf16.mxu0 0
    %8907 = vmatmul.mubr.bf16.gmra.mrb[0].mxu0 %v8470
    %v8908 = vpop.f32.mrb[0].mxu0
    %v8909 = vadd.f32 0.0, %v8908
    %v8910 = vpop.f32.mrb[0].mxu0
    %v8911 = vadd.f32 0.0, %v8910
    %v8912 = vpop.f32.mrb[0].mxu0
    %v8913 = vpop.f32.mrb[0].mxu0
    %8914 = vdwg.mxu0
    %8915 = vmatprep.subr.bf16.mxu0 %v8671
    %8916 = vmatpush1.bf16.msra.mxu0 %v8670
    %8917 = vmatprep.subr.bf16.mxu0 %v8679
    %8918 = vmatpush1.bf16.msra.mxu0 %v8678
    %8919 = vmatprep.subr.bf16.mxu0 %v8687
    %8920 = vmatpush1.bf16.msra.mxu0 %v8686
    %8921 = vmatprep.subr.bf16.mxu0 %v8695
    %8922 = vmatpush1.bf16.msra.mxu0 %v8694
    %8923 = vmatprep.subr.bf16.mxu0 %v8703
    %8924 = vmatpush1.bf16.msra.mxu0 %v8702
    %8925 = vmatprep.subr.bf16.mxu0 %v8711
    %8926 = vmatpush1.bf16.msra.mxu0 %v8710
    %8927 = vmatprep.subr.bf16.mxu0 %v8719
    %8928 = vmatpush1.bf16.msra.mxu0 %v8718
    %8929 = vmatprep.subr.bf16.mxu0 %v8727
    %8930 = vmatpush1.bf16.msra.mxu0 %v8726
    %8931 = vmatprep.subr.bf16.mxu0 0
    %8932 = vmatpush1.bf16.msra.mxu0 0
    %8933 = vmatprep.subr.bf16.mxu0 0
    %8934 = vmatpush1.bf16.msra.mxu0 0
    %8935 = vmatprep.subr.bf16.mxu0 0
    %8936 = vmatpush1.bf16.msra.mxu0 0
    %8937 = vmatprep.subr.bf16.mxu0 0
    %8938 = vmatpush1.bf16.msra.mxu0 0
    %8939 = vmatprep.subr.bf16.mxu0 0
    %8940 = vmatpush1.bf16.msra.mxu0 0
    %8941 = vmatprep.subr.bf16.mxu0 0
    %8942 = vmatpush1.bf16.msra.mxu0 0
    %8943 = vmatprep.subr.bf16.mxu0 0
    %8944 = vmatpush1.bf16.msra.mxu0 0
    %8945 = vmatprep.subr.bf16.mxu0 0
    %8946 = vmatpush1.bf16.msra.mxu0 0
    %8947 = vmatprep.mubr.bf16.mxu0 0
    %8948 = vmatmul.mubr.bf16.gmra.mrb[0].mxu0 %v8470
    %v8949 = vpop.f32.mrb[0].mxu0
    %v8950 = vadd.f32 0.0, %v8949
    %v8951 = vpop.f32.mrb[0].mxu0
    %v8952 = vadd.f32 0.0, %v8951
    %v8953 = vpop.f32.mrb[0].mxu0
    %v8954 = vpop.f32.mrb[0].mxu0
    %8955 = vdwg.mxu0
    %v8956 = vadd.f32 %v8383, %v8827
    %v8957 = vadd.f32 %v8384, %v8829
    %v8958 = vadd.f32 %v8385, %v8868
    %v8959 = vadd.f32 %v8386, %v8870
    %v8960 = vadd.f32 %v8387, %v8909
    %v8961 = vadd.f32 %v8388, %v8911
    %v8962 = vadd.f32 %v8389, %v8950
    %v8963 = vadd.f32 %v8390, %v8952
    %s8964 = scalar_lea.vmem [#allocation10], 6656
    %v8965 = vld [vmem:[%s8964] sm:$0xff]
    %v8966 = vld [vmem:[%s8964 + $0x8] sm:$0xff]
    %v8967 = vld [vmem:[%s8964 + $0x10] sm:$0xff]
    %v8968 = vld [vmem:[%s8964 + $0x18] sm:$0xff]
    %v8969 = vld [vmem:[%s8964 + $0x20] sm:$0xff]
    %v8970 = vld [vmem:[%s8964 + $0x28] sm:$0xff]
    %v8971 = vld [vmem:[%s8964 + $0x30] sm:$0xff]
    %v8972 = vld [vmem:[%s8964 + $0x38] sm:$0xff]
    %v8973 = vld [vmem:[%s8964 + $0x40] sm:$0xff]
    %v8974 = vld [vmem:[%s8964 + $0x48] sm:$0xff]
    %v8975 = vld [vmem:[%s8964 + $0x50] sm:$0xff]
    %v8976 = vld [vmem:[%s8964 + $0x58] sm:$0xff]
    %v8977 = vld [vmem:[%s8964 + $0x60] sm:$0xff]
    %v8978 = vld [vmem:[%s8964 + $0x68] sm:$0xff]
    %v8979 = vld [vmem:[%s8964 + $0x70] sm:$0xff]
    %v8980 = vld [vmem:[%s8964 + $0x78] sm:$0xff]
    %v8981 = vld [vmem:[%s8964 + $0x80] sm:$0xff]
    %v8982 = vld [vmem:[%s8964 + $0x88] sm:$0xff]
    %v8983 = vld [vmem:[%s8964 + $0x90] sm:$0xff]
    %v8984 = vld [vmem:[%s8964 + $0x98] sm:$0xff]
    %v8985 = vld [vmem:[%s8964 + $0xa0] sm:$0xff]
    %v8986 = vld [vmem:[%s8964 + $0xa8] sm:$0xff]
    %v8987 = vld [vmem:[%s8964 + $0xb0] sm:$0xff]
    %v8988 = vld [vmem:[%s8964 + $0xb8] sm:$0xff]
    %v8989 = vld [vmem:[%s8964 + $0xc0] sm:$0xff]
    %v8990 = vld [vmem:[%s8964 + $0xc8] sm:$0xff]
    %v8991 = vld [vmem:[%s8964 + $0xd0] sm:$0xff]
    %v8992 = vld [vmem:[%s8964 + $0xd8] sm:$0xff]
    %v8993 = vld [vmem:[%s8964 + $0xe0] sm:$0xff]
    %v8994 = vld [vmem:[%s8964 + $0xe8] sm:$0xff]
    %v8995 = vld [vmem:[%s8964 + $0xf0] sm:$0xff]
    %v8996 = vld [vmem:[%s8964 + $0xf8] sm:$0xff]
    %v8997 = vld [vmem:[%s8964 + $0x100] sm:$0xff]
    %v8998 = vld [vmem:[%s8964 + $0x108] sm:$0xff]
    %v8999 = vld [vmem:[%s8964 + $0x110] sm:$0xff]
    %v9000 = vld [vmem:[%s8964 + $0x118] sm:$0xff]
    %v9001 = vld [vmem:[%s8964 + $0x120] sm:$0xff]
    %v9002 = vld [vmem:[%s8964 + $0x128] sm:$0xff]
    %v9003 = vld [vmem:[%s8964 + $0x130] sm:$0xff]
    %v9004 = vld [vmem:[%s8964 + $0x138] sm:$0xff]
    %v9005 = vld [vmem:[%s8964 + $0x140] sm:$0xff]
    %v9006 = vld [vmem:[%s8964 + $0x148] sm:$0xff]
    %v9007 = vld [vmem:[%s8964 + $0x150] sm:$0xff]
    %v9008 = vld [vmem:[%s8964 + $0x158] sm:$0xff]
    %v9009 = vld [vmem:[%s8964 + $0x160] sm:$0xff]
    %v9010 = vld [vmem:[%s8964 + $0x168] sm:$0xff]
    %v9011 = vld [vmem:[%s8964 + $0x170] sm:$0xff]
    %v9012 = vld [vmem:[%s8964 + $0x178] sm:$0xff]
    %v9013 = vld [vmem:[%s8964 + $0x180] sm:$0xff]
    %v9014 = vld [vmem:[%s8964 + $0x188] sm:$0xff]
    %v9015 = vld [vmem:[%s8964 + $0x190] sm:$0xff]
    %v9016 = vld [vmem:[%s8964 + $0x198] sm:$0xff]
    %v9017 = vld [vmem:[%s8964 + $0x1a0] sm:$0xff]
    %v9018 = vld [vmem:[%s8964 + $0x1a8] sm:$0xff]
    %v9019 = vld [vmem:[%s8964 + $0x1b0] sm:$0xff]
    %v9020 = vld [vmem:[%s8964 + $0x1b8] sm:$0xff]
    %v9021 = vld [vmem:[%s8964 + $0x1c0] sm:$0xff]
    %v9022 = vld [vmem:[%s8964 + $0x1c8] sm:$0xff]
    %v9023 = vld [vmem:[%s8964 + $0x1d0] sm:$0xff]
    %v9024 = vld [vmem:[%s8964 + $0x1d8] sm:$0xff]
    %v9025 = vld [vmem:[%s8964 + $0x1e0] sm:$0xff]
    %v9026 = vld [vmem:[%s8964 + $0x1e8] sm:$0xff]
    %v9027 = vld [vmem:[%s8964 + $0x1f0] sm:$0xff]
    %v9028 = vld [vmem:[%s8964 + $0x1f8] sm:$0xff]
    %v9029 = vrot.slane %v6156, 5
    %v9030 = vrot.slane %v6157, 4
    %v9031 = vsel %vm1647, %v9030, %v9029
    %v9032 = vrot.slane %v6158, 3
    %v9033 = vsel %vm1650, %v9032, %v9031
    %v9034 = vrot.slane %v6159, 2
    %v9035 = vsel %vm1653, %v9034, %v9033
    %v9036 = vrot.slane %v6160, 1
    %v9037 = vsel %vm1656, %v9036, %v9035
    %v9038 = vsel %vm1659, %v6161, %v9037
    %v9039 = vrot.slane %v6162, 7
    %v9040 = vsel %vm1662, %v9039, %v9038
    %v9041 = vrot.slane %v6163, 6
    %v9042 = vsel %vm1665, %v9041, %v9040
    %v9043 = vpack.c.b16 %v9042, %v9042
    %v9109 = vunpack.c.l.b16 %v8965
    %v9110 = vunpack.c.h.b16 %v8965
    %v9111 = vunpack.c.l.b16 %v8966
    %v9112 = vunpack.c.h.b16 %v8966
    %v9113 = vunpack.c.l.b16 %v8967
    %v9114 = vunpack.c.h.b16 %v8967
    %v9115 = vunpack.c.l.b16 %v8968
    %v9116 = vunpack.c.h.b16 %v8968
    %v9117 = vunpack.c.l.b16 %v8969
    %v9118 = vunpack.c.h.b16 %v8969
    %v9119 = vunpack.c.l.b16 %v8970
    %v9120 = vunpack.c.h.b16 %v8970
    %v9121 = vunpack.c.l.b16 %v8971
    %v9122 = vunpack.c.h.b16 %v8971
    %v9123 = vunpack.c.l.b16 %v8972
    %v9124 = vunpack.c.h.b16 %v8972
    %v9125 = vunpack.c.l.b16 %v8973
    %v9126 = vunpack.c.h.b16 %v8973
    %v9127 = vunpack.c.l.b16 %v8974
    %v9128 = vunpack.c.h.b16 %v8974
    %v9129 = vunpack.c.l.b16 %v8975
    %v9130 = vunpack.c.h.b16 %v8975
    %v9131 = vunpack.c.l.b16 %v8976
    %v9132 = vunpack.c.h.b16 %v8976
    %v9133 = vunpack.c.l.b16 %v8977
    %v9134 = vunpack.c.h.b16 %v8977
    %v9135 = vunpack.c.l.b16 %v8978
    %v9136 = vunpack.c.h.b16 %v8978
    %v9137 = vunpack.c.l.b16 %v8979
    %v9138 = vunpack.c.h.b16 %v8979
    %v9139 = vunpack.c.l.b16 %v8980
    %v9140 = vunpack.c.h.b16 %v8980
    %v9141 = vunpack.c.l.b16 %v8981
    %v9142 = vunpack.c.h.b16 %v8981
    %v9143 = vunpack.c.l.b16 %v8982
    %v9144 = vunpack.c.h.b16 %v8982
    %v9145 = vunpack.c.l.b16 %v8983
    %v9146 = vunpack.c.h.b16 %v8983
    %v9147 = vunpack.c.l.b16 %v8984
    %v9148 = vunpack.c.h.b16 %v8984
    %v9149 = vunpack.c.l.b16 %v8985
    %v9150 = vunpack.c.h.b16 %v8985
    %v9151 = vunpack.c.l.b16 %v8986
    %v9152 = vunpack.c.h.b16 %v8986
    %v9153 = vunpack.c.l.b16 %v8987
    %v9154 = vunpack.c.h.b16 %v8987
    %v9155 = vunpack.c.l.b16 %v8988
    %v9156 = vunpack.c.h.b16 %v8988
    %v9157 = vunpack.c.l.b16 %v8989
    %v9158 = vunpack.c.h.b16 %v8989
    %v9159 = vunpack.c.l.b16 %v8990
    %v9160 = vunpack.c.h.b16 %v8990
    %v9161 = vunpack.c.l.b16 %v8991
    %v9162 = vunpack.c.h.b16 %v8991
    %v9163 = vunpack.c.l.b16 %v8992
    %v9164 = vunpack.c.h.b16 %v8992
    %v9165 = vunpack.c.l.b16 %v8993
    %v9166 = vunpack.c.h.b16 %v8993
    %v9167 = vunpack.c.l.b16 %v8994
    %v9168 = vunpack.c.h.b16 %v8994
    %v9169 = vunpack.c.l.b16 %v8995
    %v9170 = vunpack.c.h.b16 %v8995
    %v9171 = vunpack.c.l.b16 %v8996
    %v9172 = vunpack.c.h.b16 %v8996
    %v9173 = vunpack.c.l.b16 %v8997
    %v9174 = vunpack.c.h.b16 %v8997
    %v9175 = vunpack.c.l.b16 %v8998
    %v9176 = vunpack.c.h.b16 %v8998
    %v9177 = vunpack.c.l.b16 %v8999
    %v9178 = vunpack.c.h.b16 %v8999
    %v9179 = vunpack.c.l.b16 %v9000
    %v9180 = vunpack.c.h.b16 %v9000
    %v9181 = vunpack.c.l.b16 %v9001
    %v9182 = vunpack.c.h.b16 %v9001
    %v9183 = vunpack.c.l.b16 %v9002
    %v9184 = vunpack.c.h.b16 %v9002
    %v9185 = vunpack.c.l.b16 %v9003
    %v9186 = vunpack.c.h.b16 %v9003
    %v9187 = vunpack.c.l.b16 %v9004
    %v9188 = vunpack.c.h.b16 %v9004
    %v9189 = vunpack.c.l.b16 %v9005
    %v9190 = vunpack.c.h.b16 %v9005
    %v9191 = vunpack.c.l.b16 %v9006
    %v9192 = vunpack.c.h.b16 %v9006
    %v9193 = vunpack.c.l.b16 %v9007
    %v9194 = vunpack.c.h.b16 %v9007
    %v9195 = vunpack.c.l.b16 %v9008
    %v9196 = vunpack.c.h.b16 %v9008
    %v9197 = vunpack.c.l.b16 %v9009
    %v9198 = vunpack.c.h.b16 %v9009
    %v9199 = vunpack.c.l.b16 %v9010
    %v9200 = vunpack.c.h.b16 %v9010
    %v9201 = vunpack.c.l.b16 %v9011
    %v9202 = vunpack.c.h.b16 %v9011
    %v9203 = vunpack.c.l.b16 %v9012
    %v9204 = vunpack.c.h.b16 %v9012
    %v9205 = vunpack.c.l.b16 %v9013
    %v9206 = vunpack.c.h.b16 %v9013
    %v9207 = vunpack.c.l.b16 %v9014
    %v9208 = vunpack.c.h.b16 %v9014
    %v9209 = vunpack.c.l.b16 %v9015
    %v9210 = vunpack.c.h.b16 %v9015
    %v9211 = vunpack.c.l.b16 %v9016
    %v9212 = vunpack.c.h.b16 %v9016
    %v9213 = vunpack.c.l.b16 %v9017
    %v9214 = vunpack.c.h.b16 %v9017
    %v9215 = vunpack.c.l.b16 %v9018
    %v9216 = vunpack.c.h.b16 %v9018
    %v9217 = vunpack.c.l.b16 %v9019
    %v9218 = vunpack.c.h.b16 %v9019
    %v9219 = vunpack.c.l.b16 %v9020
    %v9220 = vunpack.c.h.b16 %v9020
    %v9221 = vunpack.c.l.b16 %v9021
    %v9222 = vunpack.c.h.b16 %v9021
    %v9223 = vunpack.c.l.b16 %v9022
    %v9224 = vunpack.c.h.b16 %v9022
    %v9225 = vunpack.c.l.b16 %v9023
    %v9226 = vunpack.c.h.b16 %v9023
    %v9227 = vunpack.c.l.b16 %v9024
    %v9228 = vunpack.c.h.b16 %v9024
    %v9229 = vunpack.c.l.b16 %v9025
    %v9230 = vunpack.c.h.b16 %v9025
    %v9231 = vunpack.c.l.b16 %v9026
    %v9232 = vunpack.c.h.b16 %v9026
    %v9233 = vunpack.c.l.b16 %v9027
    %v9234 = vunpack.c.h.b16 %v9027
    %v9235 = vunpack.c.l.b16 %v9028
    %v9236 = vunpack.c.h.b16 %v9028
    %v9237 = vpack.c.b16 %v9117, %v9109
    %v9238 = vpack.c.b16 %v9118, %v9110
    %v9239 = vpack.c.b16 %v9119, %v9111
    %v9240 = vpack.c.b16 %v9120, %v9112
    %v9241 = vpack.c.b16 %v9121, %v9113
    %v9242 = vpack.c.b16 %v9122, %v9114
    %v9243 = vpack.c.b16 %v9123, %v9115
    %v9244 = vpack.c.b16 %v9124, %v9116
    %v9245 = vpack.c.b16 %v9133, %v9125
    %v9246 = vpack.c.b16 %v9134, %v9126
    %v9247 = vpack.c.b16 %v9135, %v9127
    %v9248 = vpack.c.b16 %v9136, %v9128
    %v9249 = vpack.c.b16 %v9137, %v9129
    %v9250 = vpack.c.b16 %v9138, %v9130
    %v9251 = vpack.c.b16 %v9139, %v9131
    %v9252 = vpack.c.b16 %v9140, %v9132
    %v9253 = vpack.c.b16 %v9149, %v9141
    %v9254 = vpack.c.b16 %v9150, %v9142
    %v9255 = vpack.c.b16 %v9151, %v9143
    %v9256 = vpack.c.b16 %v9152, %v9144
    %v9257 = vpack.c.b16 %v9153, %v9145
    %v9258 = vpack.c.b16 %v9154, %v9146
    %v9259 = vpack.c.b16 %v9155, %v9147
    %v9260 = vpack.c.b16 %v9156, %v9148
    %v9261 = vpack.c.b16 %v9165, %v9157
    %v9262 = vpack.c.b16 %v9166, %v9158
    %v9263 = vpack.c.b16 %v9167, %v9159
    %v9264 = vpack.c.b16 %v9168, %v9160
    %v9265 = vpack.c.b16 %v9169, %v9161
    %v9266 = vpack.c.b16 %v9170, %v9162
    %v9267 = vpack.c.b16 %v9171, %v9163
    %v9268 = vpack.c.b16 %v9172, %v9164
    %v9269 = vpack.c.b16 %v9181, %v9173
    %v9270 = vpack.c.b16 %v9182, %v9174
    %v9271 = vpack.c.b16 %v9183, %v9175
    %v9272 = vpack.c.b16 %v9184, %v9176
    %v9273 = vpack.c.b16 %v9185, %v9177
    %v9274 = vpack.c.b16 %v9186, %v9178
    %v9275 = vpack.c.b16 %v9187, %v9179
    %v9276 = vpack.c.b16 %v9188, %v9180
    %v9277 = vpack.c.b16 %v9197, %v9189
    %v9278 = vpack.c.b16 %v9198, %v9190
    %v9279 = vpack.c.b16 %v9199, %v9191
    %v9280 = vpack.c.b16 %v9200, %v9192
    %v9281 = vpack.c.b16 %v9201, %v9193
    %v9282 = vpack.c.b16 %v9202, %v9194
    %v9283 = vpack.c.b16 %v9203, %v9195
    %v9284 = vpack.c.b16 %v9204, %v9196
    %v9285 = vpack.c.b16 %v9213, %v9205
    %v9286 = vpack.c.b16 %v9214, %v9206
    %v9287 = vpack.c.b16 %v9215, %v9207
    %v9288 = vpack.c.b16 %v9216, %v9208
    %v9289 = vpack.c.b16 %v9217, %v9209
    %v9290 = vpack.c.b16 %v9218, %v9210
    %v9291 = vpack.c.b16 %v9219, %v9211
    %v9292 = vpack.c.b16 %v9220, %v9212
    %v9293 = vpack.c.b16 %v9229, %v9221
    %v9294 = vpack.c.b16 %v9230, %v9222
    %v9295 = vpack.c.b16 %v9231, %v9223
    %v9296 = vpack.c.b16 %v9232, %v9224
    %v9297 = vpack.c.b16 %v9233, %v9225
    %v9298 = vpack.c.b16 %v9234, %v9226
    %v9299 = vpack.c.b16 %v9235, %v9227
    %v9300 = vpack.c.b16 %v9236, %v9228
    %9365 = vmatprep.subr.bf16.mxu0 %v9238
    %9366 = vmatpush1.bf16.msra.mxu0 %v9237
    %9367 = vmatprep.subr.bf16.mxu0 %v9246
    %9368 = vmatpush1.bf16.msra.mxu0 %v9245
    %9369 = vmatprep.subr.bf16.mxu0 %v9254
    %9370 = vmatpush1.bf16.msra.mxu0 %v9253
    %9371 = vmatprep.subr.bf16.mxu0 %v9262
    %9372 = vmatpush1.bf16.msra.mxu0 %v9261
    %9373 = vmatprep.subr.bf16.mxu0 %v9270
    %9374 = vmatpush1.bf16.msra.mxu0 %v9269
    %9375 = vmatprep.subr.bf16.mxu0 %v9278
    %9376 = vmatpush1.bf16.msra.mxu0 %v9277
    %9377 = vmatprep.subr.bf16.mxu0 %v9286
    %9378 = vmatpush1.bf16.msra.mxu0 %v9285
    %9379 = vmatprep.subr.bf16.mxu0 %v9294
    %9380 = vmatpush1.bf16.msra.mxu0 %v9293
    %9381 = vmatprep.subr.bf16.mxu0 0
    %9382 = vmatpush1.bf16.msra.mxu0 0
    %9383 = vmatprep.subr.bf16.mxu0 0
    %9384 = vmatpush1.bf16.msra.mxu0 0
    %9385 = vmatprep.subr.bf16.mxu0 0
    %9386 = vmatpush1.bf16.msra.mxu0 0
    %9387 = vmatprep.subr.bf16.mxu0 0
    %9388 = vmatpush1.bf16.msra.mxu0 0
    %9389 = vmatprep.subr.bf16.mxu0 0
    %9390 = vmatpush1.bf16.msra.mxu0 0
    %9391 = vmatprep.subr.bf16.mxu0 0
    %9392 = vmatpush1.bf16.msra.mxu0 0
    %9393 = vmatprep.subr.bf16.mxu0 0
    %9394 = vmatpush1.bf16.msra.mxu0 0
    %9395 = vmatprep.subr.bf16.mxu0 0
    %9396 = vmatpush1.bf16.msra.mxu0 0
    %9397 = vmatprep.mubr.bf16.mxu0 0
    %9398 = vmatmul.mubr.bf16.gmra.mrb[0].mxu0 %v9043
    %v9399 = vpop.f32.mrb[0].mxu0
    %v9400 = vadd.f32 0.0, %v9399
    %v9401 = vpop.f32.mrb[0].mxu0
    %v9402 = vadd.f32 0.0, %v9401
    %v9403 = vpop.f32.mrb[0].mxu0
    %v9404 = vpop.f32.mrb[0].mxu0
    %9405 = vdwg.mxu0
    %9406 = vmatprep.subr.bf16.mxu0 %v9240
    %9407 = vmatpush1.bf16.msra.mxu0 %v9239
    %9408 = vmatprep.subr.bf16.mxu0 %v9248
    %9409 = vmatpush1.bf16.msra.mxu0 %v9247
    %9410 = vmatprep.subr.bf16.mxu0 %v9256
    %9411 = vmatpush1.bf16.msra.mxu0 %v9255
    %9412 = vmatprep.subr.bf16.mxu0 %v9264
    %9413 = vmatpush1.bf16.msra.mxu0 %v9263
    %9414 = vmatprep.subr.bf16.mxu0 %v9272
    %9415 = vmatpush1.bf16.msra.mxu0 %v9271
    %9416 = vmatprep.subr.bf16.mxu0 %v9280
    %9417 = vmatpush1.bf16.msra.mxu0 %v9279
    %9418 = vmatprep.subr.bf16.mxu0 %v9288
    %9419 = vmatpush1.bf16.msra.mxu0 %v9287
    %9420 = vmatprep.subr.bf16.mxu0 %v9296
    %9421 = vmatpush1.bf16.msra.mxu0 %v9295
    %9422 = vmatprep.subr.bf16.mxu0 0
    %9423 = vmatpush1.bf16.msra.mxu0 0
    %9424 = vmatprep.subr.bf16.mxu0 0
    %9425 = vmatpush1.bf16.msra.mxu0 0
    %9426 = vmatprep.subr.bf16.mxu0 0
    %9427 = vmatpush1.bf16.msra.mxu0 0
    %9428 = vmatprep.subr.bf16.mxu0 0
    %9429 = vmatpush1.bf16.msra.mxu0 0
    %9430 = vmatprep.subr.bf16.mxu0 0
    %9431 = vmatpush1.bf16.msra.mxu0 0
    %9432 = vmatprep.subr.bf16.mxu0 0
    %9433 = vmatpush1.bf16.msra.mxu0 0
    %9434 = vmatprep.subr.bf16.mxu0 0
    %9435 = vmatpush1.bf16.msra.mxu0 0
    %9436 = vmatprep.subr.bf16.mxu0 0
    %9437 = vmatpush1.bf16.msra.mxu0 0
    %9438 = vmatprep.mubr.bf16.mxu0 0
    %9439 = vmatmul.mubr.bf16.gmra.mrb[0].mxu0 %v9043
    %v9440 = vpop.f32.mrb[0].mxu0
    %v9441 = vadd.f32 0.0, %v9440
    %v9442 = vpop.f32.mrb[0].mxu0
    %v9443 = vadd.f32 0.0, %v9442
    %v9444 = vpop.f32.mrb[0].mxu0
    %v9445 = vpop.f32.mrb[0].mxu0
    %9446 = vdwg.mxu0
    %9447 = vmatprep.subr.bf16.mxu0 %v9242
    %9448 = vmatpush1.bf16.msra.mxu0 %v9241
    %9449 = vmatprep.subr.bf16.mxu0 %v9250
    %9450 = vmatpush1.bf16.msra.mxu0 %v9249
    %9451 = vmatprep.subr.bf16.mxu0 %v9258
    %9452 = vmatpush1.bf16.msra.mxu0 %v9257
    %9453 = vmatprep.subr.bf16.mxu0 %v9266
    %9454 = vmatpush1.bf16.msra.mxu0 %v9265
    %9455 = vmatprep.subr.bf16.mxu0 %v9274
    %9456 = vmatpush1.bf16.msra.mxu0 %v9273
    %9457 = vmatprep.subr.bf16.mxu0 %v9282
    %9458 = vmatpush1.bf16.msra.mxu0 %v9281
    %9459 = vmatprep.subr.bf16.mxu0 %v9290
    %9460 = vmatpush1.bf16.msra.mxu0 %v9289
    %9461 = vmatprep.subr.bf16.mxu0 %v9298
    %9462 = vmatpush1.bf16.msra.mxu0 %v9297
    %9463 = vmatprep.subr.bf16.mxu0 0
    %9464 = vmatpush1.bf16.msra.mxu0 0
    %9465 = vmatprep.subr.bf16.mxu0 0
    %9466 = vmatpush1.bf16.msra.mxu0 0
    %9467 = vmatprep.subr.bf16.mxu0 0
    %9468 = vmatpush1.bf16.msra.mxu0 0
    %9469 = vmatprep.subr.bf16.mxu0 0
    %9470 = vmatpush1.bf16.msra.mxu0 0
    %9471 = vmatprep.subr.bf16.mxu0 0
    %9472 = vmatpush1.bf16.msra.mxu0 0
    %9473 = vmatprep.subr.bf16.mxu0 0
    %9474 = vmatpush1.bf16.msra.mxu0 0
    %9475 = vmatprep.subr.bf16.mxu0 0
    %9476 = vmatpush1.bf16.msra.mxu0 0
    %9477 = vmatprep.subr.bf16.mxu0 0
    %9478 = vmatpush1.bf16.msra.mxu0 0
    %9479 = vmatprep.mubr.bf16.mxu0 0
    %9480 = vmatmul.mubr.bf16.gmra.mrb[0].mxu0 %v9043
    %v9481 = vpop.f32.mrb[0].mxu0
    %v9482 = vadd.f32 0.0, %v9481
    %v9483 = vpop.f32.mrb[0].mxu0
    %v9484 = vadd.f32 0.0, %v9483
    %v9485 = vpop.f32.mrb[0].mxu0
    %v9486 = vpop.f32.mrb[0].mxu0
    %9487 = vdwg.mxu0
    %9488 = vmatprep.subr.bf16.mxu0 %v9244
    %9489 = vmatpush1.bf16.msra.mxu0 %v9243
    %9490 = vmatprep.subr.bf16.mxu0 %v9252
    %9491 = vmatpush1.bf16.msra.mxu0 %v9251
    %9492 = vmatprep.subr.bf16.mxu0 %v9260
    %9493 = vmatpush1.bf16.msra.mxu0 %v9259
    %9494 = vmatprep.subr.bf16.mxu0 %v9268
    %9495 = vmatpush1.bf16.msra.mxu0 %v9267
    %9496 = vmatprep.subr.bf16.mxu0 %v9276
    %9497 = vmatpush1.bf16.msra.mxu0 %v9275
    %9498 = vmatprep.subr.bf16.mxu0 %v9284
    %9499 = vmatpush1.bf16.msra.mxu0 %v9283
    %9500 = vmatprep.subr.bf16.mxu0 %v9292
    %9501 = vmatpush1.bf16.msra.mxu0 %v9291
    %9502 = vmatprep.subr.bf16.mxu0 %v9300
    %9503 = vmatpush1.bf16.msra.mxu0 %v9299
    %9504 = vmatprep.subr.bf16.mxu0 0
    %9505 = vmatpush1.bf16.msra.mxu0 0
    %9506 = vmatprep.subr.bf16.mxu0 0
    %9507 = vmatpush1.bf16.msra.mxu0 0
    %9508 = vmatprep.subr.bf16.mxu0 0
    %9509 = vmatpush1.bf16.msra.mxu0 0
    %9510 = vmatprep.subr.bf16.mxu0 0
    %9511 = vmatpush1.bf16.msra.mxu0 0
    %9512 = vmatprep.subr.bf16.mxu0 0
    %9513 = vmatpush1.bf16.msra.mxu0 0
    %9514 = vmatprep.subr.bf16.mxu0 0
    %9515 = vmatpush1.bf16.msra.mxu0 0
    %9516 = vmatprep.subr.bf16.mxu0 0
    %9517 = vmatpush1.bf16.msra.mxu0 0
    %9518 = vmatprep.subr.bf16.mxu0 0
    %9519 = vmatpush1.bf16.msra.mxu0 0
    %9520 = vmatprep.mubr.bf16.mxu0 0
    %9521 = vmatmul.mubr.bf16.gmra.mrb[0].mxu0 %v9043
    %v9522 = vpop.f32.mrb[0].mxu0
    %v9523 = vadd.f32 0.0, %v9522
    %v9524 = vpop.f32.mrb[0].mxu0
    %v9525 = vadd.f32 0.0, %v9524
    %v9526 = vpop.f32.mrb[0].mxu0
    %v9527 = vpop.f32.mrb[0].mxu0
    %9528 = vdwg.mxu0
    %v9529 = vadd.f32 %v8956, %v9400
    %v9530 = vadd.f32 %v8957, %v9402
    %v9531 = vadd.f32 %v8958, %v9441
    %v9532 = vadd.f32 %v8959, %v9443
    %v9533 = vadd.f32 %v8960, %v9482
    %v9534 = vadd.f32 %v8961, %v9484
    %v9535 = vadd.f32 %v8962, %v9523
    %v9536 = vadd.f32 %v8963, %v9525
    %s9537 = scalar_lea.vmem [#allocation10], 7168
    %v9538 = vld [vmem:[%s9537] sm:$0xff]
    %v9539 = vld [vmem:[%s9537 + $0x8] sm:$0xff]
    %v9540 = vld [vmem:[%s9537 + $0x10] sm:$0xff]
    %v9541 = vld [vmem:[%s9537 + $0x18] sm:$0xff]
    %v9542 = vld [vmem:[%s9537 + $0x20] sm:$0xff]
    %v9543 = vld [vmem:[%s9537 + $0x28] sm:$0xff]
    %v9544 = vld [vmem:[%s9537 + $0x30] sm:$0xff]
    %v9545 = vld [vmem:[%s9537 + $0x38] sm:$0xff]
    %v9546 = vld [vmem:[%s9537 + $0x40] sm:$0xff]
    %v9547 = vld [vmem:[%s9537 + $0x48] sm:$0xff]
    %v9548 = vld [vmem:[%s9537 + $0x50] sm:$0xff]
    %v9549 = vld [vmem:[%s9537 + $0x58] sm:$0xff]
    %v9550 = vld [vmem:[%s9537 + $0x60] sm:$0xff]
    %v9551 = vld [vmem:[%s9537 + $0x68] sm:$0xff]
    %v9552 = vld [vmem:[%s9537 + $0x70] sm:$0xff]
    %v9553 = vld [vmem:[%s9537 + $0x78] sm:$0xff]
    %v9554 = vld [vmem:[%s9537 + $0x80] sm:$0xff]
    %v9555 = vld [vmem:[%s9537 + $0x88] sm:$0xff]
    %v9556 = vld [vmem:[%s9537 + $0x90] sm:$0xff]
    %v9557 = vld [vmem:[%s9537 + $0x98] sm:$0xff]
    %v9558 = vld [vmem:[%s9537 + $0xa0] sm:$0xff]
    %v9559 = vld [vmem:[%s9537 + $0xa8] sm:$0xff]
    %v9560 = vld [vmem:[%s9537 + $0xb0] sm:$0xff]
    %v9561 = vld [vmem:[%s9537 + $0xb8] sm:$0xff]
    %v9562 = vld [vmem:[%s9537 + $0xc0] sm:$0xff]
    %v9563 = vld [vmem:[%s9537 + $0xc8] sm:$0xff]
    %v9564 = vld [vmem:[%s9537 + $0xd0] sm:$0xff]
    %v9565 = vld [vmem:[%s9537 + $0xd8] sm:$0xff]
    %v9566 = vld [vmem:[%s9537 + $0xe0] sm:$0xff]
    %v9567 = vld [vmem:[%s9537 + $0xe8] sm:$0xff]
    %v9568 = vld [vmem:[%s9537 + $0xf0] sm:$0xff]
    %v9569 = vld [vmem:[%s9537 + $0xf8] sm:$0xff]
    %v9570 = vld [vmem:[%s9537 + $0x100] sm:$0xff]
    %v9571 = vld [vmem:[%s9537 + $0x108] sm:$0xff]
    %v9572 = vld [vmem:[%s9537 + $0x110] sm:$0xff]
    %v9573 = vld [vmem:[%s9537 + $0x118] sm:$0xff]
    %v9574 = vld [vmem:[%s9537 + $0x120] sm:$0xff]
    %v9575 = vld [vmem:[%s9537 + $0x128] sm:$0xff]
    %v9576 = vld [vmem:[%s9537 + $0x130] sm:$0xff]
    %v9577 = vld [vmem:[%s9537 + $0x138] sm:$0xff]
    %v9578 = vld [vmem:[%s9537 + $0x140] sm:$0xff]
    %v9579 = vld [vmem:[%s9537 + $0x148] sm:$0xff]
    %v9580 = vld [vmem:[%s9537 + $0x150] sm:$0xff]
    %v9581 = vld [vmem:[%s9537 + $0x158] sm:$0xff]
    %v9582 = vld [vmem:[%s9537 + $0x160] sm:$0xff]
    %v9583 = vld [vmem:[%s9537 + $0x168] sm:$0xff]
    %v9584 = vld [vmem:[%s9537 + $0x170] sm:$0xff]
    %v9585 = vld [vmem:[%s9537 + $0x178] sm:$0xff]
    %v9586 = vld [vmem:[%s9537 + $0x180] sm:$0xff]
    %v9587 = vld [vmem:[%s9537 + $0x188] sm:$0xff]
    %v9588 = vld [vmem:[%s9537 + $0x190] sm:$0xff]
    %v9589 = vld [vmem:[%s9537 + $0x198] sm:$0xff]
    %v9590 = vld [vmem:[%s9537 + $0x1a0] sm:$0xff]
    %v9591 = vld [vmem:[%s9537 + $0x1a8] sm:$0xff]
    %v9592 = vld [vmem:[%s9537 + $0x1b0] sm:$0xff]
    %v9593 = vld [vmem:[%s9537 + $0x1b8] sm:$0xff]
    %v9594 = vld [vmem:[%s9537 + $0x1c0] sm:$0xff]
    %v9595 = vld [vmem:[%s9537 + $0x1c8] sm:$0xff]
    %v9596 = vld [vmem:[%s9537 + $0x1d0] sm:$0xff]
    %v9597 = vld [vmem:[%s9537 + $0x1d8] sm:$0xff]
    %v9598 = vld [vmem:[%s9537 + $0x1e0] sm:$0xff]
    %v9599 = vld [vmem:[%s9537 + $0x1e8] sm:$0xff]
    %v9600 = vld [vmem:[%s9537 + $0x1f0] sm:$0xff]
    %v9601 = vld [vmem:[%s9537 + $0x1f8] sm:$0xff]
    %v9602 = vrot.slane %v6156, 6
    %v9603 = vrot.slane %v6157, 5
    %v9604 = vsel %vm1647, %v9603, %v9602
    %v9605 = vrot.slane %v6158, 4
    %v9606 = vsel %vm1650, %v9605, %v9604
    %v9607 = vrot.slane %v6159, 3
    %v9608 = vsel %vm1653, %v9607, %v9606
    %v9609 = vrot.slane %v6160, 2
    %v9610 = vsel %vm1656, %v9609, %v9608
    %v9611 = vrot.slane %v6161, 1
    %v9612 = vsel %vm1659, %v9611, %v9610
    %v9613 = vsel %vm1662, %v6162, %v9612
    %v9614 = vrot.slane %v6163, 7
    %v9615 = vsel %vm1665, %v9614, %v9613
    %v9616 = vpack.c.b16 %v9615, %v9615
    %v9682 = vunpack.c.l.b16 %v9538
    %v9683 = vunpack.c.h.b16 %v9538
    %v9684 = vunpack.c.l.b16 %v9539
    %v9685 = vunpack.c.h.b16 %v9539
    %v9686 = vunpack.c.l.b16 %v9540
    %v9687 = vunpack.c.h.b16 %v9540
    %v9688 = vunpack.c.l.b16 %v9541
    %v9689 = vunpack.c.h.b16 %v9541
    %v9690 = vunpack.c.l.b16 %v9542
    %v9691 = vunpack.c.h.b16 %v9542
    %v9692 = vunpack.c.l.b16 %v9543
    %v9693 = vunpack.c.h.b16 %v9543
    %v9694 = vunpack.c.l.b16 %v9544
    %v9695 = vunpack.c.h.b16 %v9544
    %v9696 = vunpack.c.l.b16 %v9545
    %v9697 = vunpack.c.h.b16 %v9545
    %v9698 = vunpack.c.l.b16 %v9546
    %v9699 = vunpack.c.h.b16 %v9546
    %v9700 = vunpack.c.l.b16 %v9547
    %v9701 = vunpack.c.h.b16 %v9547
    %v9702 = vunpack.c.l.b16 %v9548
    %v9703 = vunpack.c.h.b16 %v9548
    %v9704 = vunpack.c.l.b16 %v9549
    %v9705 = vunpack.c.h.b16 %v9549
    %v9706 = vunpack.c.l.b16 %v9550
    %v9707 = vunpack.c.h.b16 %v9550
    %v9708 = vunpack.c.l.b16 %v9551
    %v9709 = vunpack.c.h.b16 %v9551
    %v9710 = vunpack.c.l.b16 %v9552
    %v9711 = vunpack.c.h.b16 %v9552
    %v9712 = vunpack.c.l.b16 %v9553
    %v9713 = vunpack.c.h.b16 %v9553
    %v9714 = vunpack.c.l.b16 %v9554
    %v9715 = vunpack.c.h.b16 %v9554
    %v9716 = vunpack.c.l.b16 %v9555
    %v9717 = vunpack.c.h.b16 %v9555
    %v9718 = vunpack.c.l.b16 %v9556
    %v9719 = vunpack.c.h.b16 %v9556
    %v9720 = vunpack.c.l.b16 %v9557
    %v9721 = vunpack.c.h.b16 %v9557
    %v9722 = vunpack.c.l.b16 %v9558
    %v9723 = vunpack.c.h.b16 %v9558
    %v9724 = vunpack.c.l.b16 %v9559
    %v9725 = vunpack.c.h.b16 %v9559
    %v9726 = vunpack.c.l.b16 %v9560
    %v9727 = vunpack.c.h.b16 %v9560
    %v9728 = vunpack.c.l.b16 %v9561
    %v9729 = vunpack.c.h.b16 %v9561
    %v9730 = vunpack.c.l.b16 %v9562
    %v9731 = vunpack.c.h.b16 %v9562
    %v9732 = vunpack.c.l.b16 %v9563
    %v9733 = vunpack.c.h.b16 %v9563
    %v9734 = vunpack.c.l.b16 %v9564
    %v9735 = vunpack.c.h.b16 %v9564
    %v9736 = vunpack.c.l.b16 %v9565
    %v9737 = vunpack.c.h.b16 %v9565
    %v9738 = vunpack.c.l.b16 %v9566
    %v9739 = vunpack.c.h.b16 %v9566
    %v9740 = vunpack.c.l.b16 %v9567
    %v9741 = vunpack.c.h.b16 %v9567
    %v9742 = vunpack.c.l.b16 %v9568
    %v9743 = vunpack.c.h.b16 %v9568
    %v9744 = vunpack.c.l.b16 %v9569
    %v9745 = vunpack.c.h.b16 %v9569
    %v9746 = vunpack.c.l.b16 %v9570
    %v9747 = vunpack.c.h.b16 %v9570
    %v9748 = vunpack.c.l.b16 %v9571
    %v9749 = vunpack.c.h.b16 %v9571
    %v9750 = vunpack.c.l.b16 %v9572
    %v9751 = vunpack.c.h.b16 %v9572
    %v9752 = vunpack.c.l.b16 %v9573
    %v9753 = vunpack.c.h.b16 %v9573
    %v9754 = vunpack.c.l.b16 %v9574
    %v9755 = vunpack.c.h.b16 %v9574
    %v9756 = vunpack.c.l.b16 %v9575
    %v9757 = vunpack.c.h.b16 %v9575
    %v9758 = vunpack.c.l.b16 %v9576
    %v9759 = vunpack.c.h.b16 %v9576
    %v9760 = vunpack.c.l.b16 %v9577
    %v9761 = vunpack.c.h.b16 %v9577
    %v9762 = vunpack.c.l.b16 %v9578
    %v9763 = vunpack.c.h.b16 %v9578
    %v9764 = vunpack.c.l.b16 %v9579
    %v9765 = vunpack.c.h.b16 %v9579
    %v9766 = vunpack.c.l.b16 %v9580
    %v9767 = vunpack.c.h.b16 %v9580
    %v9768 = vunpack.c.l.b16 %v9581
    %v9769 = vunpack.c.h.b16 %v9581
    %v9770 = vunpack.c.l.b16 %v9582
    %v9771 = vunpack.c.h.b16 %v9582
    %v9772 = vunpack.c.l.b16 %v9583
    %v9773 = vunpack.c.h.b16 %v9583
    %v9774 = vunpack.c.l.b16 %v9584
    %v9775 = vunpack.c.h.b16 %v9584
    %v9776 = vunpack.c.l.b16 %v9585
    %v9777 = vunpack.c.h.b16 %v9585
    %v9778 = vunpack.c.l.b16 %v9586
    %v9779 = vunpack.c.h.b16 %v9586
    %v9780 = vunpack.c.l.b16 %v9587
    %v9781 = vunpack.c.h.b16 %v9587
    %v9782 = vunpack.c.l.b16 %v9588
    %v9783 = vunpack.c.h.b16 %v9588
    %v9784 = vunpack.c.l.b16 %v9589
    %v9785 = vunpack.c.h.b16 %v9589
    %v9786 = vunpack.c.l.b16 %v9590
    %v9787 = vunpack.c.h.b16 %v9590
    %v9788 = vunpack.c.l.b16 %v9591
    %v9789 = vunpack.c.h.b16 %v9591
    %v9790 = vunpack.c.l.b16 %v9592
    %v9791 = vunpack.c.h.b16 %v9592
    %v9792 = vunpack.c.l.b16 %v9593
    %v9793 = vunpack.c.h.b16 %v9593
    %v9794 = vunpack.c.l.b16 %v9594
    %v9795 = vunpack.c.h.b16 %v9594
    %v9796 = vunpack.c.l.b16 %v9595
    %v9797 = vunpack.c.h.b16 %v9595
    %v9798 = vunpack.c.l.b16 %v9596
    %v9799 = vunpack.c.h.b16 %v9596
    %v9800 = vunpack.c.l.b16 %v9597
    %v9801 = vunpack.c.h.b16 %v9597
    %v9802 = vunpack.c.l.b16 %v9598
    %v9803 = vunpack.c.h.b16 %v9598
    %v9804 = vunpack.c.l.b16 %v9599
    %v9805 = vunpack.c.h.b16 %v9599
    %v9806 = vunpack.c.l.b16 %v9600
    %v9807 = vunpack.c.h.b16 %v9600
    %v9808 = vunpack.c.l.b16 %v9601
    %v9809 = vunpack.c.h.b16 %v9601
    %v9810 = vpack.c.b16 %v9690, %v9682
    %v9811 = vpack.c.b16 %v9691, %v9683
    %v9812 = vpack.c.b16 %v9692, %v9684
    %v9813 = vpack.c.b16 %v9693, %v9685
    %v9814 = vpack.c.b16 %v9694, %v9686
    %v9815 = vpack.c.b16 %v9695, %v9687
    %v9816 = vpack.c.b16 %v9696, %v9688
    %v9817 = vpack.c.b16 %v9697, %v9689
    %v9818 = vpack.c.b16 %v9706, %v9698
    %v9819 = vpack.c.b16 %v9707, %v9699
    %v9820 = vpack.c.b16 %v9708, %v9700
    %v9821 = vpack.c.b16 %v9709, %v9701
    %v9822 = vpack.c.b16 %v9710, %v9702
    %v9823 = vpack.c.b16 %v9711, %v9703
    %v9824 = vpack.c.b16 %v9712, %v9704
    %v9825 = vpack.c.b16 %v9713, %v9705
    %v9826 = vpack.c.b16 %v9722, %v9714
    %v9827 = vpack.c.b16 %v9723, %v9715
    %v9828 = vpack.c.b16 %v9724, %v9716
    %v9829 = vpack.c.b16 %v9725, %v9717
    %v9830 = vpack.c.b16 %v9726, %v9718
    %v9831 = vpack.c.b16 %v9727, %v9719
    %v9832 = vpack.c.b16 %v9728, %v9720
    %v9833 = vpack.c.b16 %v9729, %v9721
    %v9834 = vpack.c.b16 %v9738, %v9730
    %v9835 = vpack.c.b16 %v9739, %v9731
    %v9836 = vpack.c.b16 %v9740, %v9732
    %v9837 = vpack.c.b16 %v9741, %v9733
    %v9838 = vpack.c.b16 %v9742, %v9734
    %v9839 = vpack.c.b16 %v9743, %v9735
    %v9840 = vpack.c.b16 %v9744, %v9736
    %v9841 = vpack.c.b16 %v9745, %v9737
    %v9842 = vpack.c.b16 %v9754, %v9746
    %v9843 = vpack.c.b16 %v9755, %v9747
    %v9844 = vpack.c.b16 %v9756, %v9748
    %v9845 = vpack.c.b16 %v9757, %v9749
    %v9846 = vpack.c.b16 %v9758, %v9750
    %v9847 = vpack.c.b16 %v9759, %v9751
    %v9848 = vpack.c.b16 %v9760, %v9752
    %v9849 = vpack.c.b16 %v9761, %v9753
    %v9850 = vpack.c.b16 %v9770, %v9762
    %v9851 = vpack.c.b16 %v9771, %v9763
    %v9852 = vpack.c.b16 %v9772, %v9764
    %v9853 = vpack.c.b16 %v9773, %v9765
    %v9854 = vpack.c.b16 %v9774, %v9766
    %v9855 = vpack.c.b16 %v9775, %v9767
    %v9856 = vpack.c.b16 %v9776, %v9768
    %v9857 = vpack.c.b16 %v9777, %v9769
    %v9858 = vpack.c.b16 %v9786, %v9778
    %v9859 = vpack.c.b16 %v9787, %v9779
    %v9860 = vpack.c.b16 %v9788, %v9780
    %v9861 = vpack.c.b16 %v9789, %v9781
    %v9862 = vpack.c.b16 %v9790, %v9782
    %v9863 = vpack.c.b16 %v9791, %v9783
    %v9864 = vpack.c.b16 %v9792, %v9784
    %v9865 = vpack.c.b16 %v9793, %v9785
    %v9866 = vpack.c.b16 %v9802, %v9794
    %v9867 = vpack.c.b16 %v9803, %v9795
    %v9868 = vpack.c.b16 %v9804, %v9796
    %v9869 = vpack.c.b16 %v9805, %v9797
    %v9870 = vpack.c.b16 %v9806, %v9798
    %v9871 = vpack.c.b16 %v9807, %v9799
    %v9872 = vpack.c.b16 %v9808, %v9800
    %v9873 = vpack.c.b16 %v9809, %v9801
    %9938 = vmatprep.subr.bf16.mxu0 %v9811
    %9939 = vmatpush1.bf16.msra.mxu0 %v9810
    %9940 = vmatprep.subr.bf16.mxu0 %v9819
    %9941 = vmatpush1.bf16.msra.mxu0 %v9818
    %9942 = vmatprep.subr.bf16.mxu0 %v9827
    %9943 = vmatpush1.bf16.msra.mxu0 %v9826
    %9944 = vmatprep.subr.bf16.mxu0 %v9835
    %9945 = vmatpush1.bf16.msra.mxu0 %v9834
    %9946 = vmatprep.subr.bf16.mxu0 %v9843
    %9947 = vmatpush1.bf16.msra.mxu0 %v9842
    %9948 = vmatprep.subr.bf16.mxu0 %v9851
    %9949 = vmatpush1.bf16.msra.mxu0 %v9850
    %9950 = vmatprep.subr.bf16.mxu0 %v9859
    %9951 = vmatpush1.bf16.msra.mxu0 %v9858
    %9952 = vmatprep.subr.bf16.mxu0 %v9867
    %9953 = vmatpush1.bf16.msra.mxu0 %v9866
    %9954 = vmatprep.subr.bf16.mxu0 0
    %9955 = vmatpush1.bf16.msra.mxu0 0
    %9956 = vmatprep.subr.bf16.mxu0 0
    %9957 = vmatpush1.bf16.msra.mxu0 0
    %9958 = vmatprep.subr.bf16.mxu0 0
    %9959 = vmatpush1.bf16.msra.mxu0 0
    %9960 = vmatprep.subr.bf16.mxu0 0
    %9961 = vmatpush1.bf16.msra.mxu0 0
    %9962 = vmatprep.subr.bf16.mxu0 0
    %9963 = vmatpush1.bf16.msra.mxu0 0
    %9964 = vmatprep.subr.bf16.mxu0 0
    %9965 = vmatpush1.bf16.msra.mxu0 0
    %9966 = vmatprep.subr.bf16.mxu0 0
    %9967 = vmatpush1.bf16.msra.mxu0 0
    %9968 = vmatprep.subr.bf16.mxu0 0
    %9969 = vmatpush1.bf16.msra.mxu0 0
    %9970 = vmatprep.mubr.bf16.mxu0 0
    %9971 = vmatmul.mubr.bf16.gmra.mrb[0].mxu0 %v9616
    %v9972 = vpop.f32.mrb[0].mxu0
    %v9973 = vadd.f32 0.0, %v9972
    %v9974 = vpop.f32.mrb[0].mxu0
    %v9975 = vadd.f32 0.0, %v9974
    %v9976 = vpop.f32.mrb[0].mxu0
    %v9977 = vpop.f32.mrb[0].mxu0
    %9978 = vdwg.mxu0
    %9979 = vmatprep.subr.bf16.mxu0 %v9813
    %9980 = vmatpush1.bf16.msra.mxu0 %v9812
    %9981 = vmatprep.subr.bf16.mxu0 %v9821
    %9982 = vmatpush1.bf16.msra.mxu0 %v9820
    %9983 = vmatprep.subr.bf16.mxu0 %v9829
    %9984 = vmatpush1.bf16.msra.mxu0 %v9828
    %9985 = vmatprep.subr.bf16.mxu0 %v9837
    %9986 = vmatpush1.bf16.msra.mxu0 %v9836
    %9987 = vmatprep.subr.bf16.mxu0 %v9845
    %9988 = vmatpush1.bf16.msra.mxu0 %v9844
    %9989 = vmatprep.subr.bf16.mxu0 %v9853
    %9990 = vmatpush1.bf16.msra.mxu0 %v9852
    %9991 = vmatprep.subr.bf16.mxu0 %v9861
    %9992 = vmatpush1.bf16.msra.mxu0 %v9860
    %9993 = vmatprep.subr.bf16.mxu0 %v9869
    %9994 = vmatpush1.bf16.msra.mxu0 %v9868
    %9995 = vmatprep.subr.bf16.mxu0 0
    %9996 = vmatpush1.bf16.msra.mxu0 0
    %9997 = vmatprep.subr.bf16.mxu0 0
    %9998 = vmatpush1.bf16.msra.mxu0 0
    %9999 = vmatprep.subr.bf16.mxu0 0
    %10000 = vmatpush1.bf16.msra.mxu0 0
    %10001 = vmatprep.subr.bf16.mxu0 0
    %10002 = vmatpush1.bf16.msra.mxu0 0
    %10003 = vmatprep.subr.bf16.mxu0 0
    %10004 = vmatpush1.bf16.msra.mxu0 0
    %10005 = vmatprep.subr.bf16.mxu0 0
    %10006 = vmatpush1.bf16.msra.mxu0 0
    %10007 = vmatprep.subr.bf16.mxu0 0
    %10008 = vmatpush1.bf16.msra.mxu0 0
    %10009 = vmatprep.subr.bf16.mxu0 0
    %10010 = vmatpush1.bf16.msra.mxu0 0
    %10011 = vmatprep.mubr.bf16.mxu0 0
    %10012 = vmatmul.mubr.bf16.gmra.mrb[0].mxu0 %v9616
    %v10013 = vpop.f32.mrb[0].mxu0
    %v10014 = vadd.f32 0.0, %v10013
    %v10015 = vpop.f32.mrb[0].mxu0
    %v10016 = vadd.f32 0.0, %v10015
    %v10017 = vpop.f32.mrb[0].mxu0
    %v10018 = vpop.f32.mrb[0].mxu0
    %10019 = vdwg.mxu0
    %10020 = vmatprep.subr.bf16.mxu0 %v9815
    %10021 = vmatpush1.bf16.msra.mxu0 %v9814
    %10022 = vmatprep.subr.bf16.mxu0 %v9823
    %10023 = vmatpush1.bf16.msra.mxu0 %v9822
    %10024 = vmatprep.subr.bf16.mxu0 %v9831
    %10025 = vmatpush1.bf16.msra.mxu0 %v9830
    %10026 = vmatprep.subr.bf16.mxu0 %v9839
    %10027 = vmatpush1.bf16.msra.mxu0 %v9838
    %10028 = vmatprep.subr.bf16.mxu0 %v9847
    %10029 = vmatpush1.bf16.msra.mxu0 %v9846
    %10030 = vmatprep.subr.bf16.mxu0 %v9855
    %10031 = vmatpush1.bf16.msra.mxu0 %v9854
    %10032 = vmatprep.subr.bf16.mxu0 %v9863
    %10033 = vmatpush1.bf16.msra.mxu0 %v9862
    %10034 = vmatprep.subr.bf16.mxu0 %v9871
    %10035 = vmatpush1.bf16.msra.mxu0 %v9870
    %10036 = vmatprep.subr.bf16.mxu0 0
    %10037 = vmatpush1.bf16.msra.mxu0 0
    %10038 = vmatprep.subr.bf16.mxu0 0
    %10039 = vmatpush1.bf16.msra.mxu0 0
    %10040 = vmatprep.subr.bf16.mxu0 0
    %10041 = vmatpush1.bf16.msra.mxu0 0
    %10042 = vmatprep.subr.bf16.mxu0 0
    %10043 = vmatpush1.bf16.msra.mxu0 0
    %10044 = vmatprep.subr.bf16.mxu0 0
    %10045 = vmatpush1.bf16.msra.mxu0 0
    %10046 = vmatprep.subr.bf16.mxu0 0
    %10047 = vmatpush1.bf16.msra.mxu0 0
    %10048 = vmatprep.subr.bf16.mxu0 0
    %10049 = vmatpush1.bf16.msra.mxu0 0
    %10050 = vmatprep.subr.bf16.mxu0 0
    %10051 = vmatpush1.bf16.msra.mxu0 0
    %10052 = vmatprep.mubr.bf16.mxu0 0
    %10053 = vmatmul.mubr.bf16.gmra.mrb[0].mxu0 %v9616
    %v10054 = vpop.f32.mrb[0].mxu0
    %v10055 = vadd.f32 0.0, %v10054
    %v10056 = vpop.f32.mrb[0].mxu0
    %v10057 = vadd.f32 0.0, %v10056
    %v10058 = vpop.f32.mrb[0].mxu0
    %v10059 = vpop.f32.mrb[0].mxu0
    %10060 = vdwg.mxu0
    %10061 = vmatprep.subr.bf16.mxu0 %v9817
    %10062 = vmatpush1.bf16.msra.mxu0 %v9816
    %10063 = vmatprep.subr.bf16.mxu0 %v9825
    %10064 = vmatpush1.bf16.msra.mxu0 %v9824
    %10065 = vmatprep.subr.bf16.mxu0 %v9833
    %10066 = vmatpush1.bf16.msra.mxu0 %v9832
    %10067 = vmatprep.subr.bf16.mxu0 %v9841
    %10068 = vmatpush1.bf16.msra.mxu0 %v9840
    %10069 = vmatprep.subr.bf16.mxu0 %v9849
    %10070 = vmatpush1.bf16.msra.mxu0 %v9848
    %10071 = vmatprep.subr.bf16.mxu0 %v9857
    %10072 = vmatpush1.bf16.msra.mxu0 %v9856
    %10073 = vmatprep.subr.bf16.mxu0 %v9865
    %10074 = vmatpush1.bf16.msra.mxu0 %v9864
    %10075 = vmatprep.subr.bf16.mxu0 %v9873
    %10076 = vmatpush1.bf16.msra.mxu0 %v9872
    %10077 = vmatprep.subr.bf16.mxu0 0
    %10078 = vmatpush1.bf16.msra.mxu0 0
    %10079 = vmatprep.subr.bf16.mxu0 0
    %10080 = vmatpush1.bf16.msra.mxu0 0
    %10081 = vmatprep.subr.bf16.mxu0 0
    %10082 = vmatpush1.bf16.msra.mxu0 0
    %10083 = vmatprep.subr.bf16.mxu0 0
    %10084 = vmatpush1.bf16.msra.mxu0 0
    %10085 = vmatprep.subr.bf16.mxu0 0
    %10086 = vmatpush1.bf16.msra.mxu0 0
    %10087 = vmatprep.subr.bf16.mxu0 0
    %10088 = vmatpush1.bf16.msra.mxu0 0
    %10089 = vmatprep.subr.bf16.mxu0 0
    %10090 = vmatpush1.bf16.msra.mxu0 0
    %10091 = vmatprep.subr.bf16.mxu0 0
    %10092 = vmatpush1.bf16.msra.mxu0 0
    %10093 = vmatprep.mubr.bf16.mxu0 0
    %10094 = vmatmul.mubr.bf16.gmra.mrb[0].mxu0 %v9616
    %v10095 = vpop.f32.mrb[0].mxu0
    %v10096 = vadd.f32 0.0, %v10095
    %v10097 = vpop.f32.mrb[0].mxu0
    %v10098 = vadd.f32 0.0, %v10097
    %v10099 = vpop.f32.mrb[0].mxu0
    %v10100 = vpop.f32.mrb[0].mxu0
    %10101 = vdwg.mxu0
    %v10102 = vadd.f32 %v9529, %v9973
    %v10103 = vadd.f32 %v9530, %v9975
    %v10104 = vadd.f32 %v9531, %v10014
    %v10105 = vadd.f32 %v9532, %v10016
    %v10106 = vadd.f32 %v9533, %v10055
    %v10107 = vadd.f32 %v9534, %v10057
    %v10108 = vadd.f32 %v9535, %v10096
    %v10109 = vadd.f32 %v9536, %v10098
    %s10110 = scalar_lea.vmem [#allocation10], 7680
    %v10111 = vld [vmem:[%s10110] sm:$0xff]
    %v10112 = vld [vmem:[%s10110 + $0x8] sm:$0xff]
    %v10113 = vld [vmem:[%s10110 + $0x10] sm:$0xff]
    %v10114 = vld [vmem:[%s10110 + $0x18] sm:$0xff]
    %v10115 = vld [vmem:[%s10110 + $0x20] sm:$0xff]
    %v10116 = vld [vmem:[%s10110 + $0x28] sm:$0xff]
    %v10117 = vld [vmem:[%s10110 + $0x30] sm:$0xff]
    %v10118 = vld [vmem:[%s10110 + $0x38] sm:$0xff]
    %v10119 = vld [vmem:[%s10110 + $0x40] sm:$0xff]
    %v10120 = vld [vmem:[%s10110 + $0x48] sm:$0xff]
    %v10121 = vld [vmem:[%s10110 + $0x50] sm:$0xff]
    %v10122 = vld [vmem:[%s10110 + $0x58] sm:$0xff]
    %v10123 = vld [vmem:[%s10110 + $0x60] sm:$0xff]
    %v10124 = vld [vmem:[%s10110 + $0x68] sm:$0xff]
    %v10125 = vld [vmem:[%s10110 + $0x70] sm:$0xff]
    %v10126 = vld [vmem:[%s10110 + $0x78] sm:$0xff]
    %v10127 = vld [vmem:[%s10110 + $0x80] sm:$0xff]
    %v10128 = vld [vmem:[%s10110 + $0x88] sm:$0xff]
    %v10129 = vld [vmem:[%s10110 + $0x90] sm:$0xff]
    %v10130 = vld [vmem:[%s10110 + $0x98] sm:$0xff]
    %v10131 = vld [vmem:[%s10110 + $0xa0] sm:$0xff]
    %v10132 = vld [vmem:[%s10110 + $0xa8] sm:$0xff]
    %v10133 = vld [vmem:[%s10110 + $0xb0] sm:$0xff]
    %v10134 = vld [vmem:[%s10110 + $0xb8] sm:$0xff]
    %v10135 = vld [vmem:[%s10110 + $0xc0] sm:$0xff]
    %v10136 = vld [vmem:[%s10110 + $0xc8] sm:$0xff]
    %v10137 = vld [vmem:[%s10110 + $0xd0] sm:$0xff]
    %v10138 = vld [vmem:[%s10110 + $0xd8] sm:$0xff]
    %v10139 = vld [vmem:[%s10110 + $0xe0] sm:$0xff]
    %v10140 = vld [vmem:[%s10110 + $0xe8] sm:$0xff]
    %v10141 = vld [vmem:[%s10110 + $0xf0] sm:$0xff]
    %v10142 = vld [vmem:[%s10110 + $0xf8] sm:$0xff]
    %v10143 = vld [vmem:[%s10110 + $0x100] sm:$0xff]
    %v10144 = vld [vmem:[%s10110 + $0x108] sm:$0xff]
    %v10145 = vld [vmem:[%s10110 + $0x110] sm:$0xff]
    %v10146 = vld [vmem:[%s10110 + $0x118] sm:$0xff]
    %v10147 = vld [vmem:[%s10110 + $0x120] sm:$0xff]
    %v10148 = vld [vmem:[%s10110 + $0x128] sm:$0xff]
    %v10149 = vld [vmem:[%s10110 + $0x130] sm:$0xff]
    %v10150 = vld [vmem:[%s10110 + $0x138] sm:$0xff]
    %v10151 = vld [vmem:[%s10110 + $0x140] sm:$0xff]
    %v10152 = vld [vmem:[%s10110 + $0x148] sm:$0xff]
    %v10153 = vld [vmem:[%s10110 + $0x150] sm:$0xff]
    %v10154 = vld [vmem:[%s10110 + $0x158] sm:$0xff]
    %v10155 = vld [vmem:[%s10110 + $0x160] sm:$0xff]
    %v10156 = vld [vmem:[%s10110 + $0x168] sm:$0xff]
    %v10157 = vld [vmem:[%s10110 + $0x170] sm:$0xff]
    %v10158 = vld [vmem:[%s10110 + $0x178] sm:$0xff]
    %v10159 = vld [vmem:[%s10110 + $0x180] sm:$0xff]
    %v10160 = vld [vmem:[%s10110 + $0x188] sm:$0xff]
    %v10161 = vld [vmem:[%s10110 + $0x190] sm:$0xff]
    %v10162 = vld [vmem:[%s10110 + $0x198] sm:$0xff]
    %v10163 = vld [vmem:[%s10110 + $0x1a0] sm:$0xff]
    %v10164 = vld [vmem:[%s10110 + $0x1a8] sm:$0xff]
    %v10165 = vld [vmem:[%s10110 + $0x1b0] sm:$0xff]
    %v10166 = vld [vmem:[%s10110 + $0x1b8] sm:$0xff]
    %v10167 = vld [vmem:[%s10110 + $0x1c0] sm:$0xff]
    %v10168 = vld [vmem:[%s10110 + $0x1c8] sm:$0xff]
    %v10169 = vld [vmem:[%s10110 + $0x1d0] sm:$0xff]
    %v10170 = vld [vmem:[%s10110 + $0x1d8] sm:$0xff]
    %v10171 = vld [vmem:[%s10110 + $0x1e0] sm:$0xff]
    %v10172 = vld [vmem:[%s10110 + $0x1e8] sm:$0xff]
    %v10173 = vld [vmem:[%s10110 + $0x1f0] sm:$0xff]
    %v10174 = vld [vmem:[%s10110 + $0x1f8] sm:$0xff]
    %v10175 = vrot.slane %v6156, 7
    %v10176 = vrot.slane %v6157, 6
    %v10177 = vsel %vm1647, %v10176, %v10175
    %v10178 = vrot.slane %v6158, 5
    %v10179 = vsel %vm1650, %v10178, %v10177
    %v10180 = vrot.slane %v6159, 4
    %v10181 = vsel %vm1653, %v10180, %v10179
    %v10182 = vrot.slane %v6160, 3
    %v10183 = vsel %vm1656, %v10182, %v10181
    %v10184 = vrot.slane %v6161, 2
    %v10185 = vsel %vm1659, %v10184, %v10183
    %v10186 = vrot.slane %v6162, 1
    %v10187 = vsel %vm1662, %v10186, %v10185
    %v10188 = vsel %vm1665, %v6163, %v10187
    %v10189 = vpack.c.b16 %v10188, %v10188
    %v10255 = vunpack.c.l.b16 %v10111
    %v10256 = vunpack.c.h.b16 %v10111
    %v10257 = vunpack.c.l.b16 %v10112
    %v10258 = vunpack.c.h.b16 %v10112
    %v10259 = vunpack.c.l.b16 %v10113
    %v10260 = vunpack.c.h.b16 %v10113
    %v10261 = vunpack.c.l.b16 %v10114
    %v10262 = vunpack.c.h.b16 %v10114
    %v10263 = vunpack.c.l.b16 %v10115
    %v10264 = vunpack.c.h.b16 %v10115
    %v10265 = vunpack.c.l.b16 %v10116
    %v10266 = vunpack.c.h.b16 %v10116
    %v10267 = vunpack.c.l.b16 %v10117
    %v10268 = vunpack.c.h.b16 %v10117
    %v10269 = vunpack.c.l.b16 %v10118
    %v10270 = vunpack.c.h.b16 %v10118
    %v10271 = vunpack.c.l.b16 %v10119
    %v10272 = vunpack.c.h.b16 %v10119
    %v10273 = vunpack.c.l.b16 %v10120
    %v10274 = vunpack.c.h.b16 %v10120
    %v10275 = vunpack.c.l.b16 %v10121
    %v10276 = vunpack.c.h.b16 %v10121
    %v10277 = vunpack.c.l.b16 %v10122
    %v10278 = vunpack.c.h.b16 %v10122
    %v10279 = vunpack.c.l.b16 %v10123
    %v10280 = vunpack.c.h.b16 %v10123
    %v10281 = vunpack.c.l.b16 %v10124
    %v10282 = vunpack.c.h.b16 %v10124
    %v10283 = vunpack.c.l.b16 %v10125
    %v10284 = vunpack.c.h.b16 %v10125
    %v10285 = vunpack.c.l.b16 %v10126
    %v10286 = vunpack.c.h.b16 %v10126
    %v10287 = vunpack.c.l.b16 %v10127
    %v10288 = vunpack.c.h.b16 %v10127
    %v10289 = vunpack.c.l.b16 %v10128
    %v10290 = vunpack.c.h.b16 %v10128
    %v10291 = vunpack.c.l.b16 %v10129
    %v10292 = vunpack.c.h.b16 %v10129
    %v10293 = vunpack.c.l.b16 %v10130
    %v10294 = vunpack.c.h.b16 %v10130
    %v10295 = vunpack.c.l.b16 %v10131
    %v10296 = vunpack.c.h.b16 %v10131
    %v10297 = vunpack.c.l.b16 %v10132
    %v10298 = vunpack.c.h.b16 %v10132
    %v10299 = vunpack.c.l.b16 %v10133
    %v10300 = vunpack.c.h.b16 %v10133
    %v10301 = vunpack.c.l.b16 %v10134
    %v10302 = vunpack.c.h.b16 %v10134
    %v10303 = vunpack.c.l.b16 %v10135
    %v10304 = vunpack.c.h.b16 %v10135
    %v10305 = vunpack.c.l.b16 %v10136
    %v10306 = vunpack.c.h.b16 %v10136
    %v10307 = vunpack.c.l.b16 %v10137
    %v10308 = vunpack.c.h.b16 %v10137
    %v10309 = vunpack.c.l.b16 %v10138
    %v10310 = vunpack.c.h.b16 %v10138
    %v10311 = vunpack.c.l.b16 %v10139
    %v10312 = vunpack.c.h.b16 %v10139
    %v10313 = vunpack.c.l.b16 %v10140
    %v10314 = vunpack.c.h.b16 %v10140
    %v10315 = vunpack.c.l.b16 %v10141
    %v10316 = vunpack.c.h.b16 %v10141
    %v10317 = vunpack.c.l.b16 %v10142
    %v10318 = vunpack.c.h.b16 %v10142
    %v10319 = vunpack.c.l.b16 %v10143
    %v10320 = vunpack.c.h.b16 %v10143
    %v10321 = vunpack.c.l.b16 %v10144
    %v10322 = vunpack.c.h.b16 %v10144
    %v10323 = vunpack.c.l.b16 %v10145
    %v10324 = vunpack.c.h.b16 %v10145
    %v10325 = vunpack.c.l.b16 %v10146
    %v10326 = vunpack.c.h.b16 %v10146
    %v10327 = vunpack.c.l.b16 %v10147
    %v10328 = vunpack.c.h.b16 %v10147
    %v10329 = vunpack.c.l.b16 %v10148
    %v10330 = vunpack.c.h.b16 %v10148
    %v10331 = vunpack.c.l.b16 %v10149
    %v10332 = vunpack.c.h.b16 %v10149
    %v10333 = vunpack.c.l.b16 %v10150
    %v10334 = vunpack.c.h.b16 %v10150
    %v10335 = vunpack.c.l.b16 %v10151
    %v10336 = vunpack.c.h.b16 %v10151
    %v10337 = vunpack.c.l.b16 %v10152
    %v10338 = vunpack.c.h.b16 %v10152
    %v10339 = vunpack.c.l.b16 %v10153
    %v10340 = vunpack.c.h.b16 %v10153
    %v10341 = vunpack.c.l.b16 %v10154
    %v10342 = vunpack.c.h.b16 %v10154
    %v10343 = vunpack.c.l.b16 %v10155
    %v10344 = vunpack.c.h.b16 %v10155
    %v10345 = vunpack.c.l.b16 %v10156
    %v10346 = vunpack.c.h.b16 %v10156
    %v10347 = vunpack.c.l.b16 %v10157
    %v10348 = vunpack.c.h.b16 %v10157
    %v10349 = vunpack.c.l.b16 %v10158
    %v10350 = vunpack.c.h.b16 %v10158
    %v10351 = vunpack.c.l.b16 %v10159
    %v10352 = vunpack.c.h.b16 %v10159
    %v10353 = vunpack.c.l.b16 %v10160
    %v10354 = vunpack.c.h.b16 %v10160
    %v10355 = vunpack.c.l.b16 %v10161
    %v10356 = vunpack.c.h.b16 %v10161
    %v10357 = vunpack.c.l.b16 %v10162
    %v10358 = vunpack.c.h.b16 %v10162
    %v10359 = vunpack.c.l.b16 %v10163
    %v10360 = vunpack.c.h.b16 %v10163
    %v10361 = vunpack.c.l.b16 %v10164
    %v10362 = vunpack.c.h.b16 %v10164
    %v10363 = vunpack.c.l.b16 %v10165
    %v10364 = vunpack.c.h.b16 %v10165
    %v10365 = vunpack.c.l.b16 %v10166
    %v10366 = vunpack.c.h.b16 %v10166
    %v10367 = vunpack.c.l.b16 %v10167
    %v10368 = vunpack.c.h.b16 %v10167
    %v10369 = vunpack.c.l.b16 %v10168
    %v10370 = vunpack.c.h.b16 %v10168
    %v10371 = vunpack.c.l.b16 %v10169
    %v10372 = vunpack.c.h.b16 %v10169
    %v10373 = vunpack.c.l.b16 %v10170
    %v10374 = vunpack.c.h.b16 %v10170
    %v10375 = vunpack.c.l.b16 %v10171
    %v10376 = vunpack.c.h.b16 %v10171
    %v10377 = vunpack.c.l.b16 %v10172
    %v10378 = vunpack.c.h.b16 %v10172
    %v10379 = vunpack.c.l.b16 %v10173
    %v10380 = vunpack.c.h.b16 %v10173
    %v10381 = vunpack.c.l.b16 %v10174
    %v10382 = vunpack.c.h.b16 %v10174
    %v10383 = vpack.c.b16 %v10263, %v10255
    %v10384 = vpack.c.b16 %v10264, %v10256
    %v10385 = vpack.c.b16 %v10265, %v10257
    %v10386 = vpack.c.b16 %v10266, %v10258
    %v10387 = vpack.c.b16 %v10267, %v10259
    %v10388 = vpack.c.b16 %v10268, %v10260
    %v10389 = vpack.c.b16 %v10269, %v10261
    %v10390 = vpack.c.b16 %v10270, %v10262
    %v10391 = vpack.c.b16 %v10279, %v10271
    %v10392 = vpack.c.b16 %v10280, %v10272
    %v10393 = vpack.c.b16 %v10281, %v10273
    %v10394 = vpack.c.b16 %v10282, %v10274
    %v10395 = vpack.c.b16 %v10283, %v10275
    %v10396 = vpack.c.b16 %v10284, %v10276
    %v10397 = vpack.c.b16 %v10285, %v10277
    %v10398 = vpack.c.b16 %v10286, %v10278
    %v10399 = vpack.c.b16 %v10295, %v10287
    %v10400 = vpack.c.b16 %v10296, %v10288
    %v10401 = vpack.c.b16 %v10297, %v10289
    %v10402 = vpack.c.b16 %v10298, %v10290
    %v10403 = vpack.c.b16 %v10299, %v10291
    %v10404 = vpack.c.b16 %v10300, %v10292
    %v10405 = vpack.c.b16 %v10301, %v10293
    %v10406 = vpack.c.b16 %v10302, %v10294
    %v10407 = vpack.c.b16 %v10311, %v10303
    %v10408 = vpack.c.b16 %v10312, %v10304
    %v10409 = vpack.c.b16 %v10313, %v10305
    %v10410 = vpack.c.b16 %v10314, %v10306
    %v10411 = vpack.c.b16 %v10315, %v10307
    %v10412 = vpack.c.b16 %v10316, %v10308
    %v10413 = vpack.c.b16 %v10317, %v10309
    %v10414 = vpack.c.b16 %v10318, %v10310
    %v10415 = vpack.c.b16 %v10327, %v10319
    %v10416 = vpack.c.b16 %v10328, %v10320
    %v10417 = vpack.c.b16 %v10329, %v10321
    %v10418 = vpack.c.b16 %v10330, %v10322
    %v10419 = vpack.c.b16 %v10331, %v10323
    %v10420 = vpack.c.b16 %v10332, %v10324
    %v10421 = vpack.c.b16 %v10333, %v10325
    %v10422 = vpack.c.b16 %v10334, %v10326
    %v10423 = vpack.c.b16 %v10343, %v10335
    %v10424 = vpack.c.b16 %v10344, %v10336
    %v10425 = vpack.c.b16 %v10345, %v10337
    %v10426 = vpack.c.b16 %v10346, %v10338
    %v10427 = vpack.c.b16 %v10347, %v10339
    %v10428 = vpack.c.b16 %v10348, %v10340
    %v10429 = vpack.c.b16 %v10349, %v10341
    %v10430 = vpack.c.b16 %v10350, %v10342
    %v10431 = vpack.c.b16 %v10359, %v10351
    %v10432 = vpack.c.b16 %v10360, %v10352
    %v10433 = vpack.c.b16 %v10361, %v10353
    %v10434 = vpack.c.b16 %v10362, %v10354
    %v10435 = vpack.c.b16 %v10363, %v10355
    %v10436 = vpack.c.b16 %v10364, %v10356
    %v10437 = vpack.c.b16 %v10365, %v10357
    %v10438 = vpack.c.b16 %v10366, %v10358
    %v10439 = vpack.c.b16 %v10375, %v10367
    %v10440 = vpack.c.b16 %v10376, %v10368
    %v10441 = vpack.c.b16 %v10377, %v10369
    %v10442 = vpack.c.b16 %v10378, %v10370
    %v10443 = vpack.c.b16 %v10379, %v10371
    %v10444 = vpack.c.b16 %v10380, %v10372
    %v10445 = vpack.c.b16 %v10381, %v10373
    %v10446 = vpack.c.b16 %v10382, %v10374
    %10511 = vmatprep.subr.bf16.mxu0 %v10384
    %10512 = vmatpush1.bf16.msra.mxu0 %v10383
    %10513 = vmatprep.subr.bf16.mxu0 %v10392
    %10514 = vmatpush1.bf16.msra.mxu0 %v10391
    %10515 = vmatprep.subr.bf16.mxu0 %v10400
    %10516 = vmatpush1.bf16.msra.mxu0 %v10399
    %10517 = vmatprep.subr.bf16.mxu0 %v10408
    %10518 = vmatpush1.bf16.msra.mxu0 %v10407
    %10519 = vmatprep.subr.bf16.mxu0 %v10416
    %10520 = vmatpush1.bf16.msra.mxu0 %v10415
    %10521 = vmatprep.subr.bf16.mxu0 %v10424
    %10522 = vmatpush1.bf16.msra.mxu0 %v10423
    %10523 = vmatprep.subr.bf16.mxu0 %v10432
    %10524 = vmatpush1.bf16.msra.mxu0 %v10431
    %10525 = vmatprep.subr.bf16.mxu0 %v10440
    %10526 = vmatpush1.bf16.msra.mxu0 %v10439
    %10527 = vmatprep.subr.bf16.mxu0 0
    %10528 = vmatpush1.bf16.msra.mxu0 0
    %10529 = vmatprep.subr.bf16.mxu0 0
    %10530 = vmatpush1.bf16.msra.mxu0 0
    %10531 = vmatprep.subr.bf16.mxu0 0
    %10532 = vmatpush1.bf16.msra.mxu0 0
    %10533 = vmatprep.subr.bf16.mxu0 0
    %10534 = vmatpush1.bf16.msra.mxu0 0
    %10535 = vmatprep.subr.bf16.mxu0 0
    %10536 = vmatpush1.bf16.msra.mxu0 0
    %10537 = vmatprep.subr.bf16.mxu0 0
    %10538 = vmatpush1.bf16.msra.mxu0 0
    %10539 = vmatprep.subr.bf16.mxu0 0
    %10540 = vmatpush1.bf16.msra.mxu0 0
    %10541 = vmatprep.subr.bf16.mxu0 0
    %10542 = vmatpush1.bf16.msra.mxu0 0
    %10543 = vmatprep.mubr.bf16.mxu0 0
    %10544 = vmatmul.mubr.bf16.gmra.mrb[0].mxu0 %v10189
    %v10545 = vpop.f32.mrb[0].mxu0
    %v10546 = vadd.f32 0.0, %v10545
    %v10547 = vpop.f32.mrb[0].mxu0
    %v10548 = vadd.f32 0.0, %v10547
    %v10549 = vpop.f32.mrb[0].mxu0
    %v10550 = vpop.f32.mrb[0].mxu0
    %10551 = vdwg.mxu0
    %10552 = vmatprep.subr.bf16.mxu0 %v10386
    %10553 = vmatpush1.bf16.msra.mxu0 %v10385
    %10554 = vmatprep.subr.bf16.mxu0 %v10394
    %10555 = vmatpush1.bf16.msra.mxu0 %v10393
    %10556 = vmatprep.subr.bf16.mxu0 %v10402
    %10557 = vmatpush1.bf16.msra.mxu0 %v10401
    %10558 = vmatprep.subr.bf16.mxu0 %v10410
    %10559 = vmatpush1.bf16.msra.mxu0 %v10409
    %10560 = vmatprep.subr.bf16.mxu0 %v10418
    %10561 = vmatpush1.bf16.msra.mxu0 %v10417
    %10562 = vmatprep.subr.bf16.mxu0 %v10426
    %10563 = vmatpush1.bf16.msra.mxu0 %v10425
    %10564 = vmatprep.subr.bf16.mxu0 %v10434
    %10565 = vmatpush1.bf16.msra.mxu0 %v10433
    %10566 = vmatprep.subr.bf16.mxu0 %v10442
    %10567 = vmatpush1.bf16.msra.mxu0 %v10441
    %10568 = vmatprep.subr.bf16.mxu0 0
    %10569 = vmatpush1.bf16.msra.mxu0 0
    %10570 = vmatprep.subr.bf16.mxu0 0
    %10571 = vmatpush1.bf16.msra.mxu0 0
    %10572 = vmatprep.subr.bf16.mxu0 0
    %10573 = vmatpush1.bf16.msra.mxu0 0
    %10574 = vmatprep.subr.bf16.mxu0 0
    %10575 = vmatpush1.bf16.msra.mxu0 0
    %10576 = vmatprep.subr.bf16.mxu0 0
    %10577 = vmatpush1.bf16.msra.mxu0 0
    %10578 = vmatprep.subr.bf16.mxu0 0
    %10579 = vmatpush1.bf16.msra.mxu0 0
    %10580 = vmatprep.subr.bf16.mxu0 0
    %10581 = vmatpush1.bf16.msra.mxu0 0
    %10582 = vmatprep.subr.bf16.mxu0 0
    %10583 = vmatpush1.bf16.msra.mxu0 0
    %10584 = vmatprep.mubr.bf16.mxu0 0
    %10585 = vmatmul.mubr.bf16.gmra.mrb[0].mxu0 %v10189
    %v10586 = vpop.f32.mrb[0].mxu0
    %v10587 = vadd.f32 0.0, %v10586
    %v10588 = vpop.f32.mrb[0].mxu0
    %v10589 = vadd.f32 0.0, %v10588
    %v10590 = vpop.f32.mrb[0].mxu0
    %v10591 = vpop.f32.mrb[0].mxu0
    %10592 = vdwg.mxu0
    %10593 = vmatprep.subr.bf16.mxu0 %v10388
    %10594 = vmatpush1.bf16.msra.mxu0 %v10387
    %10595 = vmatprep.subr.bf16.mxu0 %v10396
    %10596 = vmatpush1.bf16.msra.mxu0 %v10395
    %10597 = vmatprep.subr.bf16.mxu0 %v10404
    %10598 = vmatpush1.bf16.msra.mxu0 %v10403
    %10599 = vmatprep.subr.bf16.mxu0 %v10412
    %10600 = vmatpush1.bf16.msra.mxu0 %v10411
    %10601 = vmatprep.subr.bf16.mxu0 %v10420
    %10602 = vmatpush1.bf16.msra.mxu0 %v10419
    %10603 = vmatprep.subr.bf16.mxu0 %v10428
    %10604 = vmatpush1.bf16.msra.mxu0 %v10427
    %10605 = vmatprep.subr.bf16.mxu0 %v10436
    %10606 = vmatpush1.bf16.msra.mxu0 %v10435
    %10607 = vmatprep.subr.bf16.mxu0 %v10444
    %10608 = vmatpush1.bf16.msra.mxu0 %v10443
    %10609 = vmatprep.subr.bf16.mxu0 0
    %10610 = vmatpush1.bf16.msra.mxu0 0
    %10611 = vmatprep.subr.bf16.mxu0 0
    %10612 = vmatpush1.bf16.msra.mxu0 0
    %10613 = vmatprep.subr.bf16.mxu0 0
    %10614 = vmatpush1.bf16.msra.mxu0 0
    %10615 = vmatprep.subr.bf16.mxu0 0
    %10616 = vmatpush1.bf16.msra.mxu0 0
    %10617 = vmatprep.subr.bf16.mxu0 0
    %10618 = vmatpush1.bf16.msra.mxu0 0
    %10619 = vmatprep.subr.bf16.mxu0 0
    %10620 = vmatpush1.bf16.msra.mxu0 0
    %10621 = vmatprep.subr.bf16.mxu0 0
    %10622 = vmatpush1.bf16.msra.mxu0 0
    %10623 = vmatprep.subr.bf16.mxu0 0
    %10624 = vmatpush1.bf16.msra.mxu0 0
    %10625 = vmatprep.mubr.bf16.mxu0 0
    %10626 = vmatmul.mubr.bf16.gmra.mrb[0].mxu0 %v10189
    %v10627 = vpop.f32.mrb[0].mxu0
    %v10628 = vadd.f32 0.0, %v10627
    %v10629 = vpop.f32.mrb[0].mxu0
    %v10630 = vadd.f32 0.0, %v10629
    %v10631 = vpop.f32.mrb[0].mxu0
    %v10632 = vpop.f32.mrb[0].mxu0
    %10633 = vdwg.mxu0
    %10634 = vmatprep.subr.bf16.mxu0 %v10390
    %10635 = vmatpush1.bf16.msra.mxu0 %v10389
    %10636 = vmatprep.subr.bf16.mxu0 %v10398
    %10637 = vmatpush1.bf16.msra.mxu0 %v10397
    %10638 = vmatprep.subr.bf16.mxu0 %v10406
    %10639 = vmatpush1.bf16.msra.mxu0 %v10405
    %10640 = vmatprep.subr.bf16.mxu0 %v10414
    %10641 = vmatpush1.bf16.msra.mxu0 %v10413
    %10642 = vmatprep.subr.bf16.mxu0 %v10422
    %10643 = vmatpush1.bf16.msra.mxu0 %v10421
    %10644 = vmatprep.subr.bf16.mxu0 %v10430
    %10645 = vmatpush1.bf16.msra.mxu0 %v10429
    %10646 = vmatprep.subr.bf16.mxu0 %v10438
    %10647 = vmatpush1.bf16.msra.mxu0 %v10437
    %10648 = vmatprep.subr.bf16.mxu0 %v10446
    %10649 = vmatpush1.bf16.msra.mxu0 %v10445
    %10650 = vmatprep.subr.bf16.mxu0 0
    %10651 = vmatpush1.bf16.msra.mxu0 0
    %10652 = vmatprep.subr.bf16.mxu0 0
    %10653 = vmatpush1.bf16.msra.mxu0 0
    %10654 = vmatprep.subr.bf16.mxu0 0
    %10655 = vmatpush1.bf16.msra.mxu0 0
    %10656 = vmatprep.subr.bf16.mxu0 0
    %10657 = vmatpush1.bf16.msra.mxu0 0
    %10658 = vmatprep.subr.bf16.mxu0 0
    %10659 = vmatpush1.bf16.msra.mxu0 0
    %10660 = vmatprep.subr.bf16.mxu0 0
    %10661 = vmatpush1.bf16.msra.mxu0 0
    %10662 = vmatprep.subr.bf16.mxu0 0
    %10663 = vmatpush1.bf16.msra.mxu0 0
    %10664 = vmatprep.subr.bf16.mxu0 0
    %10665 = vmatpush1.bf16.msra.mxu0 0
    %10666 = vmatprep.mubr.bf16.mxu0 0
    %10667 = vmatmul.mubr.bf16.gmra.mrb[0].mxu0 %v10189
    %v10668 = vpop.f32.mrb[0].mxu0
    %v10669 = vadd.f32 0.0, %v10668
    %v10670 = vpop.f32.mrb[0].mxu0
    %v10671 = vadd.f32 0.0, %v10670
    %v10672 = vpop.f32.mrb[0].mxu0
    %v10673 = vpop.f32.mrb[0].mxu0
    %10674 = vdwg.mxu0
    %v10675 = vadd.f32 %v10102, %v10546
    %v10676 = vadd.f32 %v10103, %v10548
    %v10677 = vadd.f32 %v10104, %v10587
    %v10678 = vadd.f32 %v10105, %v10589
    %v10679 = vadd.f32 %v10106, %v10628
    %v10680 = vadd.f32 %v10107, %v10630
    %v10681 = vadd.f32 %v10108, %v10669
    %v10682 = vadd.f32 %v10109, %v10671
    %v10683 = vld [vmem:[#allocation11] sm:$0xff]
    %v10685 = vlaneseq
    %v10686 = vshrl.u32 %v10685, 7
    %v10687 = vsub.s32 0, %v10686
    %v10688 = vrot.slane %v10683, %v10687
    %v10689 = vlaneseq
    %v10690 = vshrl.u32 %v10689, 7
    %v10691 = vsub.s32 1, %v10690
    %v10692 = vrot.slane %v10683, %v10691
    %v10693 = vlaneseq
    %v10694 = vshrl.u32 %v10693, 7
    %v10695 = vsub.s32 2, %v10694
    %v10696 = vrot.slane %v10683, %v10695
    %v10697 = vlaneseq
    %v10698 = vshrl.u32 %v10697, 7
    %v10699 = vsub.s32 3, %v10698
    %v10700 = vrot.slane %v10683, %v10699
    %v10701 = vlaneseq
    %v10702 = vshrl.u32 %v10701, 7
    %v10703 = vsub.s32 4, %v10702
    %v10704 = vrot.slane %v10683, %v10703
    %v10705 = vlaneseq
    %v10706 = vshrl.u32 %v10705, 7
    %v10707 = vsub.s32 5, %v10706
    %v10708 = vrot.slane %v10683, %v10707
    %v10709 = vlaneseq
    %v10710 = vshrl.u32 %v10709, 7
    %v10711 = vsub.s32 6, %v10710
    %v10712 = vrot.slane %v10683, %v10711
    %v10713 = vlaneseq
    %v10714 = vshrl.u32 %v10713, 7
    %v10715 = vsub.s32 7, %v10714
    %v10716 = vrot.slane %v10683, %v10715
    %v10725 = vadd.f32 %v10675, %v10688
    %v10726 = vadd.f32 %v10676, %v10692
    %v10727 = vadd.f32 %v10677, %v10696
    %v10728 = vadd.f32 %v10678, %v10700
    %v10729 = vadd.f32 %v10679, %v10704
    %v10730 = vadd.f32 %v10680, %v10708
    %v10731 = vadd.f32 %v10681, %v10712
    %v10732 = vadd.f32 %v10682, %v10716
    %v10733 = vmax.f32 %v10725, 0.0
    %v10734 = vmax.f32 %v10726, 0.0
    %v10735 = vmax.f32 %v10727, 0.0
    %v10736 = vmax.f32 %v10728, 0.0
    %v10737 = vmax.f32 %v10729, 0.0
    %v10738 = vmax.f32 %v10730, 0.0
    %v10739 = vmax.f32 %v10731, 0.0
    %v10740 = vmax.f32 %v10732, 0.0
    %v10741 = vpack.c.bf16 %v10733, %v10733
    %v10742 = vpack.c.bf16 %v10734, %v10734
    %v10743 = vpack.c.bf16 %v10735, %v10735
    %v10744 = vpack.c.bf16 %v10736, %v10736
    %v10745 = vpack.c.bf16 %v10737, %v10737
    %v10746 = vpack.c.bf16 %v10738, %v10738
    %v10747 = vpack.c.bf16 %v10739, %v10739
    %v10748 = vpack.c.bf16 %v10740, %v10740
    %v10749 = vld [vmem:[#allocation13] sm:$0xf]
    %v10750 = vld [vmem:[#allocation13 + $0x4] sm:$0xf]
    %v10751 = vld [vmem:[#allocation13 + $0x8] sm:$0xf]
    %v10752 = vld [vmem:[#allocation13 + $0xc] sm:$0xf]
    %v10753 = vld [vmem:[#allocation13 + $0x10] sm:$0xf]
    %v10754 = vld [vmem:[#allocation13 + $0x14] sm:$0xf]
    %v10755 = vld [vmem:[#allocation13 + $0x18] sm:$0xf]
    %v10756 = vld [vmem:[#allocation13 + $0x1c] sm:$0xf]
    %v10757 = vld [vmem:[#allocation13 + $0x20] sm:$0xf]
    %v10758 = vld [vmem:[#allocation13 + $0x24] sm:$0xf]
    %v10759 = vld [vmem:[#allocation13 + $0x28] sm:$0xf]
    %v10760 = vld [vmem:[#allocation13 + $0x2c] sm:$0xf]
    %v10761 = vld [vmem:[#allocation13 + $0x30] sm:$0xf]
    %v10762 = vld [vmem:[#allocation13 + $0x34] sm:$0xf]
    %v10763 = vld [vmem:[#allocation13 + $0x38] sm:$0xf]
    %v10764 = vld [vmem:[#allocation13 + $0x3c] sm:$0xf]
    %v10765 = vld [vmem:[#allocation13 + $0x40] sm:$0xf]
    %v10766 = vld [vmem:[#allocation13 + $0x44] sm:$0xf]
    %v10767 = vld [vmem:[#allocation13 + $0x48] sm:$0xf]
    %v10768 = vld [vmem:[#allocation13 + $0x4c] sm:$0xf]
    %v10769 = vld [vmem:[#allocation13 + $0x50] sm:$0xf]
    %v10770 = vld [vmem:[#allocation13 + $0x54] sm:$0xf]
    %v10771 = vld [vmem:[#allocation13 + $0x58] sm:$0xf]
    %v10772 = vld [vmem:[#allocation13 + $0x5c] sm:$0xf]
    %v10773 = vld [vmem:[#allocation13 + $0x60] sm:$0xf]
    %v10774 = vld [vmem:[#allocation13 + $0x64] sm:$0xf]
    %v10775 = vld [vmem:[#allocation13 + $0x68] sm:$0xf]
    %v10776 = vld [vmem:[#allocation13 + $0x6c] sm:$0xf]
    %v10777 = vld [vmem:[#allocation13 + $0x70] sm:$0xf]
    %v10778 = vld [vmem:[#allocation13 + $0x74] sm:$0xf]
    %v10779 = vld [vmem:[#allocation13 + $0x78] sm:$0xf]
    %v10780 = vld [vmem:[#allocation13 + $0x7c] sm:$0xf]
    %v10781 = vld [vmem:[#allocation13 + $0x80] sm:$0xf]
    %v10782 = vld [vmem:[#allocation13 + $0x84] sm:$0xf]
    %v10783 = vld [vmem:[#allocation13 + $0x88] sm:$0xf]
    %v10784 = vld [vmem:[#allocation13 + $0x8c] sm:$0xf]
    %v10785 = vld [vmem:[#allocation13 + $0x90] sm:$0xf]
    %v10786 = vld [vmem:[#allocation13 + $0x94] sm:$0xf]
    %v10787 = vld [vmem:[#allocation13 + $0x98] sm:$0xf]
    %v10788 = vld [vmem:[#allocation13 + $0x9c] sm:$0xf]
    %v10789 = vld [vmem:[#allocation13 + $0xa0] sm:$0xf]
    %v10790 = vld [vmem:[#allocation13 + $0xa4] sm:$0xf]
    %v10791 = vld [vmem:[#allocation13 + $0xa8] sm:$0xf]
    %v10792 = vld [vmem:[#allocation13 + $0xac] sm:$0xf]
    %v10793 = vld [vmem:[#allocation13 + $0xb0] sm:$0xf]
    %v10794 = vld [vmem:[#allocation13 + $0xb4] sm:$0xf]
    %v10795 = vld [vmem:[#allocation13 + $0xb8] sm:$0xf]
    %v10796 = vld [vmem:[#allocation13 + $0xbc] sm:$0xf]
    %v10797 = vld [vmem:[#allocation13 + $0xc0] sm:$0xf]
    %v10798 = vld [vmem:[#allocation13 + $0xc4] sm:$0xf]
    %v10799 = vld [vmem:[#allocation13 + $0xc8] sm:$0xf]
    %v10800 = vld [vmem:[#allocation13 + $0xcc] sm:$0xf]
    %v10801 = vld [vmem:[#allocation13 + $0xd0] sm:$0xf]
    %v10802 = vld [vmem:[#allocation13 + $0xd4] sm:$0xf]
    %v10803 = vld [vmem:[#allocation13 + $0xd8] sm:$0xf]
    %v10804 = vld [vmem:[#allocation13 + $0xdc] sm:$0xf]
    %v10805 = vld [vmem:[#allocation13 + $0xe0] sm:$0xf]
    %v10806 = vld [vmem:[#allocation13 + $0xe4] sm:$0xf]
    %v10807 = vld [vmem:[#allocation13 + $0xe8] sm:$0xf]
    %v10808 = vld [vmem:[#allocation13 + $0xec] sm:$0xf]
    %v10809 = vld [vmem:[#allocation13 + $0xf0] sm:$0xf]
    %v10810 = vld [vmem:[#allocation13 + $0xf4] sm:$0xf]
    %v10811 = vld [vmem:[#allocation13 + $0xf8] sm:$0xf]
    %v10812 = vld [vmem:[#allocation13 + $0xfc] sm:$0xf]
    %v10813 = vld [vmem:[#allocation13 + $0x100] sm:$0xf]
    %v10814 = vld [vmem:[#allocation13 + $0x104] sm:$0xf]
    %v10815 = vld [vmem:[#allocation13 + $0x108] sm:$0xf]
    %v10816 = vld [vmem:[#allocation13 + $0x10c] sm:$0xf]
    %v10817 = vld [vmem:[#allocation13 + $0x110] sm:$0xf]
    %v10818 = vld [vmem:[#allocation13 + $0x114] sm:$0xf]
    %v10819 = vld [vmem:[#allocation13 + $0x118] sm:$0xf]
    %v10820 = vld [vmem:[#allocation13 + $0x11c] sm:$0xf]
    %v10821 = vld [vmem:[#allocation13 + $0x120] sm:$0xf]
    %v10822 = vld [vmem:[#allocation13 + $0x124] sm:$0xf]
    %v10823 = vld [vmem:[#allocation13 + $0x128] sm:$0xf]
    %v10824 = vld [vmem:[#allocation13 + $0x12c] sm:$0xf]
    %v10825 = vld [vmem:[#allocation13 + $0x130] sm:$0xf]
    %v10826 = vld [vmem:[#allocation13 + $0x134] sm:$0xf]
    %v10827 = vld [vmem:[#allocation13 + $0x138] sm:$0xf]
    %v10828 = vld [vmem:[#allocation13 + $0x13c] sm:$0xf]
    %v10829 = vld [vmem:[#allocation13 + $0x140] sm:$0xf]
    %v10830 = vld [vmem:[#allocation13 + $0x144] sm:$0xf]
    %v10831 = vld [vmem:[#allocation13 + $0x148] sm:$0xf]
    %v10832 = vld [vmem:[#allocation13 + $0x14c] sm:$0xf]
    %v10833 = vld [vmem:[#allocation13 + $0x150] sm:$0xf]
    %v10834 = vld [vmem:[#allocation13 + $0x154] sm:$0xf]
    %v10835 = vld [vmem:[#allocation13 + $0x158] sm:$0xf]
    %v10836 = vld [vmem:[#allocation13 + $0x15c] sm:$0xf]
    %v10837 = vld [vmem:[#allocation13 + $0x160] sm:$0xf]
    %v10838 = vld [vmem:[#allocation13 + $0x164] sm:$0xf]
    %v10839 = vld [vmem:[#allocation13 + $0x168] sm:$0xf]
    %v10840 = vld [vmem:[#allocation13 + $0x16c] sm:$0xf]
    %v10841 = vld [vmem:[#allocation13 + $0x170] sm:$0xf]
    %v10842 = vld [vmem:[#allocation13 + $0x174] sm:$0xf]
    %v10843 = vld [vmem:[#allocation13 + $0x178] sm:$0xf]
    %v10844 = vld [vmem:[#allocation13 + $0x17c] sm:$0xf]
    %v10845 = vld [vmem:[#allocation13 + $0x180] sm:$0xf]
    %v10846 = vld [vmem:[#allocation13 + $0x184] sm:$0xf]
    %v10847 = vld [vmem:[#allocation13 + $0x188] sm:$0xf]
    %v10848 = vld [vmem:[#allocation13 + $0x18c] sm:$0xf]
    %v10849 = vld [vmem:[#allocation13 + $0x190] sm:$0xf]
    %v10850 = vld [vmem:[#allocation13 + $0x194] sm:$0xf]
    %v10851 = vld [vmem:[#allocation13 + $0x198] sm:$0xf]
    %v10852 = vld [vmem:[#allocation13 + $0x19c] sm:$0xf]
    %v10853 = vld [vmem:[#allocation13 + $0x1a0] sm:$0xf]
    %v10854 = vld [vmem:[#allocation13 + $0x1a4] sm:$0xf]
    %v10855 = vld [vmem:[#allocation13 + $0x1a8] sm:$0xf]
    %v10856 = vld [vmem:[#allocation13 + $0x1ac] sm:$0xf]
    %v10857 = vld [vmem:[#allocation13 + $0x1b0] sm:$0xf]
    %v10858 = vld [vmem:[#allocation13 + $0x1b4] sm:$0xf]
    %v10859 = vld [vmem:[#allocation13 + $0x1b8] sm:$0xf]
    %v10860 = vld [vmem:[#allocation13 + $0x1bc] sm:$0xf]
    %v10861 = vld [vmem:[#allocation13 + $0x1c0] sm:$0xf]
    %v10862 = vld [vmem:[#allocation13 + $0x1c4] sm:$0xf]
    %v10863 = vld [vmem:[#allocation13 + $0x1c8] sm:$0xf]
    %v10864 = vld [vmem:[#allocation13 + $0x1cc] sm:$0xf]
    %v10865 = vld [vmem:[#allocation13 + $0x1d0] sm:$0xf]
    %v10866 = vld [vmem:[#allocation13 + $0x1d4] sm:$0xf]
    %v10867 = vld [vmem:[#allocation13 + $0x1d8] sm:$0xf]
    %v10868 = vld [vmem:[#allocation13 + $0x1dc] sm:$0xf]
    %v10869 = vld [vmem:[#allocation13 + $0x1e0] sm:$0xf]
    %v10870 = vld [vmem:[#allocation13 + $0x1e4] sm:$0xf]
    %v10871 = vld [vmem:[#allocation13 + $0x1e8] sm:$0xf]
    %v10872 = vld [vmem:[#allocation13 + $0x1ec] sm:$0xf]
    %v10873 = vld [vmem:[#allocation13 + $0x1f0] sm:$0xf]
    %v10874 = vld [vmem:[#allocation13 + $0x1f4] sm:$0xf]
    %v10875 = vld [vmem:[#allocation13 + $0x1f8] sm:$0xf]
    %v10876 = vld [vmem:[#allocation13 + $0x1fc] sm:$0xf]
    %v10877 = vld [vmem:[#allocation14] sm:$0x1]
    %v10879 = vlaneseq
    %v10880 = vshrl.u32 %v10879, 7
    %v10881 = vsub.s32 0, %v10880
    %v10882 = vrot.slane %v10877, %v10881
    %v11012 = vunpack.c.l.b16 %v10749
    %v11013 = vunpack.c.l.b16 %v10750
    %v11014 = vunpack.c.l.b16 %v10751
    %v11015 = vunpack.c.l.b16 %v10752
    %v11016 = vunpack.c.l.b16 %v10753
    %v11017 = vunpack.c.l.b16 %v10754
    %v11018 = vunpack.c.l.b16 %v10755
    %v11019 = vunpack.c.l.b16 %v10756
    %v11020 = vunpack.c.l.b16 %v10757
    %v11021 = vunpack.c.l.b16 %v10758
    %v11022 = vunpack.c.l.b16 %v10759
    %v11023 = vunpack.c.l.b16 %v10760
    %v11024 = vunpack.c.l.b16 %v10761
    %v11025 = vunpack.c.l.b16 %v10762
    %v11026 = vunpack.c.l.b16 %v10763
    %v11027 = vunpack.c.l.b16 %v10764
    %v11028 = vunpack.c.l.b16 %v10765
    %v11029 = vunpack.c.l.b16 %v10766
    %v11030 = vunpack.c.l.b16 %v10767
    %v11031 = vunpack.c.l.b16 %v10768
    %v11032 = vunpack.c.l.b16 %v10769
    %v11033 = vunpack.c.l.b16 %v10770
    %v11034 = vunpack.c.l.b16 %v10771
    %v11035 = vunpack.c.l.b16 %v10772
    %v11036 = vunpack.c.l.b16 %v10773
    %v11037 = vunpack.c.l.b16 %v10774
    %v11038 = vunpack.c.l.b16 %v10775
    %v11039 = vunpack.c.l.b16 %v10776
    %v11040 = vunpack.c.l.b16 %v10777
    %v11041 = vunpack.c.l.b16 %v10778
    %v11042 = vunpack.c.l.b16 %v10779
    %v11043 = vunpack.c.l.b16 %v10780
    %v11044 = vunpack.c.l.b16 %v10781
    %v11045 = vunpack.c.l.b16 %v10782
    %v11046 = vunpack.c.l.b16 %v10783
    %v11047 = vunpack.c.l.b16 %v10784
    %v11048 = vunpack.c.l.b16 %v10785
    %v11049 = vunpack.c.l.b16 %v10786
    %v11050 = vunpack.c.l.b16 %v10787
    %v11051 = vunpack.c.l.b16 %v10788
    %v11052 = vunpack.c.l.b16 %v10789
    %v11053 = vunpack.c.l.b16 %v10790
    %v11054 = vunpack.c.l.b16 %v10791
    %v11055 = vunpack.c.l.b16 %v10792
    %v11056 = vunpack.c.l.b16 %v10793
    %v11057 = vunpack.c.l.b16 %v10794
    %v11058 = vunpack.c.l.b16 %v10795
    %v11059 = vunpack.c.l.b16 %v10796
    %v11060 = vunpack.c.l.b16 %v10797
    %v11061 = vunpack.c.l.b16 %v10798
    %v11062 = vunpack.c.l.b16 %v10799
    %v11063 = vunpack.c.l.b16 %v10800
    %v11064 = vunpack.c.l.b16 %v10801
    %v11065 = vunpack.c.l.b16 %v10802
    %v11066 = vunpack.c.l.b16 %v10803
    %v11067 = vunpack.c.l.b16 %v10804
    %v11068 = vunpack.c.l.b16 %v10805
    %v11069 = vunpack.c.l.b16 %v10806
    %v11070 = vunpack.c.l.b16 %v10807
    %v11071 = vunpack.c.l.b16 %v10808
    %v11072 = vunpack.c.l.b16 %v10809
    %v11073 = vunpack.c.l.b16 %v10810
    %v11074 = vunpack.c.l.b16 %v10811
    %v11075 = vunpack.c.l.b16 %v10812
    %v11076 = vunpack.c.l.b16 %v10813
    %v11077 = vunpack.c.l.b16 %v10814
    %v11078 = vunpack.c.l.b16 %v10815
    %v11079 = vunpack.c.l.b16 %v10816
    %v11080 = vunpack.c.l.b16 %v10817
    %v11081 = vunpack.c.l.b16 %v10818
    %v11082 = vunpack.c.l.b16 %v10819
    %v11083 = vunpack.c.l.b16 %v10820
    %v11084 = vunpack.c.l.b16 %v10821
    %v11085 = vunpack.c.l.b16 %v10822
    %v11086 = vunpack.c.l.b16 %v10823
    %v11087 = vunpack.c.l.b16 %v10824
    %v11088 = vunpack.c.l.b16 %v10825
    %v11089 = vunpack.c.l.b16 %v10826
    %v11090 = vunpack.c.l.b16 %v10827
    %v11091 = vunpack.c.l.b16 %v10828
    %v11092 = vunpack.c.l.b16 %v10829
    %v11093 = vunpack.c.l.b16 %v10830
    %v11094 = vunpack.c.l.b16 %v10831
    %v11095 = vunpack.c.l.b16 %v10832
    %v11096 = vunpack.c.l.b16 %v10833
    %v11097 = vunpack.c.l.b16 %v10834
    %v11098 = vunpack.c.l.b16 %v10835
    %v11099 = vunpack.c.l.b16 %v10836
    %v11100 = vunpack.c.l.b16 %v10837
    %v11101 = vunpack.c.l.b16 %v10838
    %v11102 = vunpack.c.l.b16 %v10839
    %v11103 = vunpack.c.l.b16 %v10840
    %v11104 = vunpack.c.l.b16 %v10841
    %v11105 = vunpack.c.l.b16 %v10842
    %v11106 = vunpack.c.l.b16 %v10843
    %v11107 = vunpack.c.l.b16 %v10844
    %v11108 = vunpack.c.l.b16 %v10845
    %v11109 = vunpack.c.l.b16 %v10846
    %v11110 = vunpack.c.l.b16 %v10847
    %v11111 = vunpack.c.l.b16 %v10848
    %v11112 = vunpack.c.l.b16 %v10849
    %v11113 = vunpack.c.l.b16 %v10850
    %v11114 = vunpack.c.l.b16 %v10851
    %v11115 = vunpack.c.l.b16 %v10852
    %v11116 = vunpack.c.l.b16 %v10853
    %v11117 = vunpack.c.l.b16 %v10854
    %v11118 = vunpack.c.l.b16 %v10855
    %v11119 = vunpack.c.l.b16 %v10856
    %v11120 = vunpack.c.l.b16 %v10857
    %v11121 = vunpack.c.l.b16 %v10858
    %v11122 = vunpack.c.l.b16 %v10859
    %v11123 = vunpack.c.l.b16 %v10860
    %v11124 = vunpack.c.l.b16 %v10861
    %v11125 = vunpack.c.l.b16 %v10862
    %v11126 = vunpack.c.l.b16 %v10863
    %v11127 = vunpack.c.l.b16 %v10864
    %v11128 = vunpack.c.l.b16 %v10865
    %v11129 = vunpack.c.l.b16 %v10866
    %v11130 = vunpack.c.l.b16 %v10867
    %v11131 = vunpack.c.l.b16 %v10868
    %v11132 = vunpack.c.l.b16 %v10869
    %v11133 = vunpack.c.l.b16 %v10870
    %v11134 = vunpack.c.l.b16 %v10871
    %v11135 = vunpack.c.l.b16 %v10872
    %v11136 = vunpack.c.l.b16 %v10873
    %v11137 = vunpack.c.l.b16 %v10874
    %v11138 = vunpack.c.l.b16 %v10875
    %v11139 = vunpack.c.l.b16 %v10876
    %v11140 = vpack.c.b16 %v11013, %v11012
    %v11141 = vpack.c.b16 %v11015, %v11014
    %v11142 = vpack.c.b16 %v11017, %v11016
    %v11143 = vpack.c.b16 %v11019, %v11018
    %v11144 = vpack.c.b16 %v11021, %v11020
    %v11145 = vpack.c.b16 %v11023, %v11022
    %v11146 = vpack.c.b16 %v11025, %v11024
    %v11147 = vpack.c.b16 %v11027, %v11026
    %v11148 = vpack.c.b16 %v11029, %v11028
    %v11149 = vpack.c.b16 %v11031, %v11030
    %v11150 = vpack.c.b16 %v11033, %v11032
    %v11151 = vpack.c.b16 %v11035, %v11034
    %v11152 = vpack.c.b16 %v11037, %v11036
    %v11153 = vpack.c.b16 %v11039, %v11038
    %v11154 = vpack.c.b16 %v11041, %v11040
    %v11155 = vpack.c.b16 %v11043, %v11042
    %v11156 = vpack.c.b16 %v11045, %v11044
    %v11157 = vpack.c.b16 %v11047, %v11046
    %v11158 = vpack.c.b16 %v11049, %v11048
    %v11159 = vpack.c.b16 %v11051, %v11050
    %v11160 = vpack.c.b16 %v11053, %v11052
    %v11161 = vpack.c.b16 %v11055, %v11054
    %v11162 = vpack.c.b16 %v11057, %v11056
    %v11163 = vpack.c.b16 %v11059, %v11058
    %v11164 = vpack.c.b16 %v11061, %v11060
    %v11165 = vpack.c.b16 %v11063, %v11062
    %v11166 = vpack.c.b16 %v11065, %v11064
    %v11167 = vpack.c.b16 %v11067, %v11066
    %v11168 = vpack.c.b16 %v11069, %v11068
    %v11169 = vpack.c.b16 %v11071, %v11070
    %v11170 = vpack.c.b16 %v11073, %v11072
    %v11171 = vpack.c.b16 %v11075, %v11074
    %v11172 = vpack.c.b16 %v11077, %v11076
    %v11173 = vpack.c.b16 %v11079, %v11078
    %v11174 = vpack.c.b16 %v11081, %v11080
    %v11175 = vpack.c.b16 %v11083, %v11082
    %v11176 = vpack.c.b16 %v11085, %v11084
    %v11177 = vpack.c.b16 %v11087, %v11086
    %v11178 = vpack.c.b16 %v11089, %v11088
    %v11179 = vpack.c.b16 %v11091, %v11090
    %v11180 = vpack.c.b16 %v11093, %v11092
    %v11181 = vpack.c.b16 %v11095, %v11094
    %v11182 = vpack.c.b16 %v11097, %v11096
    %v11183 = vpack.c.b16 %v11099, %v11098
    %v11184 = vpack.c.b16 %v11101, %v11100
    %v11185 = vpack.c.b16 %v11103, %v11102
    %v11186 = vpack.c.b16 %v11105, %v11104
    %v11187 = vpack.c.b16 %v11107, %v11106
    %v11188 = vpack.c.b16 %v11109, %v11108
    %v11189 = vpack.c.b16 %v11111, %v11110
    %v11190 = vpack.c.b16 %v11113, %v11112
    %v11191 = vpack.c.b16 %v11115, %v11114
    %v11192 = vpack.c.b16 %v11117, %v11116
    %v11193 = vpack.c.b16 %v11119, %v11118
    %v11194 = vpack.c.b16 %v11121, %v11120
    %v11195 = vpack.c.b16 %v11123, %v11122
    %v11196 = vpack.c.b16 %v11125, %v11124
    %v11197 = vpack.c.b16 %v11127, %v11126
    %v11198 = vpack.c.b16 %v11129, %v11128
    %v11199 = vpack.c.b16 %v11131, %v11130
    %v11200 = vpack.c.b16 %v11133, %v11132
    %v11201 = vpack.c.b16 %v11135, %v11134
    %v11202 = vpack.c.b16 %v11137, %v11136
    %v11203 = vpack.c.b16 %v11139, %v11138
    %11268 = vmatprep.subr.bf16.mxu0 0
    %11269 = vmatpush1.bf16.msra.mxu0 %v11140
    %11270 = vmatprep.subr.bf16.mxu0 0
    %11271 = vmatpush1.bf16.msra.mxu0 %v11141
    %11272 = vmatprep.subr.bf16.mxu0 0
    %11273 = vmatpush1.bf16.msra.mxu0 %v11142
    %11274 = vmatprep.subr.bf16.mxu0 0
    %11275 = vmatpush1.bf16.msra.mxu0 %v11143
    %11276 = vmatprep.subr.bf16.mxu0 0
    %11277 = vmatpush1.bf16.msra.mxu0 %v11144
    %11278 = vmatprep.subr.bf16.mxu0 0
    %11279 = vmatpush1.bf16.msra.mxu0 %v11145
    %11280 = vmatprep.subr.bf16.mxu0 0
    %11281 = vmatpush1.bf16.msra.mxu0 %v11146
    %11282 = vmatprep.subr.bf16.mxu0 0
    %11283 = vmatpush1.bf16.msra.mxu0 %v11147
    %11284 = vmatprep.subr.bf16.mxu0 0
    %11285 = vmatpush1.bf16.msra.mxu0 %v11148
    %11286 = vmatprep.subr.bf16.mxu0 0
    %11287 = vmatpush1.bf16.msra.mxu0 %v11149
    %11288 = vmatprep.subr.bf16.mxu0 0
    %11289 = vmatpush1.bf16.msra.mxu0 %v11150
    %11290 = vmatprep.subr.bf16.mxu0 0
    %11291 = vmatpush1.bf16.msra.mxu0 %v11151
    %11292 = vmatprep.subr.bf16.mxu0 0
    %11293 = vmatpush1.bf16.msra.mxu0 %v11152
    %11294 = vmatprep.subr.bf16.mxu0 0
    %11295 = vmatpush1.bf16.msra.mxu0 %v11153
    %11296 = vmatprep.subr.bf16.mxu0 0
    %11297 = vmatpush1.bf16.msra.mxu0 %v11154
    %11298 = vmatprep.subr.bf16.mxu0 0
    %11299 = vmatpush1.bf16.msra.mxu0 %v11155
    %11300 = vmatprep.mubr.bf16.mxu0 %v10742
    %11301 = vmatmul.mubr.bf16.gmra.mrb[0].mxu0 %v10741
    %v11302 = vpop.f32.mrb[0].mxu0
    %v11303 = vadd.f32 %v10882, %v11302
    %v11304 = vpop.f32.mrb[0].mxu0
    %v11305 = vpop.f32.mrb[0].mxu0
    %v11306 = vpop.f32.mrb[0].mxu0
    %11307 = vdwg.mxu0
    %11308 = vmatprep.subr.bf16.mxu0 0
    %11309 = vmatpush1.bf16.msra.mxu0 %v11156
    %11310 = vmatprep.subr.bf16.mxu0 0
    %11311 = vmatpush1.bf16.msra.mxu0 %v11157
    %11312 = vmatprep.subr.bf16.mxu0 0
    %11313 = vmatpush1.bf16.msra.mxu0 %v11158
    %11314 = vmatprep.subr.bf16.mxu0 0
    %11315 = vmatpush1.bf16.msra.mxu0 %v11159
    %11316 = vmatprep.subr.bf16.mxu0 0
    %11317 = vmatpush1.bf16.msra.mxu0 %v11160
    %11318 = vmatprep.subr.bf16.mxu0 0
    %11319 = vmatpush1.bf16.msra.mxu0 %v11161
    %11320 = vmatprep.subr.bf16.mxu0 0
    %11321 = vmatpush1.bf16.msra.mxu0 %v11162
    %11322 = vmatprep.subr.bf16.mxu0 0
    %11323 = vmatpush1.bf16.msra.mxu0 %v11163
    %11324 = vmatprep.subr.bf16.mxu0 0
    %11325 = vmatpush1.bf16.msra.mxu0 %v11164
    %11326 = vmatprep.subr.bf16.mxu0 0
    %11327 = vmatpush1.bf16.msra.mxu0 %v11165
    %11328 = vmatprep.subr.bf16.mxu0 0
    %11329 = vmatpush1.bf16.msra.mxu0 %v11166
    %11330 = vmatprep.subr.bf16.mxu0 0
    %11331 = vmatpush1.bf16.msra.mxu0 %v11167
    %11332 = vmatprep.subr.bf16.mxu0 0
    %11333 = vmatpush1.bf16.msra.mxu0 %v11168
    %11334 = vmatprep.subr.bf16.mxu0 0
    %11335 = vmatpush1.bf16.msra.mxu0 %v11169
    %11336 = vmatprep.subr.bf16.mxu0 0
    %11337 = vmatpush1.bf16.msra.mxu0 %v11170
    %11338 = vmatprep.subr.bf16.mxu0 0
    %11339 = vmatpush1.bf16.msra.mxu0 %v11171
    %11340 = vmatprep.mubr.bf16.mxu0 %v10744
    %11341 = vmatmul.mubr.bf16.gmra.mrb[0].mxu0 %v10743
    %v11342 = vpop.f32.mrb[0].mxu0
    %v11343 = vadd.f32 %v11303, %v11342
    %v11344 = vpop.f32.mrb[0].mxu0
    %v11345 = vpop.f32.mrb[0].mxu0
    %v11346 = vpop.f32.mrb[0].mxu0
    %11347 = vdwg.mxu0
    %11348 = vmatprep.subr.bf16.mxu0 0
    %11349 = vmatpush1.bf16.msra.mxu0 %v11172
    %11350 = vmatprep.subr.bf16.mxu0 0
    %11351 = vmatpush1.bf16.msra.mxu0 %v11173
    %11352 = vmatprep.subr.bf16.mxu0 0
    %11353 = vmatpush1.bf16.msra.mxu0 %v11174
    %11354 = vmatprep.subr.bf16.mxu0 0
    %11355 = vmatpush1.bf16.msra.mxu0 %v11175
    %11356 = vmatprep.subr.bf16.mxu0 0
    %11357 = vmatpush1.bf16.msra.mxu0 %v11176
    %11358 = vmatprep.subr.bf16.mxu0 0
    %11359 = vmatpush1.bf16.msra.mxu0 %v11177
    %11360 = vmatprep.subr.bf16.mxu0 0
    %11361 = vmatpush1.bf16.msra.mxu0 %v11178
    %11362 = vmatprep.subr.bf16.mxu0 0
    %11363 = vmatpush1.bf16.msra.mxu0 %v11179
    %11364 = vmatprep.subr.bf16.mxu0 0
    %11365 = vmatpush1.bf16.msra.mxu0 %v11180
    %11366 = vmatprep.subr.bf16.mxu0 0
    %11367 = vmatpush1.bf16.msra.mxu0 %v11181
    %11368 = vmatprep.subr.bf16.mxu0 0
    %11369 = vmatpush1.bf16.msra.mxu0 %v11182
    %11370 = vmatprep.subr.bf16.mxu0 0
    %11371 = vmatpush1.bf16.msra.mxu0 %v11183
    %11372 = vmatprep.subr.bf16.mxu0 0
    %11373 = vmatpush1.bf16.msra.mxu0 %v11184
    %11374 = vmatprep.subr.bf16.mxu0 0
    %11375 = vmatpush1.bf16.msra.mxu0 %v11185
    %11376 = vmatprep.subr.bf16.mxu0 0
    %11377 = vmatpush1.bf16.msra.mxu0 %v11186
    %11378 = vmatprep.subr.bf16.mxu0 0
    %11379 = vmatpush1.bf16.msra.mxu0 %v11187
    %11380 = vmatprep.mubr.bf16.mxu0 %v10746
    %11381 = vmatmul.mubr.bf16.gmra.mrb[0].mxu0 %v10745
    %v11382 = vpop.f32.mrb[0].mxu0
    %v11383 = vadd.f32 %v11343, %v11382
    %v11384 = vpop.f32.mrb[0].mxu0
    %v11385 = vpop.f32.mrb[0].mxu0
    %v11386 = vpop.f32.mrb[0].mxu0
    %11387 = vdwg.mxu0
    %11388 = vmatprep.subr.bf16.mxu0 0
    %11389 = vmatpush1.bf16.msra.mxu0 %v11188
    %11390 = vmatprep.subr.bf16.mxu0 0
    %11391 = vmatpush1.bf16.msra.mxu0 %v11189
    %11392 = vmatprep.subr.bf16.mxu0 0
    %11393 = vmatpush1.bf16.msra.mxu0 %v11190
    %11394 = vmatprep.subr.bf16.mxu0 0
    %11395 = vmatpush1.bf16.msra.mxu0 %v11191
    %11396 = vmatprep.subr.bf16.mxu0 0
    %11397 = vmatpush1.bf16.msra.mxu0 %v11192
    %11398 = vmatprep.subr.bf16.mxu0 0
    %11399 = vmatpush1.bf16.msra.mxu0 %v11193
    %11400 = vmatprep.subr.bf16.mxu0 0
    %11401 = vmatpush1.bf16.msra.mxu0 %v11194
    %11402 = vmatprep.subr.bf16.mxu0 0
    %11403 = vmatpush1.bf16.msra.mxu0 %v11195
    %11404 = vmatprep.subr.bf16.mxu0 0
    %11405 = vmatpush1.bf16.msra.mxu0 %v11196
    %11406 = vmatprep.subr.bf16.mxu0 0
    %11407 = vmatpush1.bf16.msra.mxu0 %v11197
    %11408 = vmatprep.subr.bf16.mxu0 0
    %11409 = vmatpush1.bf16.msra.mxu0 %v11198
    %11410 = vmatprep.subr.bf16.mxu0 0
    %11411 = vmatpush1.bf16.msra.mxu0 %v11199
    %11412 = vmatprep.subr.bf16.mxu0 0
    %11413 = vmatpush1.bf16.msra.mxu0 %v11200
    %11414 = vmatprep.subr.bf16.mxu0 0
    %11415 = vmatpush1.bf16.msra.mxu0 %v11201
    %11416 = vmatprep.subr.bf16.mxu0 0
    %11417 = vmatpush1.bf16.msra.mxu0 %v11202
    %11418 = vmatprep.subr.bf16.mxu0 0
    %11419 = vmatpush1.bf16.msra.mxu0 %v11203
    %11420 = vmatprep.mubr.bf16.mxu0 %v10748
    %11421 = vmatmul.mubr.bf16.gmra.mrb[0].mxu0 %v10747
    %v11422 = vpop.f32.mrb[0].mxu0
    %v11423 = vadd.f32 %v11383, %v11422
    %v11424 = vpop.f32.mrb[0].mxu0
    %v11425 = vpop.f32.mrb[0].mxu0
    %v11426 = vpop.f32.mrb[0].mxu0
    %11427 = vdwg.mxu0
    %11428 = vst [vmem:[#allocation16] sm:$0xff] %v11423
    // Predicated region
    $region70: #{tpu_custom_call.1} parent=1 // pred_check
      _
    $region71: #{tpu_custom_call.1} parent=1 // pred_check_branch
      %11430 = sbr.rel (0) target = $region73
    $region72: #{tpu_custom_call.1} parent=1 // pred_region
      %s11432 = ssub.s32 128, 128
      %11433 = vsyncadd [#allocation4], %s11432
      %s11435 = sshll.u32 [#allocation16], 4
      %s11436 = int_to_ptr.vmem [resolvable:$true] %s11435
      %11438 = dma.vmem_to_hbm [thread:$0]  %s11436, 128, %s9, [#allocation4]
    $region73: #{tpu_custom_call.1} parent=1 // pred_fallthru
      _
    // Predicated region
    $region74: #{tpu_custom_call.1} parent=1 // pred_check
      _
    $region75: #{tpu_custom_call.1} parent=1 // pred_check_branch
      %11440 = sbr.rel (0) target = $region77
    $region76: #{tpu_custom_call.1} parent=1 // pred_region
      %11441 = dma.done [#allocation4], 128
    $region77: #{tpu_custom_call.1} parent=1 // pred_fallthru
      _
    %11442 = vsyncpa [#allocation3], 1
    %11443 = vsyncpa [#allocation6], 1
    %11444 = vsyncpa [#allocation9], 1
    %11445 = vsyncpa [#allocation12], 1
    %11446 = vsyncpa [#allocation15], 1
    %11447 = vsyncpa [#allocation4], 1

</llo_original>
